<compile_context>
chip_gen: v7x
topology: tpu7x:2x2x1
jax: 0.10.0
libtpu: 0.0.40
codegen_flags: <defaults>
</compile_context>

<pallas_src>
import jax
import jax.numpy as jnp
from jax.experimental import pallas as pl
from jax.experimental.pallas import tpu as pltpu


D_IN, D_H1, D_H2, D_OUT = 2048, 1024, 512, 2
D_OUT_PAD = 128  # lane-dense padded width for the final layer


def _round_up(n, m):
    return ((n + m - 1) // m) * m


def _mlp_kernel(x_ref, w1_ref, b1_ref, w2_ref, b2_ref, w3_ref, b3_ref, o_ref):
    # In-kernel f32 -> bf16 cast of the activation tile (free under MXU work).
    x = x_ref[...].astype(jnp.bfloat16)
    # fc1 + ReLU   (bf16 operands on MXU, f32 accumulate, f32 epilogue on VPU)
    z1 = jnp.dot(x, w1_ref[...], preferred_element_type=jnp.float32)
    a1 = jnp.maximum(z1 + b1_ref[...], 0.0)
    # Dropout2d (eval mode) -> identity
    # fc2 + ReLU
    z2 = jnp.dot(a1.astype(jnp.bfloat16), w2_ref[...],
                 preferred_element_type=jnp.float32)
    a2 = jnp.maximum(z2 + b2_ref[...], 0.0)
    # Dropout2d (eval mode) -> identity
    # fc3 (output padded to 128 lanes; real logits are columns 0..1)
    z3 = jnp.dot(a2.astype(jnp.bfloat16), w3_ref[...],
                 preferred_element_type=jnp.float32)
    o_ref[...] = (z3 + b3_ref[...]).astype(o_ref.dtype)


def fully_connected_forward(x, params, *, block_b=512):
    """x: (B, 2048) float32.  params: bf16 weights (in,out) + f32 biases (1,out);
    w3/b3 are zero-padded to 128 output columns.  Returns (B, 2) float32 logits."""
    B = x.shape[0]
    w1, b1, w2, b2, w3, b3 = (params[k] for k in ("w1", "b1", "w2", "b2", "w3", "b3"))
    assert w3.shape == (D_H2, D_OUT_PAD) and b3.shape == (1, D_OUT_PAD)

    # Batch tile: multiple of 16 sublane-pairs (bf16 packing), capped at block_b
    # (default 512: a multiple of 256 for the v6e/v7x MXU, of 128 for v5e).
    tb = min(block_b, _round_up(B, 16))
    nb = pl.cdiv(B, tb)

    def resident(arr):
        # Weights / biases: constant block index -> DMA'd from HBM only once and
        # held in VMEM; Buffered(1) avoids allocating a useless second buffer.
        return pl.BlockSpec(arr.shape, lambda i: (0, 0),
                            pipeline_mode=pl.Buffered(1))

    weight_bytes = int(w1.size + w2.size + w3.size) * 2          # bf16
    bias_bytes = int(b1.size + b2.size + b3.size) * 4            # f32

    flops = 2 * nb * tb * (D_IN * D_H1 + D_H1 * D_H2 + D_H2 * D_OUT_PAD)
    bytes_accessed = (
        B * D_IN * 4                       # f32 activations in (cast in-kernel)
        + weight_bytes + bias_bytes        # resident params, streamed once
        + B * D_OUT_PAD * 4                # f32 output slab
    )

    # VMEM footprint: x tile (f32, double-buffered) + single-buffered weights
    # + output slab (double-buffered) + f32/bf16 intermediates + headroom.
    vmem_limit = int(min(
        2 * tb * D_IN * 4
        + weight_bytes + bias_bytes
        + 2 * tb * D_OUT_PAD * 4
        + tb * (D_H1 + D_H2) * 6
        + (8 << 20),
        60 << 20,                          # stay under v7x's 64 MiB per TC
    ))

    out = pl.pallas_call(
        _mlp_kernel,
        out_shape=jax.ShapeDtypeStruct((B, D_OUT_PAD), jnp.float32),
        grid_spec=pltpu.PrefetchScalarGridSpec(
            num_scalar_prefetch=0,
            grid=(nb,),
            in_specs=[
                pl.BlockSpec((tb, D_IN), lambda i: (i, 0)),   # x tile (pipelined)
                resident(w1), resident(b1),                    # W1 (2048,1024), b1
                resident(w2), resident(b2),                    # W2 (1024, 512), b2
                resident(w3), resident(b3),                    # W3 ( 512, 128), b3
            ],
            out_specs=pl.BlockSpec((tb, D_OUT_PAD), lambda i: (i, 0)),
        ),
        compiler_params=pltpu.CompilerParams(
            dimension_semantics=("parallel",),   # v7x: shard batch over 2 TCs
            vmem_limit_bytes=vmem_limit,
        ),
        cost_estimate=pl.CostEstimate(
            flops=flops, transcendentals=0, bytes_accessed=bytes_accessed),
    )(x, w1, b1, w2, b2, w3, b3)

    return out[:, :D_OUT]


def init_params(key):
    """Deterministic init mimicking torch.nn.Linear default (uniform +-1/sqrt(fan_in)).
    Weights stored transposed as (in, out), cast to bf16; fc3 zero-padded to 128 cols."""
    ks = jax.random.split(key, 6)

    def linear(kw, kb, fan_in, fan_out):
        bound = 1.0 / (fan_in ** 0.5)
        w = jax.random.uniform(kw, (fan_in, fan_out), jnp.float32, -bound, bound)
        b = jax.random.uniform(kb, (1, fan_out), jnp.float32, -bound, bound)
        return w, b

    w1, b1 = linear(ks[0], ks[1], D_IN, D_H1)
    w2, b2 = linear(ks[2], ks[3], D_H1, D_H2)
    w3, b3 = linear(ks[4], ks[5], D_H2, D_OUT)
    # Pad fc3 to a lane-dense 128-wide output slab (zeros in columns 2..127).
    w3 = jnp.pad(w3, ((0, 0), (0, D_OUT_PAD - D_OUT)))
    b3 = jnp.pad(b3, ((0, 0), (0, D_OUT_PAD - D_OUT)))
    return dict(
        w1=w1.astype(jnp.bfloat16), b1=b1,
        w2=w2.astype(jnp.bfloat16), b2=b2,
        w3=w3.astype(jnp.bfloat16), b3=b3,
    )


def _reference(x, p):
    """Pure-JAX reference with the same bf16-operand / f32-accumulate pipeline."""
    z1 = jnp.dot(x.astype(jnp.bfloat16), p["w1"],
                 preferred_element_type=jnp.float32) + p["b1"]
    a1 = jnp.maximum(z1, 0.0)
    z2 = jnp.dot(a1.astype(jnp.bfloat16), p["w2"],
                 preferred_element_type=jnp.float32) + p["b2"]
    a2 = jnp.maximum(z2, 0.0)
    z3 = jnp.dot(a2.astype(jnp.bfloat16), p["w3"],
                 preferred_element_type=jnp.float32) + p["b3"]
    return z3[:, :D_OUT]


if __name__ == "__main__":
    key = jax.random.PRNGKey(0)
    k_x, k_p = jax.random.split(key)

    B = 32  # small batch for the self-test (multiple of 16 -> exact tiles)
    x = jax.random.normal(k_x, (B, D_IN), jnp.float32)
    params = init_params(k_p)

    out = fully_connected_forward(x, params)
    out = jax.block_until_ready(out)

    ref = _reference(x, params)
    assert out.shape == (B, D_OUT), out.shape
    assert jnp.allclose(out, ref, atol=1e-2, rtol=1e-2), "mismatch vs reference"

    print("KERNEL_OK")
</pallas_src>

<mosaic_0001>
module attributes {stable_mosaic.version = 11 : i64} {
  func.func @_mlp_kernel(%arg0: i32, %arg1: memref<32x2048xf32, #tpu.memory_space<vmem>>, %arg2: memref<2048x1024xbf16, #tpu.memory_space<vmem>>, %arg3: memref<1x1024xf32, #tpu.memory_space<vmem>>, %arg4: memref<1024x512xbf16, #tpu.memory_space<vmem>>, %arg5: memref<1x512xf32, #tpu.memory_space<vmem>>, %arg6: memref<512x128xbf16, #tpu.memory_space<vmem>>, %arg7: memref<1x128xf32, #tpu.memory_space<vmem>>, %arg8: memref<32x128xf32, #tpu.memory_space<vmem>>) attributes {dimension_semantics = [#tpu.dimension_semantics<parallel>], iteration_bounds = array<i64: 1>, scalar_prefetch = 0 : i64, scratch_operands = 0 : i64, tpu.core_type = #tpu.core_type<tc>, window_params = [{transform_indices = @transform_0, window_bounds = array<i64: 32, 2048>}, {pipeline_mode = #tpu.pipeline_mode<synchronous>, transform_indices = @transform_1, window_bounds = array<i64: 2048, 1024>}, {pipeline_mode = #tpu.pipeline_mode<synchronous>, transform_indices = @transform_2, window_bounds = array<i64: 1, 1024>}, {pipeline_mode = #tpu.pipeline_mode<synchronous>, transform_indices = @transform_3, window_bounds = array<i64: 1024, 512>}, {pipeline_mode = #tpu.pipeline_mode<synchronous>, transform_indices = @transform_4, window_bounds = array<i64: 1, 512>}, {pipeline_mode = #tpu.pipeline_mode<synchronous>, transform_indices = @transform_5, window_bounds = array<i64: 512, 128>}, {pipeline_mode = #tpu.pipeline_mode<synchronous>, transform_indices = @transform_6, window_bounds = array<i64: 1, 128>}, {transform_indices = @transform_7, window_bounds = array<i64: 32, 128>}]} {
    %c0 = arith.constant 0 : index
    %c0_0 = arith.constant 0 : index
    %0 = vector.load %arg1[%c0, %c0_0] : memref<32x2048xf32, #tpu.memory_space<vmem>>, vector<32x2048xf32>
    %1 = arith.truncf %0 : vector<32x2048xf32> to vector<32x2048xbf16>
    %c0_1 = arith.constant 0 : index
    %c0_2 = arith.constant 0 : index
    %2 = vector.load %arg2[%c0_1, %c0_2] : memref<2048x1024xbf16, #tpu.memory_space<vmem>>, vector<2048x1024xbf16>
    %cst = arith.constant dense<0.000000e+00> : vector<32x1024xf32>
    %3 = tpu.matmul %1, %2, %cst {dimension_numbers = #tpu.dot_dimension_numbers<[1], [0], [0], [1], [0, 0, 1, 1], [], []>} : vector<32x2048xbf16>, vector<2048x1024xbf16>, vector<32x1024xf32> -> vector<32x1024xf32>
    %c0_3 = arith.constant 0 : index
    %c0_4 = arith.constant 0 : index
    %4 = vector.load %arg3[%c0_3, %c0_4] : memref<1x1024xf32, #tpu.memory_space<vmem>>, vector<1x1024xf32>
    %5 = vector.broadcast %4 : vector<1x1024xf32> to vector<32x1024xf32>
    %6 = arith.addf %3, %5 : vector<32x1024xf32>
    %cst_5 = arith.constant 0.000000e+00 : f32
    %7 = vector.broadcast %cst_5 : f32 to vector<32x1024xf32>
    %8 = arith.maximumf %6, %7 : vector<32x1024xf32>
    %9 = arith.truncf %8 : vector<32x1024xf32> to vector<32x1024xbf16>
    %c0_6 = arith.constant 0 : index
    %c0_7 = arith.constant 0 : index
    %10 = vector.load %arg4[%c0_6, %c0_7] : memref<1024x512xbf16, #tpu.memory_space<vmem>>, vector<1024x512xbf16>
    %cst_8 = arith.constant dense<0.000000e+00> : vector<32x512xf32>
    %11 = tpu.matmul %9, %10, %cst_8 {dimension_numbers = #tpu.dot_dimension_numbers<[1], [0], [0], [1], [0, 0, 1, 1], [], []>} : vector<32x1024xbf16>, vector<1024x512xbf16>, vector<32x512xf32> -> vector<32x512xf32>
    %c0_9 = arith.constant 0 : index
    %c0_10 = arith.constant 0 : index
    %12 = vector.load %arg5[%c0_9, %c0_10] : memref<1x512xf32, #tpu.memory_space<vmem>>, vector<1x512xf32>
    %13 = vector.broadcast %12 : vector<1x512xf32> to vector<32x512xf32>
    %14 = arith.addf %11, %13 : vector<32x512xf32>
    %cst_11 = arith.constant 0.000000e+00 : f32
    %15 = vector.broadcast %cst_11 : f32 to vector<32x512xf32>
    %16 = arith.maximumf %14, %15 : vector<32x512xf32>
    %17 = arith.truncf %16 : vector<32x512xf32> to vector<32x512xbf16>
    %c0_12 = arith.constant 0 : index
    %c0_13 = arith.constant 0 : index
    %18 = vector.load %arg6[%c0_12, %c0_13] : memref<512x128xbf16, #tpu.memory_space<vmem>>, vector<512x128xbf16>
    %cst_14 = arith.constant dense<0.000000e+00> : vector<32x128xf32>
    %19 = tpu.matmul %17, %18, %cst_14 {dimension_numbers = #tpu.dot_dimension_numbers<[1], [0], [0], [1], [0, 0, 1, 1], [], []>} : vector<32x512xbf16>, vector<512x128xbf16>, vector<32x128xf32> -> vector<32x128xf32>
    %c0_15 = arith.constant 0 : index
    %c0_16 = arith.constant 0 : index
    %20 = vector.load %arg7[%c0_15, %c0_16] : memref<1x128xf32, #tpu.memory_space<vmem>>, vector<1x128xf32>
    %21 = vector.broadcast %20 : vector<1x128xf32> to vector<32x128xf32>
    %22 = arith.addf %19, %21 : vector<32x128xf32>
    %c0_17 = arith.constant 0 : index
    %c0_18 = arith.constant 0 : index
    %23 = vector.load %arg8[%c0_17, %c0_18] : memref<32x128xf32, #tpu.memory_space<vmem>>, vector<32x128xf32>
    tpu.vector_store %arg8[%c0_17, %c0_18], %22 {strides = array<i32>} : memref<32x128xf32, #tpu.memory_space<vmem>>, vector<32x128xf32>,
    return
  }
  func.func @transform_0(%arg0: i32) -> (i32, i32) {
    %c0_i32 = arith.constant 0 : i32
    %c0_i32_0 = arith.constant 0 : i32
    return %arg0, %c0_i32 : i32, i32
  }
  func.func @transform_1(%arg0: i32) -> (i32, i32) {
    %c0_i32 = arith.constant 0 : i32
    %c0_i32_0 = arith.constant 0 : i32
    %c0_i32_1 = arith.constant 0 : i32
    return %c0_i32, %c0_i32_0 : i32, i32
  }
  func.func @transform_2(%arg0: i32) -> (i32, i32) {
    %c0_i32 = arith.constant 0 : i32
    %c0_i32_0 = arith.constant 0 : i32
    %c0_i32_1 = arith.constant 0 : i32
    return %c0_i32, %c0_i32_0 : i32, i32
  }
  func.func @transform_3(%arg0: i32) -> (i32, i32) {
    %c0_i32 = arith.constant 0 : i32
    %c0_i32_0 = arith.constant 0 : i32
    %c0_i32_1 = arith.constant 0 : i32
    return %c0_i32, %c0_i32_0 : i32, i32
  }
  func.func @transform_4(%arg0: i32) -> (i32, i32) {
    %c0_i32 = arith.constant 0 : i32
    %c0_i32_0 = arith.constant 0 : i32
    %c0_i32_1 = arith.constant 0 : i32
    return %c0_i32, %c0_i32_0 : i32, i32
  }
  func.func @transform_5(%arg0: i32) -> (i32, i32) {
    %c0_i32 = arith.constant 0 : i32
    %c0_i32_0 = arith.constant 0 : i32
    %c0_i32_1 = arith.constant 0 : i32
    return %c0_i32, %c0_i32_0 : i32, i32
  }
  func.func @transform_6(%arg0: i32) -> (i32, i32) {
    %c0_i32 = arith.constant 0 : i32
    %c0_i32_0 = arith.constant 0 : i32
    %c0_i32_1 = arith.constant 0 : i32
    return %c0_i32, %c0_i32_0 : i32, i32
  }
  func.func @transform_7(%arg0: i32) -> (i32, i32) {
    %c0_i32 = arith.constant 0 : i32
    %c0_i32_0 = arith.constant 0 : i32
    return %arg0, %c0_i32 : i32, i32
  }
}

</mosaic_0001>

<llo_original>
// kernel: tpu_custom_call.1
$region0: #{tpu_custom_call.1}
  #allocation0 [shape = 'u32[]', space=smem, size = 0x4, offset = 0x4, fixed_abs, tag = 'smem constant byte address 0x4 - core index']
  #allocation1 [shape = 'u32[144,128]{1,0:T(1,128)}', space=vmem, size = 0x12000, scoped, tag = 'internal scratch']
  %s0 = inlined_call_operand.hbm [shape: f32[32,2048], index: 0, kind: input, shape index: {}]
  %s1 = inlined_call_operand.hbm [shape: bf16[2048,1024], index: 1, kind: input, shape index: {}]
  %s2 = inlined_call_operand.hbm [shape: f32[1,1024], index: 2, kind: input, shape index: {}]
  %s3 = inlined_call_operand.hbm [shape: bf16[1024,512], index: 3, kind: input, shape index: {}]
  %s4 = inlined_call_operand.hbm [shape: f32[1,512], index: 4, kind: input, shape index: {}]
  %s5 = inlined_call_operand.hbm [shape: bf16[512,128], index: 5, kind: input, shape index: {}]
  %s6 = inlined_call_operand.hbm [shape: f32[1,128], index: 6, kind: input, shape index: {}]
  %s7 = inlined_call_operand.hbm [shape: f32[32,128], index: 7, kind: output, shape index: {}]
  %s8 = sld [smem:[#allocation0]]
  $region66: #{tpu_custom_call.1} parent=0
    _
  %s10 = ssub.s32 1, %s8
  %s11 = scalar_select 0, %s10, %s8
  $region1: #{tpu_custom_call.1} parent=0
    #allocation2 [shape = 'u8[262144]{0}', space=vmem, size = 0x40000, scoped, tag = 'input window, operand 0, single buffered']
    #allocation3 [shape = 's32[1]{0}', space=sflag, size = 0x4, scoped, tag = 'scoped memory for tpu_custom_call.1']
    #allocation4 [shape = 's32[1]{0}', space=sflag, size = 0x4, scoped, tag = 'scoped memory for tpu_custom_call.1']
    #allocation5 [shape = 'u8[4194304]{0}', space=vmem, size = 0x400000, scoped, tag = 'input window, operand 1, single buffered']
    #allocation6 [shape = 's32[1]{0}', space=sflag, size = 0x4, scoped, tag = 'scoped memory for tpu_custom_call.1']
    #allocation7 [shape = 'u8[4096]{0}', space=vmem, size = 0x1000, scoped, tag = 'input window, operand 2, single buffered']
    #allocation8 [shape = 'u8[1048576]{0}', space=vmem, size = 0x100000, scoped, tag = 'input window, operand 3, single buffered']
    #allocation9 [shape = 's32[1]{0}', space=sflag, size = 0x4, scoped, tag = 'scoped memory for tpu_custom_call.1']
    #allocation10 [shape = 'u8[2048]{0}', space=vmem, size = 0x800, scoped, tag = 'input window, operand 4, single buffered']
    #allocation11 [shape = 'u8[131072]{0}', space=vmem, size = 0x20000, scoped, tag = 'input window, operand 5, single buffered']
    #allocation12 [shape = 's32[1]{0}', space=sflag, size = 0x4, scoped, tag = 'scoped memory for tpu_custom_call.1']
    #allocation13 [shape = 'u8[512]{0}', space=vmem, size = 0x400, scoped, tag = 'input window, operand 6, single buffered']
    #allocation14 [shape = 'u8[16384]{0}', space=vmem, size = 0x4000, scoped, tag = 'output window, operand 0, single buffered']
    %12 = vsyncpa [#allocation3], 0
    %13 = vsyncpa [#allocation6], 0
    %14 = vsyncpa [#allocation9], 0
    %15 = vsyncpa [#allocation12], 0
    %16 = vsyncpa [#allocation4], 0
    // Predicated region
    $region2: #{tpu_custom_call.1} parent=1 // pred_check
      _
    $region3: #{tpu_custom_call.1} parent=1 // pred_check_branch
      %18 = sbr.rel (0) target = $region5
    $region4: #{tpu_custom_call.1} parent=1 // pred_region
      %s20 = ssub.s32 8192, 8192
      %21 = vsyncadd [#allocation3], %s20
      %s22 = sshll.u32 [#allocation2], 4
      %s23 = int_to_ptr.vmem [resolvable:$true] %s22
      %28 = dma.hbm_to_vmem [thread:$0]  %s0, 8192, %s23, [#allocation3], 2048, 2048, 128
    $region5: #{tpu_custom_call.1} parent=1 // pred_fallthru
      _
    // Predicated region
    $region6: #{tpu_custom_call.1} parent=1 // pred_check
      _
    $region7: #{tpu_custom_call.1} parent=1 // pred_check_branch
      %30 = sbr.rel (0) target = $region9
    $region8: #{tpu_custom_call.1} parent=1 // pred_region
      %s32 = ssub.s32 131072, 131072
      %33 = vsyncadd [#allocation6], %s32
      %s34 = sshll.u32 [#allocation5], 4
      %s35 = int_to_ptr.vmem [resolvable:$true] %s34
      %40 = dma.hbm_to_vmem [thread:$0]  %s1, 131072, %s35, [#allocation6], 512, 512, 32
    $region9: #{tpu_custom_call.1} parent=1 // pred_fallthru
      _
    // Predicated region
    $region10: #{tpu_custom_call.1} parent=1 // pred_check
      _
    $region11: #{tpu_custom_call.1} parent=1 // pred_check_branch
      %42 = sbr.rel (0) target = $region13
    $region12: #{tpu_custom_call.1} parent=1 // pred_region
      %s44 = ssub.s32 128, 128
      %45 = vsyncadd [#allocation6], %s44
      %s47 = sshll.u32 [#allocation7], 4
      %s48 = int_to_ptr.vmem [resolvable:$true] %s47
      %50 = dma.hbm_to_vmem [thread:$0]  %s2, 128, %s48, [#allocation6]
    $region13: #{tpu_custom_call.1} parent=1 // pred_fallthru
      _
    // Predicated region
    $region14: #{tpu_custom_call.1} parent=1 // pred_check
      _
    $region15: #{tpu_custom_call.1} parent=1 // pred_check_branch
      %52 = sbr.rel (0) target = $region17
    $region16: #{tpu_custom_call.1} parent=1 // pred_region
      %s54 = ssub.s32 32768, 32768
      %55 = vsyncadd [#allocation9], %s54
      %s56 = sshll.u32 [#allocation8], 4
      %s57 = int_to_ptr.vmem [resolvable:$true] %s56
      %62 = dma.hbm_to_vmem [thread:$0]  %s3, 32768, %s57, [#allocation9], 256, 256, 16
    $region17: #{tpu_custom_call.1} parent=1 // pred_fallthru
      _
    // Predicated region
    $region18: #{tpu_custom_call.1} parent=1 // pred_check
      _
    $region19: #{tpu_custom_call.1} parent=1 // pred_check_branch
      %64 = sbr.rel (0) target = $region21
    $region20: #{tpu_custom_call.1} parent=1 // pred_region
      %s66 = ssub.s32 64, 64
      %67 = vsyncadd [#allocation9], %s66
      %s69 = sshll.u32 [#allocation10], 4
      %s70 = int_to_ptr.vmem [resolvable:$true] %s69
      %72 = dma.hbm_to_vmem [thread:$0]  %s4, 64, %s70, [#allocation9]
    $region21: #{tpu_custom_call.1} parent=1 // pred_fallthru
      _
    // Predicated region
    $region22: #{tpu_custom_call.1} parent=1 // pred_check
      _
    $region23: #{tpu_custom_call.1} parent=1 // pred_check_branch
      %74 = sbr.rel (0) target = $region25
    $region24: #{tpu_custom_call.1} parent=1 // pred_region
      %s76 = ssub.s32 4096, 4096
      %77 = vsyncadd [#allocation12], %s76
      %s78 = sshll.u32 [#allocation11], 4
      %s79 = int_to_ptr.vmem [resolvable:$true] %s78
      %84 = dma.hbm_to_vmem [thread:$0]  %s5, 4096, %s79, [#allocation12], 64, 64, 4
    $region25: #{tpu_custom_call.1} parent=1 // pred_fallthru
      _
    // Predicated region
    $region26: #{tpu_custom_call.1} parent=1 // pred_check
      _
    $region27: #{tpu_custom_call.1} parent=1 // pred_check_branch
      %86 = sbr.rel (0) target = $region29
    $region28: #{tpu_custom_call.1} parent=1 // pred_region
      %s88 = ssub.s32 16, 16
      %89 = vsyncadd [#allocation12], %s88
      %s91 = sshll.u32 [#allocation13], 4
      %s92 = int_to_ptr.vmem [resolvable:$true] %s91
      %94 = dma.hbm_to_vmem [thread:$0]  %s6, 16, %s92, [#allocation12]
    $region29: #{tpu_custom_call.1} parent=1 // pred_fallthru
      _
    // Predicated region
    $region30: #{tpu_custom_call.1} parent=1 // pred_check
      _
    $region31: #{tpu_custom_call.1} parent=1 // pred_check_branch
      %96 = sbr.rel (0) target = $region33
    $region32: #{tpu_custom_call.1} parent=1 // pred_region
      %97 = dma.done [#allocation3], 8192
    $region33: #{tpu_custom_call.1} parent=1 // pred_fallthru
      _
    // Predicated region
    $region34: #{tpu_custom_call.1} parent=1 // pred_check
      _
    $region35: #{tpu_custom_call.1} parent=1 // pred_check_branch
      %99 = sbr.rel (0) target = $region37
    $region36: #{tpu_custom_call.1} parent=1 // pred_region
      %100 = dma.done [#allocation6], 131072
    $region37: #{tpu_custom_call.1} parent=1 // pred_fallthru
      _
    // Predicated region
    $region38: #{tpu_custom_call.1} parent=1 // pred_check
      _
    $region39: #{tpu_custom_call.1} parent=1 // pred_check_branch
      %102 = sbr.rel (0) target = $region41
    $region40: #{tpu_custom_call.1} parent=1 // pred_region
      %103 = dma.done [#allocation6], 128
    $region41: #{tpu_custom_call.1} parent=1 // pred_fallthru
      _
    // Predicated region
    $region42: #{tpu_custom_call.1} parent=1 // pred_check
      _
    $region43: #{tpu_custom_call.1} parent=1 // pred_check_branch
      %105 = sbr.rel (0) target = $region45
    $region44: #{tpu_custom_call.1} parent=1 // pred_region
      %106 = dma.done [#allocation9], 32768
    $region45: #{tpu_custom_call.1} parent=1 // pred_fallthru
      _
    // Predicated region
    $region46: #{tpu_custom_call.1} parent=1 // pred_check
      _
    $region47: #{tpu_custom_call.1} parent=1 // pred_check_branch
      %108 = sbr.rel (0) target = $region49
    $region48: #{tpu_custom_call.1} parent=1 // pred_region
      %109 = dma.done [#allocation9], 64
    $region49: #{tpu_custom_call.1} parent=1 // pred_fallthru
      _
    // Predicated region
    $region50: #{tpu_custom_call.1} parent=1 // pred_check
      _
    $region51: #{tpu_custom_call.1} parent=1 // pred_check_branch
      %111 = sbr.rel (0) target = $region53
    $region52: #{tpu_custom_call.1} parent=1 // pred_region
      %112 = dma.done [#allocation12], 4096
    $region53: #{tpu_custom_call.1} parent=1 // pred_fallthru
      _
    // Predicated region
    $region54: #{tpu_custom_call.1} parent=1 // pred_check
      _
    $region55: #{tpu_custom_call.1} parent=1 // pred_check_branch
      %114 = sbr.rel (0) target = $region57
    $region56: #{tpu_custom_call.1} parent=1 // pred_region
      %115 = dma.done [#allocation12], 16
    $region57: #{tpu_custom_call.1} parent=1 // pred_fallthru
      _
    %v117 = vld [vmem:[#allocation2] sm:$0xff]
    %v118 = vld [vmem:[#allocation2 + $0x8] sm:$0xff]
    %v119 = vld [vmem:[#allocation2 + $0x10] sm:$0xff]
    %v120 = vld [vmem:[#allocation2 + $0x18] sm:$0xff]
    %v121 = vld [vmem:[#allocation2 + $0x20] sm:$0xff]
    %v122 = vld [vmem:[#allocation2 + $0x28] sm:$0xff]
    %v123 = vld [vmem:[#allocation2 + $0x30] sm:$0xff]
    %v124 = vld [vmem:[#allocation2 + $0x38] sm:$0xff]
    %v125 = vld [vmem:[#allocation2 + $0x40] sm:$0xff]
    %v126 = vld [vmem:[#allocation2 + $0x48] sm:$0xff]
    %v127 = vld [vmem:[#allocation2 + $0x50] sm:$0xff]
    %v128 = vld [vmem:[#allocation2 + $0x58] sm:$0xff]
    %v129 = vld [vmem:[#allocation2 + $0x60] sm:$0xff]
    %v130 = vld [vmem:[#allocation2 + $0x68] sm:$0xff]
    %v131 = vld [vmem:[#allocation2 + $0x70] sm:$0xff]
    %v132 = vld [vmem:[#allocation2 + $0x78] sm:$0xff]
    %v133 = vld [vmem:[#allocation2 + $0x80] sm:$0xff]
    %v134 = vld [vmem:[#allocation2 + $0x88] sm:$0xff]
    %v135 = vld [vmem:[#allocation2 + $0x90] sm:$0xff]
    %v136 = vld [vmem:[#allocation2 + $0x98] sm:$0xff]
    %v137 = vld [vmem:[#allocation2 + $0xa0] sm:$0xff]
    %v138 = vld [vmem:[#allocation2 + $0xa8] sm:$0xff]
    %v139 = vld [vmem:[#allocation2 + $0xb0] sm:$0xff]
    %v140 = vld [vmem:[#allocation2 + $0xb8] sm:$0xff]
    %v141 = vld [vmem:[#allocation2 + $0xc0] sm:$0xff]
    %v142 = vld [vmem:[#allocation2 + $0xc8] sm:$0xff]
    %v143 = vld [vmem:[#allocation2 + $0xd0] sm:$0xff]
    %v144 = vld [vmem:[#allocation2 + $0xd8] sm:$0xff]
    %v145 = vld [vmem:[#allocation2 + $0xe0] sm:$0xff]
    %v146 = vld [vmem:[#allocation2 + $0xe8] sm:$0xff]
    %v147 = vld [vmem:[#allocation2 + $0xf0] sm:$0xff]
    %v148 = vld [vmem:[#allocation2 + $0xf8] sm:$0xff]
    %v149 = vld [vmem:[#allocation2 + $0x100] sm:$0xff]
    %v150 = vld [vmem:[#allocation2 + $0x108] sm:$0xff]
    %v151 = vld [vmem:[#allocation2 + $0x110] sm:$0xff]
    %v152 = vld [vmem:[#allocation2 + $0x118] sm:$0xff]
    %v153 = vld [vmem:[#allocation2 + $0x120] sm:$0xff]
    %v154 = vld [vmem:[#allocation2 + $0x128] sm:$0xff]
    %v155 = vld [vmem:[#allocation2 + $0x130] sm:$0xff]
    %v156 = vld [vmem:[#allocation2 + $0x138] sm:$0xff]
    %v157 = vld [vmem:[#allocation2 + $0x140] sm:$0xff]
    %v158 = vld [vmem:[#allocation2 + $0x148] sm:$0xff]
    %v159 = vld [vmem:[#allocation2 + $0x150] sm:$0xff]
    %v160 = vld [vmem:[#allocation2 + $0x158] sm:$0xff]
    %v161 = vld [vmem:[#allocation2 + $0x160] sm:$0xff]
    %v162 = vld [vmem:[#allocation2 + $0x168] sm:$0xff]
    %v163 = vld [vmem:[#allocation2 + $0x170] sm:$0xff]
    %v164 = vld [vmem:[#allocation2 + $0x178] sm:$0xff]
    %v165 = vld [vmem:[#allocation2 + $0x180] sm:$0xff]
    %v166 = vld [vmem:[#allocation2 + $0x188] sm:$0xff]
    %v167 = vld [vmem:[#allocation2 + $0x190] sm:$0xff]
    %v168 = vld [vmem:[#allocation2 + $0x198] sm:$0xff]
    %v169 = vld [vmem:[#allocation2 + $0x1a0] sm:$0xff]
    %v170 = vld [vmem:[#allocation2 + $0x1a8] sm:$0xff]
    %v171 = vld [vmem:[#allocation2 + $0x1b0] sm:$0xff]
    %v172 = vld [vmem:[#allocation2 + $0x1b8] sm:$0xff]
    %v173 = vld [vmem:[#allocation2 + $0x1c0] sm:$0xff]
    %v174 = vld [vmem:[#allocation2 + $0x1c8] sm:$0xff]
    %v175 = vld [vmem:[#allocation2 + $0x1d0] sm:$0xff]
    %v176 = vld [vmem:[#allocation2 + $0x1d8] sm:$0xff]
    %v177 = vld [vmem:[#allocation2 + $0x1e0] sm:$0xff]
    %v178 = vld [vmem:[#allocation2 + $0x1e8] sm:$0xff]
    %v179 = vld [vmem:[#allocation2 + $0x1f0] sm:$0xff]
    %v180 = vld [vmem:[#allocation2 + $0x1f8] sm:$0xff]
    %v181 = vpack.c.bf16 %v133, %v117
    %v182 = vpack.c.bf16 %v134, %v118
    %v183 = vpack.c.bf16 %v135, %v119
    %v184 = vpack.c.bf16 %v136, %v120
    %v185 = vpack.c.bf16 %v137, %v121
    %v186 = vpack.c.bf16 %v138, %v122
    %v187 = vpack.c.bf16 %v139, %v123
    %v188 = vpack.c.bf16 %v140, %v124
    %v189 = vpack.c.bf16 %v141, %v125
    %v190 = vpack.c.bf16 %v142, %v126
    %v191 = vpack.c.bf16 %v143, %v127
    %v192 = vpack.c.bf16 %v144, %v128
    %v193 = vpack.c.bf16 %v145, %v129
    %v194 = vpack.c.bf16 %v146, %v130
    %v195 = vpack.c.bf16 %v147, %v131
    %v196 = vpack.c.bf16 %v148, %v132
    %v197 = vpack.c.bf16 %v165, %v149
    %v198 = vpack.c.bf16 %v166, %v150
    %v199 = vpack.c.bf16 %v167, %v151
    %v200 = vpack.c.bf16 %v168, %v152
    %v201 = vpack.c.bf16 %v169, %v153
    %v202 = vpack.c.bf16 %v170, %v154
    %v203 = vpack.c.bf16 %v171, %v155
    %v204 = vpack.c.bf16 %v172, %v156
    %v205 = vpack.c.bf16 %v173, %v157
    %v206 = vpack.c.bf16 %v174, %v158
    %v207 = vpack.c.bf16 %v175, %v159
    %v208 = vpack.c.bf16 %v176, %v160
    %v209 = vpack.c.bf16 %v177, %v161
    %v210 = vpack.c.bf16 %v178, %v162
    %v211 = vpack.c.bf16 %v179, %v163
    %v212 = vpack.c.bf16 %v180, %v164
    %v213 = vld [vmem:[#allocation5] sm:$0xff]
    %v214 = vld [vmem:[#allocation5 + $0x8] sm:$0xff]
    %v215 = vld [vmem:[#allocation5 + $0x10] sm:$0xff]
    %v216 = vld [vmem:[#allocation5 + $0x18] sm:$0xff]
    %v217 = vld [vmem:[#allocation5 + $0x20] sm:$0xff]
    %v218 = vld [vmem:[#allocation5 + $0x28] sm:$0xff]
    %v219 = vld [vmem:[#allocation5 + $0x30] sm:$0xff]
    %v220 = vld [vmem:[#allocation5 + $0x38] sm:$0xff]
    %v221 = vld [vmem:[#allocation5 + $0x40] sm:$0xff]
    %v222 = vld [vmem:[#allocation5 + $0x48] sm:$0xff]
    %v223 = vld [vmem:[#allocation5 + $0x50] sm:$0xff]
    %v224 = vld [vmem:[#allocation5 + $0x58] sm:$0xff]
    %v225 = vld [vmem:[#allocation5 + $0x60] sm:$0xff]
    %v226 = vld [vmem:[#allocation5 + $0x68] sm:$0xff]
    %v227 = vld [vmem:[#allocation5 + $0x70] sm:$0xff]
    %v228 = vld [vmem:[#allocation5 + $0x78] sm:$0xff]
    %v229 = vld [vmem:[#allocation5 + $0x80] sm:$0xff]
    %v230 = vld [vmem:[#allocation5 + $0x88] sm:$0xff]
    %v231 = vld [vmem:[#allocation5 + $0x90] sm:$0xff]
    %v232 = vld [vmem:[#allocation5 + $0x98] sm:$0xff]
    %v233 = vld [vmem:[#allocation5 + $0xa0] sm:$0xff]
    %v234 = vld [vmem:[#allocation5 + $0xa8] sm:$0xff]
    %v235 = vld [vmem:[#allocation5 + $0xb0] sm:$0xff]
    %v236 = vld [vmem:[#allocation5 + $0xb8] sm:$0xff]
    %v237 = vld [vmem:[#allocation5 + $0xc0] sm:$0xff]
    %v238 = vld [vmem:[#allocation5 + $0xc8] sm:$0xff]
    %v239 = vld [vmem:[#allocation5 + $0xd0] sm:$0xff]
    %v240 = vld [vmem:[#allocation5 + $0xd8] sm:$0xff]
    %v241 = vld [vmem:[#allocation5 + $0xe0] sm:$0xff]
    %v242 = vld [vmem:[#allocation5 + $0xe8] sm:$0xff]
    %v243 = vld [vmem:[#allocation5 + $0xf0] sm:$0xff]
    %v244 = vld [vmem:[#allocation5 + $0xf8] sm:$0xff]
    %v245 = vld [vmem:[#allocation5 + $0x100] sm:$0xff]
    %v246 = vld [vmem:[#allocation5 + $0x108] sm:$0xff]
    %v247 = vld [vmem:[#allocation5 + $0x110] sm:$0xff]
    %v248 = vld [vmem:[#allocation5 + $0x118] sm:$0xff]
    %v249 = vld [vmem:[#allocation5 + $0x120] sm:$0xff]
    %v250 = vld [vmem:[#allocation5 + $0x128] sm:$0xff]
    %v251 = vld [vmem:[#allocation5 + $0x130] sm:$0xff]
    %v252 = vld [vmem:[#allocation5 + $0x138] sm:$0xff]
    %v253 = vld [vmem:[#allocation5 + $0x140] sm:$0xff]
    %v254 = vld [vmem:[#allocation5 + $0x148] sm:$0xff]
    %v255 = vld [vmem:[#allocation5 + $0x150] sm:$0xff]
    %v256 = vld [vmem:[#allocation5 + $0x158] sm:$0xff]
    %v257 = vld [vmem:[#allocation5 + $0x160] sm:$0xff]
    %v258 = vld [vmem:[#allocation5 + $0x168] sm:$0xff]
    %v259 = vld [vmem:[#allocation5 + $0x170] sm:$0xff]
    %v260 = vld [vmem:[#allocation5 + $0x178] sm:$0xff]
    %v261 = vld [vmem:[#allocation5 + $0x180] sm:$0xff]
    %v262 = vld [vmem:[#allocation5 + $0x188] sm:$0xff]
    %v263 = vld [vmem:[#allocation5 + $0x190] sm:$0xff]
    %v264 = vld [vmem:[#allocation5 + $0x198] sm:$0xff]
    %v265 = vld [vmem:[#allocation5 + $0x1a0] sm:$0xff]
    %v266 = vld [vmem:[#allocation5 + $0x1a8] sm:$0xff]
    %v267 = vld [vmem:[#allocation5 + $0x1b0] sm:$0xff]
    %v268 = vld [vmem:[#allocation5 + $0x1b8] sm:$0xff]
    %v269 = vld [vmem:[#allocation5 + $0x1c0] sm:$0xff]
    %v270 = vld [vmem:[#allocation5 + $0x1c8] sm:$0xff]
    %v271 = vld [vmem:[#allocation5 + $0x1d0] sm:$0xff]
    %v272 = vld [vmem:[#allocation5 + $0x1d8] sm:$0xff]
    %v273 = vld [vmem:[#allocation5 + $0x1e0] sm:$0xff]
    %v274 = vld [vmem:[#allocation5 + $0x1e8] sm:$0xff]
    %v275 = vld [vmem:[#allocation5 + $0x1f0] sm:$0xff]
    %v276 = vld [vmem:[#allocation5 + $0x1f8] sm:$0xff]
    %v277 = vld [vmem:[#allocation5 + $0x200] sm:$0xff]
    %v278 = vld [vmem:[#allocation5 + $0x208] sm:$0xff]
    %v279 = vld [vmem:[#allocation5 + $0x210] sm:$0xff]
    %v280 = vld [vmem:[#allocation5 + $0x218] sm:$0xff]
    %v281 = vld [vmem:[#allocation5 + $0x220] sm:$0xff]
    %v282 = vld [vmem:[#allocation5 + $0x228] sm:$0xff]
    %v283 = vld [vmem:[#allocation5 + $0x230] sm:$0xff]
    %v284 = vld [vmem:[#allocation5 + $0x238] sm:$0xff]
    %v285 = vld [vmem:[#allocation5 + $0x240] sm:$0xff]
    %v286 = vld [vmem:[#allocation5 + $0x248] sm:$0xff]
    %v287 = vld [vmem:[#allocation5 + $0x250] sm:$0xff]
    %v288 = vld [vmem:[#allocation5 + $0x258] sm:$0xff]
    %v289 = vld [vmem:[#allocation5 + $0x260] sm:$0xff]
    %v290 = vld [vmem:[#allocation5 + $0x268] sm:$0xff]
    %v291 = vld [vmem:[#allocation5 + $0x270] sm:$0xff]
    %v292 = vld [vmem:[#allocation5 + $0x278] sm:$0xff]
    %v293 = vld [vmem:[#allocation5 + $0x280] sm:$0xff]
    %v294 = vld [vmem:[#allocation5 + $0x288] sm:$0xff]
    %v295 = vld [vmem:[#allocation5 + $0x290] sm:$0xff]
    %v296 = vld [vmem:[#allocation5 + $0x298] sm:$0xff]
    %v297 = vld [vmem:[#allocation5 + $0x2a0] sm:$0xff]
    %v298 = vld [vmem:[#allocation5 + $0x2a8] sm:$0xff]
    %v299 = vld [vmem:[#allocation5 + $0x2b0] sm:$0xff]
    %v300 = vld [vmem:[#allocation5 + $0x2b8] sm:$0xff]
    %v301 = vld [vmem:[#allocation5 + $0x2c0] sm:$0xff]
    %v302 = vld [vmem:[#allocation5 + $0x2c8] sm:$0xff]
    %v303 = vld [vmem:[#allocation5 + $0x2d0] sm:$0xff]
    %v304 = vld [vmem:[#allocation5 + $0x2d8] sm:$0xff]
    %v305 = vld [vmem:[#allocation5 + $0x2e0] sm:$0xff]
    %v306 = vld [vmem:[#allocation5 + $0x2e8] sm:$0xff]
    %v307 = vld [vmem:[#allocation5 + $0x2f0] sm:$0xff]
    %v308 = vld [vmem:[#allocation5 + $0x2f8] sm:$0xff]
    %v309 = vld [vmem:[#allocation5 + $0x300] sm:$0xff]
    %v310 = vld [vmem:[#allocation5 + $0x308] sm:$0xff]
    %v311 = vld [vmem:[#allocation5 + $0x310] sm:$0xff]
    %v312 = vld [vmem:[#allocation5 + $0x318] sm:$0xff]
    %v313 = vld [vmem:[#allocation5 + $0x320] sm:$0xff]
    %v314 = vld [vmem:[#allocation5 + $0x328] sm:$0xff]
    %v315 = vld [vmem:[#allocation5 + $0x330] sm:$0xff]
    %v316 = vld [vmem:[#allocation5 + $0x338] sm:$0xff]
    %v317 = vld [vmem:[#allocation5 + $0x340] sm:$0xff]
    %v318 = vld [vmem:[#allocation5 + $0x348] sm:$0xff]
    %v319 = vld [vmem:[#allocation5 + $0x350] sm:$0xff]
    %v320 = vld [vmem:[#allocation5 + $0x358] sm:$0xff]
    %v321 = vld [vmem:[#allocation5 + $0x360] sm:$0xff]
    %v322 = vld [vmem:[#allocation5 + $0x368] sm:$0xff]
    %v323 = vld [vmem:[#allocation5 + $0x370] sm:$0xff]
    %v324 = vld [vmem:[#allocation5 + $0x378] sm:$0xff]
    %v325 = vld [vmem:[#allocation5 + $0x380] sm:$0xff]
    %v326 = vld [vmem:[#allocation5 + $0x388] sm:$0xff]
    %v327 = vld [vmem:[#allocation5 + $0x390] sm:$0xff]
    %v328 = vld [vmem:[#allocation5 + $0x398] sm:$0xff]
    %v329 = vld [vmem:[#allocation5 + $0x3a0] sm:$0xff]
    %v330 = vld [vmem:[#allocation5 + $0x3a8] sm:$0xff]
    %v331 = vld [vmem:[#allocation5 + $0x3b0] sm:$0xff]
    %v332 = vld [vmem:[#allocation5 + $0x3b8] sm:$0xff]
    %v333 = vld [vmem:[#allocation5 + $0x3c0] sm:$0xff]
    %v334 = vld [vmem:[#allocation5 + $0x3c8] sm:$0xff]
    %v335 = vld [vmem:[#allocation5 + $0x3d0] sm:$0xff]
    %v336 = vld [vmem:[#allocation5 + $0x3d8] sm:$0xff]
    %v337 = vld [vmem:[#allocation5 + $0x3e0] sm:$0xff]
    %v338 = vld [vmem:[#allocation5 + $0x3e8] sm:$0xff]
    %v339 = vld [vmem:[#allocation5 + $0x3f0] sm:$0xff]
    %v340 = vld [vmem:[#allocation5 + $0x3f8] sm:$0xff]
    %v341 = vld [vmem:[#allocation5 + $0x400] sm:$0xff]
    %v342 = vld [vmem:[#allocation5 + $0x408] sm:$0xff]
    %v343 = vld [vmem:[#allocation5 + $0x410] sm:$0xff]
    %v344 = vld [vmem:[#allocation5 + $0x418] sm:$0xff]
    %v345 = vld [vmem:[#allocation5 + $0x420] sm:$0xff]
    %v346 = vld [vmem:[#allocation5 + $0x428] sm:$0xff]
    %v347 = vld [vmem:[#allocation5 + $0x430] sm:$0xff]
    %v348 = vld [vmem:[#allocation5 + $0x438] sm:$0xff]
    %v349 = vld [vmem:[#allocation5 + $0x440] sm:$0xff]
    %v350 = vld [vmem:[#allocation5 + $0x448] sm:$0xff]
    %v351 = vld [vmem:[#allocation5 + $0x450] sm:$0xff]
    %v352 = vld [vmem:[#allocation5 + $0x458] sm:$0xff]
    %v353 = vld [vmem:[#allocation5 + $0x460] sm:$0xff]
    %v354 = vld [vmem:[#allocation5 + $0x468] sm:$0xff]
    %v355 = vld [vmem:[#allocation5 + $0x470] sm:$0xff]
    %v356 = vld [vmem:[#allocation5 + $0x478] sm:$0xff]
    %v357 = vld [vmem:[#allocation5 + $0x480] sm:$0xff]
    %v358 = vld [vmem:[#allocation5 + $0x488] sm:$0xff]
    %v359 = vld [vmem:[#allocation5 + $0x490] sm:$0xff]
    %v360 = vld [vmem:[#allocation5 + $0x498] sm:$0xff]
    %v361 = vld [vmem:[#allocation5 + $0x4a0] sm:$0xff]
    %v362 = vld [vmem:[#allocation5 + $0x4a8] sm:$0xff]
    %v363 = vld [vmem:[#allocation5 + $0x4b0] sm:$0xff]
    %v364 = vld [vmem:[#allocation5 + $0x4b8] sm:$0xff]
    %v365 = vld [vmem:[#allocation5 + $0x4c0] sm:$0xff]
    %v366 = vld [vmem:[#allocation5 + $0x4c8] sm:$0xff]
    %v367 = vld [vmem:[#allocation5 + $0x4d0] sm:$0xff]
    %v368 = vld [vmem:[#allocation5 + $0x4d8] sm:$0xff]
    %v369 = vld [vmem:[#allocation5 + $0x4e0] sm:$0xff]
    %v370 = vld [vmem:[#allocation5 + $0x4e8] sm:$0xff]
    %v371 = vld [vmem:[#allocation5 + $0x4f0] sm:$0xff]
    %v372 = vld [vmem:[#allocation5 + $0x4f8] sm:$0xff]
    %v373 = vld [vmem:[#allocation5 + $0x500] sm:$0xff]
    %v374 = vld [vmem:[#allocation5 + $0x508] sm:$0xff]
    %v375 = vld [vmem:[#allocation5 + $0x510] sm:$0xff]
    %v376 = vld [vmem:[#allocation5 + $0x518] sm:$0xff]
    %v377 = vld [vmem:[#allocation5 + $0x520] sm:$0xff]
    %v378 = vld [vmem:[#allocation5 + $0x528] sm:$0xff]
    %v379 = vld [vmem:[#allocation5 + $0x530] sm:$0xff]
    %v380 = vld [vmem:[#allocation5 + $0x538] sm:$0xff]
    %v381 = vld [vmem:[#allocation5 + $0x540] sm:$0xff]
    %v382 = vld [vmem:[#allocation5 + $0x548] sm:$0xff]
    %v383 = vld [vmem:[#allocation5 + $0x550] sm:$0xff]
    %v384 = vld [vmem:[#allocation5 + $0x558] sm:$0xff]
    %v385 = vld [vmem:[#allocation5 + $0x560] sm:$0xff]
    %v386 = vld [vmem:[#allocation5 + $0x568] sm:$0xff]
    %v387 = vld [vmem:[#allocation5 + $0x570] sm:$0xff]
    %v388 = vld [vmem:[#allocation5 + $0x578] sm:$0xff]
    %v389 = vld [vmem:[#allocation5 + $0x580] sm:$0xff]
    %v390 = vld [vmem:[#allocation5 + $0x588] sm:$0xff]
    %v391 = vld [vmem:[#allocation5 + $0x590] sm:$0xff]
    %v392 = vld [vmem:[#allocation5 + $0x598] sm:$0xff]
    %v393 = vld [vmem:[#allocation5 + $0x5a0] sm:$0xff]
    %v394 = vld [vmem:[#allocation5 + $0x5a8] sm:$0xff]
    %v395 = vld [vmem:[#allocation5 + $0x5b0] sm:$0xff]
    %v396 = vld [vmem:[#allocation5 + $0x5b8] sm:$0xff]
    %v397 = vld [vmem:[#allocation5 + $0x5c0] sm:$0xff]
    %v398 = vld [vmem:[#allocation5 + $0x5c8] sm:$0xff]
    %v399 = vld [vmem:[#allocation5 + $0x5d0] sm:$0xff]
    %v400 = vld [vmem:[#allocation5 + $0x5d8] sm:$0xff]
    %v401 = vld [vmem:[#allocation5 + $0x5e0] sm:$0xff]
    %v402 = vld [vmem:[#allocation5 + $0x5e8] sm:$0xff]
    %v403 = vld [vmem:[#allocation5 + $0x5f0] sm:$0xff]
    %v404 = vld [vmem:[#allocation5 + $0x5f8] sm:$0xff]
    %v405 = vld [vmem:[#allocation5 + $0x600] sm:$0xff]
    %v406 = vld [vmem:[#allocation5 + $0x608] sm:$0xff]
    %v407 = vld [vmem:[#allocation5 + $0x610] sm:$0xff]
    %v408 = vld [vmem:[#allocation5 + $0x618] sm:$0xff]
    %v409 = vld [vmem:[#allocation5 + $0x620] sm:$0xff]
    %v410 = vld [vmem:[#allocation5 + $0x628] sm:$0xff]
    %v411 = vld [vmem:[#allocation5 + $0x630] sm:$0xff]
    %v412 = vld [vmem:[#allocation5 + $0x638] sm:$0xff]
    %v413 = vld [vmem:[#allocation5 + $0x640] sm:$0xff]
    %v414 = vld [vmem:[#allocation5 + $0x648] sm:$0xff]
    %v415 = vld [vmem:[#allocation5 + $0x650] sm:$0xff]
    %v416 = vld [vmem:[#allocation5 + $0x658] sm:$0xff]
    %v417 = vld [vmem:[#allocation5 + $0x660] sm:$0xff]
    %v418 = vld [vmem:[#allocation5 + $0x668] sm:$0xff]
    %v419 = vld [vmem:[#allocation5 + $0x670] sm:$0xff]
    %v420 = vld [vmem:[#allocation5 + $0x678] sm:$0xff]
    %v421 = vld [vmem:[#allocation5 + $0x680] sm:$0xff]
    %v422 = vld [vmem:[#allocation5 + $0x688] sm:$0xff]
    %v423 = vld [vmem:[#allocation5 + $0x690] sm:$0xff]
    %v424 = vld [vmem:[#allocation5 + $0x698] sm:$0xff]
    %v425 = vld [vmem:[#allocation5 + $0x6a0] sm:$0xff]
    %v426 = vld [vmem:[#allocation5 + $0x6a8] sm:$0xff]
    %v427 = vld [vmem:[#allocation5 + $0x6b0] sm:$0xff]
    %v428 = vld [vmem:[#allocation5 + $0x6b8] sm:$0xff]
    %v429 = vld [vmem:[#allocation5 + $0x6c0] sm:$0xff]
    %v430 = vld [vmem:[#allocation5 + $0x6c8] sm:$0xff]
    %v431 = vld [vmem:[#allocation5 + $0x6d0] sm:$0xff]
    %v432 = vld [vmem:[#allocation5 + $0x6d8] sm:$0xff]
    %v433 = vld [vmem:[#allocation5 + $0x6e0] sm:$0xff]
    %v434 = vld [vmem:[#allocation5 + $0x6e8] sm:$0xff]
    %v435 = vld [vmem:[#allocation5 + $0x6f0] sm:$0xff]
    %v436 = vld [vmem:[#allocation5 + $0x6f8] sm:$0xff]
    %v437 = vld [vmem:[#allocation5 + $0x700] sm:$0xff]
    %v438 = vld [vmem:[#allocation5 + $0x708] sm:$0xff]
    %v439 = vld [vmem:[#allocation5 + $0x710] sm:$0xff]
    %v440 = vld [vmem:[#allocation5 + $0x718] sm:$0xff]
    %v441 = vld [vmem:[#allocation5 + $0x720] sm:$0xff]
    %v442 = vld [vmem:[#allocation5 + $0x728] sm:$0xff]
    %v443 = vld [vmem:[#allocation5 + $0x730] sm:$0xff]
    %v444 = vld [vmem:[#allocation5 + $0x738] sm:$0xff]
    %v445 = vld [vmem:[#allocation5 + $0x740] sm:$0xff]
    %v446 = vld [vmem:[#allocation5 + $0x748] sm:$0xff]
    %v447 = vld [vmem:[#allocation5 + $0x750] sm:$0xff]
    %v448 = vld [vmem:[#allocation5 + $0x758] sm:$0xff]
    %v449 = vld [vmem:[#allocation5 + $0x760] sm:$0xff]
    %v450 = vld [vmem:[#allocation5 + $0x768] sm:$0xff]
    %v451 = vld [vmem:[#allocation5 + $0x770] sm:$0xff]
    %v452 = vld [vmem:[#allocation5 + $0x778] sm:$0xff]
    %v453 = vld [vmem:[#allocation5 + $0x780] sm:$0xff]
    %v454 = vld [vmem:[#allocation5 + $0x788] sm:$0xff]
    %v455 = vld [vmem:[#allocation5 + $0x790] sm:$0xff]
    %v456 = vld [vmem:[#allocation5 + $0x798] sm:$0xff]
    %v457 = vld [vmem:[#allocation5 + $0x7a0] sm:$0xff]
    %v458 = vld [vmem:[#allocation5 + $0x7a8] sm:$0xff]
    %v459 = vld [vmem:[#allocation5 + $0x7b0] sm:$0xff]
    %v460 = vld [vmem:[#allocation5 + $0x7b8] sm:$0xff]
    %v461 = vld [vmem:[#allocation5 + $0x7c0] sm:$0xff]
    %v462 = vld [vmem:[#allocation5 + $0x7c8] sm:$0xff]
    %v463 = vld [vmem:[#allocation5 + $0x7d0] sm:$0xff]
    %v464 = vld [vmem:[#allocation5 + $0x7d8] sm:$0xff]
    %v465 = vld [vmem:[#allocation5 + $0x7e0] sm:$0xff]
    %v466 = vld [vmem:[#allocation5 + $0x7e8] sm:$0xff]
    %v467 = vld [vmem:[#allocation5 + $0x7f0] sm:$0xff]
    %v468 = vld [vmem:[#allocation5 + $0x7f8] sm:$0xff]
    %v469 = vld [vmem:[#allocation5 + $0x800] sm:$0xff]
    %v470 = vld [vmem:[#allocation5 + $0x808] sm:$0xff]
    %v471 = vld [vmem:[#allocation5 + $0x810] sm:$0xff]
    %v472 = vld [vmem:[#allocation5 + $0x818] sm:$0xff]
    %v473 = vld [vmem:[#allocation5 + $0x820] sm:$0xff]
    %v474 = vld [vmem:[#allocation5 + $0x828] sm:$0xff]
    %v475 = vld [vmem:[#allocation5 + $0x830] sm:$0xff]
    %v476 = vld [vmem:[#allocation5 + $0x838] sm:$0xff]
    %v477 = vld [vmem:[#allocation5 + $0x840] sm:$0xff]
    %v478 = vld [vmem:[#allocation5 + $0x848] sm:$0xff]
    %v479 = vld [vmem:[#allocation5 + $0x850] sm:$0xff]
    %v480 = vld [vmem:[#allocation5 + $0x858] sm:$0xff]
    %v481 = vld [vmem:[#allocation5 + $0x860] sm:$0xff]
    %v482 = vld [vmem:[#allocation5 + $0x868] sm:$0xff]
    %v483 = vld [vmem:[#allocation5 + $0x870] sm:$0xff]
    %v484 = vld [vmem:[#allocation5 + $0x878] sm:$0xff]
    %v485 = vld [vmem:[#allocation5 + $0x880] sm:$0xff]
    %v486 = vld [vmem:[#allocation5 + $0x888] sm:$0xff]
    %v487 = vld [vmem:[#allocation5 + $0x890] sm:$0xff]
    %v488 = vld [vmem:[#allocation5 + $0x898] sm:$0xff]
    %v489 = vld [vmem:[#allocation5 + $0x8a0] sm:$0xff]
    %v490 = vld [vmem:[#allocation5 + $0x8a8] sm:$0xff]
    %v491 = vld [vmem:[#allocation5 + $0x8b0] sm:$0xff]
    %v492 = vld [vmem:[#allocation5 + $0x8b8] sm:$0xff]
    %v493 = vld [vmem:[#allocation5 + $0x8c0] sm:$0xff]
    %v494 = vld [vmem:[#allocation5 + $0x8c8] sm:$0xff]
    %v495 = vld [vmem:[#allocation5 + $0x8d0] sm:$0xff]
    %v496 = vld [vmem:[#allocation5 + $0x8d8] sm:$0xff]
    %v497 = vld [vmem:[#allocation5 + $0x8e0] sm:$0xff]
    %v498 = vld [vmem:[#allocation5 + $0x8e8] sm:$0xff]
    %v499 = vld [vmem:[#allocation5 + $0x8f0] sm:$0xff]
    %v500 = vld [vmem:[#allocation5 + $0x8f8] sm:$0xff]
    %v501 = vld [vmem:[#allocation5 + $0x900] sm:$0xff]
    %v502 = vld [vmem:[#allocation5 + $0x908] sm:$0xff]
    %v503 = vld [vmem:[#allocation5 + $0x910] sm:$0xff]
    %v504 = vld [vmem:[#allocation5 + $0x918] sm:$0xff]
    %v505 = vld [vmem:[#allocation5 + $0x920] sm:$0xff]
    %v506 = vld [vmem:[#allocation5 + $0x928] sm:$0xff]
    %v507 = vld [vmem:[#allocation5 + $0x930] sm:$0xff]
    %v508 = vld [vmem:[#allocation5 + $0x938] sm:$0xff]
    %v509 = vld [vmem:[#allocation5 + $0x940] sm:$0xff]
    %v510 = vld [vmem:[#allocation5 + $0x948] sm:$0xff]
    %v511 = vld [vmem:[#allocation5 + $0x950] sm:$0xff]
    %v512 = vld [vmem:[#allocation5 + $0x958] sm:$0xff]
    %v513 = vld [vmem:[#allocation5 + $0x960] sm:$0xff]
    %v514 = vld [vmem:[#allocation5 + $0x968] sm:$0xff]
    %v515 = vld [vmem:[#allocation5 + $0x970] sm:$0xff]
    %v516 = vld [vmem:[#allocation5 + $0x978] sm:$0xff]
    %v517 = vld [vmem:[#allocation5 + $0x980] sm:$0xff]
    %v518 = vld [vmem:[#allocation5 + $0x988] sm:$0xff]
    %v519 = vld [vmem:[#allocation5 + $0x990] sm:$0xff]
    %v520 = vld [vmem:[#allocation5 + $0x998] sm:$0xff]
    %v521 = vld [vmem:[#allocation5 + $0x9a0] sm:$0xff]
    %v522 = vld [vmem:[#allocation5 + $0x9a8] sm:$0xff]
    %v523 = vld [vmem:[#allocation5 + $0x9b0] sm:$0xff]
    %v524 = vld [vmem:[#allocation5 + $0x9b8] sm:$0xff]
    %v525 = vld [vmem:[#allocation5 + $0x9c0] sm:$0xff]
    %v526 = vld [vmem:[#allocation5 + $0x9c8] sm:$0xff]
    %v527 = vld [vmem:[#allocation5 + $0x9d0] sm:$0xff]
    %v528 = vld [vmem:[#allocation5 + $0x9d8] sm:$0xff]
    %v529 = vld [vmem:[#allocation5 + $0x9e0] sm:$0xff]
    %v530 = vld [vmem:[#allocation5 + $0x9e8] sm:$0xff]
    %v531 = vld [vmem:[#allocation5 + $0x9f0] sm:$0xff]
    %v532 = vld [vmem:[#allocation5 + $0x9f8] sm:$0xff]
    %v533 = vld [vmem:[#allocation5 + $0xa00] sm:$0xff]
    %v534 = vld [vmem:[#allocation5 + $0xa08] sm:$0xff]
    %v535 = vld [vmem:[#allocation5 + $0xa10] sm:$0xff]
    %v536 = vld [vmem:[#allocation5 + $0xa18] sm:$0xff]
    %v537 = vld [vmem:[#allocation5 + $0xa20] sm:$0xff]
    %v538 = vld [vmem:[#allocation5 + $0xa28] sm:$0xff]
    %v539 = vld [vmem:[#allocation5 + $0xa30] sm:$0xff]
    %v540 = vld [vmem:[#allocation5 + $0xa38] sm:$0xff]
    %v541 = vld [vmem:[#allocation5 + $0xa40] sm:$0xff]
    %v542 = vld [vmem:[#allocation5 + $0xa48] sm:$0xff]
    %v543 = vld [vmem:[#allocation5 + $0xa50] sm:$0xff]
    %v544 = vld [vmem:[#allocation5 + $0xa58] sm:$0xff]
    %v545 = vld [vmem:[#allocation5 + $0xa60] sm:$0xff]
    %v546 = vld [vmem:[#allocation5 + $0xa68] sm:$0xff]
    %v547 = vld [vmem:[#allocation5 + $0xa70] sm:$0xff]
    %v548 = vld [vmem:[#allocation5 + $0xa78] sm:$0xff]
    %v549 = vld [vmem:[#allocation5 + $0xa80] sm:$0xff]
    %v550 = vld [vmem:[#allocation5 + $0xa88] sm:$0xff]
    %v551 = vld [vmem:[#allocation5 + $0xa90] sm:$0xff]
    %v552 = vld [vmem:[#allocation5 + $0xa98] sm:$0xff]
    %v553 = vld [vmem:[#allocation5 + $0xaa0] sm:$0xff]
    %v554 = vld [vmem:[#allocation5 + $0xaa8] sm:$0xff]
    %v555 = vld [vmem:[#allocation5 + $0xab0] sm:$0xff]
    %v556 = vld [vmem:[#allocation5 + $0xab8] sm:$0xff]
    %v557 = vld [vmem:[#allocation5 + $0xac0] sm:$0xff]
    %v558 = vld [vmem:[#allocation5 + $0xac8] sm:$0xff]
    %v559 = vld [vmem:[#allocation5 + $0xad0] sm:$0xff]
    %v560 = vld [vmem:[#allocation5 + $0xad8] sm:$0xff]
    %v561 = vld [vmem:[#allocation5 + $0xae0] sm:$0xff]
    %v562 = vld [vmem:[#allocation5 + $0xae8] sm:$0xff]
    %v563 = vld [vmem:[#allocation5 + $0xaf0] sm:$0xff]
    %v564 = vld [vmem:[#allocation5 + $0xaf8] sm:$0xff]
    %v565 = vld [vmem:[#allocation5 + $0xb00] sm:$0xff]
    %v566 = vld [vmem:[#allocation5 + $0xb08] sm:$0xff]
    %v567 = vld [vmem:[#allocation5 + $0xb10] sm:$0xff]
    %v568 = vld [vmem:[#allocation5 + $0xb18] sm:$0xff]
    %v569 = vld [vmem:[#allocation5 + $0xb20] sm:$0xff]
    %v570 = vld [vmem:[#allocation5 + $0xb28] sm:$0xff]
    %v571 = vld [vmem:[#allocation5 + $0xb30] sm:$0xff]
    %v572 = vld [vmem:[#allocation5 + $0xb38] sm:$0xff]
    %v573 = vld [vmem:[#allocation5 + $0xb40] sm:$0xff]
    %v574 = vld [vmem:[#allocation5 + $0xb48] sm:$0xff]
    %v575 = vld [vmem:[#allocation5 + $0xb50] sm:$0xff]
    %v576 = vld [vmem:[#allocation5 + $0xb58] sm:$0xff]
    %v577 = vld [vmem:[#allocation5 + $0xb60] sm:$0xff]
    %v578 = vld [vmem:[#allocation5 + $0xb68] sm:$0xff]
    %v579 = vld [vmem:[#allocation5 + $0xb70] sm:$0xff]
    %v580 = vld [vmem:[#allocation5 + $0xb78] sm:$0xff]
    %v581 = vld [vmem:[#allocation5 + $0xb80] sm:$0xff]
    %v582 = vld [vmem:[#allocation5 + $0xb88] sm:$0xff]
    %v583 = vld [vmem:[#allocation5 + $0xb90] sm:$0xff]
    %v584 = vld [vmem:[#allocation5 + $0xb98] sm:$0xff]
    %v585 = vld [vmem:[#allocation5 + $0xba0] sm:$0xff]
    %v586 = vld [vmem:[#allocation5 + $0xba8] sm:$0xff]
    %v587 = vld [vmem:[#allocation5 + $0xbb0] sm:$0xff]
    %v588 = vld [vmem:[#allocation5 + $0xbb8] sm:$0xff]
    %v589 = vld [vmem:[#allocation5 + $0xbc0] sm:$0xff]
    %v590 = vld [vmem:[#allocation5 + $0xbc8] sm:$0xff]
    %v591 = vld [vmem:[#allocation5 + $0xbd0] sm:$0xff]
    %v592 = vld [vmem:[#allocation5 + $0xbd8] sm:$0xff]
    %v593 = vld [vmem:[#allocation5 + $0xbe0] sm:$0xff]
    %v594 = vld [vmem:[#allocation5 + $0xbe8] sm:$0xff]
    %v595 = vld [vmem:[#allocation5 + $0xbf0] sm:$0xff]
    %v596 = vld [vmem:[#allocation5 + $0xbf8] sm:$0xff]
    %v597 = vld [vmem:[#allocation5 + $0xc00] sm:$0xff]
    %v598 = vld [vmem:[#allocation5 + $0xc08] sm:$0xff]
    %v599 = vld [vmem:[#allocation5 + $0xc10] sm:$0xff]
    %v600 = vld [vmem:[#allocation5 + $0xc18] sm:$0xff]
    %v601 = vld [vmem:[#allocation5 + $0xc20] sm:$0xff]
    %v602 = vld [vmem:[#allocation5 + $0xc28] sm:$0xff]
    %v603 = vld [vmem:[#allocation5 + $0xc30] sm:$0xff]
    %v604 = vld [vmem:[#allocation5 + $0xc38] sm:$0xff]
    %v605 = vld [vmem:[#allocation5 + $0xc40] sm:$0xff]
    %v606 = vld [vmem:[#allocation5 + $0xc48] sm:$0xff]
    %v607 = vld [vmem:[#allocation5 + $0xc50] sm:$0xff]
    %v608 = vld [vmem:[#allocation5 + $0xc58] sm:$0xff]
    %v609 = vld [vmem:[#allocation5 + $0xc60] sm:$0xff]
    %v610 = vld [vmem:[#allocation5 + $0xc68] sm:$0xff]
    %v611 = vld [vmem:[#allocation5 + $0xc70] sm:$0xff]
    %v612 = vld [vmem:[#allocation5 + $0xc78] sm:$0xff]
    %v613 = vld [vmem:[#allocation5 + $0xc80] sm:$0xff]
    %v614 = vld [vmem:[#allocation5 + $0xc88] sm:$0xff]
    %v615 = vld [vmem:[#allocation5 + $0xc90] sm:$0xff]
    %v616 = vld [vmem:[#allocation5 + $0xc98] sm:$0xff]
    %v617 = vld [vmem:[#allocation5 + $0xca0] sm:$0xff]
    %v618 = vld [vmem:[#allocation5 + $0xca8] sm:$0xff]
    %v619 = vld [vmem:[#allocation5 + $0xcb0] sm:$0xff]
    %v620 = vld [vmem:[#allocation5 + $0xcb8] sm:$0xff]
    %v621 = vld [vmem:[#allocation5 + $0xcc0] sm:$0xff]
    %v622 = vld [vmem:[#allocation5 + $0xcc8] sm:$0xff]
    %v623 = vld [vmem:[#allocation5 + $0xcd0] sm:$0xff]
    %v624 = vld [vmem:[#allocation5 + $0xcd8] sm:$0xff]
    %v625 = vld [vmem:[#allocation5 + $0xce0] sm:$0xff]
    %v626 = vld [vmem:[#allocation5 + $0xce8] sm:$0xff]
    %v627 = vld [vmem:[#allocation5 + $0xcf0] sm:$0xff]
    %v628 = vld [vmem:[#allocation5 + $0xcf8] sm:$0xff]
    %v629 = vld [vmem:[#allocation5 + $0xd00] sm:$0xff]
    %v630 = vld [vmem:[#allocation5 + $0xd08] sm:$0xff]
    %v631 = vld [vmem:[#allocation5 + $0xd10] sm:$0xff]
    %v632 = vld [vmem:[#allocation5 + $0xd18] sm:$0xff]
    %v633 = vld [vmem:[#allocation5 + $0xd20] sm:$0xff]
    %v634 = vld [vmem:[#allocation5 + $0xd28] sm:$0xff]
    %v635 = vld [vmem:[#allocation5 + $0xd30] sm:$0xff]
    %v636 = vld [vmem:[#allocation5 + $0xd38] sm:$0xff]
    %v637 = vld [vmem:[#allocation5 + $0xd40] sm:$0xff]
    %v638 = vld [vmem:[#allocation5 + $0xd48] sm:$0xff]
    %v639 = vld [vmem:[#allocation5 + $0xd50] sm:$0xff]
    %v640 = vld [vmem:[#allocation5 + $0xd58] sm:$0xff]
    %v641 = vld [vmem:[#allocation5 + $0xd60] sm:$0xff]
    %v642 = vld [vmem:[#allocation5 + $0xd68] sm:$0xff]
    %v643 = vld [vmem:[#allocation5 + $0xd70] sm:$0xff]
    %v644 = vld [vmem:[#allocation5 + $0xd78] sm:$0xff]
    %v645 = vld [vmem:[#allocation5 + $0xd80] sm:$0xff]
    %v646 = vld [vmem:[#allocation5 + $0xd88] sm:$0xff]
    %v647 = vld [vmem:[#allocation5 + $0xd90] sm:$0xff]
    %v648 = vld [vmem:[#allocation5 + $0xd98] sm:$0xff]
    %v649 = vld [vmem:[#allocation5 + $0xda0] sm:$0xff]
    %v650 = vld [vmem:[#allocation5 + $0xda8] sm:$0xff]
    %v651 = vld [vmem:[#allocation5 + $0xdb0] sm:$0xff]
    %v652 = vld [vmem:[#allocation5 + $0xdb8] sm:$0xff]
    %v653 = vld [vmem:[#allocation5 + $0xdc0] sm:$0xff]
    %v654 = vld [vmem:[#allocation5 + $0xdc8] sm:$0xff]
    %v655 = vld [vmem:[#allocation5 + $0xdd0] sm:$0xff]
    %v656 = vld [vmem:[#allocation5 + $0xdd8] sm:$0xff]
    %v657 = vld [vmem:[#allocation5 + $0xde0] sm:$0xff]
    %v658 = vld [vmem:[#allocation5 + $0xde8] sm:$0xff]
    %v659 = vld [vmem:[#allocation5 + $0xdf0] sm:$0xff]
    %v660 = vld [vmem:[#allocation5 + $0xdf8] sm:$0xff]
    %v661 = vld [vmem:[#allocation5 + $0xe00] sm:$0xff]
    %v662 = vld [vmem:[#allocation5 + $0xe08] sm:$0xff]
    %v663 = vld [vmem:[#allocation5 + $0xe10] sm:$0xff]
    %v664 = vld [vmem:[#allocation5 + $0xe18] sm:$0xff]
    %v665 = vld [vmem:[#allocation5 + $0xe20] sm:$0xff]
    %v666 = vld [vmem:[#allocation5 + $0xe28] sm:$0xff]
    %v667 = vld [vmem:[#allocation5 + $0xe30] sm:$0xff]
    %v668 = vld [vmem:[#allocation5 + $0xe38] sm:$0xff]
    %v669 = vld [vmem:[#allocation5 + $0xe40] sm:$0xff]
    %v670 = vld [vmem:[#allocation5 + $0xe48] sm:$0xff]
    %v671 = vld [vmem:[#allocation5 + $0xe50] sm:$0xff]
    %v672 = vld [vmem:[#allocation5 + $0xe58] sm:$0xff]
    %v673 = vld [vmem:[#allocation5 + $0xe60] sm:$0xff]
    %v674 = vld [vmem:[#allocation5 + $0xe68] sm:$0xff]
    %v675 = vld [vmem:[#allocation5 + $0xe70] sm:$0xff]
    %v676 = vld [vmem:[#allocation5 + $0xe78] sm:$0xff]
    %v677 = vld [vmem:[#allocation5 + $0xe80] sm:$0xff]
    %v678 = vld [vmem:[#allocation5 + $0xe88] sm:$0xff]
    %v679 = vld [vmem:[#allocation5 + $0xe90] sm:$0xff]
    %v680 = vld [vmem:[#allocation5 + $0xe98] sm:$0xff]
    %v681 = vld [vmem:[#allocation5 + $0xea0] sm:$0xff]
    %v682 = vld [vmem:[#allocation5 + $0xea8] sm:$0xff]
    %v683 = vld [vmem:[#allocation5 + $0xeb0] sm:$0xff]
    %v684 = vld [vmem:[#allocation5 + $0xeb8] sm:$0xff]
    %v685 = vld [vmem:[#allocation5 + $0xec0] sm:$0xff]
    %v686 = vld [vmem:[#allocation5 + $0xec8] sm:$0xff]
    %v687 = vld [vmem:[#allocation5 + $0xed0] sm:$0xff]
    %v688 = vld [vmem:[#allocation5 + $0xed8] sm:$0xff]
    %v689 = vld [vmem:[#allocation5 + $0xee0] sm:$0xff]
    %v690 = vld [vmem:[#allocation5 + $0xee8] sm:$0xff]
    %v691 = vld [vmem:[#allocation5 + $0xef0] sm:$0xff]
    %v692 = vld [vmem:[#allocation5 + $0xef8] sm:$0xff]
    %v693 = vld [vmem:[#allocation5 + $0xf00] sm:$0xff]
    %v694 = vld [vmem:[#allocation5 + $0xf08] sm:$0xff]
    %v695 = vld [vmem:[#allocation5 + $0xf10] sm:$0xff]
    %v696 = vld [vmem:[#allocation5 + $0xf18] sm:$0xff]
    %v697 = vld [vmem:[#allocation5 + $0xf20] sm:$0xff]
    %v698 = vld [vmem:[#allocation5 + $0xf28] sm:$0xff]
    %v699 = vld [vmem:[#allocation5 + $0xf30] sm:$0xff]
    %v700 = vld [vmem:[#allocation5 + $0xf38] sm:$0xff]
    %v701 = vld [vmem:[#allocation5 + $0xf40] sm:$0xff]
    %v702 = vld [vmem:[#allocation5 + $0xf48] sm:$0xff]
    %v703 = vld [vmem:[#allocation5 + $0xf50] sm:$0xff]
    %v704 = vld [vmem:[#allocation5 + $0xf58] sm:$0xff]
    %v705 = vld [vmem:[#allocation5 + $0xf60] sm:$0xff]
    %v706 = vld [vmem:[#allocation5 + $0xf68] sm:$0xff]
    %v707 = vld [vmem:[#allocation5 + $0xf70] sm:$0xff]
    %v708 = vld [vmem:[#allocation5 + $0xf78] sm:$0xff]
    %v709 = vld [vmem:[#allocation5 + $0xf80] sm:$0xff]
    %v710 = vld [vmem:[#allocation5 + $0xf88] sm:$0xff]
    %v711 = vld [vmem:[#allocation5 + $0xf90] sm:$0xff]
    %v712 = vld [vmem:[#allocation5 + $0xf98] sm:$0xff]
    %v713 = vld [vmem:[#allocation5 + $0xfa0] sm:$0xff]
    %v714 = vld [vmem:[#allocation5 + $0xfa8] sm:$0xff]
    %v715 = vld [vmem:[#allocation5 + $0xfb0] sm:$0xff]
    %v716 = vld [vmem:[#allocation5 + $0xfb8] sm:$0xff]
    %v717 = vld [vmem:[#allocation5 + $0xfc0] sm:$0xff]
    %v718 = vld [vmem:[#allocation5 + $0xfc8] sm:$0xff]
    %v719 = vld [vmem:[#allocation5 + $0xfd0] sm:$0xff]
    %v720 = vld [vmem:[#allocation5 + $0xfd8] sm:$0xff]
    %v721 = vld [vmem:[#allocation5 + $0xfe0] sm:$0xff]
    %v722 = vld [vmem:[#allocation5 + $0xfe8] sm:$0xff]
    %v723 = vld [vmem:[#allocation5 + $0xff0] sm:$0xff]
    %v724 = vld [vmem:[#allocation5 + $0xff8] sm:$0xff]
    %v725 = vld [vmem:[#allocation5 + $0x1000] sm:$0xff]
    %v726 = vld [vmem:[#allocation5 + $0x1008] sm:$0xff]
    %v727 = vld [vmem:[#allocation5 + $0x1010] sm:$0xff]
    %v728 = vld [vmem:[#allocation5 + $0x1018] sm:$0xff]
    %v729 = vld [vmem:[#allocation5 + $0x1020] sm:$0xff]
    %v730 = vld [vmem:[#allocation5 + $0x1028] sm:$0xff]
    %v731 = vld [vmem:[#allocation5 + $0x1030] sm:$0xff]
    %v732 = vld [vmem:[#allocation5 + $0x1038] sm:$0xff]
    %v733 = vld [vmem:[#allocation5 + $0x1040] sm:$0xff]
    %v734 = vld [vmem:[#allocation5 + $0x1048] sm:$0xff]
    %v735 = vld [vmem:[#allocation5 + $0x1050] sm:$0xff]
    %v736 = vld [vmem:[#allocation5 + $0x1058] sm:$0xff]
    %v737 = vld [vmem:[#allocation5 + $0x1060] sm:$0xff]
    %v738 = vld [vmem:[#allocation5 + $0x1068] sm:$0xff]
    %v739 = vld [vmem:[#allocation5 + $0x1070] sm:$0xff]
    %v740 = vld [vmem:[#allocation5 + $0x1078] sm:$0xff]
    %v741 = vld [vmem:[#allocation5 + $0x1080] sm:$0xff]
    %v742 = vld [vmem:[#allocation5 + $0x1088] sm:$0xff]
    %v743 = vld [vmem:[#allocation5 + $0x1090] sm:$0xff]
    %v744 = vld [vmem:[#allocation5 + $0x1098] sm:$0xff]
    %v745 = vld [vmem:[#allocation5 + $0x10a0] sm:$0xff]
    %v746 = vld [vmem:[#allocation5 + $0x10a8] sm:$0xff]
    %v747 = vld [vmem:[#allocation5 + $0x10b0] sm:$0xff]
    %v748 = vld [vmem:[#allocation5 + $0x10b8] sm:$0xff]
    %v749 = vld [vmem:[#allocation5 + $0x10c0] sm:$0xff]
    %v750 = vld [vmem:[#allocation5 + $0x10c8] sm:$0xff]
    %v751 = vld [vmem:[#allocation5 + $0x10d0] sm:$0xff]
    %v752 = vld [vmem:[#allocation5 + $0x10d8] sm:$0xff]
    %v753 = vld [vmem:[#allocation5 + $0x10e0] sm:$0xff]
    %v754 = vld [vmem:[#allocation5 + $0x10e8] sm:$0xff]
    %v755 = vld [vmem:[#allocation5 + $0x10f0] sm:$0xff]
    %v756 = vld [vmem:[#allocation5 + $0x10f8] sm:$0xff]
    %v757 = vld [vmem:[#allocation5 + $0x1100] sm:$0xff]
    %v758 = vld [vmem:[#allocation5 + $0x1108] sm:$0xff]
    %v759 = vld [vmem:[#allocation5 + $0x1110] sm:$0xff]
    %v760 = vld [vmem:[#allocation5 + $0x1118] sm:$0xff]
    %v761 = vld [vmem:[#allocation5 + $0x1120] sm:$0xff]
    %v762 = vld [vmem:[#allocation5 + $0x1128] sm:$0xff]
    %v763 = vld [vmem:[#allocation5 + $0x1130] sm:$0xff]
    %v764 = vld [vmem:[#allocation5 + $0x1138] sm:$0xff]
    %v765 = vld [vmem:[#allocation5 + $0x1140] sm:$0xff]
    %v766 = vld [vmem:[#allocation5 + $0x1148] sm:$0xff]
    %v767 = vld [vmem:[#allocation5 + $0x1150] sm:$0xff]
    %v768 = vld [vmem:[#allocation5 + $0x1158] sm:$0xff]
    %v769 = vld [vmem:[#allocation5 + $0x1160] sm:$0xff]
    %v770 = vld [vmem:[#allocation5 + $0x1168] sm:$0xff]
    %v771 = vld [vmem:[#allocation5 + $0x1170] sm:$0xff]
    %v772 = vld [vmem:[#allocation5 + $0x1178] sm:$0xff]
    %v773 = vld [vmem:[#allocation5 + $0x1180] sm:$0xff]
    %v774 = vld [vmem:[#allocation5 + $0x1188] sm:$0xff]
    %v775 = vld [vmem:[#allocation5 + $0x1190] sm:$0xff]
    %v776 = vld [vmem:[#allocation5 + $0x1198] sm:$0xff]
    %v777 = vld [vmem:[#allocation5 + $0x11a0] sm:$0xff]
    %v778 = vld [vmem:[#allocation5 + $0x11a8] sm:$0xff]
    %v779 = vld [vmem:[#allocation5 + $0x11b0] sm:$0xff]
    %v780 = vld [vmem:[#allocation5 + $0x11b8] sm:$0xff]
    %v781 = vld [vmem:[#allocation5 + $0x11c0] sm:$0xff]
    %v782 = vld [vmem:[#allocation5 + $0x11c8] sm:$0xff]
    %v783 = vld [vmem:[#allocation5 + $0x11d0] sm:$0xff]
    %v784 = vld [vmem:[#allocation5 + $0x11d8] sm:$0xff]
    %v785 = vld [vmem:[#allocation5 + $0x11e0] sm:$0xff]
    %v786 = vld [vmem:[#allocation5 + $0x11e8] sm:$0xff]
    %v787 = vld [vmem:[#allocation5 + $0x11f0] sm:$0xff]
    %v788 = vld [vmem:[#allocation5 + $0x11f8] sm:$0xff]
    %v789 = vld [vmem:[#allocation5 + $0x1200] sm:$0xff]
    %v790 = vld [vmem:[#allocation5 + $0x1208] sm:$0xff]
    %v791 = vld [vmem:[#allocation5 + $0x1210] sm:$0xff]
    %v792 = vld [vmem:[#allocation5 + $0x1218] sm:$0xff]
    %v793 = vld [vmem:[#allocation5 + $0x1220] sm:$0xff]
    %v794 = vld [vmem:[#allocation5 + $0x1228] sm:$0xff]
    %v795 = vld [vmem:[#allocation5 + $0x1230] sm:$0xff]
    %v796 = vld [vmem:[#allocation5 + $0x1238] sm:$0xff]
    %v797 = vld [vmem:[#allocation5 + $0x1240] sm:$0xff]
    %v798 = vld [vmem:[#allocation5 + $0x1248] sm:$0xff]
    %v799 = vld [vmem:[#allocation5 + $0x1250] sm:$0xff]
    %v800 = vld [vmem:[#allocation5 + $0x1258] sm:$0xff]
    %v801 = vld [vmem:[#allocation5 + $0x1260] sm:$0xff]
    %v802 = vld [vmem:[#allocation5 + $0x1268] sm:$0xff]
    %v803 = vld [vmem:[#allocation5 + $0x1270] sm:$0xff]
    %v804 = vld [vmem:[#allocation5 + $0x1278] sm:$0xff]
    %v805 = vld [vmem:[#allocation5 + $0x1280] sm:$0xff]
    %v806 = vld [vmem:[#allocation5 + $0x1288] sm:$0xff]
    %v807 = vld [vmem:[#allocation5 + $0x1290] sm:$0xff]
    %v808 = vld [vmem:[#allocation5 + $0x1298] sm:$0xff]
    %v809 = vld [vmem:[#allocation5 + $0x12a0] sm:$0xff]
    %v810 = vld [vmem:[#allocation5 + $0x12a8] sm:$0xff]
    %v811 = vld [vmem:[#allocation5 + $0x12b0] sm:$0xff]
    %v812 = vld [vmem:[#allocation5 + $0x12b8] sm:$0xff]
    %v813 = vld [vmem:[#allocation5 + $0x12c0] sm:$0xff]
    %v814 = vld [vmem:[#allocation5 + $0x12c8] sm:$0xff]
    %v815 = vld [vmem:[#allocation5 + $0x12d0] sm:$0xff]
    %v816 = vld [vmem:[#allocation5 + $0x12d8] sm:$0xff]
    %v817 = vld [vmem:[#allocation5 + $0x12e0] sm:$0xff]
    %v818 = vld [vmem:[#allocation5 + $0x12e8] sm:$0xff]
    %v819 = vld [vmem:[#allocation5 + $0x12f0] sm:$0xff]
    %v820 = vld [vmem:[#allocation5 + $0x12f8] sm:$0xff]
    %v821 = vld [vmem:[#allocation5 + $0x1300] sm:$0xff]
    %v822 = vld [vmem:[#allocation5 + $0x1308] sm:$0xff]
    %v823 = vld [vmem:[#allocation5 + $0x1310] sm:$0xff]
    %v824 = vld [vmem:[#allocation5 + $0x1318] sm:$0xff]
    %v825 = vld [vmem:[#allocation5 + $0x1320] sm:$0xff]
    %v826 = vld [vmem:[#allocation5 + $0x1328] sm:$0xff]
    %v827 = vld [vmem:[#allocation5 + $0x1330] sm:$0xff]
    %v828 = vld [vmem:[#allocation5 + $0x1338] sm:$0xff]
    %v829 = vld [vmem:[#allocation5 + $0x1340] sm:$0xff]
    %v830 = vld [vmem:[#allocation5 + $0x1348] sm:$0xff]
    %v831 = vld [vmem:[#allocation5 + $0x1350] sm:$0xff]
    %v832 = vld [vmem:[#allocation5 + $0x1358] sm:$0xff]
    %v833 = vld [vmem:[#allocation5 + $0x1360] sm:$0xff]
    %v834 = vld [vmem:[#allocation5 + $0x1368] sm:$0xff]
    %v835 = vld [vmem:[#allocation5 + $0x1370] sm:$0xff]
    %v836 = vld [vmem:[#allocation5 + $0x1378] sm:$0xff]
    %v837 = vld [vmem:[#allocation5 + $0x1380] sm:$0xff]
    %v838 = vld [vmem:[#allocation5 + $0x1388] sm:$0xff]
    %v839 = vld [vmem:[#allocation5 + $0x1390] sm:$0xff]
    %v840 = vld [vmem:[#allocation5 + $0x1398] sm:$0xff]
    %v841 = vld [vmem:[#allocation5 + $0x13a0] sm:$0xff]
    %v842 = vld [vmem:[#allocation5 + $0x13a8] sm:$0xff]
    %v843 = vld [vmem:[#allocation5 + $0x13b0] sm:$0xff]
    %v844 = vld [vmem:[#allocation5 + $0x13b8] sm:$0xff]
    %v845 = vld [vmem:[#allocation5 + $0x13c0] sm:$0xff]
    %v846 = vld [vmem:[#allocation5 + $0x13c8] sm:$0xff]
    %v847 = vld [vmem:[#allocation5 + $0x13d0] sm:$0xff]
    %v848 = vld [vmem:[#allocation5 + $0x13d8] sm:$0xff]
    %v849 = vld [vmem:[#allocation5 + $0x13e0] sm:$0xff]
    %v850 = vld [vmem:[#allocation5 + $0x13e8] sm:$0xff]
    %v851 = vld [vmem:[#allocation5 + $0x13f0] sm:$0xff]
    %v852 = vld [vmem:[#allocation5 + $0x13f8] sm:$0xff]
    %v853 = vld [vmem:[#allocation5 + $0x1400] sm:$0xff]
    %v854 = vld [vmem:[#allocation5 + $0x1408] sm:$0xff]
    %v855 = vld [vmem:[#allocation5 + $0x1410] sm:$0xff]
    %v856 = vld [vmem:[#allocation5 + $0x1418] sm:$0xff]
    %v857 = vld [vmem:[#allocation5 + $0x1420] sm:$0xff]
    %v858 = vld [vmem:[#allocation5 + $0x1428] sm:$0xff]
    %v859 = vld [vmem:[#allocation5 + $0x1430] sm:$0xff]
    %v860 = vld [vmem:[#allocation5 + $0x1438] sm:$0xff]
    %v861 = vld [vmem:[#allocation5 + $0x1440] sm:$0xff]
    %v862 = vld [vmem:[#allocation5 + $0x1448] sm:$0xff]
    %v863 = vld [vmem:[#allocation5 + $0x1450] sm:$0xff]
    %v864 = vld [vmem:[#allocation5 + $0x1458] sm:$0xff]
    %v865 = vld [vmem:[#allocation5 + $0x1460] sm:$0xff]
    %v866 = vld [vmem:[#allocation5 + $0x1468] sm:$0xff]
    %v867 = vld [vmem:[#allocation5 + $0x1470] sm:$0xff]
    %v868 = vld [vmem:[#allocation5 + $0x1478] sm:$0xff]
    %v869 = vld [vmem:[#allocation5 + $0x1480] sm:$0xff]
    %v870 = vld [vmem:[#allocation5 + $0x1488] sm:$0xff]
    %v871 = vld [vmem:[#allocation5 + $0x1490] sm:$0xff]
    %v872 = vld [vmem:[#allocation5 + $0x1498] sm:$0xff]
    %v873 = vld [vmem:[#allocation5 + $0x14a0] sm:$0xff]
    %v874 = vld [vmem:[#allocation5 + $0x14a8] sm:$0xff]
    %v875 = vld [vmem:[#allocation5 + $0x14b0] sm:$0xff]
    %v876 = vld [vmem:[#allocation5 + $0x14b8] sm:$0xff]
    %v877 = vld [vmem:[#allocation5 + $0x14c0] sm:$0xff]
    %v878 = vld [vmem:[#allocation5 + $0x14c8] sm:$0xff]
    %v879 = vld [vmem:[#allocation5 + $0x14d0] sm:$0xff]
    %v880 = vld [vmem:[#allocation5 + $0x14d8] sm:$0xff]
    %v881 = vld [vmem:[#allocation5 + $0x14e0] sm:$0xff]
    %v882 = vld [vmem:[#allocation5 + $0x14e8] sm:$0xff]
    %v883 = vld [vmem:[#allocation5 + $0x14f0] sm:$0xff]
    %v884 = vld [vmem:[#allocation5 + $0x14f8] sm:$0xff]
    %v885 = vld [vmem:[#allocation5 + $0x1500] sm:$0xff]
    %v886 = vld [vmem:[#allocation5 + $0x1508] sm:$0xff]
    %v887 = vld [vmem:[#allocation5 + $0x1510] sm:$0xff]
    %v888 = vld [vmem:[#allocation5 + $0x1518] sm:$0xff]
    %v889 = vld [vmem:[#allocation5 + $0x1520] sm:$0xff]
    %v890 = vld [vmem:[#allocation5 + $0x1528] sm:$0xff]
    %v891 = vld [vmem:[#allocation5 + $0x1530] sm:$0xff]
    %v892 = vld [vmem:[#allocation5 + $0x1538] sm:$0xff]
    %v893 = vld [vmem:[#allocation5 + $0x1540] sm:$0xff]
    %v894 = vld [vmem:[#allocation5 + $0x1548] sm:$0xff]
    %v895 = vld [vmem:[#allocation5 + $0x1550] sm:$0xff]
    %v896 = vld [vmem:[#allocation5 + $0x1558] sm:$0xff]
    %v897 = vld [vmem:[#allocation5 + $0x1560] sm:$0xff]
    %v898 = vld [vmem:[#allocation5 + $0x1568] sm:$0xff]
    %v899 = vld [vmem:[#allocation5 + $0x1570] sm:$0xff]
    %v900 = vld [vmem:[#allocation5 + $0x1578] sm:$0xff]
    %v901 = vld [vmem:[#allocation5 + $0x1580] sm:$0xff]
    %v902 = vld [vmem:[#allocation5 + $0x1588] sm:$0xff]
    %v903 = vld [vmem:[#allocation5 + $0x1590] sm:$0xff]
    %v904 = vld [vmem:[#allocation5 + $0x1598] sm:$0xff]
    %v905 = vld [vmem:[#allocation5 + $0x15a0] sm:$0xff]
    %v906 = vld [vmem:[#allocation5 + $0x15a8] sm:$0xff]
    %v907 = vld [vmem:[#allocation5 + $0x15b0] sm:$0xff]
    %v908 = vld [vmem:[#allocation5 + $0x15b8] sm:$0xff]
    %v909 = vld [vmem:[#allocation5 + $0x15c0] sm:$0xff]
    %v910 = vld [vmem:[#allocation5 + $0x15c8] sm:$0xff]
    %v911 = vld [vmem:[#allocation5 + $0x15d0] sm:$0xff]
    %v912 = vld [vmem:[#allocation5 + $0x15d8] sm:$0xff]
    %v913 = vld [vmem:[#allocation5 + $0x15e0] sm:$0xff]
    %v914 = vld [vmem:[#allocation5 + $0x15e8] sm:$0xff]
    %v915 = vld [vmem:[#allocation5 + $0x15f0] sm:$0xff]
    %v916 = vld [vmem:[#allocation5 + $0x15f8] sm:$0xff]
    %v917 = vld [vmem:[#allocation5 + $0x1600] sm:$0xff]
    %v918 = vld [vmem:[#allocation5 + $0x1608] sm:$0xff]
    %v919 = vld [vmem:[#allocation5 + $0x1610] sm:$0xff]
    %v920 = vld [vmem:[#allocation5 + $0x1618] sm:$0xff]
    %v921 = vld [vmem:[#allocation5 + $0x1620] sm:$0xff]
    %v922 = vld [vmem:[#allocation5 + $0x1628] sm:$0xff]
    %v923 = vld [vmem:[#allocation5 + $0x1630] sm:$0xff]
    %v924 = vld [vmem:[#allocation5 + $0x1638] sm:$0xff]
    %v925 = vld [vmem:[#allocation5 + $0x1640] sm:$0xff]
    %v926 = vld [vmem:[#allocation5 + $0x1648] sm:$0xff]
    %v927 = vld [vmem:[#allocation5 + $0x1650] sm:$0xff]
    %v928 = vld [vmem:[#allocation5 + $0x1658] sm:$0xff]
    %v929 = vld [vmem:[#allocation5 + $0x1660] sm:$0xff]
    %v930 = vld [vmem:[#allocation5 + $0x1668] sm:$0xff]
    %v931 = vld [vmem:[#allocation5 + $0x1670] sm:$0xff]
    %v932 = vld [vmem:[#allocation5 + $0x1678] sm:$0xff]
    %v933 = vld [vmem:[#allocation5 + $0x1680] sm:$0xff]
    %v934 = vld [vmem:[#allocation5 + $0x1688] sm:$0xff]
    %v935 = vld [vmem:[#allocation5 + $0x1690] sm:$0xff]
    %v936 = vld [vmem:[#allocation5 + $0x1698] sm:$0xff]
    %v937 = vld [vmem:[#allocation5 + $0x16a0] sm:$0xff]
    %v938 = vld [vmem:[#allocation5 + $0x16a8] sm:$0xff]
    %v939 = vld [vmem:[#allocation5 + $0x16b0] sm:$0xff]
    %v940 = vld [vmem:[#allocation5 + $0x16b8] sm:$0xff]
    %v941 = vld [vmem:[#allocation5 + $0x16c0] sm:$0xff]
    %v942 = vld [vmem:[#allocation5 + $0x16c8] sm:$0xff]
    %v943 = vld [vmem:[#allocation5 + $0x16d0] sm:$0xff]
    %v944 = vld [vmem:[#allocation5 + $0x16d8] sm:$0xff]
    %v945 = vld [vmem:[#allocation5 + $0x16e0] sm:$0xff]
    %v946 = vld [vmem:[#allocation5 + $0x16e8] sm:$0xff]
    %v947 = vld [vmem:[#allocation5 + $0x16f0] sm:$0xff]
    %v948 = vld [vmem:[#allocation5 + $0x16f8] sm:$0xff]
    %v949 = vld [vmem:[#allocation5 + $0x1700] sm:$0xff]
    %v950 = vld [vmem:[#allocation5 + $0x1708] sm:$0xff]
    %v951 = vld [vmem:[#allocation5 + $0x1710] sm:$0xff]
    %v952 = vld [vmem:[#allocation5 + $0x1718] sm:$0xff]
    %v953 = vld [vmem:[#allocation5 + $0x1720] sm:$0xff]
    %v954 = vld [vmem:[#allocation5 + $0x1728] sm:$0xff]
    %v955 = vld [vmem:[#allocation5 + $0x1730] sm:$0xff]
    %v956 = vld [vmem:[#allocation5 + $0x1738] sm:$0xff]
    %v957 = vld [vmem:[#allocation5 + $0x1740] sm:$0xff]
    %v958 = vld [vmem:[#allocation5 + $0x1748] sm:$0xff]
    %v959 = vld [vmem:[#allocation5 + $0x1750] sm:$0xff]
    %v960 = vld [vmem:[#allocation5 + $0x1758] sm:$0xff]
    %v961 = vld [vmem:[#allocation5 + $0x1760] sm:$0xff]
    %v962 = vld [vmem:[#allocation5 + $0x1768] sm:$0xff]
    %v963 = vld [vmem:[#allocation5 + $0x1770] sm:$0xff]
    %v964 = vld [vmem:[#allocation5 + $0x1778] sm:$0xff]
    %v965 = vld [vmem:[#allocation5 + $0x1780] sm:$0xff]
    %v966 = vld [vmem:[#allocation5 + $0x1788] sm:$0xff]
    %v967 = vld [vmem:[#allocation5 + $0x1790] sm:$0xff]
    %v968 = vld [vmem:[#allocation5 + $0x1798] sm:$0xff]
    %v969 = vld [vmem:[#allocation5 + $0x17a0] sm:$0xff]
    %v970 = vld [vmem:[#allocation5 + $0x17a8] sm:$0xff]
    %v971 = vld [vmem:[#allocation5 + $0x17b0] sm:$0xff]
    %v972 = vld [vmem:[#allocation5 + $0x17b8] sm:$0xff]
    %v973 = vld [vmem:[#allocation5 + $0x17c0] sm:$0xff]
    %v974 = vld [vmem:[#allocation5 + $0x17c8] sm:$0xff]
    %v975 = vld [vmem:[#allocation5 + $0x17d0] sm:$0xff]
    %v976 = vld [vmem:[#allocation5 + $0x17d8] sm:$0xff]
    %v977 = vld [vmem:[#allocation5 + $0x17e0] sm:$0xff]
    %v978 = vld [vmem:[#allocation5 + $0x17e8] sm:$0xff]
    %v979 = vld [vmem:[#allocation5 + $0x17f0] sm:$0xff]
    %v980 = vld [vmem:[#allocation5 + $0x17f8] sm:$0xff]
    %v981 = vld [vmem:[#allocation5 + $0x1800] sm:$0xff]
    %v982 = vld [vmem:[#allocation5 + $0x1808] sm:$0xff]
    %v983 = vld [vmem:[#allocation5 + $0x1810] sm:$0xff]
    %v984 = vld [vmem:[#allocation5 + $0x1818] sm:$0xff]
    %v985 = vld [vmem:[#allocation5 + $0x1820] sm:$0xff]
    %v986 = vld [vmem:[#allocation5 + $0x1828] sm:$0xff]
    %v987 = vld [vmem:[#allocation5 + $0x1830] sm:$0xff]
    %v988 = vld [vmem:[#allocation5 + $0x1838] sm:$0xff]
    %v989 = vld [vmem:[#allocation5 + $0x1840] sm:$0xff]
    %v990 = vld [vmem:[#allocation5 + $0x1848] sm:$0xff]
    %v991 = vld [vmem:[#allocation5 + $0x1850] sm:$0xff]
    %v992 = vld [vmem:[#allocation5 + $0x1858] sm:$0xff]
    %v993 = vld [vmem:[#allocation5 + $0x1860] sm:$0xff]
    %v994 = vld [vmem:[#allocation5 + $0x1868] sm:$0xff]
    %v995 = vld [vmem:[#allocation5 + $0x1870] sm:$0xff]
    %v996 = vld [vmem:[#allocation5 + $0x1878] sm:$0xff]
    %v997 = vld [vmem:[#allocation5 + $0x1880] sm:$0xff]
    %v998 = vld [vmem:[#allocation5 + $0x1888] sm:$0xff]
    %v999 = vld [vmem:[#allocation5 + $0x1890] sm:$0xff]
    %v1000 = vld [vmem:[#allocation5 + $0x1898] sm:$0xff]
    %v1001 = vld [vmem:[#allocation5 + $0x18a0] sm:$0xff]
    %v1002 = vld [vmem:[#allocation5 + $0x18a8] sm:$0xff]
    %v1003 = vld [vmem:[#allocation5 + $0x18b0] sm:$0xff]
    %v1004 = vld [vmem:[#allocation5 + $0x18b8] sm:$0xff]
    %v1005 = vld [vmem:[#allocation5 + $0x18c0] sm:$0xff]
    %v1006 = vld [vmem:[#allocation5 + $0x18c8] sm:$0xff]
    %v1007 = vld [vmem:[#allocation5 + $0x18d0] sm:$0xff]
    %v1008 = vld [vmem:[#allocation5 + $0x18d8] sm:$0xff]
    %v1009 = vld [vmem:[#allocation5 + $0x18e0] sm:$0xff]
    %v1010 = vld [vmem:[#allocation5 + $0x18e8] sm:$0xff]
    %v1011 = vld [vmem:[#allocation5 + $0x18f0] sm:$0xff]
    %v1012 = vld [vmem:[#allocation5 + $0x18f8] sm:$0xff]
    %v1013 = vld [vmem:[#allocation5 + $0x1900] sm:$0xff]
    %v1014 = vld [vmem:[#allocation5 + $0x1908] sm:$0xff]
    %v1015 = vld [vmem:[#allocation5 + $0x1910] sm:$0xff]
    %v1016 = vld [vmem:[#allocation5 + $0x1918] sm:$0xff]
    %v1017 = vld [vmem:[#allocation5 + $0x1920] sm:$0xff]
    %v1018 = vld [vmem:[#allocation5 + $0x1928] sm:$0xff]
    %v1019 = vld [vmem:[#allocation5 + $0x1930] sm:$0xff]
    %v1020 = vld [vmem:[#allocation5 + $0x1938] sm:$0xff]
    %v1021 = vld [vmem:[#allocation5 + $0x1940] sm:$0xff]
    %v1022 = vld [vmem:[#allocation5 + $0x1948] sm:$0xff]
    %v1023 = vld [vmem:[#allocation5 + $0x1950] sm:$0xff]
    %v1024 = vld [vmem:[#allocation5 + $0x1958] sm:$0xff]
    %v1025 = vld [vmem:[#allocation5 + $0x1960] sm:$0xff]
    %v1026 = vld [vmem:[#allocation5 + $0x1968] sm:$0xff]
    %v1027 = vld [vmem:[#allocation5 + $0x1970] sm:$0xff]
    %v1028 = vld [vmem:[#allocation5 + $0x1978] sm:$0xff]
    %v1029 = vld [vmem:[#allocation5 + $0x1980] sm:$0xff]
    %v1030 = vld [vmem:[#allocation5 + $0x1988] sm:$0xff]
    %v1031 = vld [vmem:[#allocation5 + $0x1990] sm:$0xff]
    %v1032 = vld [vmem:[#allocation5 + $0x1998] sm:$0xff]
    %v1033 = vld [vmem:[#allocation5 + $0x19a0] sm:$0xff]
    %v1034 = vld [vmem:[#allocation5 + $0x19a8] sm:$0xff]
    %v1035 = vld [vmem:[#allocation5 + $0x19b0] sm:$0xff]
    %v1036 = vld [vmem:[#allocation5 + $0x19b8] sm:$0xff]
    %v1037 = vld [vmem:[#allocation5 + $0x19c0] sm:$0xff]
    %v1038 = vld [vmem:[#allocation5 + $0x19c8] sm:$0xff]
    %v1039 = vld [vmem:[#allocation5 + $0x19d0] sm:$0xff]
    %v1040 = vld [vmem:[#allocation5 + $0x19d8] sm:$0xff]
    %v1041 = vld [vmem:[#allocation5 + $0x19e0] sm:$0xff]
    %v1042 = vld [vmem:[#allocation5 + $0x19e8] sm:$0xff]
    %v1043 = vld [vmem:[#allocation5 + $0x19f0] sm:$0xff]
    %v1044 = vld [vmem:[#allocation5 + $0x19f8] sm:$0xff]
    %v1045 = vld [vmem:[#allocation5 + $0x1a00] sm:$0xff]
    %v1046 = vld [vmem:[#allocation5 + $0x1a08] sm:$0xff]
    %v1047 = vld [vmem:[#allocation5 + $0x1a10] sm:$0xff]
    %v1048 = vld [vmem:[#allocation5 + $0x1a18] sm:$0xff]
    %v1049 = vld [vmem:[#allocation5 + $0x1a20] sm:$0xff]
    %v1050 = vld [vmem:[#allocation5 + $0x1a28] sm:$0xff]
    %v1051 = vld [vmem:[#allocation5 + $0x1a30] sm:$0xff]
    %v1052 = vld [vmem:[#allocation5 + $0x1a38] sm:$0xff]
    %v1053 = vld [vmem:[#allocation5 + $0x1a40] sm:$0xff]
    %v1054 = vld [vmem:[#allocation5 + $0x1a48] sm:$0xff]
    %v1055 = vld [vmem:[#allocation5 + $0x1a50] sm:$0xff]
    %v1056 = vld [vmem:[#allocation5 + $0x1a58] sm:$0xff]
    %v1057 = vld [vmem:[#allocation5 + $0x1a60] sm:$0xff]
    %v1058 = vld [vmem:[#allocation5 + $0x1a68] sm:$0xff]
    %v1059 = vld [vmem:[#allocation5 + $0x1a70] sm:$0xff]
    %v1060 = vld [vmem:[#allocation5 + $0x1a78] sm:$0xff]
    %v1061 = vld [vmem:[#allocation5 + $0x1a80] sm:$0xff]
    %v1062 = vld [vmem:[#allocation5 + $0x1a88] sm:$0xff]
    %v1063 = vld [vmem:[#allocation5 + $0x1a90] sm:$0xff]
    %v1064 = vld [vmem:[#allocation5 + $0x1a98] sm:$0xff]
    %v1065 = vld [vmem:[#allocation5 + $0x1aa0] sm:$0xff]
    %v1066 = vld [vmem:[#allocation5 + $0x1aa8] sm:$0xff]
    %v1067 = vld [vmem:[#allocation5 + $0x1ab0] sm:$0xff]
    %v1068 = vld [vmem:[#allocation5 + $0x1ab8] sm:$0xff]
    %v1069 = vld [vmem:[#allocation5 + $0x1ac0] sm:$0xff]
    %v1070 = vld [vmem:[#allocation5 + $0x1ac8] sm:$0xff]
    %v1071 = vld [vmem:[#allocation5 + $0x1ad0] sm:$0xff]
    %v1072 = vld [vmem:[#allocation5 + $0x1ad8] sm:$0xff]
    %v1073 = vld [vmem:[#allocation5 + $0x1ae0] sm:$0xff]
    %v1074 = vld [vmem:[#allocation5 + $0x1ae8] sm:$0xff]
    %v1075 = vld [vmem:[#allocation5 + $0x1af0] sm:$0xff]
    %v1076 = vld [vmem:[#allocation5 + $0x1af8] sm:$0xff]
    %v1077 = vld [vmem:[#allocation5 + $0x1b00] sm:$0xff]
    %v1078 = vld [vmem:[#allocation5 + $0x1b08] sm:$0xff]
    %v1079 = vld [vmem:[#allocation5 + $0x1b10] sm:$0xff]
    %v1080 = vld [vmem:[#allocation5 + $0x1b18] sm:$0xff]
    %v1081 = vld [vmem:[#allocation5 + $0x1b20] sm:$0xff]
    %v1082 = vld [vmem:[#allocation5 + $0x1b28] sm:$0xff]
    %v1083 = vld [vmem:[#allocation5 + $0x1b30] sm:$0xff]
    %v1084 = vld [vmem:[#allocation5 + $0x1b38] sm:$0xff]
    %v1085 = vld [vmem:[#allocation5 + $0x1b40] sm:$0xff]
    %v1086 = vld [vmem:[#allocation5 + $0x1b48] sm:$0xff]
    %v1087 = vld [vmem:[#allocation5 + $0x1b50] sm:$0xff]
    %v1088 = vld [vmem:[#allocation5 + $0x1b58] sm:$0xff]
    %v1089 = vld [vmem:[#allocation5 + $0x1b60] sm:$0xff]
    %v1090 = vld [vmem:[#allocation5 + $0x1b68] sm:$0xff]
    %v1091 = vld [vmem:[#allocation5 + $0x1b70] sm:$0xff]
    %v1092 = vld [vmem:[#allocation5 + $0x1b78] sm:$0xff]
    %v1093 = vld [vmem:[#allocation5 + $0x1b80] sm:$0xff]
    %v1094 = vld [vmem:[#allocation5 + $0x1b88] sm:$0xff]
    %v1095 = vld [vmem:[#allocation5 + $0x1b90] sm:$0xff]
    %v1096 = vld [vmem:[#allocation5 + $0x1b98] sm:$0xff]
    %v1097 = vld [vmem:[#allocation5 + $0x1ba0] sm:$0xff]
    %v1098 = vld [vmem:[#allocation5 + $0x1ba8] sm:$0xff]
    %v1099 = vld [vmem:[#allocation5 + $0x1bb0] sm:$0xff]
    %v1100 = vld [vmem:[#allocation5 + $0x1bb8] sm:$0xff]
    %v1101 = vld [vmem:[#allocation5 + $0x1bc0] sm:$0xff]
    %v1102 = vld [vmem:[#allocation5 + $0x1bc8] sm:$0xff]
    %v1103 = vld [vmem:[#allocation5 + $0x1bd0] sm:$0xff]
    %v1104 = vld [vmem:[#allocation5 + $0x1bd8] sm:$0xff]
    %v1105 = vld [vmem:[#allocation5 + $0x1be0] sm:$0xff]
    %v1106 = vld [vmem:[#allocation5 + $0x1be8] sm:$0xff]
    %v1107 = vld [vmem:[#allocation5 + $0x1bf0] sm:$0xff]
    %v1108 = vld [vmem:[#allocation5 + $0x1bf8] sm:$0xff]
    %v1109 = vld [vmem:[#allocation5 + $0x1c00] sm:$0xff]
    %v1110 = vld [vmem:[#allocation5 + $0x1c08] sm:$0xff]
    %v1111 = vld [vmem:[#allocation5 + $0x1c10] sm:$0xff]
    %v1112 = vld [vmem:[#allocation5 + $0x1c18] sm:$0xff]
    %v1113 = vld [vmem:[#allocation5 + $0x1c20] sm:$0xff]
    %v1114 = vld [vmem:[#allocation5 + $0x1c28] sm:$0xff]
    %v1115 = vld [vmem:[#allocation5 + $0x1c30] sm:$0xff]
    %v1116 = vld [vmem:[#allocation5 + $0x1c38] sm:$0xff]
    %v1117 = vld [vmem:[#allocation5 + $0x1c40] sm:$0xff]
    %v1118 = vld [vmem:[#allocation5 + $0x1c48] sm:$0xff]
    %v1119 = vld [vmem:[#allocation5 + $0x1c50] sm:$0xff]
    %v1120 = vld [vmem:[#allocation5 + $0x1c58] sm:$0xff]
    %v1121 = vld [vmem:[#allocation5 + $0x1c60] sm:$0xff]
    %v1122 = vld [vmem:[#allocation5 + $0x1c68] sm:$0xff]
    %v1123 = vld [vmem:[#allocation5 + $0x1c70] sm:$0xff]
    %v1124 = vld [vmem:[#allocation5 + $0x1c78] sm:$0xff]
    %v1125 = vld [vmem:[#allocation5 + $0x1c80] sm:$0xff]
    %v1126 = vld [vmem:[#allocation5 + $0x1c88] sm:$0xff]
    %v1127 = vld [vmem:[#allocation5 + $0x1c90] sm:$0xff]
    %v1128 = vld [vmem:[#allocation5 + $0x1c98] sm:$0xff]
    %v1129 = vld [vmem:[#allocation5 + $0x1ca0] sm:$0xff]
    %v1130 = vld [vmem:[#allocation5 + $0x1ca8] sm:$0xff]
    %v1131 = vld [vmem:[#allocation5 + $0x1cb0] sm:$0xff]
    %v1132 = vld [vmem:[#allocation5 + $0x1cb8] sm:$0xff]
    %v1133 = vld [vmem:[#allocation5 + $0x1cc0] sm:$0xff]
    %v1134 = vld [vmem:[#allocation5 + $0x1cc8] sm:$0xff]
    %v1135 = vld [vmem:[#allocation5 + $0x1cd0] sm:$0xff]
    %v1136 = vld [vmem:[#allocation5 + $0x1cd8] sm:$0xff]
    %v1137 = vld [vmem:[#allocation5 + $0x1ce0] sm:$0xff]
    %v1138 = vld [vmem:[#allocation5 + $0x1ce8] sm:$0xff]
    %v1139 = vld [vmem:[#allocation5 + $0x1cf0] sm:$0xff]
    %v1140 = vld [vmem:[#allocation5 + $0x1cf8] sm:$0xff]
    %v1141 = vld [vmem:[#allocation5 + $0x1d00] sm:$0xff]
    %v1142 = vld [vmem:[#allocation5 + $0x1d08] sm:$0xff]
    %v1143 = vld [vmem:[#allocation5 + $0x1d10] sm:$0xff]
    %v1144 = vld [vmem:[#allocation5 + $0x1d18] sm:$0xff]
    %v1145 = vld [vmem:[#allocation5 + $0x1d20] sm:$0xff]
    %v1146 = vld [vmem:[#allocation5 + $0x1d28] sm:$0xff]
    %v1147 = vld [vmem:[#allocation5 + $0x1d30] sm:$0xff]
    %v1148 = vld [vmem:[#allocation5 + $0x1d38] sm:$0xff]
    %v1149 = vld [vmem:[#allocation5 + $0x1d40] sm:$0xff]
    %v1150 = vld [vmem:[#allocation5 + $0x1d48] sm:$0xff]
    %v1151 = vld [vmem:[#allocation5 + $0x1d50] sm:$0xff]
    %v1152 = vld [vmem:[#allocation5 + $0x1d58] sm:$0xff]
    %v1153 = vld [vmem:[#allocation5 + $0x1d60] sm:$0xff]
    %v1154 = vld [vmem:[#allocation5 + $0x1d68] sm:$0xff]
    %v1155 = vld [vmem:[#allocation5 + $0x1d70] sm:$0xff]
    %v1156 = vld [vmem:[#allocation5 + $0x1d78] sm:$0xff]
    %v1157 = vld [vmem:[#allocation5 + $0x1d80] sm:$0xff]
    %v1158 = vld [vmem:[#allocation5 + $0x1d88] sm:$0xff]
    %v1159 = vld [vmem:[#allocation5 + $0x1d90] sm:$0xff]
    %v1160 = vld [vmem:[#allocation5 + $0x1d98] sm:$0xff]
    %v1161 = vld [vmem:[#allocation5 + $0x1da0] sm:$0xff]
    %v1162 = vld [vmem:[#allocation5 + $0x1da8] sm:$0xff]
    %v1163 = vld [vmem:[#allocation5 + $0x1db0] sm:$0xff]
    %v1164 = vld [vmem:[#allocation5 + $0x1db8] sm:$0xff]
    %v1165 = vld [vmem:[#allocation5 + $0x1dc0] sm:$0xff]
    %v1166 = vld [vmem:[#allocation5 + $0x1dc8] sm:$0xff]
    %v1167 = vld [vmem:[#allocation5 + $0x1dd0] sm:$0xff]
    %v1168 = vld [vmem:[#allocation5 + $0x1dd8] sm:$0xff]
    %v1169 = vld [vmem:[#allocation5 + $0x1de0] sm:$0xff]
    %v1170 = vld [vmem:[#allocation5 + $0x1de8] sm:$0xff]
    %v1171 = vld [vmem:[#allocation5 + $0x1df0] sm:$0xff]
    %v1172 = vld [vmem:[#allocation5 + $0x1df8] sm:$0xff]
    %v1173 = vld [vmem:[#allocation5 + $0x1e00] sm:$0xff]
    %v1174 = vld [vmem:[#allocation5 + $0x1e08] sm:$0xff]
    %v1175 = vld [vmem:[#allocation5 + $0x1e10] sm:$0xff]
    %v1176 = vld [vmem:[#allocation5 + $0x1e18] sm:$0xff]
    %v1177 = vld [vmem:[#allocation5 + $0x1e20] sm:$0xff]
    %v1178 = vld [vmem:[#allocation5 + $0x1e28] sm:$0xff]
    %v1179 = vld [vmem:[#allocation5 + $0x1e30] sm:$0xff]
    %v1180 = vld [vmem:[#allocation5 + $0x1e38] sm:$0xff]
    %v1181 = vld [vmem:[#allocation5 + $0x1e40] sm:$0xff]
    %v1182 = vld [vmem:[#allocation5 + $0x1e48] sm:$0xff]
    %v1183 = vld [vmem:[#allocation5 + $0x1e50] sm:$0xff]
    %v1184 = vld [vmem:[#allocation5 + $0x1e58] sm:$0xff]
    %v1185 = vld [vmem:[#allocation5 + $0x1e60] sm:$0xff]
    %v1186 = vld [vmem:[#allocation5 + $0x1e68] sm:$0xff]
    %v1187 = vld [vmem:[#allocation5 + $0x1e70] sm:$0xff]
    %v1188 = vld [vmem:[#allocation5 + $0x1e78] sm:$0xff]
    %v1189 = vld [vmem:[#allocation5 + $0x1e80] sm:$0xff]
    %v1190 = vld [vmem:[#allocation5 + $0x1e88] sm:$0xff]
    %v1191 = vld [vmem:[#allocation5 + $0x1e90] sm:$0xff]
    %v1192 = vld [vmem:[#allocation5 + $0x1e98] sm:$0xff]
    %v1193 = vld [vmem:[#allocation5 + $0x1ea0] sm:$0xff]
    %v1194 = vld [vmem:[#allocation5 + $0x1ea8] sm:$0xff]
    %v1195 = vld [vmem:[#allocation5 + $0x1eb0] sm:$0xff]
    %v1196 = vld [vmem:[#allocation5 + $0x1eb8] sm:$0xff]
    %v1197 = vld [vmem:[#allocation5 + $0x1ec0] sm:$0xff]
    %v1198 = vld [vmem:[#allocation5 + $0x1ec8] sm:$0xff]
    %v1199 = vld [vmem:[#allocation5 + $0x1ed0] sm:$0xff]
    %v1200 = vld [vmem:[#allocation5 + $0x1ed8] sm:$0xff]
    %v1201 = vld [vmem:[#allocation5 + $0x1ee0] sm:$0xff]
    %v1202 = vld [vmem:[#allocation5 + $0x1ee8] sm:$0xff]
    %v1203 = vld [vmem:[#allocation5 + $0x1ef0] sm:$0xff]
    %v1204 = vld [vmem:[#allocation5 + $0x1ef8] sm:$0xff]
    %v1205 = vld [vmem:[#allocation5 + $0x1f00] sm:$0xff]
    %v1206 = vld [vmem:[#allocation5 + $0x1f08] sm:$0xff]
    %v1207 = vld [vmem:[#allocation5 + $0x1f10] sm:$0xff]
    %v1208 = vld [vmem:[#allocation5 + $0x1f18] sm:$0xff]
    %v1209 = vld [vmem:[#allocation5 + $0x1f20] sm:$0xff]
    %v1210 = vld [vmem:[#allocation5 + $0x1f28] sm:$0xff]
    %v1211 = vld [vmem:[#allocation5 + $0x1f30] sm:$0xff]
    %v1212 = vld [vmem:[#allocation5 + $0x1f38] sm:$0xff]
    %v1213 = vld [vmem:[#allocation5 + $0x1f40] sm:$0xff]
    %v1214 = vld [vmem:[#allocation5 + $0x1f48] sm:$0xff]
    %v1215 = vld [vmem:[#allocation5 + $0x1f50] sm:$0xff]
    %v1216 = vld [vmem:[#allocation5 + $0x1f58] sm:$0xff]
    %v1217 = vld [vmem:[#allocation5 + $0x1f60] sm:$0xff]
    %v1218 = vld [vmem:[#allocation5 + $0x1f68] sm:$0xff]
    %v1219 = vld [vmem:[#allocation5 + $0x1f70] sm:$0xff]
    %v1220 = vld [vmem:[#allocation5 + $0x1f78] sm:$0xff]
    %v1221 = vld [vmem:[#allocation5 + $0x1f80] sm:$0xff]
    %v1222 = vld [vmem:[#allocation5 + $0x1f88] sm:$0xff]
    %v1223 = vld [vmem:[#allocation5 + $0x1f90] sm:$0xff]
    %v1224 = vld [vmem:[#allocation5 + $0x1f98] sm:$0xff]
    %v1225 = vld [vmem:[#allocation5 + $0x1fa0] sm:$0xff]
    %v1226 = vld [vmem:[#allocation5 + $0x1fa8] sm:$0xff]
    %v1227 = vld [vmem:[#allocation5 + $0x1fb0] sm:$0xff]
    %v1228 = vld [vmem:[#allocation5 + $0x1fb8] sm:$0xff]
    %v1229 = vld [vmem:[#allocation5 + $0x1fc0] sm:$0xff]
    %v1230 = vld [vmem:[#allocation5 + $0x1fc8] sm:$0xff]
    %v1231 = vld [vmem:[#allocation5 + $0x1fd0] sm:$0xff]
    %v1232 = vld [vmem:[#allocation5 + $0x1fd8] sm:$0xff]
    %v1233 = vld [vmem:[#allocation5 + $0x1fe0] sm:$0xff]
    %v1234 = vld [vmem:[#allocation5 + $0x1fe8] sm:$0xff]
    %v1235 = vld [vmem:[#allocation5 + $0x1ff0] sm:$0xff]
    %v1236 = vld [vmem:[#allocation5 + $0x1ff8] sm:$0xff]
    %v1237 = vld [vmem:[#allocation7] sm:$0xff]
    %v1239 = vlaneseq
    %v1240 = vshrl.u32 %v1239, 7
    %v1241 = vsub.s32 0, %v1240
    %v1242 = vrot.slane %v1237, %v1241
    %v1243 = vlaneseq
    %v1244 = vshrl.u32 %v1243, 7
    %v1245 = vsub.s32 1, %v1244
    %v1246 = vrot.slane %v1237, %v1245
    %v1247 = vlaneseq
    %v1248 = vshrl.u32 %v1247, 7
    %v1249 = vsub.s32 2, %v1248
    %v1250 = vrot.slane %v1237, %v1249
    %v1251 = vlaneseq
    %v1252 = vshrl.u32 %v1251, 7
    %v1253 = vsub.s32 3, %v1252
    %v1254 = vrot.slane %v1237, %v1253
    %v1255 = vlaneseq
    %v1256 = vshrl.u32 %v1255, 7
    %v1257 = vsub.s32 4, %v1256
    %v1258 = vrot.slane %v1237, %v1257
    %v1259 = vlaneseq
    %v1260 = vshrl.u32 %v1259, 7
    %v1261 = vsub.s32 5, %v1260
    %v1262 = vrot.slane %v1237, %v1261
    %v1263 = vlaneseq
    %v1264 = vshrl.u32 %v1263, 7
    %v1265 = vsub.s32 6, %v1264
    %v1266 = vrot.slane %v1237, %v1265
    %v1267 = vlaneseq
    %v1268 = vshrl.u32 %v1267, 7
    %v1269 = vsub.s32 7, %v1268
    %v1270 = vrot.slane %v1237, %v1269
    %v2303 = vunpack.c.l.b16 %v213
    %v2304 = vunpack.c.h.b16 %v213
    %v2305 = vunpack.c.l.b16 %v214
    %v2306 = vunpack.c.h.b16 %v214
    %v2307 = vunpack.c.l.b16 %v215
    %v2308 = vunpack.c.h.b16 %v215
    %v2309 = vunpack.c.l.b16 %v216
    %v2310 = vunpack.c.h.b16 %v216
    %v2311 = vunpack.c.l.b16 %v217
    %v2312 = vunpack.c.h.b16 %v217
    %v2313 = vunpack.c.l.b16 %v218
    %v2314 = vunpack.c.h.b16 %v218
    %v2315 = vunpack.c.l.b16 %v219
    %v2316 = vunpack.c.h.b16 %v219
    %v2317 = vunpack.c.l.b16 %v220
    %v2318 = vunpack.c.h.b16 %v220
    %v2319 = vunpack.c.l.b16 %v221
    %v2320 = vunpack.c.h.b16 %v221
    %v2321 = vunpack.c.l.b16 %v222
    %v2322 = vunpack.c.h.b16 %v222
    %v2323 = vunpack.c.l.b16 %v223
    %v2324 = vunpack.c.h.b16 %v223
    %v2325 = vunpack.c.l.b16 %v224
    %v2326 = vunpack.c.h.b16 %v224
    %v2327 = vunpack.c.l.b16 %v225
    %v2328 = vunpack.c.h.b16 %v225
    %v2329 = vunpack.c.l.b16 %v226
    %v2330 = vunpack.c.h.b16 %v226
    %v2331 = vunpack.c.l.b16 %v227
    %v2332 = vunpack.c.h.b16 %v227
    %v2333 = vunpack.c.l.b16 %v228
    %v2334 = vunpack.c.h.b16 %v228
    %v2335 = vunpack.c.l.b16 %v229
    %v2336 = vunpack.c.h.b16 %v229
    %v2337 = vunpack.c.l.b16 %v230
    %v2338 = vunpack.c.h.b16 %v230
    %v2339 = vunpack.c.l.b16 %v231
    %v2340 = vunpack.c.h.b16 %v231
    %v2341 = vunpack.c.l.b16 %v232
    %v2342 = vunpack.c.h.b16 %v232
    %v2343 = vunpack.c.l.b16 %v233
    %v2344 = vunpack.c.h.b16 %v233
    %v2345 = vunpack.c.l.b16 %v234
    %v2346 = vunpack.c.h.b16 %v234
    %v2347 = vunpack.c.l.b16 %v235
    %v2348 = vunpack.c.h.b16 %v235
    %v2349 = vunpack.c.l.b16 %v236
    %v2350 = vunpack.c.h.b16 %v236
    %v2351 = vunpack.c.l.b16 %v237
    %v2352 = vunpack.c.h.b16 %v237
    %v2353 = vunpack.c.l.b16 %v238
    %v2354 = vunpack.c.h.b16 %v238
    %v2355 = vunpack.c.l.b16 %v239
    %v2356 = vunpack.c.h.b16 %v239
    %v2357 = vunpack.c.l.b16 %v240
    %v2358 = vunpack.c.h.b16 %v240
    %v2359 = vunpack.c.l.b16 %v241
    %v2360 = vunpack.c.h.b16 %v241
    %v2361 = vunpack.c.l.b16 %v242
    %v2362 = vunpack.c.h.b16 %v242
    %v2363 = vunpack.c.l.b16 %v243
    %v2364 = vunpack.c.h.b16 %v243
    %v2365 = vunpack.c.l.b16 %v244
    %v2366 = vunpack.c.h.b16 %v244
    %v2367 = vunpack.c.l.b16 %v245
    %v2368 = vunpack.c.h.b16 %v245
    %v2369 = vunpack.c.l.b16 %v246
    %v2370 = vunpack.c.h.b16 %v246
    %v2371 = vunpack.c.l.b16 %v247
    %v2372 = vunpack.c.h.b16 %v247
    %v2373 = vunpack.c.l.b16 %v248
    %v2374 = vunpack.c.h.b16 %v248
    %v2375 = vunpack.c.l.b16 %v249
    %v2376 = vunpack.c.h.b16 %v249
    %v2377 = vunpack.c.l.b16 %v250
    %v2378 = vunpack.c.h.b16 %v250
    %v2379 = vunpack.c.l.b16 %v251
    %v2380 = vunpack.c.h.b16 %v251
    %v2381 = vunpack.c.l.b16 %v252
    %v2382 = vunpack.c.h.b16 %v252
    %v2383 = vunpack.c.l.b16 %v253
    %v2384 = vunpack.c.h.b16 %v253
    %v2385 = vunpack.c.l.b16 %v254
    %v2386 = vunpack.c.h.b16 %v254
    %v2387 = vunpack.c.l.b16 %v255
    %v2388 = vunpack.c.h.b16 %v255
    %v2389 = vunpack.c.l.b16 %v256
    %v2390 = vunpack.c.h.b16 %v256
    %v2391 = vunpack.c.l.b16 %v257
    %v2392 = vunpack.c.h.b16 %v257
    %v2393 = vunpack.c.l.b16 %v258
    %v2394 = vunpack.c.h.b16 %v258
    %v2395 = vunpack.c.l.b16 %v259
    %v2396 = vunpack.c.h.b16 %v259
    %v2397 = vunpack.c.l.b16 %v260
    %v2398 = vunpack.c.h.b16 %v260
    %v2399 = vunpack.c.l.b16 %v261
    %v2400 = vunpack.c.h.b16 %v261
    %v2401 = vunpack.c.l.b16 %v262
    %v2402 = vunpack.c.h.b16 %v262
    %v2403 = vunpack.c.l.b16 %v263
    %v2404 = vunpack.c.h.b16 %v263
    %v2405 = vunpack.c.l.b16 %v264
    %v2406 = vunpack.c.h.b16 %v264
    %v2407 = vunpack.c.l.b16 %v265
    %v2408 = vunpack.c.h.b16 %v265
    %v2409 = vunpack.c.l.b16 %v266
    %v2410 = vunpack.c.h.b16 %v266
    %v2411 = vunpack.c.l.b16 %v267
    %v2412 = vunpack.c.h.b16 %v267
    %v2413 = vunpack.c.l.b16 %v268
    %v2414 = vunpack.c.h.b16 %v268
    %v2415 = vunpack.c.l.b16 %v269
    %v2416 = vunpack.c.h.b16 %v269
    %v2417 = vunpack.c.l.b16 %v270
    %v2418 = vunpack.c.h.b16 %v270
    %v2419 = vunpack.c.l.b16 %v271
    %v2420 = vunpack.c.h.b16 %v271
    %v2421 = vunpack.c.l.b16 %v272
    %v2422 = vunpack.c.h.b16 %v272
    %v2423 = vunpack.c.l.b16 %v273
    %v2424 = vunpack.c.h.b16 %v273
    %v2425 = vunpack.c.l.b16 %v274
    %v2426 = vunpack.c.h.b16 %v274
    %v2427 = vunpack.c.l.b16 %v275
    %v2428 = vunpack.c.h.b16 %v275
    %v2429 = vunpack.c.l.b16 %v276
    %v2430 = vunpack.c.h.b16 %v276
    %v2431 = vunpack.c.l.b16 %v277
    %v2432 = vunpack.c.h.b16 %v277
    %v2433 = vunpack.c.l.b16 %v278
    %v2434 = vunpack.c.h.b16 %v278
    %v2435 = vunpack.c.l.b16 %v279
    %v2436 = vunpack.c.h.b16 %v279
    %v2437 = vunpack.c.l.b16 %v280
    %v2438 = vunpack.c.h.b16 %v280
    %v2439 = vunpack.c.l.b16 %v281
    %v2440 = vunpack.c.h.b16 %v281
    %v2441 = vunpack.c.l.b16 %v282
    %v2442 = vunpack.c.h.b16 %v282
    %v2443 = vunpack.c.l.b16 %v283
    %v2444 = vunpack.c.h.b16 %v283
    %v2445 = vunpack.c.l.b16 %v284
    %v2446 = vunpack.c.h.b16 %v284
    %v2447 = vunpack.c.l.b16 %v285
    %v2448 = vunpack.c.h.b16 %v285
    %v2449 = vunpack.c.l.b16 %v286
    %v2450 = vunpack.c.h.b16 %v286
    %v2451 = vunpack.c.l.b16 %v287
    %v2452 = vunpack.c.h.b16 %v287
    %v2453 = vunpack.c.l.b16 %v288
    %v2454 = vunpack.c.h.b16 %v288
    %v2455 = vunpack.c.l.b16 %v289
    %v2456 = vunpack.c.h.b16 %v289
    %v2457 = vunpack.c.l.b16 %v290
    %v2458 = vunpack.c.h.b16 %v290
    %v2459 = vunpack.c.l.b16 %v291
    %v2460 = vunpack.c.h.b16 %v291
    %v2461 = vunpack.c.l.b16 %v292
    %v2462 = vunpack.c.h.b16 %v292
    %v2463 = vunpack.c.l.b16 %v293
    %v2464 = vunpack.c.h.b16 %v293
    %v2465 = vunpack.c.l.b16 %v294
    %v2466 = vunpack.c.h.b16 %v294
    %v2467 = vunpack.c.l.b16 %v295
    %v2468 = vunpack.c.h.b16 %v295
    %v2469 = vunpack.c.l.b16 %v296
    %v2470 = vunpack.c.h.b16 %v296
    %v2471 = vunpack.c.l.b16 %v297
    %v2472 = vunpack.c.h.b16 %v297
    %v2473 = vunpack.c.l.b16 %v298
    %v2474 = vunpack.c.h.b16 %v298
    %v2475 = vunpack.c.l.b16 %v299
    %v2476 = vunpack.c.h.b16 %v299
    %v2477 = vunpack.c.l.b16 %v300
    %v2478 = vunpack.c.h.b16 %v300
    %v2479 = vunpack.c.l.b16 %v301
    %v2480 = vunpack.c.h.b16 %v301
    %v2481 = vunpack.c.l.b16 %v302
    %v2482 = vunpack.c.h.b16 %v302
    %v2483 = vunpack.c.l.b16 %v303
    %v2484 = vunpack.c.h.b16 %v303
    %v2485 = vunpack.c.l.b16 %v304
    %v2486 = vunpack.c.h.b16 %v304
    %v2487 = vunpack.c.l.b16 %v305
    %v2488 = vunpack.c.h.b16 %v305
    %v2489 = vunpack.c.l.b16 %v306
    %v2490 = vunpack.c.h.b16 %v306
    %v2491 = vunpack.c.l.b16 %v307
    %v2492 = vunpack.c.h.b16 %v307
    %v2493 = vunpack.c.l.b16 %v308
    %v2494 = vunpack.c.h.b16 %v308
    %v2495 = vunpack.c.l.b16 %v309
    %v2496 = vunpack.c.h.b16 %v309
    %v2497 = vunpack.c.l.b16 %v310
    %v2498 = vunpack.c.h.b16 %v310
    %v2499 = vunpack.c.l.b16 %v311
    %v2500 = vunpack.c.h.b16 %v311
    %v2501 = vunpack.c.l.b16 %v312
    %v2502 = vunpack.c.h.b16 %v312
    %v2503 = vunpack.c.l.b16 %v313
    %v2504 = vunpack.c.h.b16 %v313
    %v2505 = vunpack.c.l.b16 %v314
    %v2506 = vunpack.c.h.b16 %v314
    %v2507 = vunpack.c.l.b16 %v315
    %v2508 = vunpack.c.h.b16 %v315
    %v2509 = vunpack.c.l.b16 %v316
    %v2510 = vunpack.c.h.b16 %v316
    %v2511 = vunpack.c.l.b16 %v317
    %v2512 = vunpack.c.h.b16 %v317
    %v2513 = vunpack.c.l.b16 %v318
    %v2514 = vunpack.c.h.b16 %v318
    %v2515 = vunpack.c.l.b16 %v319
    %v2516 = vunpack.c.h.b16 %v319
    %v2517 = vunpack.c.l.b16 %v320
    %v2518 = vunpack.c.h.b16 %v320
    %v2519 = vunpack.c.l.b16 %v321
    %v2520 = vunpack.c.h.b16 %v321
    %v2521 = vunpack.c.l.b16 %v322
    %v2522 = vunpack.c.h.b16 %v322
    %v2523 = vunpack.c.l.b16 %v323
    %v2524 = vunpack.c.h.b16 %v323
    %v2525 = vunpack.c.l.b16 %v324
    %v2526 = vunpack.c.h.b16 %v324
    %v2527 = vunpack.c.l.b16 %v325
    %v2528 = vunpack.c.h.b16 %v325
    %v2529 = vunpack.c.l.b16 %v326
    %v2530 = vunpack.c.h.b16 %v326
    %v2531 = vunpack.c.l.b16 %v327
    %v2532 = vunpack.c.h.b16 %v327
    %v2533 = vunpack.c.l.b16 %v328
    %v2534 = vunpack.c.h.b16 %v328
    %v2535 = vunpack.c.l.b16 %v329
    %v2536 = vunpack.c.h.b16 %v329
    %v2537 = vunpack.c.l.b16 %v330
    %v2538 = vunpack.c.h.b16 %v330
    %v2539 = vunpack.c.l.b16 %v331
    %v2540 = vunpack.c.h.b16 %v331
    %v2541 = vunpack.c.l.b16 %v332
    %v2542 = vunpack.c.h.b16 %v332
    %v2543 = vunpack.c.l.b16 %v333
    %v2544 = vunpack.c.h.b16 %v333
    %v2545 = vunpack.c.l.b16 %v334
    %v2546 = vunpack.c.h.b16 %v334
    %v2547 = vunpack.c.l.b16 %v335
    %v2548 = vunpack.c.h.b16 %v335
    %v2549 = vunpack.c.l.b16 %v336
    %v2550 = vunpack.c.h.b16 %v336
    %v2551 = vunpack.c.l.b16 %v337
    %v2552 = vunpack.c.h.b16 %v337
    %v2553 = vunpack.c.l.b16 %v338
    %v2554 = vunpack.c.h.b16 %v338
    %v2555 = vunpack.c.l.b16 %v339
    %v2556 = vunpack.c.h.b16 %v339
    %v2557 = vunpack.c.l.b16 %v340
    %v2558 = vunpack.c.h.b16 %v340
    %v2559 = vunpack.c.l.b16 %v341
    %v2560 = vunpack.c.h.b16 %v341
    %v2561 = vunpack.c.l.b16 %v342
    %v2562 = vunpack.c.h.b16 %v342
    %v2563 = vunpack.c.l.b16 %v343
    %v2564 = vunpack.c.h.b16 %v343
    %v2565 = vunpack.c.l.b16 %v344
    %v2566 = vunpack.c.h.b16 %v344
    %v2567 = vunpack.c.l.b16 %v345
    %v2568 = vunpack.c.h.b16 %v345
    %v2569 = vunpack.c.l.b16 %v346
    %v2570 = vunpack.c.h.b16 %v346
    %v2571 = vunpack.c.l.b16 %v347
    %v2572 = vunpack.c.h.b16 %v347
    %v2573 = vunpack.c.l.b16 %v348
    %v2574 = vunpack.c.h.b16 %v348
    %v2575 = vunpack.c.l.b16 %v349
    %v2576 = vunpack.c.h.b16 %v349
    %v2577 = vunpack.c.l.b16 %v350
    %v2578 = vunpack.c.h.b16 %v350
    %v2579 = vunpack.c.l.b16 %v351
    %v2580 = vunpack.c.h.b16 %v351
    %v2581 = vunpack.c.l.b16 %v352
    %v2582 = vunpack.c.h.b16 %v352
    %v2583 = vunpack.c.l.b16 %v353
    %v2584 = vunpack.c.h.b16 %v353
    %v2585 = vunpack.c.l.b16 %v354
    %v2586 = vunpack.c.h.b16 %v354
    %v2587 = vunpack.c.l.b16 %v355
    %v2588 = vunpack.c.h.b16 %v355
    %v2589 = vunpack.c.l.b16 %v356
    %v2590 = vunpack.c.h.b16 %v356
    %v2591 = vunpack.c.l.b16 %v357
    %v2592 = vunpack.c.h.b16 %v357
    %v2593 = vunpack.c.l.b16 %v358
    %v2594 = vunpack.c.h.b16 %v358
    %v2595 = vunpack.c.l.b16 %v359
    %v2596 = vunpack.c.h.b16 %v359
    %v2597 = vunpack.c.l.b16 %v360
    %v2598 = vunpack.c.h.b16 %v360
    %v2599 = vunpack.c.l.b16 %v361
    %v2600 = vunpack.c.h.b16 %v361
    %v2601 = vunpack.c.l.b16 %v362
    %v2602 = vunpack.c.h.b16 %v362
    %v2603 = vunpack.c.l.b16 %v363
    %v2604 = vunpack.c.h.b16 %v363
    %v2605 = vunpack.c.l.b16 %v364
    %v2606 = vunpack.c.h.b16 %v364
    %v2607 = vunpack.c.l.b16 %v365
    %v2608 = vunpack.c.h.b16 %v365
    %v2609 = vunpack.c.l.b16 %v366
    %v2610 = vunpack.c.h.b16 %v366
    %v2611 = vunpack.c.l.b16 %v367
    %v2612 = vunpack.c.h.b16 %v367
    %v2613 = vunpack.c.l.b16 %v368
    %v2614 = vunpack.c.h.b16 %v368
    %v2615 = vunpack.c.l.b16 %v369
    %v2616 = vunpack.c.h.b16 %v369
    %v2617 = vunpack.c.l.b16 %v370
    %v2618 = vunpack.c.h.b16 %v370
    %v2619 = vunpack.c.l.b16 %v371
    %v2620 = vunpack.c.h.b16 %v371
    %v2621 = vunpack.c.l.b16 %v372
    %v2622 = vunpack.c.h.b16 %v372
    %v2623 = vunpack.c.l.b16 %v373
    %v2624 = vunpack.c.h.b16 %v373
    %v2625 = vunpack.c.l.b16 %v374
    %v2626 = vunpack.c.h.b16 %v374
    %v2627 = vunpack.c.l.b16 %v375
    %v2628 = vunpack.c.h.b16 %v375
    %v2629 = vunpack.c.l.b16 %v376
    %v2630 = vunpack.c.h.b16 %v376
    %v2631 = vunpack.c.l.b16 %v377
    %v2632 = vunpack.c.h.b16 %v377
    %v2633 = vunpack.c.l.b16 %v378
    %v2634 = vunpack.c.h.b16 %v378
    %v2635 = vunpack.c.l.b16 %v379
    %v2636 = vunpack.c.h.b16 %v379
    %v2637 = vunpack.c.l.b16 %v380
    %v2638 = vunpack.c.h.b16 %v380
    %v2639 = vunpack.c.l.b16 %v381
    %v2640 = vunpack.c.h.b16 %v381
    %v2641 = vunpack.c.l.b16 %v382
    %v2642 = vunpack.c.h.b16 %v382
    %v2643 = vunpack.c.l.b16 %v383
    %v2644 = vunpack.c.h.b16 %v383
    %v2645 = vunpack.c.l.b16 %v384
    %v2646 = vunpack.c.h.b16 %v384
    %v2647 = vunpack.c.l.b16 %v385
    %v2648 = vunpack.c.h.b16 %v385
    %v2649 = vunpack.c.l.b16 %v386
    %v2650 = vunpack.c.h.b16 %v386
    %v2651 = vunpack.c.l.b16 %v387
    %v2652 = vunpack.c.h.b16 %v387
    %v2653 = vunpack.c.l.b16 %v388
    %v2654 = vunpack.c.h.b16 %v388
    %v2655 = vunpack.c.l.b16 %v389
    %v2656 = vunpack.c.h.b16 %v389
    %v2657 = vunpack.c.l.b16 %v390
    %v2658 = vunpack.c.h.b16 %v390
    %v2659 = vunpack.c.l.b16 %v391
    %v2660 = vunpack.c.h.b16 %v391
    %v2661 = vunpack.c.l.b16 %v392
    %v2662 = vunpack.c.h.b16 %v392
    %v2663 = vunpack.c.l.b16 %v393
    %v2664 = vunpack.c.h.b16 %v393
    %v2665 = vunpack.c.l.b16 %v394
    %v2666 = vunpack.c.h.b16 %v394
    %v2667 = vunpack.c.l.b16 %v395
    %v2668 = vunpack.c.h.b16 %v395
    %v2669 = vunpack.c.l.b16 %v396
    %v2670 = vunpack.c.h.b16 %v396
    %v2671 = vunpack.c.l.b16 %v397
    %v2672 = vunpack.c.h.b16 %v397
    %v2673 = vunpack.c.l.b16 %v398
    %v2674 = vunpack.c.h.b16 %v398
    %v2675 = vunpack.c.l.b16 %v399
    %v2676 = vunpack.c.h.b16 %v399
    %v2677 = vunpack.c.l.b16 %v400
    %v2678 = vunpack.c.h.b16 %v400
    %v2679 = vunpack.c.l.b16 %v401
    %v2680 = vunpack.c.h.b16 %v401
    %v2681 = vunpack.c.l.b16 %v402
    %v2682 = vunpack.c.h.b16 %v402
    %v2683 = vunpack.c.l.b16 %v403
    %v2684 = vunpack.c.h.b16 %v403
    %v2685 = vunpack.c.l.b16 %v404
    %v2686 = vunpack.c.h.b16 %v404
    %v2687 = vunpack.c.l.b16 %v405
    %v2688 = vunpack.c.h.b16 %v405
    %v2689 = vunpack.c.l.b16 %v406
    %v2690 = vunpack.c.h.b16 %v406
    %v2691 = vunpack.c.l.b16 %v407
    %v2692 = vunpack.c.h.b16 %v407
    %v2693 = vunpack.c.l.b16 %v408
    %v2694 = vunpack.c.h.b16 %v408
    %v2695 = vunpack.c.l.b16 %v409
    %v2696 = vunpack.c.h.b16 %v409
    %v2697 = vunpack.c.l.b16 %v410
    %v2698 = vunpack.c.h.b16 %v410
    %v2699 = vunpack.c.l.b16 %v411
    %v2700 = vunpack.c.h.b16 %v411
    %v2701 = vunpack.c.l.b16 %v412
    %v2702 = vunpack.c.h.b16 %v412
    %v2703 = vunpack.c.l.b16 %v413
    %v2704 = vunpack.c.h.b16 %v413
    %v2705 = vunpack.c.l.b16 %v414
    %v2706 = vunpack.c.h.b16 %v414
    %v2707 = vunpack.c.l.b16 %v415
    %v2708 = vunpack.c.h.b16 %v415
    %v2709 = vunpack.c.l.b16 %v416
    %v2710 = vunpack.c.h.b16 %v416
    %v2711 = vunpack.c.l.b16 %v417
    %v2712 = vunpack.c.h.b16 %v417
    %v2713 = vunpack.c.l.b16 %v418
    %v2714 = vunpack.c.h.b16 %v418
    %v2715 = vunpack.c.l.b16 %v419
    %v2716 = vunpack.c.h.b16 %v419
    %v2717 = vunpack.c.l.b16 %v420
    %v2718 = vunpack.c.h.b16 %v420
    %v2719 = vunpack.c.l.b16 %v421
    %v2720 = vunpack.c.h.b16 %v421
    %v2721 = vunpack.c.l.b16 %v422
    %v2722 = vunpack.c.h.b16 %v422
    %v2723 = vunpack.c.l.b16 %v423
    %v2724 = vunpack.c.h.b16 %v423
    %v2725 = vunpack.c.l.b16 %v424
    %v2726 = vunpack.c.h.b16 %v424
    %v2727 = vunpack.c.l.b16 %v425
    %v2728 = vunpack.c.h.b16 %v425
    %v2729 = vunpack.c.l.b16 %v426
    %v2730 = vunpack.c.h.b16 %v426
    %v2731 = vunpack.c.l.b16 %v427
    %v2732 = vunpack.c.h.b16 %v427
    %v2733 = vunpack.c.l.b16 %v428
    %v2734 = vunpack.c.h.b16 %v428
    %v2735 = vunpack.c.l.b16 %v429
    %v2736 = vunpack.c.h.b16 %v429
    %v2737 = vunpack.c.l.b16 %v430
    %v2738 = vunpack.c.h.b16 %v430
    %v2739 = vunpack.c.l.b16 %v431
    %v2740 = vunpack.c.h.b16 %v431
    %v2741 = vunpack.c.l.b16 %v432
    %v2742 = vunpack.c.h.b16 %v432
    %v2743 = vunpack.c.l.b16 %v433
    %v2744 = vunpack.c.h.b16 %v433
    %v2745 = vunpack.c.l.b16 %v434
    %v2746 = vunpack.c.h.b16 %v434
    %v2747 = vunpack.c.l.b16 %v435
    %v2748 = vunpack.c.h.b16 %v435
    %v2749 = vunpack.c.l.b16 %v436
    %v2750 = vunpack.c.h.b16 %v436
    %v2751 = vunpack.c.l.b16 %v437
    %v2752 = vunpack.c.h.b16 %v437
    %v2753 = vunpack.c.l.b16 %v438
    %v2754 = vunpack.c.h.b16 %v438
    %v2755 = vunpack.c.l.b16 %v439
    %v2756 = vunpack.c.h.b16 %v439
    %v2757 = vunpack.c.l.b16 %v440
    %v2758 = vunpack.c.h.b16 %v440
    %v2759 = vunpack.c.l.b16 %v441
    %v2760 = vunpack.c.h.b16 %v441
    %v2761 = vunpack.c.l.b16 %v442
    %v2762 = vunpack.c.h.b16 %v442
    %v2763 = vunpack.c.l.b16 %v443
    %v2764 = vunpack.c.h.b16 %v443
    %v2765 = vunpack.c.l.b16 %v444
    %v2766 = vunpack.c.h.b16 %v444
    %v2767 = vunpack.c.l.b16 %v445
    %v2768 = vunpack.c.h.b16 %v445
    %v2769 = vunpack.c.l.b16 %v446
    %v2770 = vunpack.c.h.b16 %v446
    %v2771 = vunpack.c.l.b16 %v447
    %v2772 = vunpack.c.h.b16 %v447
    %v2773 = vunpack.c.l.b16 %v448
    %v2774 = vunpack.c.h.b16 %v448
    %v2775 = vunpack.c.l.b16 %v449
    %v2776 = vunpack.c.h.b16 %v449
    %v2777 = vunpack.c.l.b16 %v450
    %v2778 = vunpack.c.h.b16 %v450
    %v2779 = vunpack.c.l.b16 %v451
    %v2780 = vunpack.c.h.b16 %v451
    %v2781 = vunpack.c.l.b16 %v452
    %v2782 = vunpack.c.h.b16 %v452
    %v2783 = vunpack.c.l.b16 %v453
    %v2784 = vunpack.c.h.b16 %v453
    %v2785 = vunpack.c.l.b16 %v454
    %v2786 = vunpack.c.h.b16 %v454
    %v2787 = vunpack.c.l.b16 %v455
    %v2788 = vunpack.c.h.b16 %v455
    %v2789 = vunpack.c.l.b16 %v456
    %v2790 = vunpack.c.h.b16 %v456
    %v2791 = vunpack.c.l.b16 %v457
    %v2792 = vunpack.c.h.b16 %v457
    %v2793 = vunpack.c.l.b16 %v458
    %v2794 = vunpack.c.h.b16 %v458
    %v2795 = vunpack.c.l.b16 %v459
    %v2796 = vunpack.c.h.b16 %v459
    %v2797 = vunpack.c.l.b16 %v460
    %v2798 = vunpack.c.h.b16 %v460
    %v2799 = vunpack.c.l.b16 %v461
    %v2800 = vunpack.c.h.b16 %v461
    %v2801 = vunpack.c.l.b16 %v462
    %v2802 = vunpack.c.h.b16 %v462
    %v2803 = vunpack.c.l.b16 %v463
    %v2804 = vunpack.c.h.b16 %v463
    %v2805 = vunpack.c.l.b16 %v464
    %v2806 = vunpack.c.h.b16 %v464
    %v2807 = vunpack.c.l.b16 %v465
    %v2808 = vunpack.c.h.b16 %v465
    %v2809 = vunpack.c.l.b16 %v466
    %v2810 = vunpack.c.h.b16 %v466
    %v2811 = vunpack.c.l.b16 %v467
    %v2812 = vunpack.c.h.b16 %v467
    %v2813 = vunpack.c.l.b16 %v468
    %v2814 = vunpack.c.h.b16 %v468
    %v2815 = vunpack.c.l.b16 %v469
    %v2816 = vunpack.c.h.b16 %v469
    %v2817 = vunpack.c.l.b16 %v470
    %v2818 = vunpack.c.h.b16 %v470
    %v2819 = vunpack.c.l.b16 %v471
    %v2820 = vunpack.c.h.b16 %v471
    %v2821 = vunpack.c.l.b16 %v472
    %v2822 = vunpack.c.h.b16 %v472
    %v2823 = vunpack.c.l.b16 %v473
    %v2824 = vunpack.c.h.b16 %v473
    %v2825 = vunpack.c.l.b16 %v474
    %v2826 = vunpack.c.h.b16 %v474
    %v2827 = vunpack.c.l.b16 %v475
    %v2828 = vunpack.c.h.b16 %v475
    %v2829 = vunpack.c.l.b16 %v476
    %v2830 = vunpack.c.h.b16 %v476
    %v2831 = vunpack.c.l.b16 %v477
    %v2832 = vunpack.c.h.b16 %v477
    %v2833 = vunpack.c.l.b16 %v478
    %v2834 = vunpack.c.h.b16 %v478
    %v2835 = vunpack.c.l.b16 %v479
    %v2836 = vunpack.c.h.b16 %v479
    %v2837 = vunpack.c.l.b16 %v480
    %v2838 = vunpack.c.h.b16 %v480
    %v2839 = vunpack.c.l.b16 %v481
    %v2840 = vunpack.c.h.b16 %v481
    %v2841 = vunpack.c.l.b16 %v482
    %v2842 = vunpack.c.h.b16 %v482
    %v2843 = vunpack.c.l.b16 %v483
    %v2844 = vunpack.c.h.b16 %v483
    %v2845 = vunpack.c.l.b16 %v484
    %v2846 = vunpack.c.h.b16 %v484
    %v2847 = vunpack.c.l.b16 %v485
    %v2848 = vunpack.c.h.b16 %v485
    %v2849 = vunpack.c.l.b16 %v486
    %v2850 = vunpack.c.h.b16 %v486
    %v2851 = vunpack.c.l.b16 %v487
    %v2852 = vunpack.c.h.b16 %v487
    %v2853 = vunpack.c.l.b16 %v488
    %v2854 = vunpack.c.h.b16 %v488
    %v2855 = vunpack.c.l.b16 %v489
    %v2856 = vunpack.c.h.b16 %v489
    %v2857 = vunpack.c.l.b16 %v490
    %v2858 = vunpack.c.h.b16 %v490
    %v2859 = vunpack.c.l.b16 %v491
    %v2860 = vunpack.c.h.b16 %v491
    %v2861 = vunpack.c.l.b16 %v492
    %v2862 = vunpack.c.h.b16 %v492
    %v2863 = vunpack.c.l.b16 %v493
    %v2864 = vunpack.c.h.b16 %v493
    %v2865 = vunpack.c.l.b16 %v494
    %v2866 = vunpack.c.h.b16 %v494
    %v2867 = vunpack.c.l.b16 %v495
    %v2868 = vunpack.c.h.b16 %v495
    %v2869 = vunpack.c.l.b16 %v496
    %v2870 = vunpack.c.h.b16 %v496
    %v2871 = vunpack.c.l.b16 %v497
    %v2872 = vunpack.c.h.b16 %v497
    %v2873 = vunpack.c.l.b16 %v498
    %v2874 = vunpack.c.h.b16 %v498
    %v2875 = vunpack.c.l.b16 %v499
    %v2876 = vunpack.c.h.b16 %v499
    %v2877 = vunpack.c.l.b16 %v500
    %v2878 = vunpack.c.h.b16 %v500
    %v2879 = vunpack.c.l.b16 %v501
    %v2880 = vunpack.c.h.b16 %v501
    %v2881 = vunpack.c.l.b16 %v502
    %v2882 = vunpack.c.h.b16 %v502
    %v2883 = vunpack.c.l.b16 %v503
    %v2884 = vunpack.c.h.b16 %v503
    %v2885 = vunpack.c.l.b16 %v504
    %v2886 = vunpack.c.h.b16 %v504
    %v2887 = vunpack.c.l.b16 %v505
    %v2888 = vunpack.c.h.b16 %v505
    %v2889 = vunpack.c.l.b16 %v506
    %v2890 = vunpack.c.h.b16 %v506
    %v2891 = vunpack.c.l.b16 %v507
    %v2892 = vunpack.c.h.b16 %v507
    %v2893 = vunpack.c.l.b16 %v508
    %v2894 = vunpack.c.h.b16 %v508
    %v2895 = vunpack.c.l.b16 %v509
    %v2896 = vunpack.c.h.b16 %v509
    %v2897 = vunpack.c.l.b16 %v510
    %v2898 = vunpack.c.h.b16 %v510
    %v2899 = vunpack.c.l.b16 %v511
    %v2900 = vunpack.c.h.b16 %v511
    %v2901 = vunpack.c.l.b16 %v512
    %v2902 = vunpack.c.h.b16 %v512
    %v2903 = vunpack.c.l.b16 %v513
    %v2904 = vunpack.c.h.b16 %v513
    %v2905 = vunpack.c.l.b16 %v514
    %v2906 = vunpack.c.h.b16 %v514
    %v2907 = vunpack.c.l.b16 %v515
    %v2908 = vunpack.c.h.b16 %v515
    %v2909 = vunpack.c.l.b16 %v516
    %v2910 = vunpack.c.h.b16 %v516
    %v2911 = vunpack.c.l.b16 %v517
    %v2912 = vunpack.c.h.b16 %v517
    %v2913 = vunpack.c.l.b16 %v518
    %v2914 = vunpack.c.h.b16 %v518
    %v2915 = vunpack.c.l.b16 %v519
    %v2916 = vunpack.c.h.b16 %v519
    %v2917 = vunpack.c.l.b16 %v520
    %v2918 = vunpack.c.h.b16 %v520
    %v2919 = vunpack.c.l.b16 %v521
    %v2920 = vunpack.c.h.b16 %v521
    %v2921 = vunpack.c.l.b16 %v522
    %v2922 = vunpack.c.h.b16 %v522
    %v2923 = vunpack.c.l.b16 %v523
    %v2924 = vunpack.c.h.b16 %v523
    %v2925 = vunpack.c.l.b16 %v524
    %v2926 = vunpack.c.h.b16 %v524
    %v2927 = vunpack.c.l.b16 %v525
    %v2928 = vunpack.c.h.b16 %v525
    %v2929 = vunpack.c.l.b16 %v526
    %v2930 = vunpack.c.h.b16 %v526
    %v2931 = vunpack.c.l.b16 %v527
    %v2932 = vunpack.c.h.b16 %v527
    %v2933 = vunpack.c.l.b16 %v528
    %v2934 = vunpack.c.h.b16 %v528
    %v2935 = vunpack.c.l.b16 %v529
    %v2936 = vunpack.c.h.b16 %v529
    %v2937 = vunpack.c.l.b16 %v530
    %v2938 = vunpack.c.h.b16 %v530
    %v2939 = vunpack.c.l.b16 %v531
    %v2940 = vunpack.c.h.b16 %v531
    %v2941 = vunpack.c.l.b16 %v532
    %v2942 = vunpack.c.h.b16 %v532
    %v2943 = vunpack.c.l.b16 %v533
    %v2944 = vunpack.c.h.b16 %v533
    %v2945 = vunpack.c.l.b16 %v534
    %v2946 = vunpack.c.h.b16 %v534
    %v2947 = vunpack.c.l.b16 %v535
    %v2948 = vunpack.c.h.b16 %v535
    %v2949 = vunpack.c.l.b16 %v536
    %v2950 = vunpack.c.h.b16 %v536
    %v2951 = vunpack.c.l.b16 %v537
    %v2952 = vunpack.c.h.b16 %v537
    %v2953 = vunpack.c.l.b16 %v538
    %v2954 = vunpack.c.h.b16 %v538
    %v2955 = vunpack.c.l.b16 %v539
    %v2956 = vunpack.c.h.b16 %v539
    %v2957 = vunpack.c.l.b16 %v540
    %v2958 = vunpack.c.h.b16 %v540
    %v2959 = vunpack.c.l.b16 %v541
    %v2960 = vunpack.c.h.b16 %v541
    %v2961 = vunpack.c.l.b16 %v542
    %v2962 = vunpack.c.h.b16 %v542
    %v2963 = vunpack.c.l.b16 %v543
    %v2964 = vunpack.c.h.b16 %v543
    %v2965 = vunpack.c.l.b16 %v544
    %v2966 = vunpack.c.h.b16 %v544
    %v2967 = vunpack.c.l.b16 %v545
    %v2968 = vunpack.c.h.b16 %v545
    %v2969 = vunpack.c.l.b16 %v546
    %v2970 = vunpack.c.h.b16 %v546
    %v2971 = vunpack.c.l.b16 %v547
    %v2972 = vunpack.c.h.b16 %v547
    %v2973 = vunpack.c.l.b16 %v548
    %v2974 = vunpack.c.h.b16 %v548
    %v2975 = vunpack.c.l.b16 %v549
    %v2976 = vunpack.c.h.b16 %v549
    %v2977 = vunpack.c.l.b16 %v550
    %v2978 = vunpack.c.h.b16 %v550
    %v2979 = vunpack.c.l.b16 %v551
    %v2980 = vunpack.c.h.b16 %v551
    %v2981 = vunpack.c.l.b16 %v552
    %v2982 = vunpack.c.h.b16 %v552
    %v2983 = vunpack.c.l.b16 %v553
    %v2984 = vunpack.c.h.b16 %v553
    %v2985 = vunpack.c.l.b16 %v554
    %v2986 = vunpack.c.h.b16 %v554
    %v2987 = vunpack.c.l.b16 %v555
    %v2988 = vunpack.c.h.b16 %v555
    %v2989 = vunpack.c.l.b16 %v556
    %v2990 = vunpack.c.h.b16 %v556
    %v2991 = vunpack.c.l.b16 %v557
    %v2992 = vunpack.c.h.b16 %v557
    %v2993 = vunpack.c.l.b16 %v558
    %v2994 = vunpack.c.h.b16 %v558
    %v2995 = vunpack.c.l.b16 %v559
    %v2996 = vunpack.c.h.b16 %v559
    %v2997 = vunpack.c.l.b16 %v560
    %v2998 = vunpack.c.h.b16 %v560
    %v2999 = vunpack.c.l.b16 %v561
    %v3000 = vunpack.c.h.b16 %v561
    %v3001 = vunpack.c.l.b16 %v562
    %v3002 = vunpack.c.h.b16 %v562
    %v3003 = vunpack.c.l.b16 %v563
    %v3004 = vunpack.c.h.b16 %v563
    %v3005 = vunpack.c.l.b16 %v564
    %v3006 = vunpack.c.h.b16 %v564
    %v3007 = vunpack.c.l.b16 %v565
    %v3008 = vunpack.c.h.b16 %v565
    %v3009 = vunpack.c.l.b16 %v566
    %v3010 = vunpack.c.h.b16 %v566
    %v3011 = vunpack.c.l.b16 %v567
    %v3012 = vunpack.c.h.b16 %v567
    %v3013 = vunpack.c.l.b16 %v568
    %v3014 = vunpack.c.h.b16 %v568
    %v3015 = vunpack.c.l.b16 %v569
    %v3016 = vunpack.c.h.b16 %v569
    %v3017 = vunpack.c.l.b16 %v570
    %v3018 = vunpack.c.h.b16 %v570
    %v3019 = vunpack.c.l.b16 %v571
    %v3020 = vunpack.c.h.b16 %v571
    %v3021 = vunpack.c.l.b16 %v572
    %v3022 = vunpack.c.h.b16 %v572
    %v3023 = vunpack.c.l.b16 %v573
    %v3024 = vunpack.c.h.b16 %v573
    %v3025 = vunpack.c.l.b16 %v574
    %v3026 = vunpack.c.h.b16 %v574
    %v3027 = vunpack.c.l.b16 %v575
    %v3028 = vunpack.c.h.b16 %v575
    %v3029 = vunpack.c.l.b16 %v576
    %v3030 = vunpack.c.h.b16 %v576
    %v3031 = vunpack.c.l.b16 %v577
    %v3032 = vunpack.c.h.b16 %v577
    %v3033 = vunpack.c.l.b16 %v578
    %v3034 = vunpack.c.h.b16 %v578
    %v3035 = vunpack.c.l.b16 %v579
    %v3036 = vunpack.c.h.b16 %v579
    %v3037 = vunpack.c.l.b16 %v580
    %v3038 = vunpack.c.h.b16 %v580
    %v3039 = vunpack.c.l.b16 %v581
    %v3040 = vunpack.c.h.b16 %v581
    %v3041 = vunpack.c.l.b16 %v582
    %v3042 = vunpack.c.h.b16 %v582
    %v3043 = vunpack.c.l.b16 %v583
    %v3044 = vunpack.c.h.b16 %v583
    %v3045 = vunpack.c.l.b16 %v584
    %v3046 = vunpack.c.h.b16 %v584
    %v3047 = vunpack.c.l.b16 %v585
    %v3048 = vunpack.c.h.b16 %v585
    %v3049 = vunpack.c.l.b16 %v586
    %v3050 = vunpack.c.h.b16 %v586
    %v3051 = vunpack.c.l.b16 %v587
    %v3052 = vunpack.c.h.b16 %v587
    %v3053 = vunpack.c.l.b16 %v588
    %v3054 = vunpack.c.h.b16 %v588
    %v3055 = vunpack.c.l.b16 %v589
    %v3056 = vunpack.c.h.b16 %v589
    %v3057 = vunpack.c.l.b16 %v590
    %v3058 = vunpack.c.h.b16 %v590
    %v3059 = vunpack.c.l.b16 %v591
    %v3060 = vunpack.c.h.b16 %v591
    %v3061 = vunpack.c.l.b16 %v592
    %v3062 = vunpack.c.h.b16 %v592
    %v3063 = vunpack.c.l.b16 %v593
    %v3064 = vunpack.c.h.b16 %v593
    %v3065 = vunpack.c.l.b16 %v594
    %v3066 = vunpack.c.h.b16 %v594
    %v3067 = vunpack.c.l.b16 %v595
    %v3068 = vunpack.c.h.b16 %v595
    %v3069 = vunpack.c.l.b16 %v596
    %v3070 = vunpack.c.h.b16 %v596
    %v3071 = vunpack.c.l.b16 %v597
    %v3072 = vunpack.c.h.b16 %v597
    %v3073 = vunpack.c.l.b16 %v598
    %v3074 = vunpack.c.h.b16 %v598
    %v3075 = vunpack.c.l.b16 %v599
    %v3076 = vunpack.c.h.b16 %v599
    %v3077 = vunpack.c.l.b16 %v600
    %v3078 = vunpack.c.h.b16 %v600
    %v3079 = vunpack.c.l.b16 %v601
    %v3080 = vunpack.c.h.b16 %v601
    %v3081 = vunpack.c.l.b16 %v602
    %v3082 = vunpack.c.h.b16 %v602
    %v3083 = vunpack.c.l.b16 %v603
    %v3084 = vunpack.c.h.b16 %v603
    %v3085 = vunpack.c.l.b16 %v604
    %v3086 = vunpack.c.h.b16 %v604
    %v3087 = vunpack.c.l.b16 %v605
    %v3088 = vunpack.c.h.b16 %v605
    %v3089 = vunpack.c.l.b16 %v606
    %v3090 = vunpack.c.h.b16 %v606
    %v3091 = vunpack.c.l.b16 %v607
    %v3092 = vunpack.c.h.b16 %v607
    %v3093 = vunpack.c.l.b16 %v608
    %v3094 = vunpack.c.h.b16 %v608
    %v3095 = vunpack.c.l.b16 %v609
    %v3096 = vunpack.c.h.b16 %v609
    %v3097 = vunpack.c.l.b16 %v610
    %v3098 = vunpack.c.h.b16 %v610
    %v3099 = vunpack.c.l.b16 %v611
    %v3100 = vunpack.c.h.b16 %v611
    %v3101 = vunpack.c.l.b16 %v612
    %v3102 = vunpack.c.h.b16 %v612
    %v3103 = vunpack.c.l.b16 %v613
    %v3104 = vunpack.c.h.b16 %v613
    %v3105 = vunpack.c.l.b16 %v614
    %v3106 = vunpack.c.h.b16 %v614
    %v3107 = vunpack.c.l.b16 %v615
    %v3108 = vunpack.c.h.b16 %v615
    %v3109 = vunpack.c.l.b16 %v616
    %v3110 = vunpack.c.h.b16 %v616
    %v3111 = vunpack.c.l.b16 %v617
    %v3112 = vunpack.c.h.b16 %v617
    %v3113 = vunpack.c.l.b16 %v618
    %v3114 = vunpack.c.h.b16 %v618
    %v3115 = vunpack.c.l.b16 %v619
    %v3116 = vunpack.c.h.b16 %v619
    %v3117 = vunpack.c.l.b16 %v620
    %v3118 = vunpack.c.h.b16 %v620
    %v3119 = vunpack.c.l.b16 %v621
    %v3120 = vunpack.c.h.b16 %v621
    %v3121 = vunpack.c.l.b16 %v622
    %v3122 = vunpack.c.h.b16 %v622
    %v3123 = vunpack.c.l.b16 %v623
    %v3124 = vunpack.c.h.b16 %v623
    %v3125 = vunpack.c.l.b16 %v624
    %v3126 = vunpack.c.h.b16 %v624
    %v3127 = vunpack.c.l.b16 %v625
    %v3128 = vunpack.c.h.b16 %v625
    %v3129 = vunpack.c.l.b16 %v626
    %v3130 = vunpack.c.h.b16 %v626
    %v3131 = vunpack.c.l.b16 %v627
    %v3132 = vunpack.c.h.b16 %v627
    %v3133 = vunpack.c.l.b16 %v628
    %v3134 = vunpack.c.h.b16 %v628
    %v3135 = vunpack.c.l.b16 %v629
    %v3136 = vunpack.c.h.b16 %v629
    %v3137 = vunpack.c.l.b16 %v630
    %v3138 = vunpack.c.h.b16 %v630
    %v3139 = vunpack.c.l.b16 %v631
    %v3140 = vunpack.c.h.b16 %v631
    %v3141 = vunpack.c.l.b16 %v632
    %v3142 = vunpack.c.h.b16 %v632
    %v3143 = vunpack.c.l.b16 %v633
    %v3144 = vunpack.c.h.b16 %v633
    %v3145 = vunpack.c.l.b16 %v634
    %v3146 = vunpack.c.h.b16 %v634
    %v3147 = vunpack.c.l.b16 %v635
    %v3148 = vunpack.c.h.b16 %v635
    %v3149 = vunpack.c.l.b16 %v636
    %v3150 = vunpack.c.h.b16 %v636
    %v3151 = vunpack.c.l.b16 %v637
    %v3152 = vunpack.c.h.b16 %v637
    %v3153 = vunpack.c.l.b16 %v638
    %v3154 = vunpack.c.h.b16 %v638
    %v3155 = vunpack.c.l.b16 %v639
    %v3156 = vunpack.c.h.b16 %v639
    %v3157 = vunpack.c.l.b16 %v640
    %v3158 = vunpack.c.h.b16 %v640
    %v3159 = vunpack.c.l.b16 %v641
    %v3160 = vunpack.c.h.b16 %v641
    %v3161 = vunpack.c.l.b16 %v642
    %v3162 = vunpack.c.h.b16 %v642
    %v3163 = vunpack.c.l.b16 %v643
    %v3164 = vunpack.c.h.b16 %v643
    %v3165 = vunpack.c.l.b16 %v644
    %v3166 = vunpack.c.h.b16 %v644
    %v3167 = vunpack.c.l.b16 %v645
    %v3168 = vunpack.c.h.b16 %v645
    %v3169 = vunpack.c.l.b16 %v646
    %v3170 = vunpack.c.h.b16 %v646
    %v3171 = vunpack.c.l.b16 %v647
    %v3172 = vunpack.c.h.b16 %v647
    %v3173 = vunpack.c.l.b16 %v648
    %v3174 = vunpack.c.h.b16 %v648
    %v3175 = vunpack.c.l.b16 %v649
    %v3176 = vunpack.c.h.b16 %v649
    %v3177 = vunpack.c.l.b16 %v650
    %v3178 = vunpack.c.h.b16 %v650
    %v3179 = vunpack.c.l.b16 %v651
    %v3180 = vunpack.c.h.b16 %v651
    %v3181 = vunpack.c.l.b16 %v652
    %v3182 = vunpack.c.h.b16 %v652
    %v3183 = vunpack.c.l.b16 %v653
    %v3184 = vunpack.c.h.b16 %v653
    %v3185 = vunpack.c.l.b16 %v654
    %v3186 = vunpack.c.h.b16 %v654
    %v3187 = vunpack.c.l.b16 %v655
    %v3188 = vunpack.c.h.b16 %v655
    %v3189 = vunpack.c.l.b16 %v656
    %v3190 = vunpack.c.h.b16 %v656
    %v3191 = vunpack.c.l.b16 %v657
    %v3192 = vunpack.c.h.b16 %v657
    %v3193 = vunpack.c.l.b16 %v658
    %v3194 = vunpack.c.h.b16 %v658
    %v3195 = vunpack.c.l.b16 %v659
    %v3196 = vunpack.c.h.b16 %v659
    %v3197 = vunpack.c.l.b16 %v660
    %v3198 = vunpack.c.h.b16 %v660
    %v3199 = vunpack.c.l.b16 %v661
    %v3200 = vunpack.c.h.b16 %v661
    %v3201 = vunpack.c.l.b16 %v662
    %v3202 = vunpack.c.h.b16 %v662
    %v3203 = vunpack.c.l.b16 %v663
    %v3204 = vunpack.c.h.b16 %v663
    %v3205 = vunpack.c.l.b16 %v664
    %v3206 = vunpack.c.h.b16 %v664
    %v3207 = vunpack.c.l.b16 %v665
    %v3208 = vunpack.c.h.b16 %v665
    %v3209 = vunpack.c.l.b16 %v666
    %v3210 = vunpack.c.h.b16 %v666
    %v3211 = vunpack.c.l.b16 %v667
    %v3212 = vunpack.c.h.b16 %v667
    %v3213 = vunpack.c.l.b16 %v668
    %v3214 = vunpack.c.h.b16 %v668
    %v3215 = vunpack.c.l.b16 %v669
    %v3216 = vunpack.c.h.b16 %v669
    %v3217 = vunpack.c.l.b16 %v670
    %v3218 = vunpack.c.h.b16 %v670
    %v3219 = vunpack.c.l.b16 %v671
    %v3220 = vunpack.c.h.b16 %v671
    %v3221 = vunpack.c.l.b16 %v672
    %v3222 = vunpack.c.h.b16 %v672
    %v3223 = vunpack.c.l.b16 %v673
    %v3224 = vunpack.c.h.b16 %v673
    %v3225 = vunpack.c.l.b16 %v674
    %v3226 = vunpack.c.h.b16 %v674
    %v3227 = vunpack.c.l.b16 %v675
    %v3228 = vunpack.c.h.b16 %v675
    %v3229 = vunpack.c.l.b16 %v676
    %v3230 = vunpack.c.h.b16 %v676
    %v3231 = vunpack.c.l.b16 %v677
    %v3232 = vunpack.c.h.b16 %v677
    %v3233 = vunpack.c.l.b16 %v678
    %v3234 = vunpack.c.h.b16 %v678
    %v3235 = vunpack.c.l.b16 %v679
    %v3236 = vunpack.c.h.b16 %v679
    %v3237 = vunpack.c.l.b16 %v680
    %v3238 = vunpack.c.h.b16 %v680
    %v3239 = vunpack.c.l.b16 %v681
    %v3240 = vunpack.c.h.b16 %v681
    %v3241 = vunpack.c.l.b16 %v682
    %v3242 = vunpack.c.h.b16 %v682
    %v3243 = vunpack.c.l.b16 %v683
    %v3244 = vunpack.c.h.b16 %v683
    %v3245 = vunpack.c.l.b16 %v684
    %v3246 = vunpack.c.h.b16 %v684
    %v3247 = vunpack.c.l.b16 %v685
    %v3248 = vunpack.c.h.b16 %v685
    %v3249 = vunpack.c.l.b16 %v686
    %v3250 = vunpack.c.h.b16 %v686
    %v3251 = vunpack.c.l.b16 %v687
    %v3252 = vunpack.c.h.b16 %v687
    %v3253 = vunpack.c.l.b16 %v688
    %v3254 = vunpack.c.h.b16 %v688
    %v3255 = vunpack.c.l.b16 %v689
    %v3256 = vunpack.c.h.b16 %v689
    %v3257 = vunpack.c.l.b16 %v690
    %v3258 = vunpack.c.h.b16 %v690
    %v3259 = vunpack.c.l.b16 %v691
    %v3260 = vunpack.c.h.b16 %v691
    %v3261 = vunpack.c.l.b16 %v692
    %v3262 = vunpack.c.h.b16 %v692
    %v3263 = vunpack.c.l.b16 %v693
    %v3264 = vunpack.c.h.b16 %v693
    %v3265 = vunpack.c.l.b16 %v694
    %v3266 = vunpack.c.h.b16 %v694
    %v3267 = vunpack.c.l.b16 %v695
    %v3268 = vunpack.c.h.b16 %v695
    %v3269 = vunpack.c.l.b16 %v696
    %v3270 = vunpack.c.h.b16 %v696
    %v3271 = vunpack.c.l.b16 %v697
    %v3272 = vunpack.c.h.b16 %v697
    %v3273 = vunpack.c.l.b16 %v698
    %v3274 = vunpack.c.h.b16 %v698
    %v3275 = vunpack.c.l.b16 %v699
    %v3276 = vunpack.c.h.b16 %v699
    %v3277 = vunpack.c.l.b16 %v700
    %v3278 = vunpack.c.h.b16 %v700
    %v3279 = vunpack.c.l.b16 %v701
    %v3280 = vunpack.c.h.b16 %v701
    %v3281 = vunpack.c.l.b16 %v702
    %v3282 = vunpack.c.h.b16 %v702
    %v3283 = vunpack.c.l.b16 %v703
    %v3284 = vunpack.c.h.b16 %v703
    %v3285 = vunpack.c.l.b16 %v704
    %v3286 = vunpack.c.h.b16 %v704
    %v3287 = vunpack.c.l.b16 %v705
    %v3288 = vunpack.c.h.b16 %v705
    %v3289 = vunpack.c.l.b16 %v706
    %v3290 = vunpack.c.h.b16 %v706
    %v3291 = vunpack.c.l.b16 %v707
    %v3292 = vunpack.c.h.b16 %v707
    %v3293 = vunpack.c.l.b16 %v708
    %v3294 = vunpack.c.h.b16 %v708
    %v3295 = vunpack.c.l.b16 %v709
    %v3296 = vunpack.c.h.b16 %v709
    %v3297 = vunpack.c.l.b16 %v710
    %v3298 = vunpack.c.h.b16 %v710
    %v3299 = vunpack.c.l.b16 %v711
    %v3300 = vunpack.c.h.b16 %v711
    %v3301 = vunpack.c.l.b16 %v712
    %v3302 = vunpack.c.h.b16 %v712
    %v3303 = vunpack.c.l.b16 %v713
    %v3304 = vunpack.c.h.b16 %v713
    %v3305 = vunpack.c.l.b16 %v714
    %v3306 = vunpack.c.h.b16 %v714
    %v3307 = vunpack.c.l.b16 %v715
    %v3308 = vunpack.c.h.b16 %v715
    %v3309 = vunpack.c.l.b16 %v716
    %v3310 = vunpack.c.h.b16 %v716
    %v3311 = vunpack.c.l.b16 %v717
    %v3312 = vunpack.c.h.b16 %v717
    %v3313 = vunpack.c.l.b16 %v718
    %v3314 = vunpack.c.h.b16 %v718
    %v3315 = vunpack.c.l.b16 %v719
    %v3316 = vunpack.c.h.b16 %v719
    %v3317 = vunpack.c.l.b16 %v720
    %v3318 = vunpack.c.h.b16 %v720
    %v3319 = vunpack.c.l.b16 %v721
    %v3320 = vunpack.c.h.b16 %v721
    %v3321 = vunpack.c.l.b16 %v722
    %v3322 = vunpack.c.h.b16 %v722
    %v3323 = vunpack.c.l.b16 %v723
    %v3324 = vunpack.c.h.b16 %v723
    %v3325 = vunpack.c.l.b16 %v724
    %v3326 = vunpack.c.h.b16 %v724
    %v3327 = vunpack.c.l.b16 %v725
    %v3328 = vunpack.c.h.b16 %v725
    %v3329 = vunpack.c.l.b16 %v726
    %v3330 = vunpack.c.h.b16 %v726
    %v3331 = vunpack.c.l.b16 %v727
    %v3332 = vunpack.c.h.b16 %v727
    %v3333 = vunpack.c.l.b16 %v728
    %v3334 = vunpack.c.h.b16 %v728
    %v3335 = vunpack.c.l.b16 %v729
    %v3336 = vunpack.c.h.b16 %v729
    %v3337 = vunpack.c.l.b16 %v730
    %v3338 = vunpack.c.h.b16 %v730
    %v3339 = vunpack.c.l.b16 %v731
    %v3340 = vunpack.c.h.b16 %v731
    %v3341 = vunpack.c.l.b16 %v732
    %v3342 = vunpack.c.h.b16 %v732
    %v3343 = vunpack.c.l.b16 %v733
    %v3344 = vunpack.c.h.b16 %v733
    %v3345 = vunpack.c.l.b16 %v734
    %v3346 = vunpack.c.h.b16 %v734
    %v3347 = vunpack.c.l.b16 %v735
    %v3348 = vunpack.c.h.b16 %v735
    %v3349 = vunpack.c.l.b16 %v736
    %v3350 = vunpack.c.h.b16 %v736
    %v3351 = vunpack.c.l.b16 %v737
    %v3352 = vunpack.c.h.b16 %v737
    %v3353 = vunpack.c.l.b16 %v738
    %v3354 = vunpack.c.h.b16 %v738
    %v3355 = vunpack.c.l.b16 %v739
    %v3356 = vunpack.c.h.b16 %v739
    %v3357 = vunpack.c.l.b16 %v740
    %v3358 = vunpack.c.h.b16 %v740
    %v3359 = vunpack.c.l.b16 %v741
    %v3360 = vunpack.c.h.b16 %v741
    %v3361 = vunpack.c.l.b16 %v742
    %v3362 = vunpack.c.h.b16 %v742
    %v3363 = vunpack.c.l.b16 %v743
    %v3364 = vunpack.c.h.b16 %v743
    %v3365 = vunpack.c.l.b16 %v744
    %v3366 = vunpack.c.h.b16 %v744
    %v3367 = vunpack.c.l.b16 %v745
    %v3368 = vunpack.c.h.b16 %v745
    %v3369 = vunpack.c.l.b16 %v746
    %v3370 = vunpack.c.h.b16 %v746
    %v3371 = vunpack.c.l.b16 %v747
    %v3372 = vunpack.c.h.b16 %v747
    %v3373 = vunpack.c.l.b16 %v748
    %v3374 = vunpack.c.h.b16 %v748
    %v3375 = vunpack.c.l.b16 %v749
    %v3376 = vunpack.c.h.b16 %v749
    %v3377 = vunpack.c.l.b16 %v750
    %v3378 = vunpack.c.h.b16 %v750
    %v3379 = vunpack.c.l.b16 %v751
    %v3380 = vunpack.c.h.b16 %v751
    %v3381 = vunpack.c.l.b16 %v752
    %v3382 = vunpack.c.h.b16 %v752
    %v3383 = vunpack.c.l.b16 %v753
    %v3384 = vunpack.c.h.b16 %v753
    %v3385 = vunpack.c.l.b16 %v754
    %v3386 = vunpack.c.h.b16 %v754
    %v3387 = vunpack.c.l.b16 %v755
    %v3388 = vunpack.c.h.b16 %v755
    %v3389 = vunpack.c.l.b16 %v756
    %v3390 = vunpack.c.h.b16 %v756
    %v3391 = vunpack.c.l.b16 %v757
    %v3392 = vunpack.c.h.b16 %v757
    %v3393 = vunpack.c.l.b16 %v758
    %v3394 = vunpack.c.h.b16 %v758
    %v3395 = vunpack.c.l.b16 %v759
    %v3396 = vunpack.c.h.b16 %v759
    %v3397 = vunpack.c.l.b16 %v760
    %v3398 = vunpack.c.h.b16 %v760
    %v3399 = vunpack.c.l.b16 %v761
    %v3400 = vunpack.c.h.b16 %v761
    %v3401 = vunpack.c.l.b16 %v762
    %v3402 = vunpack.c.h.b16 %v762
    %v3403 = vunpack.c.l.b16 %v763
    %v3404 = vunpack.c.h.b16 %v763
    %v3405 = vunpack.c.l.b16 %v764
    %v3406 = vunpack.c.h.b16 %v764
    %v3407 = vunpack.c.l.b16 %v765
    %v3408 = vunpack.c.h.b16 %v765
    %v3409 = vunpack.c.l.b16 %v766
    %v3410 = vunpack.c.h.b16 %v766
    %v3411 = vunpack.c.l.b16 %v767
    %v3412 = vunpack.c.h.b16 %v767
    %v3413 = vunpack.c.l.b16 %v768
    %v3414 = vunpack.c.h.b16 %v768
    %v3415 = vunpack.c.l.b16 %v769
    %v3416 = vunpack.c.h.b16 %v769
    %v3417 = vunpack.c.l.b16 %v770
    %v3418 = vunpack.c.h.b16 %v770
    %v3419 = vunpack.c.l.b16 %v771
    %v3420 = vunpack.c.h.b16 %v771
    %v3421 = vunpack.c.l.b16 %v772
    %v3422 = vunpack.c.h.b16 %v772
    %v3423 = vunpack.c.l.b16 %v773
    %v3424 = vunpack.c.h.b16 %v773
    %v3425 = vunpack.c.l.b16 %v774
    %v3426 = vunpack.c.h.b16 %v774
    %v3427 = vunpack.c.l.b16 %v775
    %v3428 = vunpack.c.h.b16 %v775
    %v3429 = vunpack.c.l.b16 %v776
    %v3430 = vunpack.c.h.b16 %v776
    %v3431 = vunpack.c.l.b16 %v777
    %v3432 = vunpack.c.h.b16 %v777
    %v3433 = vunpack.c.l.b16 %v778
    %v3434 = vunpack.c.h.b16 %v778
    %v3435 = vunpack.c.l.b16 %v779
    %v3436 = vunpack.c.h.b16 %v779
    %v3437 = vunpack.c.l.b16 %v780
    %v3438 = vunpack.c.h.b16 %v780
    %v3439 = vunpack.c.l.b16 %v781
    %v3440 = vunpack.c.h.b16 %v781
    %v3441 = vunpack.c.l.b16 %v782
    %v3442 = vunpack.c.h.b16 %v782
    %v3443 = vunpack.c.l.b16 %v783
    %v3444 = vunpack.c.h.b16 %v783
    %v3445 = vunpack.c.l.b16 %v784
    %v3446 = vunpack.c.h.b16 %v784
    %v3447 = vunpack.c.l.b16 %v785
    %v3448 = vunpack.c.h.b16 %v785
    %v3449 = vunpack.c.l.b16 %v786
    %v3450 = vunpack.c.h.b16 %v786
    %v3451 = vunpack.c.l.b16 %v787
    %v3452 = vunpack.c.h.b16 %v787
    %v3453 = vunpack.c.l.b16 %v788
    %v3454 = vunpack.c.h.b16 %v788
    %v3455 = vunpack.c.l.b16 %v789
    %v3456 = vunpack.c.h.b16 %v789
    %v3457 = vunpack.c.l.b16 %v790
    %v3458 = vunpack.c.h.b16 %v790
    %v3459 = vunpack.c.l.b16 %v791
    %v3460 = vunpack.c.h.b16 %v791
    %v3461 = vunpack.c.l.b16 %v792
    %v3462 = vunpack.c.h.b16 %v792
    %v3463 = vunpack.c.l.b16 %v793
    %v3464 = vunpack.c.h.b16 %v793
    %v3465 = vunpack.c.l.b16 %v794
    %v3466 = vunpack.c.h.b16 %v794
    %v3467 = vunpack.c.l.b16 %v795
    %v3468 = vunpack.c.h.b16 %v795
    %v3469 = vunpack.c.l.b16 %v796
    %v3470 = vunpack.c.h.b16 %v796
    %v3471 = vunpack.c.l.b16 %v797
    %v3472 = vunpack.c.h.b16 %v797
    %v3473 = vunpack.c.l.b16 %v798
    %v3474 = vunpack.c.h.b16 %v798
    %v3475 = vunpack.c.l.b16 %v799
    %v3476 = vunpack.c.h.b16 %v799
    %v3477 = vunpack.c.l.b16 %v800
    %v3478 = vunpack.c.h.b16 %v800
    %v3479 = vunpack.c.l.b16 %v801
    %v3480 = vunpack.c.h.b16 %v801
    %v3481 = vunpack.c.l.b16 %v802
    %v3482 = vunpack.c.h.b16 %v802
    %v3483 = vunpack.c.l.b16 %v803
    %v3484 = vunpack.c.h.b16 %v803
    %v3485 = vunpack.c.l.b16 %v804
    %v3486 = vunpack.c.h.b16 %v804
    %v3487 = vunpack.c.l.b16 %v805
    %v3488 = vunpack.c.h.b16 %v805
    %v3489 = vunpack.c.l.b16 %v806
    %v3490 = vunpack.c.h.b16 %v806
    %v3491 = vunpack.c.l.b16 %v807
    %v3492 = vunpack.c.h.b16 %v807
    %v3493 = vunpack.c.l.b16 %v808
    %v3494 = vunpack.c.h.b16 %v808
    %v3495 = vunpack.c.l.b16 %v809
    %v3496 = vunpack.c.h.b16 %v809
    %v3497 = vunpack.c.l.b16 %v810
    %v3498 = vunpack.c.h.b16 %v810
    %v3499 = vunpack.c.l.b16 %v811
    %v3500 = vunpack.c.h.b16 %v811
    %v3501 = vunpack.c.l.b16 %v812
    %v3502 = vunpack.c.h.b16 %v812
    %v3503 = vunpack.c.l.b16 %v813
    %v3504 = vunpack.c.h.b16 %v813
    %v3505 = vunpack.c.l.b16 %v814
    %v3506 = vunpack.c.h.b16 %v814
    %v3507 = vunpack.c.l.b16 %v815
    %v3508 = vunpack.c.h.b16 %v815
    %v3509 = vunpack.c.l.b16 %v816
    %v3510 = vunpack.c.h.b16 %v816
    %v3511 = vunpack.c.l.b16 %v817
    %v3512 = vunpack.c.h.b16 %v817
    %v3513 = vunpack.c.l.b16 %v818
    %v3514 = vunpack.c.h.b16 %v818
    %v3515 = vunpack.c.l.b16 %v819
    %v3516 = vunpack.c.h.b16 %v819
    %v3517 = vunpack.c.l.b16 %v820
    %v3518 = vunpack.c.h.b16 %v820
    %v3519 = vunpack.c.l.b16 %v821
    %v3520 = vunpack.c.h.b16 %v821
    %v3521 = vunpack.c.l.b16 %v822
    %v3522 = vunpack.c.h.b16 %v822
    %v3523 = vunpack.c.l.b16 %v823
    %v3524 = vunpack.c.h.b16 %v823
    %v3525 = vunpack.c.l.b16 %v824
    %v3526 = vunpack.c.h.b16 %v824
    %v3527 = vunpack.c.l.b16 %v825
    %v3528 = vunpack.c.h.b16 %v825
    %v3529 = vunpack.c.l.b16 %v826
    %v3530 = vunpack.c.h.b16 %v826
    %v3531 = vunpack.c.l.b16 %v827
    %v3532 = vunpack.c.h.b16 %v827
    %v3533 = vunpack.c.l.b16 %v828
    %v3534 = vunpack.c.h.b16 %v828
    %v3535 = vunpack.c.l.b16 %v829
    %v3536 = vunpack.c.h.b16 %v829
    %v3537 = vunpack.c.l.b16 %v830
    %v3538 = vunpack.c.h.b16 %v830
    %v3539 = vunpack.c.l.b16 %v831
    %v3540 = vunpack.c.h.b16 %v831
    %v3541 = vunpack.c.l.b16 %v832
    %v3542 = vunpack.c.h.b16 %v832
    %v3543 = vunpack.c.l.b16 %v833
    %v3544 = vunpack.c.h.b16 %v833
    %v3545 = vunpack.c.l.b16 %v834
    %v3546 = vunpack.c.h.b16 %v834
    %v3547 = vunpack.c.l.b16 %v835
    %v3548 = vunpack.c.h.b16 %v835
    %v3549 = vunpack.c.l.b16 %v836
    %v3550 = vunpack.c.h.b16 %v836
    %v3551 = vunpack.c.l.b16 %v837
    %v3552 = vunpack.c.h.b16 %v837
    %v3553 = vunpack.c.l.b16 %v838
    %v3554 = vunpack.c.h.b16 %v838
    %v3555 = vunpack.c.l.b16 %v839
    %v3556 = vunpack.c.h.b16 %v839
    %v3557 = vunpack.c.l.b16 %v840
    %v3558 = vunpack.c.h.b16 %v840
    %v3559 = vunpack.c.l.b16 %v841
    %v3560 = vunpack.c.h.b16 %v841
    %v3561 = vunpack.c.l.b16 %v842
    %v3562 = vunpack.c.h.b16 %v842
    %v3563 = vunpack.c.l.b16 %v843
    %v3564 = vunpack.c.h.b16 %v843
    %v3565 = vunpack.c.l.b16 %v844
    %v3566 = vunpack.c.h.b16 %v844
    %v3567 = vunpack.c.l.b16 %v845
    %v3568 = vunpack.c.h.b16 %v845
    %v3569 = vunpack.c.l.b16 %v846
    %v3570 = vunpack.c.h.b16 %v846
    %v3571 = vunpack.c.l.b16 %v847
    %v3572 = vunpack.c.h.b16 %v847
    %v3573 = vunpack.c.l.b16 %v848
    %v3574 = vunpack.c.h.b16 %v848
    %v3575 = vunpack.c.l.b16 %v849
    %v3576 = vunpack.c.h.b16 %v849
    %v3577 = vunpack.c.l.b16 %v850
    %v3578 = vunpack.c.h.b16 %v850
    %v3579 = vunpack.c.l.b16 %v851
    %v3580 = vunpack.c.h.b16 %v851
    %v3581 = vunpack.c.l.b16 %v852
    %v3582 = vunpack.c.h.b16 %v852
    %v3583 = vunpack.c.l.b16 %v853
    %v3584 = vunpack.c.h.b16 %v853
    %v3585 = vunpack.c.l.b16 %v854
    %v3586 = vunpack.c.h.b16 %v854
    %v3587 = vunpack.c.l.b16 %v855
    %v3588 = vunpack.c.h.b16 %v855
    %v3589 = vunpack.c.l.b16 %v856
    %v3590 = vunpack.c.h.b16 %v856
    %v3591 = vunpack.c.l.b16 %v857
    %v3592 = vunpack.c.h.b16 %v857
    %v3593 = vunpack.c.l.b16 %v858
    %v3594 = vunpack.c.h.b16 %v858
    %v3595 = vunpack.c.l.b16 %v859
    %v3596 = vunpack.c.h.b16 %v859
    %v3597 = vunpack.c.l.b16 %v860
    %v3598 = vunpack.c.h.b16 %v860
    %v3599 = vunpack.c.l.b16 %v861
    %v3600 = vunpack.c.h.b16 %v861
    %v3601 = vunpack.c.l.b16 %v862
    %v3602 = vunpack.c.h.b16 %v862
    %v3603 = vunpack.c.l.b16 %v863
    %v3604 = vunpack.c.h.b16 %v863
    %v3605 = vunpack.c.l.b16 %v864
    %v3606 = vunpack.c.h.b16 %v864
    %v3607 = vunpack.c.l.b16 %v865
    %v3608 = vunpack.c.h.b16 %v865
    %v3609 = vunpack.c.l.b16 %v866
    %v3610 = vunpack.c.h.b16 %v866
    %v3611 = vunpack.c.l.b16 %v867
    %v3612 = vunpack.c.h.b16 %v867
    %v3613 = vunpack.c.l.b16 %v868
    %v3614 = vunpack.c.h.b16 %v868
    %v3615 = vunpack.c.l.b16 %v869
    %v3616 = vunpack.c.h.b16 %v869
    %v3617 = vunpack.c.l.b16 %v870
    %v3618 = vunpack.c.h.b16 %v870
    %v3619 = vunpack.c.l.b16 %v871
    %v3620 = vunpack.c.h.b16 %v871
    %v3621 = vunpack.c.l.b16 %v872
    %v3622 = vunpack.c.h.b16 %v872
    %v3623 = vunpack.c.l.b16 %v873
    %v3624 = vunpack.c.h.b16 %v873
    %v3625 = vunpack.c.l.b16 %v874
    %v3626 = vunpack.c.h.b16 %v874
    %v3627 = vunpack.c.l.b16 %v875
    %v3628 = vunpack.c.h.b16 %v875
    %v3629 = vunpack.c.l.b16 %v876
    %v3630 = vunpack.c.h.b16 %v876
    %v3631 = vunpack.c.l.b16 %v877
    %v3632 = vunpack.c.h.b16 %v877
    %v3633 = vunpack.c.l.b16 %v878
    %v3634 = vunpack.c.h.b16 %v878
    %v3635 = vunpack.c.l.b16 %v879
    %v3636 = vunpack.c.h.b16 %v879
    %v3637 = vunpack.c.l.b16 %v880
    %v3638 = vunpack.c.h.b16 %v880
    %v3639 = vunpack.c.l.b16 %v881
    %v3640 = vunpack.c.h.b16 %v881
    %v3641 = vunpack.c.l.b16 %v882
    %v3642 = vunpack.c.h.b16 %v882
    %v3643 = vunpack.c.l.b16 %v883
    %v3644 = vunpack.c.h.b16 %v883
    %v3645 = vunpack.c.l.b16 %v884
    %v3646 = vunpack.c.h.b16 %v884
    %v3647 = vunpack.c.l.b16 %v885
    %v3648 = vunpack.c.h.b16 %v885
    %v3649 = vunpack.c.l.b16 %v886
    %v3650 = vunpack.c.h.b16 %v886
    %v3651 = vunpack.c.l.b16 %v887
    %v3652 = vunpack.c.h.b16 %v887
    %v3653 = vunpack.c.l.b16 %v888
    %v3654 = vunpack.c.h.b16 %v888
    %v3655 = vunpack.c.l.b16 %v889
    %v3656 = vunpack.c.h.b16 %v889
    %v3657 = vunpack.c.l.b16 %v890
    %v3658 = vunpack.c.h.b16 %v890
    %v3659 = vunpack.c.l.b16 %v891
    %v3660 = vunpack.c.h.b16 %v891
    %v3661 = vunpack.c.l.b16 %v892
    %v3662 = vunpack.c.h.b16 %v892
    %v3663 = vunpack.c.l.b16 %v893
    %v3664 = vunpack.c.h.b16 %v893
    %v3665 = vunpack.c.l.b16 %v894
    %v3666 = vunpack.c.h.b16 %v894
    %v3667 = vunpack.c.l.b16 %v895
    %v3668 = vunpack.c.h.b16 %v895
    %v3669 = vunpack.c.l.b16 %v896
    %v3670 = vunpack.c.h.b16 %v896
    %v3671 = vunpack.c.l.b16 %v897
    %v3672 = vunpack.c.h.b16 %v897
    %v3673 = vunpack.c.l.b16 %v898
    %v3674 = vunpack.c.h.b16 %v898
    %v3675 = vunpack.c.l.b16 %v899
    %v3676 = vunpack.c.h.b16 %v899
    %v3677 = vunpack.c.l.b16 %v900
    %v3678 = vunpack.c.h.b16 %v900
    %v3679 = vunpack.c.l.b16 %v901
    %v3680 = vunpack.c.h.b16 %v901
    %v3681 = vunpack.c.l.b16 %v902
    %v3682 = vunpack.c.h.b16 %v902
    %v3683 = vunpack.c.l.b16 %v903
    %v3684 = vunpack.c.h.b16 %v903
    %v3685 = vunpack.c.l.b16 %v904
    %v3686 = vunpack.c.h.b16 %v904
    %v3687 = vunpack.c.l.b16 %v905
    %v3688 = vunpack.c.h.b16 %v905
    %v3689 = vunpack.c.l.b16 %v906
    %v3690 = vunpack.c.h.b16 %v906
    %v3691 = vunpack.c.l.b16 %v907
    %v3692 = vunpack.c.h.b16 %v907
    %v3693 = vunpack.c.l.b16 %v908
    %v3694 = vunpack.c.h.b16 %v908
    %v3695 = vunpack.c.l.b16 %v909
    %v3696 = vunpack.c.h.b16 %v909
    %v3697 = vunpack.c.l.b16 %v910
    %v3698 = vunpack.c.h.b16 %v910
    %v3699 = vunpack.c.l.b16 %v911
    %v3700 = vunpack.c.h.b16 %v911
    %v3701 = vunpack.c.l.b16 %v912
    %v3702 = vunpack.c.h.b16 %v912
    %v3703 = vunpack.c.l.b16 %v913
    %v3704 = vunpack.c.h.b16 %v913
    %v3705 = vunpack.c.l.b16 %v914
    %v3706 = vunpack.c.h.b16 %v914
    %v3707 = vunpack.c.l.b16 %v915
    %v3708 = vunpack.c.h.b16 %v915
    %v3709 = vunpack.c.l.b16 %v916
    %v3710 = vunpack.c.h.b16 %v916
    %v3711 = vunpack.c.l.b16 %v917
    %v3712 = vunpack.c.h.b16 %v917
    %v3713 = vunpack.c.l.b16 %v918
    %v3714 = vunpack.c.h.b16 %v918
    %v3715 = vunpack.c.l.b16 %v919
    %v3716 = vunpack.c.h.b16 %v919
    %v3717 = vunpack.c.l.b16 %v920
    %v3718 = vunpack.c.h.b16 %v920
    %v3719 = vunpack.c.l.b16 %v921
    %v3720 = vunpack.c.h.b16 %v921
    %v3721 = vunpack.c.l.b16 %v922
    %v3722 = vunpack.c.h.b16 %v922
    %v3723 = vunpack.c.l.b16 %v923
    %v3724 = vunpack.c.h.b16 %v923
    %v3725 = vunpack.c.l.b16 %v924
    %v3726 = vunpack.c.h.b16 %v924
    %v3727 = vunpack.c.l.b16 %v925
    %v3728 = vunpack.c.h.b16 %v925
    %v3729 = vunpack.c.l.b16 %v926
    %v3730 = vunpack.c.h.b16 %v926
    %v3731 = vunpack.c.l.b16 %v927
    %v3732 = vunpack.c.h.b16 %v927
    %v3733 = vunpack.c.l.b16 %v928
    %v3734 = vunpack.c.h.b16 %v928
    %v3735 = vunpack.c.l.b16 %v929
    %v3736 = vunpack.c.h.b16 %v929
    %v3737 = vunpack.c.l.b16 %v930
    %v3738 = vunpack.c.h.b16 %v930
    %v3739 = vunpack.c.l.b16 %v931
    %v3740 = vunpack.c.h.b16 %v931
    %v3741 = vunpack.c.l.b16 %v932
    %v3742 = vunpack.c.h.b16 %v932
    %v3743 = vunpack.c.l.b16 %v933
    %v3744 = vunpack.c.h.b16 %v933
    %v3745 = vunpack.c.l.b16 %v934
    %v3746 = vunpack.c.h.b16 %v934
    %v3747 = vunpack.c.l.b16 %v935
    %v3748 = vunpack.c.h.b16 %v935
    %v3749 = vunpack.c.l.b16 %v936
    %v3750 = vunpack.c.h.b16 %v936
    %v3751 = vunpack.c.l.b16 %v937
    %v3752 = vunpack.c.h.b16 %v937
    %v3753 = vunpack.c.l.b16 %v938
    %v3754 = vunpack.c.h.b16 %v938
    %v3755 = vunpack.c.l.b16 %v939
    %v3756 = vunpack.c.h.b16 %v939
    %v3757 = vunpack.c.l.b16 %v940
    %v3758 = vunpack.c.h.b16 %v940
    %v3759 = vunpack.c.l.b16 %v941
    %v3760 = vunpack.c.h.b16 %v941
    %v3761 = vunpack.c.l.b16 %v942
    %v3762 = vunpack.c.h.b16 %v942
    %v3763 = vunpack.c.l.b16 %v943
    %v3764 = vunpack.c.h.b16 %v943
    %v3765 = vunpack.c.l.b16 %v944
    %v3766 = vunpack.c.h.b16 %v944
    %v3767 = vunpack.c.l.b16 %v945
    %v3768 = vunpack.c.h.b16 %v945
    %v3769 = vunpack.c.l.b16 %v946
    %v3770 = vunpack.c.h.b16 %v946
    %v3771 = vunpack.c.l.b16 %v947
    %v3772 = vunpack.c.h.b16 %v947
    %v3773 = vunpack.c.l.b16 %v948
    %v3774 = vunpack.c.h.b16 %v948
    %v3775 = vunpack.c.l.b16 %v949
    %v3776 = vunpack.c.h.b16 %v949
    %v3777 = vunpack.c.l.b16 %v950
    %v3778 = vunpack.c.h.b16 %v950
    %v3779 = vunpack.c.l.b16 %v951
    %v3780 = vunpack.c.h.b16 %v951
    %v3781 = vunpack.c.l.b16 %v952
    %v3782 = vunpack.c.h.b16 %v952
    %v3783 = vunpack.c.l.b16 %v953
    %v3784 = vunpack.c.h.b16 %v953
    %v3785 = vunpack.c.l.b16 %v954
    %v3786 = vunpack.c.h.b16 %v954
    %v3787 = vunpack.c.l.b16 %v955
    %v3788 = vunpack.c.h.b16 %v955
    %v3789 = vunpack.c.l.b16 %v956
    %v3790 = vunpack.c.h.b16 %v956
    %v3791 = vunpack.c.l.b16 %v957
    %v3792 = vunpack.c.h.b16 %v957
    %v3793 = vunpack.c.l.b16 %v958
    %v3794 = vunpack.c.h.b16 %v958
    %v3795 = vunpack.c.l.b16 %v959
    %v3796 = vunpack.c.h.b16 %v959
    %v3797 = vunpack.c.l.b16 %v960
    %v3798 = vunpack.c.h.b16 %v960
    %v3799 = vunpack.c.l.b16 %v961
    %v3800 = vunpack.c.h.b16 %v961
    %v3801 = vunpack.c.l.b16 %v962
    %v3802 = vunpack.c.h.b16 %v962
    %v3803 = vunpack.c.l.b16 %v963
    %v3804 = vunpack.c.h.b16 %v963
    %v3805 = vunpack.c.l.b16 %v964
    %v3806 = vunpack.c.h.b16 %v964
    %v3807 = vunpack.c.l.b16 %v965
    %v3808 = vunpack.c.h.b16 %v965
    %v3809 = vunpack.c.l.b16 %v966
    %v3810 = vunpack.c.h.b16 %v966
    %v3811 = vunpack.c.l.b16 %v967
    %v3812 = vunpack.c.h.b16 %v967
    %v3813 = vunpack.c.l.b16 %v968
    %v3814 = vunpack.c.h.b16 %v968
    %v3815 = vunpack.c.l.b16 %v969
    %v3816 = vunpack.c.h.b16 %v969
    %v3817 = vunpack.c.l.b16 %v970
    %v3818 = vunpack.c.h.b16 %v970
    %v3819 = vunpack.c.l.b16 %v971
    %v3820 = vunpack.c.h.b16 %v971
    %v3821 = vunpack.c.l.b16 %v972
    %v3822 = vunpack.c.h.b16 %v972
    %v3823 = vunpack.c.l.b16 %v973
    %v3824 = vunpack.c.h.b16 %v973
    %v3825 = vunpack.c.l.b16 %v974
    %v3826 = vunpack.c.h.b16 %v974
    %v3827 = vunpack.c.l.b16 %v975
    %v3828 = vunpack.c.h.b16 %v975
    %v3829 = vunpack.c.l.b16 %v976
    %v3830 = vunpack.c.h.b16 %v976
    %v3831 = vunpack.c.l.b16 %v977
    %v3832 = vunpack.c.h.b16 %v977
    %v3833 = vunpack.c.l.b16 %v978
    %v3834 = vunpack.c.h.b16 %v978
    %v3835 = vunpack.c.l.b16 %v979
    %v3836 = vunpack.c.h.b16 %v979
    %v3837 = vunpack.c.l.b16 %v980
    %v3838 = vunpack.c.h.b16 %v980
    %v3839 = vunpack.c.l.b16 %v981
    %v3840 = vunpack.c.h.b16 %v981
    %v3841 = vunpack.c.l.b16 %v982
    %v3842 = vunpack.c.h.b16 %v982
    %v3843 = vunpack.c.l.b16 %v983
    %v3844 = vunpack.c.h.b16 %v983
    %v3845 = vunpack.c.l.b16 %v984
    %v3846 = vunpack.c.h.b16 %v984
    %v3847 = vunpack.c.l.b16 %v985
    %v3848 = vunpack.c.h.b16 %v985
    %v3849 = vunpack.c.l.b16 %v986
    %v3850 = vunpack.c.h.b16 %v986
    %v3851 = vunpack.c.l.b16 %v987
    %v3852 = vunpack.c.h.b16 %v987
    %v3853 = vunpack.c.l.b16 %v988
    %v3854 = vunpack.c.h.b16 %v988
    %v3855 = vunpack.c.l.b16 %v989
    %v3856 = vunpack.c.h.b16 %v989
    %v3857 = vunpack.c.l.b16 %v990
    %v3858 = vunpack.c.h.b16 %v990
    %v3859 = vunpack.c.l.b16 %v991
    %v3860 = vunpack.c.h.b16 %v991
    %v3861 = vunpack.c.l.b16 %v992
    %v3862 = vunpack.c.h.b16 %v992
    %v3863 = vunpack.c.l.b16 %v993
    %v3864 = vunpack.c.h.b16 %v993
    %v3865 = vunpack.c.l.b16 %v994
    %v3866 = vunpack.c.h.b16 %v994
    %v3867 = vunpack.c.l.b16 %v995
    %v3868 = vunpack.c.h.b16 %v995
    %v3869 = vunpack.c.l.b16 %v996
    %v3870 = vunpack.c.h.b16 %v996
    %v3871 = vunpack.c.l.b16 %v997
    %v3872 = vunpack.c.h.b16 %v997
    %v3873 = vunpack.c.l.b16 %v998
    %v3874 = vunpack.c.h.b16 %v998
    %v3875 = vunpack.c.l.b16 %v999
    %v3876 = vunpack.c.h.b16 %v999
    %v3877 = vunpack.c.l.b16 %v1000
    %v3878 = vunpack.c.h.b16 %v1000
    %v3879 = vunpack.c.l.b16 %v1001
    %v3880 = vunpack.c.h.b16 %v1001
    %v3881 = vunpack.c.l.b16 %v1002
    %v3882 = vunpack.c.h.b16 %v1002
    %v3883 = vunpack.c.l.b16 %v1003
    %v3884 = vunpack.c.h.b16 %v1003
    %v3885 = vunpack.c.l.b16 %v1004
    %v3886 = vunpack.c.h.b16 %v1004
    %v3887 = vunpack.c.l.b16 %v1005
    %v3888 = vunpack.c.h.b16 %v1005
    %v3889 = vunpack.c.l.b16 %v1006
    %v3890 = vunpack.c.h.b16 %v1006
    %v3891 = vunpack.c.l.b16 %v1007
    %v3892 = vunpack.c.h.b16 %v1007
    %v3893 = vunpack.c.l.b16 %v1008
    %v3894 = vunpack.c.h.b16 %v1008
    %v3895 = vunpack.c.l.b16 %v1009
    %v3896 = vunpack.c.h.b16 %v1009
    %v3897 = vunpack.c.l.b16 %v1010
    %v3898 = vunpack.c.h.b16 %v1010
    %v3899 = vunpack.c.l.b16 %v1011
    %v3900 = vunpack.c.h.b16 %v1011
    %v3901 = vunpack.c.l.b16 %v1012
    %v3902 = vunpack.c.h.b16 %v1012
    %v3903 = vunpack.c.l.b16 %v1013
    %v3904 = vunpack.c.h.b16 %v1013
    %v3905 = vunpack.c.l.b16 %v1014
    %v3906 = vunpack.c.h.b16 %v1014
    %v3907 = vunpack.c.l.b16 %v1015
    %v3908 = vunpack.c.h.b16 %v1015
    %v3909 = vunpack.c.l.b16 %v1016
    %v3910 = vunpack.c.h.b16 %v1016
    %v3911 = vunpack.c.l.b16 %v1017
    %v3912 = vunpack.c.h.b16 %v1017
    %v3913 = vunpack.c.l.b16 %v1018
    %v3914 = vunpack.c.h.b16 %v1018
    %v3915 = vunpack.c.l.b16 %v1019
    %v3916 = vunpack.c.h.b16 %v1019
    %v3917 = vunpack.c.l.b16 %v1020
    %v3918 = vunpack.c.h.b16 %v1020
    %v3919 = vunpack.c.l.b16 %v1021
    %v3920 = vunpack.c.h.b16 %v1021
    %v3921 = vunpack.c.l.b16 %v1022
    %v3922 = vunpack.c.h.b16 %v1022
    %v3923 = vunpack.c.l.b16 %v1023
    %v3924 = vunpack.c.h.b16 %v1023
    %v3925 = vunpack.c.l.b16 %v1024
    %v3926 = vunpack.c.h.b16 %v1024
    %v3927 = vunpack.c.l.b16 %v1025
    %v3928 = vunpack.c.h.b16 %v1025
    %v3929 = vunpack.c.l.b16 %v1026
    %v3930 = vunpack.c.h.b16 %v1026
    %v3931 = vunpack.c.l.b16 %v1027
    %v3932 = vunpack.c.h.b16 %v1027
    %v3933 = vunpack.c.l.b16 %v1028
    %v3934 = vunpack.c.h.b16 %v1028
    %v3935 = vunpack.c.l.b16 %v1029
    %v3936 = vunpack.c.h.b16 %v1029
    %v3937 = vunpack.c.l.b16 %v1030
    %v3938 = vunpack.c.h.b16 %v1030
    %v3939 = vunpack.c.l.b16 %v1031
    %v3940 = vunpack.c.h.b16 %v1031
    %v3941 = vunpack.c.l.b16 %v1032
    %v3942 = vunpack.c.h.b16 %v1032
    %v3943 = vunpack.c.l.b16 %v1033
    %v3944 = vunpack.c.h.b16 %v1033
    %v3945 = vunpack.c.l.b16 %v1034
    %v3946 = vunpack.c.h.b16 %v1034
    %v3947 = vunpack.c.l.b16 %v1035
    %v3948 = vunpack.c.h.b16 %v1035
    %v3949 = vunpack.c.l.b16 %v1036
    %v3950 = vunpack.c.h.b16 %v1036
    %v3951 = vunpack.c.l.b16 %v1037
    %v3952 = vunpack.c.h.b16 %v1037
    %v3953 = vunpack.c.l.b16 %v1038
    %v3954 = vunpack.c.h.b16 %v1038
    %v3955 = vunpack.c.l.b16 %v1039
    %v3956 = vunpack.c.h.b16 %v1039
    %v3957 = vunpack.c.l.b16 %v1040
    %v3958 = vunpack.c.h.b16 %v1040
    %v3959 = vunpack.c.l.b16 %v1041
    %v3960 = vunpack.c.h.b16 %v1041
    %v3961 = vunpack.c.l.b16 %v1042
    %v3962 = vunpack.c.h.b16 %v1042
    %v3963 = vunpack.c.l.b16 %v1043
    %v3964 = vunpack.c.h.b16 %v1043
    %v3965 = vunpack.c.l.b16 %v1044
    %v3966 = vunpack.c.h.b16 %v1044
    %v3967 = vunpack.c.l.b16 %v1045
    %v3968 = vunpack.c.h.b16 %v1045
    %v3969 = vunpack.c.l.b16 %v1046
    %v3970 = vunpack.c.h.b16 %v1046
    %v3971 = vunpack.c.l.b16 %v1047
    %v3972 = vunpack.c.h.b16 %v1047
    %v3973 = vunpack.c.l.b16 %v1048
    %v3974 = vunpack.c.h.b16 %v1048
    %v3975 = vunpack.c.l.b16 %v1049
    %v3976 = vunpack.c.h.b16 %v1049
    %v3977 = vunpack.c.l.b16 %v1050
    %v3978 = vunpack.c.h.b16 %v1050
    %v3979 = vunpack.c.l.b16 %v1051
    %v3980 = vunpack.c.h.b16 %v1051
    %v3981 = vunpack.c.l.b16 %v1052
    %v3982 = vunpack.c.h.b16 %v1052
    %v3983 = vunpack.c.l.b16 %v1053
    %v3984 = vunpack.c.h.b16 %v1053
    %v3985 = vunpack.c.l.b16 %v1054
    %v3986 = vunpack.c.h.b16 %v1054
    %v3987 = vunpack.c.l.b16 %v1055
    %v3988 = vunpack.c.h.b16 %v1055
    %v3989 = vunpack.c.l.b16 %v1056
    %v3990 = vunpack.c.h.b16 %v1056
    %v3991 = vunpack.c.l.b16 %v1057
    %v3992 = vunpack.c.h.b16 %v1057
    %v3993 = vunpack.c.l.b16 %v1058
    %v3994 = vunpack.c.h.b16 %v1058
    %v3995 = vunpack.c.l.b16 %v1059
    %v3996 = vunpack.c.h.b16 %v1059
    %v3997 = vunpack.c.l.b16 %v1060
    %v3998 = vunpack.c.h.b16 %v1060
    %v3999 = vunpack.c.l.b16 %v1061
    %v4000 = vunpack.c.h.b16 %v1061
    %v4001 = vunpack.c.l.b16 %v1062
    %v4002 = vunpack.c.h.b16 %v1062
    %v4003 = vunpack.c.l.b16 %v1063
    %v4004 = vunpack.c.h.b16 %v1063
    %v4005 = vunpack.c.l.b16 %v1064
    %v4006 = vunpack.c.h.b16 %v1064
    %v4007 = vunpack.c.l.b16 %v1065
    %v4008 = vunpack.c.h.b16 %v1065
    %v4009 = vunpack.c.l.b16 %v1066
    %v4010 = vunpack.c.h.b16 %v1066
    %v4011 = vunpack.c.l.b16 %v1067
    %v4012 = vunpack.c.h.b16 %v1067
    %v4013 = vunpack.c.l.b16 %v1068
    %v4014 = vunpack.c.h.b16 %v1068
    %v4015 = vunpack.c.l.b16 %v1069
    %v4016 = vunpack.c.h.b16 %v1069
    %v4017 = vunpack.c.l.b16 %v1070
    %v4018 = vunpack.c.h.b16 %v1070
    %v4019 = vunpack.c.l.b16 %v1071
    %v4020 = vunpack.c.h.b16 %v1071
    %v4021 = vunpack.c.l.b16 %v1072
    %v4022 = vunpack.c.h.b16 %v1072
    %v4023 = vunpack.c.l.b16 %v1073
    %v4024 = vunpack.c.h.b16 %v1073
    %v4025 = vunpack.c.l.b16 %v1074
    %v4026 = vunpack.c.h.b16 %v1074
    %v4027 = vunpack.c.l.b16 %v1075
    %v4028 = vunpack.c.h.b16 %v1075
    %v4029 = vunpack.c.l.b16 %v1076
    %v4030 = vunpack.c.h.b16 %v1076
    %v4031 = vunpack.c.l.b16 %v1077
    %v4032 = vunpack.c.h.b16 %v1077
    %v4033 = vunpack.c.l.b16 %v1078
    %v4034 = vunpack.c.h.b16 %v1078
    %v4035 = vunpack.c.l.b16 %v1079
    %v4036 = vunpack.c.h.b16 %v1079
    %v4037 = vunpack.c.l.b16 %v1080
    %v4038 = vunpack.c.h.b16 %v1080
    %v4039 = vunpack.c.l.b16 %v1081
    %v4040 = vunpack.c.h.b16 %v1081
    %v4041 = vunpack.c.l.b16 %v1082
    %v4042 = vunpack.c.h.b16 %v1082
    %v4043 = vunpack.c.l.b16 %v1083
    %v4044 = vunpack.c.h.b16 %v1083
    %v4045 = vunpack.c.l.b16 %v1084
    %v4046 = vunpack.c.h.b16 %v1084
    %v4047 = vunpack.c.l.b16 %v1085
    %v4048 = vunpack.c.h.b16 %v1085
    %v4049 = vunpack.c.l.b16 %v1086
    %v4050 = vunpack.c.h.b16 %v1086
    %v4051 = vunpack.c.l.b16 %v1087
    %v4052 = vunpack.c.h.b16 %v1087
    %v4053 = vunpack.c.l.b16 %v1088
    %v4054 = vunpack.c.h.b16 %v1088
    %v4055 = vunpack.c.l.b16 %v1089
    %v4056 = vunpack.c.h.b16 %v1089
    %v4057 = vunpack.c.l.b16 %v1090
    %v4058 = vunpack.c.h.b16 %v1090
    %v4059 = vunpack.c.l.b16 %v1091
    %v4060 = vunpack.c.h.b16 %v1091
    %v4061 = vunpack.c.l.b16 %v1092
    %v4062 = vunpack.c.h.b16 %v1092
    %v4063 = vunpack.c.l.b16 %v1093
    %v4064 = vunpack.c.h.b16 %v1093
    %v4065 = vunpack.c.l.b16 %v1094
    %v4066 = vunpack.c.h.b16 %v1094
    %v4067 = vunpack.c.l.b16 %v1095
    %v4068 = vunpack.c.h.b16 %v1095
    %v4069 = vunpack.c.l.b16 %v1096
    %v4070 = vunpack.c.h.b16 %v1096
    %v4071 = vunpack.c.l.b16 %v1097
    %v4072 = vunpack.c.h.b16 %v1097
    %v4073 = vunpack.c.l.b16 %v1098
    %v4074 = vunpack.c.h.b16 %v1098
    %v4075 = vunpack.c.l.b16 %v1099
    %v4076 = vunpack.c.h.b16 %v1099
    %v4077 = vunpack.c.l.b16 %v1100
    %v4078 = vunpack.c.h.b16 %v1100
    %v4079 = vunpack.c.l.b16 %v1101
    %v4080 = vunpack.c.h.b16 %v1101
    %v4081 = vunpack.c.l.b16 %v1102
    %v4082 = vunpack.c.h.b16 %v1102
    %v4083 = vunpack.c.l.b16 %v1103
    %v4084 = vunpack.c.h.b16 %v1103
    %v4085 = vunpack.c.l.b16 %v1104
    %v4086 = vunpack.c.h.b16 %v1104
    %v4087 = vunpack.c.l.b16 %v1105
    %v4088 = vunpack.c.h.b16 %v1105
    %v4089 = vunpack.c.l.b16 %v1106
    %v4090 = vunpack.c.h.b16 %v1106
    %v4091 = vunpack.c.l.b16 %v1107
    %v4092 = vunpack.c.h.b16 %v1107
    %v4093 = vunpack.c.l.b16 %v1108
    %v4094 = vunpack.c.h.b16 %v1108
    %v4095 = vunpack.c.l.b16 %v1109
    %v4096 = vunpack.c.h.b16 %v1109
    %v4097 = vunpack.c.l.b16 %v1110
    %v4098 = vunpack.c.h.b16 %v1110
    %v4099 = vunpack.c.l.b16 %v1111
    %v4100 = vunpack.c.h.b16 %v1111
    %v4101 = vunpack.c.l.b16 %v1112
    %v4102 = vunpack.c.h.b16 %v1112
    %v4103 = vunpack.c.l.b16 %v1113
    %v4104 = vunpack.c.h.b16 %v1113
    %v4105 = vunpack.c.l.b16 %v1114
    %v4106 = vunpack.c.h.b16 %v1114
    %v4107 = vunpack.c.l.b16 %v1115
    %v4108 = vunpack.c.h.b16 %v1115
    %v4109 = vunpack.c.l.b16 %v1116
    %v4110 = vunpack.c.h.b16 %v1116
    %v4111 = vunpack.c.l.b16 %v1117
    %v4112 = vunpack.c.h.b16 %v1117
    %v4113 = vunpack.c.l.b16 %v1118
    %v4114 = vunpack.c.h.b16 %v1118
    %v4115 = vunpack.c.l.b16 %v1119
    %v4116 = vunpack.c.h.b16 %v1119
    %v4117 = vunpack.c.l.b16 %v1120
    %v4118 = vunpack.c.h.b16 %v1120
    %v4119 = vunpack.c.l.b16 %v1121
    %v4120 = vunpack.c.h.b16 %v1121
    %v4121 = vunpack.c.l.b16 %v1122
    %v4122 = vunpack.c.h.b16 %v1122
    %v4123 = vunpack.c.l.b16 %v1123
    %v4124 = vunpack.c.h.b16 %v1123
    %v4125 = vunpack.c.l.b16 %v1124
    %v4126 = vunpack.c.h.b16 %v1124
    %v4127 = vunpack.c.l.b16 %v1125
    %v4128 = vunpack.c.h.b16 %v1125
    %v4129 = vunpack.c.l.b16 %v1126
    %v4130 = vunpack.c.h.b16 %v1126
    %v4131 = vunpack.c.l.b16 %v1127
    %v4132 = vunpack.c.h.b16 %v1127
    %v4133 = vunpack.c.l.b16 %v1128
    %v4134 = vunpack.c.h.b16 %v1128
    %v4135 = vunpack.c.l.b16 %v1129
    %v4136 = vunpack.c.h.b16 %v1129
    %v4137 = vunpack.c.l.b16 %v1130
    %v4138 = vunpack.c.h.b16 %v1130
    %v4139 = vunpack.c.l.b16 %v1131
    %v4140 = vunpack.c.h.b16 %v1131
    %v4141 = vunpack.c.l.b16 %v1132
    %v4142 = vunpack.c.h.b16 %v1132
    %v4143 = vunpack.c.l.b16 %v1133
    %v4144 = vunpack.c.h.b16 %v1133
    %v4145 = vunpack.c.l.b16 %v1134
    %v4146 = vunpack.c.h.b16 %v1134
    %v4147 = vunpack.c.l.b16 %v1135
    %v4148 = vunpack.c.h.b16 %v1135
    %v4149 = vunpack.c.l.b16 %v1136
    %v4150 = vunpack.c.h.b16 %v1136
    %v4151 = vunpack.c.l.b16 %v1137
    %v4152 = vunpack.c.h.b16 %v1137
    %v4153 = vunpack.c.l.b16 %v1138
    %v4154 = vunpack.c.h.b16 %v1138
    %v4155 = vunpack.c.l.b16 %v1139
    %v4156 = vunpack.c.h.b16 %v1139
    %v4157 = vunpack.c.l.b16 %v1140
    %v4158 = vunpack.c.h.b16 %v1140
    %v4159 = vunpack.c.l.b16 %v1141
    %v4160 = vunpack.c.h.b16 %v1141
    %v4161 = vunpack.c.l.b16 %v1142
    %v4162 = vunpack.c.h.b16 %v1142
    %v4163 = vunpack.c.l.b16 %v1143
    %v4164 = vunpack.c.h.b16 %v1143
    %v4165 = vunpack.c.l.b16 %v1144
    %v4166 = vunpack.c.h.b16 %v1144
    %v4167 = vunpack.c.l.b16 %v1145
    %v4168 = vunpack.c.h.b16 %v1145
    %v4169 = vunpack.c.l.b16 %v1146
    %v4170 = vunpack.c.h.b16 %v1146
    %v4171 = vunpack.c.l.b16 %v1147
    %v4172 = vunpack.c.h.b16 %v1147
    %v4173 = vunpack.c.l.b16 %v1148
    %v4174 = vunpack.c.h.b16 %v1148
    %v4175 = vunpack.c.l.b16 %v1149
    %v4176 = vunpack.c.h.b16 %v1149
    %v4177 = vunpack.c.l.b16 %v1150
    %v4178 = vunpack.c.h.b16 %v1150
    %v4179 = vunpack.c.l.b16 %v1151
    %v4180 = vunpack.c.h.b16 %v1151
    %v4181 = vunpack.c.l.b16 %v1152
    %v4182 = vunpack.c.h.b16 %v1152
    %v4183 = vunpack.c.l.b16 %v1153
    %v4184 = vunpack.c.h.b16 %v1153
    %v4185 = vunpack.c.l.b16 %v1154
    %v4186 = vunpack.c.h.b16 %v1154
    %v4187 = vunpack.c.l.b16 %v1155
    %v4188 = vunpack.c.h.b16 %v1155
    %v4189 = vunpack.c.l.b16 %v1156
    %v4190 = vunpack.c.h.b16 %v1156
    %v4191 = vunpack.c.l.b16 %v1157
    %v4192 = vunpack.c.h.b16 %v1157
    %v4193 = vunpack.c.l.b16 %v1158
    %v4194 = vunpack.c.h.b16 %v1158
    %v4195 = vunpack.c.l.b16 %v1159
    %v4196 = vunpack.c.h.b16 %v1159
    %v4197 = vunpack.c.l.b16 %v1160
    %v4198 = vunpack.c.h.b16 %v1160
    %v4199 = vunpack.c.l.b16 %v1161
    %v4200 = vunpack.c.h.b16 %v1161
    %v4201 = vunpack.c.l.b16 %v1162
    %v4202 = vunpack.c.h.b16 %v1162
    %v4203 = vunpack.c.l.b16 %v1163
    %v4204 = vunpack.c.h.b16 %v1163
    %v4205 = vunpack.c.l.b16 %v1164
    %v4206 = vunpack.c.h.b16 %v1164
    %v4207 = vunpack.c.l.b16 %v1165
    %v4208 = vunpack.c.h.b16 %v1165
    %v4209 = vunpack.c.l.b16 %v1166
    %v4210 = vunpack.c.h.b16 %v1166
    %v4211 = vunpack.c.l.b16 %v1167
    %v4212 = vunpack.c.h.b16 %v1167
    %v4213 = vunpack.c.l.b16 %v1168
    %v4214 = vunpack.c.h.b16 %v1168
    %v4215 = vunpack.c.l.b16 %v1169
    %v4216 = vunpack.c.h.b16 %v1169
    %v4217 = vunpack.c.l.b16 %v1170
    %v4218 = vunpack.c.h.b16 %v1170
    %v4219 = vunpack.c.l.b16 %v1171
    %v4220 = vunpack.c.h.b16 %v1171
    %v4221 = vunpack.c.l.b16 %v1172
    %v4222 = vunpack.c.h.b16 %v1172
    %v4223 = vunpack.c.l.b16 %v1173
    %v4224 = vunpack.c.h.b16 %v1173
    %v4225 = vunpack.c.l.b16 %v1174
    %v4226 = vunpack.c.h.b16 %v1174
    %v4227 = vunpack.c.l.b16 %v1175
    %v4228 = vunpack.c.h.b16 %v1175
    %v4229 = vunpack.c.l.b16 %v1176
    %v4230 = vunpack.c.h.b16 %v1176
    %v4231 = vunpack.c.l.b16 %v1177
    %v4232 = vunpack.c.h.b16 %v1177
    %v4233 = vunpack.c.l.b16 %v1178
    %v4234 = vunpack.c.h.b16 %v1178
    %v4235 = vunpack.c.l.b16 %v1179
    %v4236 = vunpack.c.h.b16 %v1179
    %v4237 = vunpack.c.l.b16 %v1180
    %v4238 = vunpack.c.h.b16 %v1180
    %v4239 = vunpack.c.l.b16 %v1181
    %v4240 = vunpack.c.h.b16 %v1181
    %v4241 = vunpack.c.l.b16 %v1182
    %v4242 = vunpack.c.h.b16 %v1182
    %v4243 = vunpack.c.l.b16 %v1183
    %v4244 = vunpack.c.h.b16 %v1183
    %v4245 = vunpack.c.l.b16 %v1184
    %v4246 = vunpack.c.h.b16 %v1184
    %v4247 = vunpack.c.l.b16 %v1185
    %v4248 = vunpack.c.h.b16 %v1185
    %v4249 = vunpack.c.l.b16 %v1186
    %v4250 = vunpack.c.h.b16 %v1186
    %v4251 = vunpack.c.l.b16 %v1187
    %v4252 = vunpack.c.h.b16 %v1187
    %v4253 = vunpack.c.l.b16 %v1188
    %v4254 = vunpack.c.h.b16 %v1188
    %v4255 = vunpack.c.l.b16 %v1189
    %v4256 = vunpack.c.h.b16 %v1189
    %v4257 = vunpack.c.l.b16 %v1190
    %v4258 = vunpack.c.h.b16 %v1190
    %v4259 = vunpack.c.l.b16 %v1191
    %v4260 = vunpack.c.h.b16 %v1191
    %v4261 = vunpack.c.l.b16 %v1192
    %v4262 = vunpack.c.h.b16 %v1192
    %v4263 = vunpack.c.l.b16 %v1193
    %v4264 = vunpack.c.h.b16 %v1193
    %v4265 = vunpack.c.l.b16 %v1194
    %v4266 = vunpack.c.h.b16 %v1194
    %v4267 = vunpack.c.l.b16 %v1195
    %v4268 = vunpack.c.h.b16 %v1195
    %v4269 = vunpack.c.l.b16 %v1196
    %v4270 = vunpack.c.h.b16 %v1196
    %v4271 = vunpack.c.l.b16 %v1197
    %v4272 = vunpack.c.h.b16 %v1197
    %v4273 = vunpack.c.l.b16 %v1198
    %v4274 = vunpack.c.h.b16 %v1198
    %v4275 = vunpack.c.l.b16 %v1199
    %v4276 = vunpack.c.h.b16 %v1199
    %v4277 = vunpack.c.l.b16 %v1200
    %v4278 = vunpack.c.h.b16 %v1200
    %v4279 = vunpack.c.l.b16 %v1201
    %v4280 = vunpack.c.h.b16 %v1201
    %v4281 = vunpack.c.l.b16 %v1202
    %v4282 = vunpack.c.h.b16 %v1202
    %v4283 = vunpack.c.l.b16 %v1203
    %v4284 = vunpack.c.h.b16 %v1203
    %v4285 = vunpack.c.l.b16 %v1204
    %v4286 = vunpack.c.h.b16 %v1204
    %v4287 = vunpack.c.l.b16 %v1205
    %v4288 = vunpack.c.h.b16 %v1205
    %v4289 = vunpack.c.l.b16 %v1206
    %v4290 = vunpack.c.h.b16 %v1206
    %v4291 = vunpack.c.l.b16 %v1207
    %v4292 = vunpack.c.h.b16 %v1207
    %v4293 = vunpack.c.l.b16 %v1208
    %v4294 = vunpack.c.h.b16 %v1208
    %v4295 = vunpack.c.l.b16 %v1209
    %v4296 = vunpack.c.h.b16 %v1209
    %v4297 = vunpack.c.l.b16 %v1210
    %v4298 = vunpack.c.h.b16 %v1210
    %v4299 = vunpack.c.l.b16 %v1211
    %v4300 = vunpack.c.h.b16 %v1211
    %v4301 = vunpack.c.l.b16 %v1212
    %v4302 = vunpack.c.h.b16 %v1212
    %v4303 = vunpack.c.l.b16 %v1213
    %v4304 = vunpack.c.h.b16 %v1213
    %v4305 = vunpack.c.l.b16 %v1214
    %v4306 = vunpack.c.h.b16 %v1214
    %v4307 = vunpack.c.l.b16 %v1215
    %v4308 = vunpack.c.h.b16 %v1215
    %v4309 = vunpack.c.l.b16 %v1216
    %v4310 = vunpack.c.h.b16 %v1216
    %v4311 = vunpack.c.l.b16 %v1217
    %v4312 = vunpack.c.h.b16 %v1217
    %v4313 = vunpack.c.l.b16 %v1218
    %v4314 = vunpack.c.h.b16 %v1218
    %v4315 = vunpack.c.l.b16 %v1219
    %v4316 = vunpack.c.h.b16 %v1219
    %v4317 = vunpack.c.l.b16 %v1220
    %v4318 = vunpack.c.h.b16 %v1220
    %v4319 = vunpack.c.l.b16 %v1221
    %v4320 = vunpack.c.h.b16 %v1221
    %v4321 = vunpack.c.l.b16 %v1222
    %v4322 = vunpack.c.h.b16 %v1222
    %v4323 = vunpack.c.l.b16 %v1223
    %v4324 = vunpack.c.h.b16 %v1223
    %v4325 = vunpack.c.l.b16 %v1224
    %v4326 = vunpack.c.h.b16 %v1224
    %v4327 = vunpack.c.l.b16 %v1225
    %v4328 = vunpack.c.h.b16 %v1225
    %v4329 = vunpack.c.l.b16 %v1226
    %v4330 = vunpack.c.h.b16 %v1226
    %v4331 = vunpack.c.l.b16 %v1227
    %v4332 = vunpack.c.h.b16 %v1227
    %v4333 = vunpack.c.l.b16 %v1228
    %v4334 = vunpack.c.h.b16 %v1228
    %v4335 = vunpack.c.l.b16 %v1229
    %v4336 = vunpack.c.h.b16 %v1229
    %v4337 = vunpack.c.l.b16 %v1230
    %v4338 = vunpack.c.h.b16 %v1230
    %v4339 = vunpack.c.l.b16 %v1231
    %v4340 = vunpack.c.h.b16 %v1231
    %v4341 = vunpack.c.l.b16 %v1232
    %v4342 = vunpack.c.h.b16 %v1232
    %v4343 = vunpack.c.l.b16 %v1233
    %v4344 = vunpack.c.h.b16 %v1233
    %v4345 = vunpack.c.l.b16 %v1234
    %v4346 = vunpack.c.h.b16 %v1234
    %v4347 = vunpack.c.l.b16 %v1235
    %v4348 = vunpack.c.h.b16 %v1235
    %v4349 = vunpack.c.l.b16 %v1236
    %v4350 = vunpack.c.h.b16 %v1236
    %v4351 = vpack.c.b16 %v2311, %v2303
    %v4352 = vpack.c.b16 %v2312, %v2304
    %v4353 = vpack.c.b16 %v2313, %v2305
    %v4354 = vpack.c.b16 %v2314, %v2306
    %v4355 = vpack.c.b16 %v2315, %v2307
    %v4356 = vpack.c.b16 %v2316, %v2308
    %v4357 = vpack.c.b16 %v2317, %v2309
    %v4358 = vpack.c.b16 %v2318, %v2310
    %v4359 = vpack.c.b16 %v2327, %v2319
    %v4360 = vpack.c.b16 %v2328, %v2320
    %v4361 = vpack.c.b16 %v2329, %v2321
    %v4362 = vpack.c.b16 %v2330, %v2322
    %v4363 = vpack.c.b16 %v2331, %v2323
    %v4364 = vpack.c.b16 %v2332, %v2324
    %v4365 = vpack.c.b16 %v2333, %v2325
    %v4366 = vpack.c.b16 %v2334, %v2326
    %v4367 = vpack.c.b16 %v2343, %v2335
    %v4368 = vpack.c.b16 %v2344, %v2336
    %v4369 = vpack.c.b16 %v2345, %v2337
    %v4370 = vpack.c.b16 %v2346, %v2338
    %v4371 = vpack.c.b16 %v2347, %v2339
    %v4372 = vpack.c.b16 %v2348, %v2340
    %v4373 = vpack.c.b16 %v2349, %v2341
    %v4374 = vpack.c.b16 %v2350, %v2342
    %v4375 = vpack.c.b16 %v2359, %v2351
    %v4376 = vpack.c.b16 %v2360, %v2352
    %v4377 = vpack.c.b16 %v2361, %v2353
    %v4378 = vpack.c.b16 %v2362, %v2354
    %v4379 = vpack.c.b16 %v2363, %v2355
    %v4380 = vpack.c.b16 %v2364, %v2356
    %v4381 = vpack.c.b16 %v2365, %v2357
    %v4382 = vpack.c.b16 %v2366, %v2358
    %v4383 = vpack.c.b16 %v2375, %v2367
    %v4384 = vpack.c.b16 %v2376, %v2368
    %v4385 = vpack.c.b16 %v2377, %v2369
    %v4386 = vpack.c.b16 %v2378, %v2370
    %v4387 = vpack.c.b16 %v2379, %v2371
    %v4388 = vpack.c.b16 %v2380, %v2372
    %v4389 = vpack.c.b16 %v2381, %v2373
    %v4390 = vpack.c.b16 %v2382, %v2374
    %v4391 = vpack.c.b16 %v2391, %v2383
    %v4392 = vpack.c.b16 %v2392, %v2384
    %v4393 = vpack.c.b16 %v2393, %v2385
    %v4394 = vpack.c.b16 %v2394, %v2386
    %v4395 = vpack.c.b16 %v2395, %v2387
    %v4396 = vpack.c.b16 %v2396, %v2388
    %v4397 = vpack.c.b16 %v2397, %v2389
    %v4398 = vpack.c.b16 %v2398, %v2390
    %v4399 = vpack.c.b16 %v2407, %v2399
    %v4400 = vpack.c.b16 %v2408, %v2400
    %v4401 = vpack.c.b16 %v2409, %v2401
    %v4402 = vpack.c.b16 %v2410, %v2402
    %v4403 = vpack.c.b16 %v2411, %v2403
    %v4404 = vpack.c.b16 %v2412, %v2404
    %v4405 = vpack.c.b16 %v2413, %v2405
    %v4406 = vpack.c.b16 %v2414, %v2406
    %v4407 = vpack.c.b16 %v2423, %v2415
    %v4408 = vpack.c.b16 %v2424, %v2416
    %v4409 = vpack.c.b16 %v2425, %v2417
    %v4410 = vpack.c.b16 %v2426, %v2418
    %v4411 = vpack.c.b16 %v2427, %v2419
    %v4412 = vpack.c.b16 %v2428, %v2420
    %v4413 = vpack.c.b16 %v2429, %v2421
    %v4414 = vpack.c.b16 %v2430, %v2422
    %v4415 = vpack.c.b16 %v2439, %v2431
    %v4416 = vpack.c.b16 %v2440, %v2432
    %v4417 = vpack.c.b16 %v2441, %v2433
    %v4418 = vpack.c.b16 %v2442, %v2434
    %v4419 = vpack.c.b16 %v2443, %v2435
    %v4420 = vpack.c.b16 %v2444, %v2436
    %v4421 = vpack.c.b16 %v2445, %v2437
    %v4422 = vpack.c.b16 %v2446, %v2438
    %v4423 = vpack.c.b16 %v2455, %v2447
    %v4424 = vpack.c.b16 %v2456, %v2448
    %v4425 = vpack.c.b16 %v2457, %v2449
    %v4426 = vpack.c.b16 %v2458, %v2450
    %v4427 = vpack.c.b16 %v2459, %v2451
    %v4428 = vpack.c.b16 %v2460, %v2452
    %v4429 = vpack.c.b16 %v2461, %v2453
    %v4430 = vpack.c.b16 %v2462, %v2454
    %v4431 = vpack.c.b16 %v2471, %v2463
    %v4432 = vpack.c.b16 %v2472, %v2464
    %v4433 = vpack.c.b16 %v2473, %v2465
    %v4434 = vpack.c.b16 %v2474, %v2466
    %v4435 = vpack.c.b16 %v2475, %v2467
    %v4436 = vpack.c.b16 %v2476, %v2468
    %v4437 = vpack.c.b16 %v2477, %v2469
    %v4438 = vpack.c.b16 %v2478, %v2470
    %v4439 = vpack.c.b16 %v2487, %v2479
    %v4440 = vpack.c.b16 %v2488, %v2480
    %v4441 = vpack.c.b16 %v2489, %v2481
    %v4442 = vpack.c.b16 %v2490, %v2482
    %v4443 = vpack.c.b16 %v2491, %v2483
    %v4444 = vpack.c.b16 %v2492, %v2484
    %v4445 = vpack.c.b16 %v2493, %v2485
    %v4446 = vpack.c.b16 %v2494, %v2486
    %v4447 = vpack.c.b16 %v2503, %v2495
    %v4448 = vpack.c.b16 %v2504, %v2496
    %v4449 = vpack.c.b16 %v2505, %v2497
    %v4450 = vpack.c.b16 %v2506, %v2498
    %v4451 = vpack.c.b16 %v2507, %v2499
    %v4452 = vpack.c.b16 %v2508, %v2500
    %v4453 = vpack.c.b16 %v2509, %v2501
    %v4454 = vpack.c.b16 %v2510, %v2502
    %v4455 = vpack.c.b16 %v2519, %v2511
    %v4456 = vpack.c.b16 %v2520, %v2512
    %v4457 = vpack.c.b16 %v2521, %v2513
    %v4458 = vpack.c.b16 %v2522, %v2514
    %v4459 = vpack.c.b16 %v2523, %v2515
    %v4460 = vpack.c.b16 %v2524, %v2516
    %v4461 = vpack.c.b16 %v2525, %v2517
    %v4462 = vpack.c.b16 %v2526, %v2518
    %v4463 = vpack.c.b16 %v2535, %v2527
    %v4464 = vpack.c.b16 %v2536, %v2528
    %v4465 = vpack.c.b16 %v2537, %v2529
    %v4466 = vpack.c.b16 %v2538, %v2530
    %v4467 = vpack.c.b16 %v2539, %v2531
    %v4468 = vpack.c.b16 %v2540, %v2532
    %v4469 = vpack.c.b16 %v2541, %v2533
    %v4470 = vpack.c.b16 %v2542, %v2534
    %v4471 = vpack.c.b16 %v2551, %v2543
    %v4472 = vpack.c.b16 %v2552, %v2544
    %v4473 = vpack.c.b16 %v2553, %v2545
    %v4474 = vpack.c.b16 %v2554, %v2546
    %v4475 = vpack.c.b16 %v2555, %v2547
    %v4476 = vpack.c.b16 %v2556, %v2548
    %v4477 = vpack.c.b16 %v2557, %v2549
    %v4478 = vpack.c.b16 %v2558, %v2550
    %v4479 = vpack.c.b16 %v2567, %v2559
    %v4480 = vpack.c.b16 %v2568, %v2560
    %v4481 = vpack.c.b16 %v2569, %v2561
    %v4482 = vpack.c.b16 %v2570, %v2562
    %v4483 = vpack.c.b16 %v2571, %v2563
    %v4484 = vpack.c.b16 %v2572, %v2564
    %v4485 = vpack.c.b16 %v2573, %v2565
    %v4486 = vpack.c.b16 %v2574, %v2566
    %v4487 = vpack.c.b16 %v2583, %v2575
    %v4488 = vpack.c.b16 %v2584, %v2576
    %v4489 = vpack.c.b16 %v2585, %v2577
    %v4490 = vpack.c.b16 %v2586, %v2578
    %v4491 = vpack.c.b16 %v2587, %v2579
    %v4492 = vpack.c.b16 %v2588, %v2580
    %v4493 = vpack.c.b16 %v2589, %v2581
    %v4494 = vpack.c.b16 %v2590, %v2582
    %v4495 = vpack.c.b16 %v2599, %v2591
    %v4496 = vpack.c.b16 %v2600, %v2592
    %v4497 = vpack.c.b16 %v2601, %v2593
    %v4498 = vpack.c.b16 %v2602, %v2594
    %v4499 = vpack.c.b16 %v2603, %v2595
    %v4500 = vpack.c.b16 %v2604, %v2596
    %v4501 = vpack.c.b16 %v2605, %v2597
    %v4502 = vpack.c.b16 %v2606, %v2598
    %v4503 = vpack.c.b16 %v2615, %v2607
    %v4504 = vpack.c.b16 %v2616, %v2608
    %v4505 = vpack.c.b16 %v2617, %v2609
    %v4506 = vpack.c.b16 %v2618, %v2610
    %v4507 = vpack.c.b16 %v2619, %v2611
    %v4508 = vpack.c.b16 %v2620, %v2612
    %v4509 = vpack.c.b16 %v2621, %v2613
    %v4510 = vpack.c.b16 %v2622, %v2614
    %v4511 = vpack.c.b16 %v2631, %v2623
    %v4512 = vpack.c.b16 %v2632, %v2624
    %v4513 = vpack.c.b16 %v2633, %v2625
    %v4514 = vpack.c.b16 %v2634, %v2626
    %v4515 = vpack.c.b16 %v2635, %v2627
    %v4516 = vpack.c.b16 %v2636, %v2628
    %v4517 = vpack.c.b16 %v2637, %v2629
    %v4518 = vpack.c.b16 %v2638, %v2630
    %v4519 = vpack.c.b16 %v2647, %v2639
    %v4520 = vpack.c.b16 %v2648, %v2640
    %v4521 = vpack.c.b16 %v2649, %v2641
    %v4522 = vpack.c.b16 %v2650, %v2642
    %v4523 = vpack.c.b16 %v2651, %v2643
    %v4524 = vpack.c.b16 %v2652, %v2644
    %v4525 = vpack.c.b16 %v2653, %v2645
    %v4526 = vpack.c.b16 %v2654, %v2646
    %v4527 = vpack.c.b16 %v2663, %v2655
    %v4528 = vpack.c.b16 %v2664, %v2656
    %v4529 = vpack.c.b16 %v2665, %v2657
    %v4530 = vpack.c.b16 %v2666, %v2658
    %v4531 = vpack.c.b16 %v2667, %v2659
    %v4532 = vpack.c.b16 %v2668, %v2660
    %v4533 = vpack.c.b16 %v2669, %v2661
    %v4534 = vpack.c.b16 %v2670, %v2662
    %v4535 = vpack.c.b16 %v2679, %v2671
    %v4536 = vpack.c.b16 %v2680, %v2672
    %v4537 = vpack.c.b16 %v2681, %v2673
    %v4538 = vpack.c.b16 %v2682, %v2674
    %v4539 = vpack.c.b16 %v2683, %v2675
    %v4540 = vpack.c.b16 %v2684, %v2676
    %v4541 = vpack.c.b16 %v2685, %v2677
    %v4542 = vpack.c.b16 %v2686, %v2678
    %v4543 = vpack.c.b16 %v2695, %v2687
    %v4544 = vpack.c.b16 %v2696, %v2688
    %v4545 = vpack.c.b16 %v2697, %v2689
    %v4546 = vpack.c.b16 %v2698, %v2690
    %v4547 = vpack.c.b16 %v2699, %v2691
    %v4548 = vpack.c.b16 %v2700, %v2692
    %v4549 = vpack.c.b16 %v2701, %v2693
    %v4550 = vpack.c.b16 %v2702, %v2694
    %v4551 = vpack.c.b16 %v2711, %v2703
    %v4552 = vpack.c.b16 %v2712, %v2704
    %v4553 = vpack.c.b16 %v2713, %v2705
    %v4554 = vpack.c.b16 %v2714, %v2706
    %v4555 = vpack.c.b16 %v2715, %v2707
    %v4556 = vpack.c.b16 %v2716, %v2708
    %v4557 = vpack.c.b16 %v2717, %v2709
    %v4558 = vpack.c.b16 %v2718, %v2710
    %v4559 = vpack.c.b16 %v2727, %v2719
    %v4560 = vpack.c.b16 %v2728, %v2720
    %v4561 = vpack.c.b16 %v2729, %v2721
    %v4562 = vpack.c.b16 %v2730, %v2722
    %v4563 = vpack.c.b16 %v2731, %v2723
    %v4564 = vpack.c.b16 %v2732, %v2724
    %v4565 = vpack.c.b16 %v2733, %v2725
    %v4566 = vpack.c.b16 %v2734, %v2726
    %v4567 = vpack.c.b16 %v2743, %v2735
    %v4568 = vpack.c.b16 %v2744, %v2736
    %v4569 = vpack.c.b16 %v2745, %v2737
    %v4570 = vpack.c.b16 %v2746, %v2738
    %v4571 = vpack.c.b16 %v2747, %v2739
    %v4572 = vpack.c.b16 %v2748, %v2740
    %v4573 = vpack.c.b16 %v2749, %v2741
    %v4574 = vpack.c.b16 %v2750, %v2742
    %v4575 = vpack.c.b16 %v2759, %v2751
    %v4576 = vpack.c.b16 %v2760, %v2752
    %v4577 = vpack.c.b16 %v2761, %v2753
    %v4578 = vpack.c.b16 %v2762, %v2754
    %v4579 = vpack.c.b16 %v2763, %v2755
    %v4580 = vpack.c.b16 %v2764, %v2756
    %v4581 = vpack.c.b16 %v2765, %v2757
    %v4582 = vpack.c.b16 %v2766, %v2758
    %v4583 = vpack.c.b16 %v2775, %v2767
    %v4584 = vpack.c.b16 %v2776, %v2768
    %v4585 = vpack.c.b16 %v2777, %v2769
    %v4586 = vpack.c.b16 %v2778, %v2770
    %v4587 = vpack.c.b16 %v2779, %v2771
    %v4588 = vpack.c.b16 %v2780, %v2772
    %v4589 = vpack.c.b16 %v2781, %v2773
    %v4590 = vpack.c.b16 %v2782, %v2774
    %v4591 = vpack.c.b16 %v2791, %v2783
    %v4592 = vpack.c.b16 %v2792, %v2784
    %v4593 = vpack.c.b16 %v2793, %v2785
    %v4594 = vpack.c.b16 %v2794, %v2786
    %v4595 = vpack.c.b16 %v2795, %v2787
    %v4596 = vpack.c.b16 %v2796, %v2788
    %v4597 = vpack.c.b16 %v2797, %v2789
    %v4598 = vpack.c.b16 %v2798, %v2790
    %v4599 = vpack.c.b16 %v2807, %v2799
    %v4600 = vpack.c.b16 %v2808, %v2800
    %v4601 = vpack.c.b16 %v2809, %v2801
    %v4602 = vpack.c.b16 %v2810, %v2802
    %v4603 = vpack.c.b16 %v2811, %v2803
    %v4604 = vpack.c.b16 %v2812, %v2804
    %v4605 = vpack.c.b16 %v2813, %v2805
    %v4606 = vpack.c.b16 %v2814, %v2806
    %v4607 = vpack.c.b16 %v2823, %v2815
    %v4608 = vpack.c.b16 %v2824, %v2816
    %v4609 = vpack.c.b16 %v2825, %v2817
    %v4610 = vpack.c.b16 %v2826, %v2818
    %v4611 = vpack.c.b16 %v2827, %v2819
    %v4612 = vpack.c.b16 %v2828, %v2820
    %v4613 = vpack.c.b16 %v2829, %v2821
    %v4614 = vpack.c.b16 %v2830, %v2822
    %v4615 = vpack.c.b16 %v2839, %v2831
    %v4616 = vpack.c.b16 %v2840, %v2832
    %v4617 = vpack.c.b16 %v2841, %v2833
    %v4618 = vpack.c.b16 %v2842, %v2834
    %v4619 = vpack.c.b16 %v2843, %v2835
    %v4620 = vpack.c.b16 %v2844, %v2836
    %v4621 = vpack.c.b16 %v2845, %v2837
    %v4622 = vpack.c.b16 %v2846, %v2838
    %v4623 = vpack.c.b16 %v2855, %v2847
    %v4624 = vpack.c.b16 %v2856, %v2848
    %v4625 = vpack.c.b16 %v2857, %v2849
    %v4626 = vpack.c.b16 %v2858, %v2850
    %v4627 = vpack.c.b16 %v2859, %v2851
    %v4628 = vpack.c.b16 %v2860, %v2852
    %v4629 = vpack.c.b16 %v2861, %v2853
    %v4630 = vpack.c.b16 %v2862, %v2854
    %v4631 = vpack.c.b16 %v2871, %v2863
    %v4632 = vpack.c.b16 %v2872, %v2864
    %v4633 = vpack.c.b16 %v2873, %v2865
    %v4634 = vpack.c.b16 %v2874, %v2866
    %v4635 = vpack.c.b16 %v2875, %v2867
    %v4636 = vpack.c.b16 %v2876, %v2868
    %v4637 = vpack.c.b16 %v2877, %v2869
    %v4638 = vpack.c.b16 %v2878, %v2870
    %v4639 = vpack.c.b16 %v2887, %v2879
    %v4640 = vpack.c.b16 %v2888, %v2880
    %v4641 = vpack.c.b16 %v2889, %v2881
    %v4642 = vpack.c.b16 %v2890, %v2882
    %v4643 = vpack.c.b16 %v2891, %v2883
    %v4644 = vpack.c.b16 %v2892, %v2884
    %v4645 = vpack.c.b16 %v2893, %v2885
    %v4646 = vpack.c.b16 %v2894, %v2886
    %v4647 = vpack.c.b16 %v2903, %v2895
    %v4648 = vpack.c.b16 %v2904, %v2896
    %v4649 = vpack.c.b16 %v2905, %v2897
    %v4650 = vpack.c.b16 %v2906, %v2898
    %v4651 = vpack.c.b16 %v2907, %v2899
    %v4652 = vpack.c.b16 %v2908, %v2900
    %v4653 = vpack.c.b16 %v2909, %v2901
    %v4654 = vpack.c.b16 %v2910, %v2902
    %v4655 = vpack.c.b16 %v2919, %v2911
    %v4656 = vpack.c.b16 %v2920, %v2912
    %v4657 = vpack.c.b16 %v2921, %v2913
    %v4658 = vpack.c.b16 %v2922, %v2914
    %v4659 = vpack.c.b16 %v2923, %v2915
    %v4660 = vpack.c.b16 %v2924, %v2916
    %v4661 = vpack.c.b16 %v2925, %v2917
    %v4662 = vpack.c.b16 %v2926, %v2918
    %v4663 = vpack.c.b16 %v2935, %v2927
    %v4664 = vpack.c.b16 %v2936, %v2928
    %v4665 = vpack.c.b16 %v2937, %v2929
    %v4666 = vpack.c.b16 %v2938, %v2930
    %v4667 = vpack.c.b16 %v2939, %v2931
    %v4668 = vpack.c.b16 %v2940, %v2932
    %v4669 = vpack.c.b16 %v2941, %v2933
    %v4670 = vpack.c.b16 %v2942, %v2934
    %v4671 = vpack.c.b16 %v2951, %v2943
    %v4672 = vpack.c.b16 %v2952, %v2944
    %v4673 = vpack.c.b16 %v2953, %v2945
    %v4674 = vpack.c.b16 %v2954, %v2946
    %v4675 = vpack.c.b16 %v2955, %v2947
    %v4676 = vpack.c.b16 %v2956, %v2948
    %v4677 = vpack.c.b16 %v2957, %v2949
    %v4678 = vpack.c.b16 %v2958, %v2950
    %v4679 = vpack.c.b16 %v2967, %v2959
    %v4680 = vpack.c.b16 %v2968, %v2960
    %v4681 = vpack.c.b16 %v2969, %v2961
    %v4682 = vpack.c.b16 %v2970, %v2962
    %v4683 = vpack.c.b16 %v2971, %v2963
    %v4684 = vpack.c.b16 %v2972, %v2964
    %v4685 = vpack.c.b16 %v2973, %v2965
    %v4686 = vpack.c.b16 %v2974, %v2966
    %v4687 = vpack.c.b16 %v2983, %v2975
    %v4688 = vpack.c.b16 %v2984, %v2976
    %v4689 = vpack.c.b16 %v2985, %v2977
    %v4690 = vpack.c.b16 %v2986, %v2978
    %v4691 = vpack.c.b16 %v2987, %v2979
    %v4692 = vpack.c.b16 %v2988, %v2980
    %v4693 = vpack.c.b16 %v2989, %v2981
    %v4694 = vpack.c.b16 %v2990, %v2982
    %v4695 = vpack.c.b16 %v2999, %v2991
    %v4696 = vpack.c.b16 %v3000, %v2992
    %v4697 = vpack.c.b16 %v3001, %v2993
    %v4698 = vpack.c.b16 %v3002, %v2994
    %v4699 = vpack.c.b16 %v3003, %v2995
    %v4700 = vpack.c.b16 %v3004, %v2996
    %v4701 = vpack.c.b16 %v3005, %v2997
    %v4702 = vpack.c.b16 %v3006, %v2998
    %v4703 = vpack.c.b16 %v3015, %v3007
    %v4704 = vpack.c.b16 %v3016, %v3008
    %v4705 = vpack.c.b16 %v3017, %v3009
    %v4706 = vpack.c.b16 %v3018, %v3010
    %v4707 = vpack.c.b16 %v3019, %v3011
    %v4708 = vpack.c.b16 %v3020, %v3012
    %v4709 = vpack.c.b16 %v3021, %v3013
    %v4710 = vpack.c.b16 %v3022, %v3014
    %v4711 = vpack.c.b16 %v3031, %v3023
    %v4712 = vpack.c.b16 %v3032, %v3024
    %v4713 = vpack.c.b16 %v3033, %v3025
    %v4714 = vpack.c.b16 %v3034, %v3026
    %v4715 = vpack.c.b16 %v3035, %v3027
    %v4716 = vpack.c.b16 %v3036, %v3028
    %v4717 = vpack.c.b16 %v3037, %v3029
    %v4718 = vpack.c.b16 %v3038, %v3030
    %v4719 = vpack.c.b16 %v3047, %v3039
    %v4720 = vpack.c.b16 %v3048, %v3040
    %v4721 = vpack.c.b16 %v3049, %v3041
    %v4722 = vpack.c.b16 %v3050, %v3042
    %v4723 = vpack.c.b16 %v3051, %v3043
    %v4724 = vpack.c.b16 %v3052, %v3044
    %v4725 = vpack.c.b16 %v3053, %v3045
    %v4726 = vpack.c.b16 %v3054, %v3046
    %v4727 = vpack.c.b16 %v3063, %v3055
    %v4728 = vpack.c.b16 %v3064, %v3056
    %v4729 = vpack.c.b16 %v3065, %v3057
    %v4730 = vpack.c.b16 %v3066, %v3058
    %v4731 = vpack.c.b16 %v3067, %v3059
    %v4732 = vpack.c.b16 %v3068, %v3060
    %v4733 = vpack.c.b16 %v3069, %v3061
    %v4734 = vpack.c.b16 %v3070, %v3062
    %v4735 = vpack.c.b16 %v3079, %v3071
    %v4736 = vpack.c.b16 %v3080, %v3072
    %v4737 = vpack.c.b16 %v3081, %v3073
    %v4738 = vpack.c.b16 %v3082, %v3074
    %v4739 = vpack.c.b16 %v3083, %v3075
    %v4740 = vpack.c.b16 %v3084, %v3076
    %v4741 = vpack.c.b16 %v3085, %v3077
    %v4742 = vpack.c.b16 %v3086, %v3078
    %v4743 = vpack.c.b16 %v3095, %v3087
    %v4744 = vpack.c.b16 %v3096, %v3088
    %v4745 = vpack.c.b16 %v3097, %v3089
    %v4746 = vpack.c.b16 %v3098, %v3090
    %v4747 = vpack.c.b16 %v3099, %v3091
    %v4748 = vpack.c.b16 %v3100, %v3092
    %v4749 = vpack.c.b16 %v3101, %v3093
    %v4750 = vpack.c.b16 %v3102, %v3094
    %v4751 = vpack.c.b16 %v3111, %v3103
    %v4752 = vpack.c.b16 %v3112, %v3104
    %v4753 = vpack.c.b16 %v3113, %v3105
    %v4754 = vpack.c.b16 %v3114, %v3106
    %v4755 = vpack.c.b16 %v3115, %v3107
    %v4756 = vpack.c.b16 %v3116, %v3108
    %v4757 = vpack.c.b16 %v3117, %v3109
    %v4758 = vpack.c.b16 %v3118, %v3110
    %v4759 = vpack.c.b16 %v3127, %v3119
    %v4760 = vpack.c.b16 %v3128, %v3120
    %v4761 = vpack.c.b16 %v3129, %v3121
    %v4762 = vpack.c.b16 %v3130, %v3122
    %v4763 = vpack.c.b16 %v3131, %v3123
    %v4764 = vpack.c.b16 %v3132, %v3124
    %v4765 = vpack.c.b16 %v3133, %v3125
    %v4766 = vpack.c.b16 %v3134, %v3126
    %v4767 = vpack.c.b16 %v3143, %v3135
    %v4768 = vpack.c.b16 %v3144, %v3136
    %v4769 = vpack.c.b16 %v3145, %v3137
    %v4770 = vpack.c.b16 %v3146, %v3138
    %v4771 = vpack.c.b16 %v3147, %v3139
    %v4772 = vpack.c.b16 %v3148, %v3140
    %v4773 = vpack.c.b16 %v3149, %v3141
    %v4774 = vpack.c.b16 %v3150, %v3142
    %v4775 = vpack.c.b16 %v3159, %v3151
    %v4776 = vpack.c.b16 %v3160, %v3152
    %v4777 = vpack.c.b16 %v3161, %v3153
    %v4778 = vpack.c.b16 %v3162, %v3154
    %v4779 = vpack.c.b16 %v3163, %v3155
    %v4780 = vpack.c.b16 %v3164, %v3156
    %v4781 = vpack.c.b16 %v3165, %v3157
    %v4782 = vpack.c.b16 %v3166, %v3158
    %v4783 = vpack.c.b16 %v3175, %v3167
    %v4784 = vpack.c.b16 %v3176, %v3168
    %v4785 = vpack.c.b16 %v3177, %v3169
    %v4786 = vpack.c.b16 %v3178, %v3170
    %v4787 = vpack.c.b16 %v3179, %v3171
    %v4788 = vpack.c.b16 %v3180, %v3172
    %v4789 = vpack.c.b16 %v3181, %v3173
    %v4790 = vpack.c.b16 %v3182, %v3174
    %v4791 = vpack.c.b16 %v3191, %v3183
    %v4792 = vpack.c.b16 %v3192, %v3184
    %v4793 = vpack.c.b16 %v3193, %v3185
    %v4794 = vpack.c.b16 %v3194, %v3186
    %v4795 = vpack.c.b16 %v3195, %v3187
    %v4796 = vpack.c.b16 %v3196, %v3188
    %v4797 = vpack.c.b16 %v3197, %v3189
    %v4798 = vpack.c.b16 %v3198, %v3190
    %v4799 = vpack.c.b16 %v3207, %v3199
    %v4800 = vpack.c.b16 %v3208, %v3200
    %v4801 = vpack.c.b16 %v3209, %v3201
    %v4802 = vpack.c.b16 %v3210, %v3202
    %v4803 = vpack.c.b16 %v3211, %v3203
    %v4804 = vpack.c.b16 %v3212, %v3204
    %v4805 = vpack.c.b16 %v3213, %v3205
    %v4806 = vpack.c.b16 %v3214, %v3206
    %v4807 = vpack.c.b16 %v3223, %v3215
    %v4808 = vpack.c.b16 %v3224, %v3216
    %v4809 = vpack.c.b16 %v3225, %v3217
    %v4810 = vpack.c.b16 %v3226, %v3218
    %v4811 = vpack.c.b16 %v3227, %v3219
    %v4812 = vpack.c.b16 %v3228, %v3220
    %v4813 = vpack.c.b16 %v3229, %v3221
    %v4814 = vpack.c.b16 %v3230, %v3222
    %v4815 = vpack.c.b16 %v3239, %v3231
    %v4816 = vpack.c.b16 %v3240, %v3232
    %v4817 = vpack.c.b16 %v3241, %v3233
    %v4818 = vpack.c.b16 %v3242, %v3234
    %v4819 = vpack.c.b16 %v3243, %v3235
    %v4820 = vpack.c.b16 %v3244, %v3236
    %v4821 = vpack.c.b16 %v3245, %v3237
    %v4822 = vpack.c.b16 %v3246, %v3238
    %v4823 = vpack.c.b16 %v3255, %v3247
    %v4824 = vpack.c.b16 %v3256, %v3248
    %v4825 = vpack.c.b16 %v3257, %v3249
    %v4826 = vpack.c.b16 %v3258, %v3250
    %v4827 = vpack.c.b16 %v3259, %v3251
    %v4828 = vpack.c.b16 %v3260, %v3252
    %v4829 = vpack.c.b16 %v3261, %v3253
    %v4830 = vpack.c.b16 %v3262, %v3254
    %v4831 = vpack.c.b16 %v3271, %v3263
    %v4832 = vpack.c.b16 %v3272, %v3264
    %v4833 = vpack.c.b16 %v3273, %v3265
    %v4834 = vpack.c.b16 %v3274, %v3266
    %v4835 = vpack.c.b16 %v3275, %v3267
    %v4836 = vpack.c.b16 %v3276, %v3268
    %v4837 = vpack.c.b16 %v3277, %v3269
    %v4838 = vpack.c.b16 %v3278, %v3270
    %v4839 = vpack.c.b16 %v3287, %v3279
    %v4840 = vpack.c.b16 %v3288, %v3280
    %v4841 = vpack.c.b16 %v3289, %v3281
    %v4842 = vpack.c.b16 %v3290, %v3282
    %v4843 = vpack.c.b16 %v3291, %v3283
    %v4844 = vpack.c.b16 %v3292, %v3284
    %v4845 = vpack.c.b16 %v3293, %v3285
    %v4846 = vpack.c.b16 %v3294, %v3286
    %v4847 = vpack.c.b16 %v3303, %v3295
    %v4848 = vpack.c.b16 %v3304, %v3296
    %v4849 = vpack.c.b16 %v3305, %v3297
    %v4850 = vpack.c.b16 %v3306, %v3298
    %v4851 = vpack.c.b16 %v3307, %v3299
    %v4852 = vpack.c.b16 %v3308, %v3300
    %v4853 = vpack.c.b16 %v3309, %v3301
    %v4854 = vpack.c.b16 %v3310, %v3302
    %v4855 = vpack.c.b16 %v3319, %v3311
    %v4856 = vpack.c.b16 %v3320, %v3312
    %v4857 = vpack.c.b16 %v3321, %v3313
    %v4858 = vpack.c.b16 %v3322, %v3314
    %v4859 = vpack.c.b16 %v3323, %v3315
    %v4860 = vpack.c.b16 %v3324, %v3316
    %v4861 = vpack.c.b16 %v3325, %v3317
    %v4862 = vpack.c.b16 %v3326, %v3318
    %v4863 = vpack.c.b16 %v3335, %v3327
    %v4864 = vpack.c.b16 %v3336, %v3328
    %v4865 = vpack.c.b16 %v3337, %v3329
    %v4866 = vpack.c.b16 %v3338, %v3330
    %v4867 = vpack.c.b16 %v3339, %v3331
    %v4868 = vpack.c.b16 %v3340, %v3332
    %v4869 = vpack.c.b16 %v3341, %v3333
    %v4870 = vpack.c.b16 %v3342, %v3334
    %v4871 = vpack.c.b16 %v3351, %v3343
    %v4872 = vpack.c.b16 %v3352, %v3344
    %v4873 = vpack.c.b16 %v3353, %v3345
    %v4874 = vpack.c.b16 %v3354, %v3346
    %v4875 = vpack.c.b16 %v3355, %v3347
    %v4876 = vpack.c.b16 %v3356, %v3348
    %v4877 = vpack.c.b16 %v3357, %v3349
    %v4878 = vpack.c.b16 %v3358, %v3350
    %v4879 = vpack.c.b16 %v3367, %v3359
    %v4880 = vpack.c.b16 %v3368, %v3360
    %v4881 = vpack.c.b16 %v3369, %v3361
    %v4882 = vpack.c.b16 %v3370, %v3362
    %v4883 = vpack.c.b16 %v3371, %v3363
    %v4884 = vpack.c.b16 %v3372, %v3364
    %v4885 = vpack.c.b16 %v3373, %v3365
    %v4886 = vpack.c.b16 %v3374, %v3366
    %v4887 = vpack.c.b16 %v3383, %v3375
    %v4888 = vpack.c.b16 %v3384, %v3376
    %v4889 = vpack.c.b16 %v3385, %v3377
    %v4890 = vpack.c.b16 %v3386, %v3378
    %v4891 = vpack.c.b16 %v3387, %v3379
    %v4892 = vpack.c.b16 %v3388, %v3380
    %v4893 = vpack.c.b16 %v3389, %v3381
    %v4894 = vpack.c.b16 %v3390, %v3382
    %v4895 = vpack.c.b16 %v3399, %v3391
    %v4896 = vpack.c.b16 %v3400, %v3392
    %v4897 = vpack.c.b16 %v3401, %v3393
    %v4898 = vpack.c.b16 %v3402, %v3394
    %v4899 = vpack.c.b16 %v3403, %v3395
    %v4900 = vpack.c.b16 %v3404, %v3396
    %v4901 = vpack.c.b16 %v3405, %v3397
    %v4902 = vpack.c.b16 %v3406, %v3398
    %v4903 = vpack.c.b16 %v3415, %v3407
    %v4904 = vpack.c.b16 %v3416, %v3408
    %v4905 = vpack.c.b16 %v3417, %v3409
    %v4906 = vpack.c.b16 %v3418, %v3410
    %v4907 = vpack.c.b16 %v3419, %v3411
    %v4908 = vpack.c.b16 %v3420, %v3412
    %v4909 = vpack.c.b16 %v3421, %v3413
    %v4910 = vpack.c.b16 %v3422, %v3414
    %v4911 = vpack.c.b16 %v3431, %v3423
    %v4912 = vpack.c.b16 %v3432, %v3424
    %v4913 = vpack.c.b16 %v3433, %v3425
    %v4914 = vpack.c.b16 %v3434, %v3426
    %v4915 = vpack.c.b16 %v3435, %v3427
    %v4916 = vpack.c.b16 %v3436, %v3428
    %v4917 = vpack.c.b16 %v3437, %v3429
    %v4918 = vpack.c.b16 %v3438, %v3430
    %v4919 = vpack.c.b16 %v3447, %v3439
    %v4920 = vpack.c.b16 %v3448, %v3440
    %v4921 = vpack.c.b16 %v3449, %v3441
    %v4922 = vpack.c.b16 %v3450, %v3442
    %v4923 = vpack.c.b16 %v3451, %v3443
    %v4924 = vpack.c.b16 %v3452, %v3444
    %v4925 = vpack.c.b16 %v3453, %v3445
    %v4926 = vpack.c.b16 %v3454, %v3446
    %v4927 = vpack.c.b16 %v3463, %v3455
    %v4928 = vpack.c.b16 %v3464, %v3456
    %v4929 = vpack.c.b16 %v3465, %v3457
    %v4930 = vpack.c.b16 %v3466, %v3458
    %v4931 = vpack.c.b16 %v3467, %v3459
    %v4932 = vpack.c.b16 %v3468, %v3460
    %v4933 = vpack.c.b16 %v3469, %v3461
    %v4934 = vpack.c.b16 %v3470, %v3462
    %v4935 = vpack.c.b16 %v3479, %v3471
    %v4936 = vpack.c.b16 %v3480, %v3472
    %v4937 = vpack.c.b16 %v3481, %v3473
    %v4938 = vpack.c.b16 %v3482, %v3474
    %v4939 = vpack.c.b16 %v3483, %v3475
    %v4940 = vpack.c.b16 %v3484, %v3476
    %v4941 = vpack.c.b16 %v3485, %v3477
    %v4942 = vpack.c.b16 %v3486, %v3478
    %v4943 = vpack.c.b16 %v3495, %v3487
    %v4944 = vpack.c.b16 %v3496, %v3488
    %v4945 = vpack.c.b16 %v3497, %v3489
    %v4946 = vpack.c.b16 %v3498, %v3490
    %v4947 = vpack.c.b16 %v3499, %v3491
    %v4948 = vpack.c.b16 %v3500, %v3492
    %v4949 = vpack.c.b16 %v3501, %v3493
    %v4950 = vpack.c.b16 %v3502, %v3494
    %v4951 = vpack.c.b16 %v3511, %v3503
    %v4952 = vpack.c.b16 %v3512, %v3504
    %v4953 = vpack.c.b16 %v3513, %v3505
    %v4954 = vpack.c.b16 %v3514, %v3506
    %v4955 = vpack.c.b16 %v3515, %v3507
    %v4956 = vpack.c.b16 %v3516, %v3508
    %v4957 = vpack.c.b16 %v3517, %v3509
    %v4958 = vpack.c.b16 %v3518, %v3510
    %v4959 = vpack.c.b16 %v3527, %v3519
    %v4960 = vpack.c.b16 %v3528, %v3520
    %v4961 = vpack.c.b16 %v3529, %v3521
    %v4962 = vpack.c.b16 %v3530, %v3522
    %v4963 = vpack.c.b16 %v3531, %v3523
    %v4964 = vpack.c.b16 %v3532, %v3524
    %v4965 = vpack.c.b16 %v3533, %v3525
    %v4966 = vpack.c.b16 %v3534, %v3526
    %v4967 = vpack.c.b16 %v3543, %v3535
    %v4968 = vpack.c.b16 %v3544, %v3536
    %v4969 = vpack.c.b16 %v3545, %v3537
    %v4970 = vpack.c.b16 %v3546, %v3538
    %v4971 = vpack.c.b16 %v3547, %v3539
    %v4972 = vpack.c.b16 %v3548, %v3540
    %v4973 = vpack.c.b16 %v3549, %v3541
    %v4974 = vpack.c.b16 %v3550, %v3542
    %v4975 = vpack.c.b16 %v3559, %v3551
    %v4976 = vpack.c.b16 %v3560, %v3552
    %v4977 = vpack.c.b16 %v3561, %v3553
    %v4978 = vpack.c.b16 %v3562, %v3554
    %v4979 = vpack.c.b16 %v3563, %v3555
    %v4980 = vpack.c.b16 %v3564, %v3556
    %v4981 = vpack.c.b16 %v3565, %v3557
    %v4982 = vpack.c.b16 %v3566, %v3558
    %v4983 = vpack.c.b16 %v3575, %v3567
    %v4984 = vpack.c.b16 %v3576, %v3568
    %v4985 = vpack.c.b16 %v3577, %v3569
    %v4986 = vpack.c.b16 %v3578, %v3570
    %v4987 = vpack.c.b16 %v3579, %v3571
    %v4988 = vpack.c.b16 %v3580, %v3572
    %v4989 = vpack.c.b16 %v3581, %v3573
    %v4990 = vpack.c.b16 %v3582, %v3574
    %v4991 = vpack.c.b16 %v3591, %v3583
    %v4992 = vpack.c.b16 %v3592, %v3584
    %v4993 = vpack.c.b16 %v3593, %v3585
    %v4994 = vpack.c.b16 %v3594, %v3586
    %v4995 = vpack.c.b16 %v3595, %v3587
    %v4996 = vpack.c.b16 %v3596, %v3588
    %v4997 = vpack.c.b16 %v3597, %v3589
    %v4998 = vpack.c.b16 %v3598, %v3590
    %v4999 = vpack.c.b16 %v3607, %v3599
    %v5000 = vpack.c.b16 %v3608, %v3600
    %v5001 = vpack.c.b16 %v3609, %v3601
    %v5002 = vpack.c.b16 %v3610, %v3602
    %v5003 = vpack.c.b16 %v3611, %v3603
    %v5004 = vpack.c.b16 %v3612, %v3604
    %v5005 = vpack.c.b16 %v3613, %v3605
    %v5006 = vpack.c.b16 %v3614, %v3606
    %v5007 = vpack.c.b16 %v3623, %v3615
    %v5008 = vpack.c.b16 %v3624, %v3616
    %v5009 = vpack.c.b16 %v3625, %v3617
    %v5010 = vpack.c.b16 %v3626, %v3618
    %v5011 = vpack.c.b16 %v3627, %v3619
    %v5012 = vpack.c.b16 %v3628, %v3620
    %v5013 = vpack.c.b16 %v3629, %v3621
    %v5014 = vpack.c.b16 %v3630, %v3622
    %v5015 = vpack.c.b16 %v3639, %v3631
    %v5016 = vpack.c.b16 %v3640, %v3632
    %v5017 = vpack.c.b16 %v3641, %v3633
    %v5018 = vpack.c.b16 %v3642, %v3634
    %v5019 = vpack.c.b16 %v3643, %v3635
    %v5020 = vpack.c.b16 %v3644, %v3636
    %v5021 = vpack.c.b16 %v3645, %v3637
    %v5022 = vpack.c.b16 %v3646, %v3638
    %v5023 = vpack.c.b16 %v3655, %v3647
    %v5024 = vpack.c.b16 %v3656, %v3648
    %v5025 = vpack.c.b16 %v3657, %v3649
    %v5026 = vpack.c.b16 %v3658, %v3650
    %v5027 = vpack.c.b16 %v3659, %v3651
    %v5028 = vpack.c.b16 %v3660, %v3652
    %v5029 = vpack.c.b16 %v3661, %v3653
    %v5030 = vpack.c.b16 %v3662, %v3654
    %v5031 = vpack.c.b16 %v3671, %v3663
    %v5032 = vpack.c.b16 %v3672, %v3664
    %v5033 = vpack.c.b16 %v3673, %v3665
    %v5034 = vpack.c.b16 %v3674, %v3666
    %v5035 = vpack.c.b16 %v3675, %v3667
    %v5036 = vpack.c.b16 %v3676, %v3668
    %v5037 = vpack.c.b16 %v3677, %v3669
    %v5038 = vpack.c.b16 %v3678, %v3670
    %v5039 = vpack.c.b16 %v3687, %v3679
    %v5040 = vpack.c.b16 %v3688, %v3680
    %v5041 = vpack.c.b16 %v3689, %v3681
    %v5042 = vpack.c.b16 %v3690, %v3682
    %v5043 = vpack.c.b16 %v3691, %v3683
    %v5044 = vpack.c.b16 %v3692, %v3684
    %v5045 = vpack.c.b16 %v3693, %v3685
    %v5046 = vpack.c.b16 %v3694, %v3686
    %v5047 = vpack.c.b16 %v3703, %v3695
    %v5048 = vpack.c.b16 %v3704, %v3696
    %v5049 = vpack.c.b16 %v3705, %v3697
    %v5050 = vpack.c.b16 %v3706, %v3698
    %v5051 = vpack.c.b16 %v3707, %v3699
    %v5052 = vpack.c.b16 %v3708, %v3700
    %v5053 = vpack.c.b16 %v3709, %v3701
    %v5054 = vpack.c.b16 %v3710, %v3702
    %v5055 = vpack.c.b16 %v3719, %v3711
    %v5056 = vpack.c.b16 %v3720, %v3712
    %v5057 = vpack.c.b16 %v3721, %v3713
    %v5058 = vpack.c.b16 %v3722, %v3714
    %v5059 = vpack.c.b16 %v3723, %v3715
    %v5060 = vpack.c.b16 %v3724, %v3716
    %v5061 = vpack.c.b16 %v3725, %v3717
    %v5062 = vpack.c.b16 %v3726, %v3718
    %v5063 = vpack.c.b16 %v3735, %v3727
    %v5064 = vpack.c.b16 %v3736, %v3728
    %v5065 = vpack.c.b16 %v3737, %v3729
    %v5066 = vpack.c.b16 %v3738, %v3730
    %v5067 = vpack.c.b16 %v3739, %v3731
    %v5068 = vpack.c.b16 %v3740, %v3732
    %v5069 = vpack.c.b16 %v3741, %v3733
    %v5070 = vpack.c.b16 %v3742, %v3734
    %v5071 = vpack.c.b16 %v3751, %v3743
    %v5072 = vpack.c.b16 %v3752, %v3744
    %v5073 = vpack.c.b16 %v3753, %v3745
    %v5074 = vpack.c.b16 %v3754, %v3746
    %v5075 = vpack.c.b16 %v3755, %v3747
    %v5076 = vpack.c.b16 %v3756, %v3748
    %v5077 = vpack.c.b16 %v3757, %v3749
    %v5078 = vpack.c.b16 %v3758, %v3750
    %v5079 = vpack.c.b16 %v3767, %v3759
    %v5080 = vpack.c.b16 %v3768, %v3760
    %v5081 = vpack.c.b16 %v3769, %v3761
    %v5082 = vpack.c.b16 %v3770, %v3762
    %v5083 = vpack.c.b16 %v3771, %v3763
    %v5084 = vpack.c.b16 %v3772, %v3764
    %v5085 = vpack.c.b16 %v3773, %v3765
    %v5086 = vpack.c.b16 %v3774, %v3766
    %v5087 = vpack.c.b16 %v3783, %v3775
    %v5088 = vpack.c.b16 %v3784, %v3776
    %v5089 = vpack.c.b16 %v3785, %v3777
    %v5090 = vpack.c.b16 %v3786, %v3778
    %v5091 = vpack.c.b16 %v3787, %v3779
    %v5092 = vpack.c.b16 %v3788, %v3780
    %v5093 = vpack.c.b16 %v3789, %v3781
    %v5094 = vpack.c.b16 %v3790, %v3782
    %v5095 = vpack.c.b16 %v3799, %v3791
    %v5096 = vpack.c.b16 %v3800, %v3792
    %v5097 = vpack.c.b16 %v3801, %v3793
    %v5098 = vpack.c.b16 %v3802, %v3794
    %v5099 = vpack.c.b16 %v3803, %v3795
    %v5100 = vpack.c.b16 %v3804, %v3796
    %v5101 = vpack.c.b16 %v3805, %v3797
    %v5102 = vpack.c.b16 %v3806, %v3798
    %v5103 = vpack.c.b16 %v3815, %v3807
    %v5104 = vpack.c.b16 %v3816, %v3808
    %v5105 = vpack.c.b16 %v3817, %v3809
    %v5106 = vpack.c.b16 %v3818, %v3810
    %v5107 = vpack.c.b16 %v3819, %v3811
    %v5108 = vpack.c.b16 %v3820, %v3812
    %v5109 = vpack.c.b16 %v3821, %v3813
    %v5110 = vpack.c.b16 %v3822, %v3814
    %v5111 = vpack.c.b16 %v3831, %v3823
    %v5112 = vpack.c.b16 %v3832, %v3824
    %v5113 = vpack.c.b16 %v3833, %v3825
    %v5114 = vpack.c.b16 %v3834, %v3826
    %v5115 = vpack.c.b16 %v3835, %v3827
    %v5116 = vpack.c.b16 %v3836, %v3828
    %v5117 = vpack.c.b16 %v3837, %v3829
    %v5118 = vpack.c.b16 %v3838, %v3830
    %v5119 = vpack.c.b16 %v3847, %v3839
    %v5120 = vpack.c.b16 %v3848, %v3840
    %v5121 = vpack.c.b16 %v3849, %v3841
    %v5122 = vpack.c.b16 %v3850, %v3842
    %v5123 = vpack.c.b16 %v3851, %v3843
    %v5124 = vpack.c.b16 %v3852, %v3844
    %v5125 = vpack.c.b16 %v3853, %v3845
    %v5126 = vpack.c.b16 %v3854, %v3846
    %v5127 = vpack.c.b16 %v3863, %v3855
    %v5128 = vpack.c.b16 %v3864, %v3856
    %v5129 = vpack.c.b16 %v3865, %v3857
    %v5130 = vpack.c.b16 %v3866, %v3858
    %v5131 = vpack.c.b16 %v3867, %v3859
    %v5132 = vpack.c.b16 %v3868, %v3860
    %v5133 = vpack.c.b16 %v3869, %v3861
    %v5134 = vpack.c.b16 %v3870, %v3862
    %v5135 = vpack.c.b16 %v3879, %v3871
    %v5136 = vpack.c.b16 %v3880, %v3872
    %v5137 = vpack.c.b16 %v3881, %v3873
    %v5138 = vpack.c.b16 %v3882, %v3874
    %v5139 = vpack.c.b16 %v3883, %v3875
    %v5140 = vpack.c.b16 %v3884, %v3876
    %v5141 = vpack.c.b16 %v3885, %v3877
    %v5142 = vpack.c.b16 %v3886, %v3878
    %v5143 = vpack.c.b16 %v3895, %v3887
    %v5144 = vpack.c.b16 %v3896, %v3888
    %v5145 = vpack.c.b16 %v3897, %v3889
    %v5146 = vpack.c.b16 %v3898, %v3890
    %v5147 = vpack.c.b16 %v3899, %v3891
    %v5148 = vpack.c.b16 %v3900, %v3892
    %v5149 = vpack.c.b16 %v3901, %v3893
    %v5150 = vpack.c.b16 %v3902, %v3894
    %v5151 = vpack.c.b16 %v3911, %v3903
    %v5152 = vpack.c.b16 %v3912, %v3904
    %v5153 = vpack.c.b16 %v3913, %v3905
    %v5154 = vpack.c.b16 %v3914, %v3906
    %v5155 = vpack.c.b16 %v3915, %v3907
    %v5156 = vpack.c.b16 %v3916, %v3908
    %v5157 = vpack.c.b16 %v3917, %v3909
    %v5158 = vpack.c.b16 %v3918, %v3910
    %v5159 = vpack.c.b16 %v3927, %v3919
    %v5160 = vpack.c.b16 %v3928, %v3920
    %v5161 = vpack.c.b16 %v3929, %v3921
    %v5162 = vpack.c.b16 %v3930, %v3922
    %v5163 = vpack.c.b16 %v3931, %v3923
    %v5164 = vpack.c.b16 %v3932, %v3924
    %v5165 = vpack.c.b16 %v3933, %v3925
    %v5166 = vpack.c.b16 %v3934, %v3926
    %v5167 = vpack.c.b16 %v3943, %v3935
    %v5168 = vpack.c.b16 %v3944, %v3936
    %v5169 = vpack.c.b16 %v3945, %v3937
    %v5170 = vpack.c.b16 %v3946, %v3938
    %v5171 = vpack.c.b16 %v3947, %v3939
    %v5172 = vpack.c.b16 %v3948, %v3940
    %v5173 = vpack.c.b16 %v3949, %v3941
    %v5174 = vpack.c.b16 %v3950, %v3942
    %v5175 = vpack.c.b16 %v3959, %v3951
    %v5176 = vpack.c.b16 %v3960, %v3952
    %v5177 = vpack.c.b16 %v3961, %v3953
    %v5178 = vpack.c.b16 %v3962, %v3954
    %v5179 = vpack.c.b16 %v3963, %v3955
    %v5180 = vpack.c.b16 %v3964, %v3956
    %v5181 = vpack.c.b16 %v3965, %v3957
    %v5182 = vpack.c.b16 %v3966, %v3958
    %v5183 = vpack.c.b16 %v3975, %v3967
    %v5184 = vpack.c.b16 %v3976, %v3968
    %v5185 = vpack.c.b16 %v3977, %v3969
    %v5186 = vpack.c.b16 %v3978, %v3970
    %v5187 = vpack.c.b16 %v3979, %v3971
    %v5188 = vpack.c.b16 %v3980, %v3972
    %v5189 = vpack.c.b16 %v3981, %v3973
    %v5190 = vpack.c.b16 %v3982, %v3974
    %v5191 = vpack.c.b16 %v3991, %v3983
    %v5192 = vpack.c.b16 %v3992, %v3984
    %v5193 = vpack.c.b16 %v3993, %v3985
    %v5194 = vpack.c.b16 %v3994, %v3986
    %v5195 = vpack.c.b16 %v3995, %v3987
    %v5196 = vpack.c.b16 %v3996, %v3988
    %v5197 = vpack.c.b16 %v3997, %v3989
    %v5198 = vpack.c.b16 %v3998, %v3990
    %v5199 = vpack.c.b16 %v4007, %v3999
    %v5200 = vpack.c.b16 %v4008, %v4000
    %v5201 = vpack.c.b16 %v4009, %v4001
    %v5202 = vpack.c.b16 %v4010, %v4002
    %v5203 = vpack.c.b16 %v4011, %v4003
    %v5204 = vpack.c.b16 %v4012, %v4004
    %v5205 = vpack.c.b16 %v4013, %v4005
    %v5206 = vpack.c.b16 %v4014, %v4006
    %v5207 = vpack.c.b16 %v4023, %v4015
    %v5208 = vpack.c.b16 %v4024, %v4016
    %v5209 = vpack.c.b16 %v4025, %v4017
    %v5210 = vpack.c.b16 %v4026, %v4018
    %v5211 = vpack.c.b16 %v4027, %v4019
    %v5212 = vpack.c.b16 %v4028, %v4020
    %v5213 = vpack.c.b16 %v4029, %v4021
    %v5214 = vpack.c.b16 %v4030, %v4022
    %v5215 = vpack.c.b16 %v4039, %v4031
    %v5216 = vpack.c.b16 %v4040, %v4032
    %v5217 = vpack.c.b16 %v4041, %v4033
    %v5218 = vpack.c.b16 %v4042, %v4034
    %v5219 = vpack.c.b16 %v4043, %v4035
    %v5220 = vpack.c.b16 %v4044, %v4036
    %v5221 = vpack.c.b16 %v4045, %v4037
    %v5222 = vpack.c.b16 %v4046, %v4038
    %v5223 = vpack.c.b16 %v4055, %v4047
    %v5224 = vpack.c.b16 %v4056, %v4048
    %v5225 = vpack.c.b16 %v4057, %v4049
    %v5226 = vpack.c.b16 %v4058, %v4050
    %v5227 = vpack.c.b16 %v4059, %v4051
    %v5228 = vpack.c.b16 %v4060, %v4052
    %v5229 = vpack.c.b16 %v4061, %v4053
    %v5230 = vpack.c.b16 %v4062, %v4054
    %v5231 = vpack.c.b16 %v4071, %v4063
    %v5232 = vpack.c.b16 %v4072, %v4064
    %v5233 = vpack.c.b16 %v4073, %v4065
    %v5234 = vpack.c.b16 %v4074, %v4066
    %v5235 = vpack.c.b16 %v4075, %v4067
    %v5236 = vpack.c.b16 %v4076, %v4068
    %v5237 = vpack.c.b16 %v4077, %v4069
    %v5238 = vpack.c.b16 %v4078, %v4070
    %v5239 = vpack.c.b16 %v4087, %v4079
    %v5240 = vpack.c.b16 %v4088, %v4080
    %v5241 = vpack.c.b16 %v4089, %v4081
    %v5242 = vpack.c.b16 %v4090, %v4082
    %v5243 = vpack.c.b16 %v4091, %v4083
    %v5244 = vpack.c.b16 %v4092, %v4084
    %v5245 = vpack.c.b16 %v4093, %v4085
    %v5246 = vpack.c.b16 %v4094, %v4086
    %v5247 = vpack.c.b16 %v4103, %v4095
    %v5248 = vpack.c.b16 %v4104, %v4096
    %v5249 = vpack.c.b16 %v4105, %v4097
    %v5250 = vpack.c.b16 %v4106, %v4098
    %v5251 = vpack.c.b16 %v4107, %v4099
    %v5252 = vpack.c.b16 %v4108, %v4100
    %v5253 = vpack.c.b16 %v4109, %v4101
    %v5254 = vpack.c.b16 %v4110, %v4102
    %v5255 = vpack.c.b16 %v4119, %v4111
    %v5256 = vpack.c.b16 %v4120, %v4112
    %v5257 = vpack.c.b16 %v4121, %v4113
    %v5258 = vpack.c.b16 %v4122, %v4114
    %v5259 = vpack.c.b16 %v4123, %v4115
    %v5260 = vpack.c.b16 %v4124, %v4116
    %v5261 = vpack.c.b16 %v4125, %v4117
    %v5262 = vpack.c.b16 %v4126, %v4118
    %v5263 = vpack.c.b16 %v4135, %v4127
    %v5264 = vpack.c.b16 %v4136, %v4128
    %v5265 = vpack.c.b16 %v4137, %v4129
    %v5266 = vpack.c.b16 %v4138, %v4130
    %v5267 = vpack.c.b16 %v4139, %v4131
    %v5268 = vpack.c.b16 %v4140, %v4132
    %v5269 = vpack.c.b16 %v4141, %v4133
    %v5270 = vpack.c.b16 %v4142, %v4134
    %v5271 = vpack.c.b16 %v4151, %v4143
    %v5272 = vpack.c.b16 %v4152, %v4144
    %v5273 = vpack.c.b16 %v4153, %v4145
    %v5274 = vpack.c.b16 %v4154, %v4146
    %v5275 = vpack.c.b16 %v4155, %v4147
    %v5276 = vpack.c.b16 %v4156, %v4148
    %v5277 = vpack.c.b16 %v4157, %v4149
    %v5278 = vpack.c.b16 %v4158, %v4150
    %v5279 = vpack.c.b16 %v4167, %v4159
    %v5280 = vpack.c.b16 %v4168, %v4160
    %v5281 = vpack.c.b16 %v4169, %v4161
    %v5282 = vpack.c.b16 %v4170, %v4162
    %v5283 = vpack.c.b16 %v4171, %v4163
    %v5284 = vpack.c.b16 %v4172, %v4164
    %v5285 = vpack.c.b16 %v4173, %v4165
    %v5286 = vpack.c.b16 %v4174, %v4166
    %v5287 = vpack.c.b16 %v4183, %v4175
    %v5288 = vpack.c.b16 %v4184, %v4176
    %v5289 = vpack.c.b16 %v4185, %v4177
    %v5290 = vpack.c.b16 %v4186, %v4178
    %v5291 = vpack.c.b16 %v4187, %v4179
    %v5292 = vpack.c.b16 %v4188, %v4180
    %v5293 = vpack.c.b16 %v4189, %v4181
    %v5294 = vpack.c.b16 %v4190, %v4182
    %v5295 = vpack.c.b16 %v4199, %v4191
    %v5296 = vpack.c.b16 %v4200, %v4192
    %v5297 = vpack.c.b16 %v4201, %v4193
    %v5298 = vpack.c.b16 %v4202, %v4194
    %v5299 = vpack.c.b16 %v4203, %v4195
    %v5300 = vpack.c.b16 %v4204, %v4196
    %v5301 = vpack.c.b16 %v4205, %v4197
    %v5302 = vpack.c.b16 %v4206, %v4198
    %v5303 = vpack.c.b16 %v4215, %v4207
    %v5304 = vpack.c.b16 %v4216, %v4208
    %v5305 = vpack.c.b16 %v4217, %v4209
    %v5306 = vpack.c.b16 %v4218, %v4210
    %v5307 = vpack.c.b16 %v4219, %v4211
    %v5308 = vpack.c.b16 %v4220, %v4212
    %v5309 = vpack.c.b16 %v4221, %v4213
    %v5310 = vpack.c.b16 %v4222, %v4214
    %v5311 = vpack.c.b16 %v4231, %v4223
    %v5312 = vpack.c.b16 %v4232, %v4224
    %v5313 = vpack.c.b16 %v4233, %v4225
    %v5314 = vpack.c.b16 %v4234, %v4226
    %v5315 = vpack.c.b16 %v4235, %v4227
    %v5316 = vpack.c.b16 %v4236, %v4228
    %v5317 = vpack.c.b16 %v4237, %v4229
    %v5318 = vpack.c.b16 %v4238, %v4230
    %v5319 = vpack.c.b16 %v4247, %v4239
    %v5320 = vpack.c.b16 %v4248, %v4240
    %v5321 = vpack.c.b16 %v4249, %v4241
    %v5322 = vpack.c.b16 %v4250, %v4242
    %v5323 = vpack.c.b16 %v4251, %v4243
    %v5324 = vpack.c.b16 %v4252, %v4244
    %v5325 = vpack.c.b16 %v4253, %v4245
    %v5326 = vpack.c.b16 %v4254, %v4246
    %v5327 = vpack.c.b16 %v4263, %v4255
    %v5328 = vpack.c.b16 %v4264, %v4256
    %v5329 = vpack.c.b16 %v4265, %v4257
    %v5330 = vpack.c.b16 %v4266, %v4258
    %v5331 = vpack.c.b16 %v4267, %v4259
    %v5332 = vpack.c.b16 %v4268, %v4260
    %v5333 = vpack.c.b16 %v4269, %v4261
    %v5334 = vpack.c.b16 %v4270, %v4262
    %v5335 = vpack.c.b16 %v4279, %v4271
    %v5336 = vpack.c.b16 %v4280, %v4272
    %v5337 = vpack.c.b16 %v4281, %v4273
    %v5338 = vpack.c.b16 %v4282, %v4274
    %v5339 = vpack.c.b16 %v4283, %v4275
    %v5340 = vpack.c.b16 %v4284, %v4276
    %v5341 = vpack.c.b16 %v4285, %v4277
    %v5342 = vpack.c.b16 %v4286, %v4278
    %v5343 = vpack.c.b16 %v4295, %v4287
    %v5344 = vpack.c.b16 %v4296, %v4288
    %v5345 = vpack.c.b16 %v4297, %v4289
    %v5346 = vpack.c.b16 %v4298, %v4290
    %v5347 = vpack.c.b16 %v4299, %v4291
    %v5348 = vpack.c.b16 %v4300, %v4292
    %v5349 = vpack.c.b16 %v4301, %v4293
    %v5350 = vpack.c.b16 %v4302, %v4294
    %v5351 = vpack.c.b16 %v4311, %v4303
    %v5352 = vpack.c.b16 %v4312, %v4304
    %v5353 = vpack.c.b16 %v4313, %v4305
    %v5354 = vpack.c.b16 %v4314, %v4306
    %v5355 = vpack.c.b16 %v4315, %v4307
    %v5356 = vpack.c.b16 %v4316, %v4308
    %v5357 = vpack.c.b16 %v4317, %v4309
    %v5358 = vpack.c.b16 %v4318, %v4310
    %v5359 = vpack.c.b16 %v4327, %v4319
    %v5360 = vpack.c.b16 %v4328, %v4320
    %v5361 = vpack.c.b16 %v4329, %v4321
    %v5362 = vpack.c.b16 %v4330, %v4322
    %v5363 = vpack.c.b16 %v4331, %v4323
    %v5364 = vpack.c.b16 %v4332, %v4324
    %v5365 = vpack.c.b16 %v4333, %v4325
    %v5366 = vpack.c.b16 %v4334, %v4326
    %v5367 = vpack.c.b16 %v4343, %v4335
    %v5368 = vpack.c.b16 %v4344, %v4336
    %v5369 = vpack.c.b16 %v4345, %v4337
    %v5370 = vpack.c.b16 %v4346, %v4338
    %v5371 = vpack.c.b16 %v4347, %v4339
    %v5372 = vpack.c.b16 %v4348, %v4340
    %v5373 = vpack.c.b16 %v4349, %v4341
    %v5374 = vpack.c.b16 %v4350, %v4342
    %6399 = vmatprep.subr.bf16.mxu0 %v4352
    %6400 = vmatpush1.bf16.msra.mxu0 %v4351
    %6401 = vmatprep.subr.bf16.mxu0 %v4360
    %6402 = vmatpush1.bf16.msra.mxu0 %v4359
    %6403 = vmatprep.subr.bf16.mxu0 %v4368
    %6404 = vmatpush1.bf16.msra.mxu0 %v4367
    %6405 = vmatprep.subr.bf16.mxu0 %v4376
    %6406 = vmatpush1.bf16.msra.mxu0 %v4375
    %6407 = vmatprep.subr.bf16.mxu0 %v4384
    %6408 = vmatpush1.bf16.msra.mxu0 %v4383
    %6409 = vmatprep.subr.bf16.mxu0 %v4392
    %6410 = vmatpush1.bf16.msra.mxu0 %v4391
    %6411 = vmatprep.subr.bf16.mxu0 %v4400
    %6412 = vmatpush1.bf16.msra.mxu0 %v4399
    %6413 = vmatprep.subr.bf16.mxu0 %v4408
    %6414 = vmatpush1.bf16.msra.mxu0 %v4407
    %6415 = vmatprep.subr.bf16.mxu0 %v4416
    %6416 = vmatpush1.bf16.msra.mxu0 %v4415
    %6417 = vmatprep.subr.bf16.mxu0 %v4424
    %6418 = vmatpush1.bf16.msra.mxu0 %v4423
    %6419 = vmatprep.subr.bf16.mxu0 %v4432
    %6420 = vmatpush1.bf16.msra.mxu0 %v4431
    %6421 = vmatprep.subr.bf16.mxu0 %v4440
    %6422 = vmatpush1.bf16.msra.mxu0 %v4439
    %6423 = vmatprep.subr.bf16.mxu0 %v4448
    %6424 = vmatpush1.bf16.msra.mxu0 %v4447
    %6425 = vmatprep.subr.bf16.mxu0 %v4456
    %6426 = vmatpush1.bf16.msra.mxu0 %v4455
    %6427 = vmatprep.subr.bf16.mxu0 %v4464
    %6428 = vmatpush1.bf16.msra.mxu0 %v4463
    %6429 = vmatprep.subr.bf16.mxu0 %v4472
    %6430 = vmatpush1.bf16.msra.mxu0 %v4471
    %6431 = vmatprep.mubr.bf16.mxu0 %v182
    %6432 = vmatmul.mubr.bf16.gmra.mrb[0].mxu0 %v181
    %v6433 = vpop.f32.mrb[0].mxu0
    %v6434 = vadd.f32 %v1242, %v6433
    %v6435 = vpop.f32.mrb[0].mxu0
    %v6436 = vadd.f32 %v1246, %v6435
    %v6437 = vpop.f32.mrb[0].mxu0
    %v6438 = vadd.f32 %v1242, %v6437
    %v6439 = vpop.f32.mrb[0].mxu0
    %v6440 = vadd.f32 %v1246, %v6439
    %6441 = vmatprep.mubr.bf16.mxu0 %v198
    %6442 = vmatmul.mubr.bf16.gmra.mrb[0].mxu0 %v197
    %v6443 = vpop.f32.mrb[0].mxu0
    %v6444 = vadd.f32 %v1242, %v6443
    %v6445 = vpop.f32.mrb[0].mxu0
    %v6446 = vadd.f32 %v1246, %v6445
    %v6447 = vpop.f32.mrb[0].mxu0
    %v6448 = vadd.f32 %v1242, %v6447
    %v6449 = vpop.f32.mrb[0].mxu0
    %v6450 = vadd.f32 %v1246, %v6449
    %6451 = vdwg.mxu0
    %6452 = vmatprep.subr.bf16.mxu0 %v4480
    %6453 = vmatpush1.bf16.msra.mxu0 %v4479
    %6454 = vmatprep.subr.bf16.mxu0 %v4488
    %6455 = vmatpush1.bf16.msra.mxu0 %v4487
    %6456 = vmatprep.subr.bf16.mxu0 %v4496
    %6457 = vmatpush1.bf16.msra.mxu0 %v4495
    %6458 = vmatprep.subr.bf16.mxu0 %v4504
    %6459 = vmatpush1.bf16.msra.mxu0 %v4503
    %6460 = vmatprep.subr.bf16.mxu0 %v4512
    %6461 = vmatpush1.bf16.msra.mxu0 %v4511
    %6462 = vmatprep.subr.bf16.mxu0 %v4520
    %6463 = vmatpush1.bf16.msra.mxu0 %v4519
    %6464 = vmatprep.subr.bf16.mxu0 %v4528
    %6465 = vmatpush1.bf16.msra.mxu0 %v4527
    %6466 = vmatprep.subr.bf16.mxu0 %v4536
    %6467 = vmatpush1.bf16.msra.mxu0 %v4535
    %6468 = vmatprep.subr.bf16.mxu0 %v4544
    %6469 = vmatpush1.bf16.msra.mxu0 %v4543
    %6470 = vmatprep.subr.bf16.mxu0 %v4552
    %6471 = vmatpush1.bf16.msra.mxu0 %v4551
    %6472 = vmatprep.subr.bf16.mxu0 %v4560
    %6473 = vmatpush1.bf16.msra.mxu0 %v4559
    %6474 = vmatprep.subr.bf16.mxu0 %v4568
    %6475 = vmatpush1.bf16.msra.mxu0 %v4567
    %6476 = vmatprep.subr.bf16.mxu0 %v4576
    %6477 = vmatpush1.bf16.msra.mxu0 %v4575
    %6478 = vmatprep.subr.bf16.mxu0 %v4584
    %6479 = vmatpush1.bf16.msra.mxu0 %v4583
    %6480 = vmatprep.subr.bf16.mxu0 %v4592
    %6481 = vmatpush1.bf16.msra.mxu0 %v4591
    %6482 = vmatprep.subr.bf16.mxu0 %v4600
    %6483 = vmatpush1.bf16.msra.mxu0 %v4599
    %6484 = vmatprep.mubr.bf16.mxu0 %v184
    %6485 = vmatmul.mubr.bf16.gmra.mrb[0].mxu0 %v183
    %v6486 = vpop.f32.mrb[0].mxu0
    %v6487 = vadd.f32 %v6434, %v6486
    %v6488 = vpop.f32.mrb[0].mxu0
    %v6489 = vadd.f32 %v6436, %v6488
    %v6490 = vpop.f32.mrb[0].mxu0
    %v6491 = vadd.f32 %v6438, %v6490
    %v6492 = vpop.f32.mrb[0].mxu0
    %v6493 = vadd.f32 %v6440, %v6492
    %6494 = vmatprep.mubr.bf16.mxu0 %v200
    %6495 = vmatmul.mubr.bf16.gmra.mrb[0].mxu0 %v199
    %v6496 = vpop.f32.mrb[0].mxu0
    %v6497 = vadd.f32 %v6444, %v6496
    %v6498 = vpop.f32.mrb[0].mxu0
    %v6499 = vadd.f32 %v6446, %v6498
    %v6500 = vpop.f32.mrb[0].mxu0
    %v6501 = vadd.f32 %v6448, %v6500
    %v6502 = vpop.f32.mrb[0].mxu0
    %v6503 = vadd.f32 %v6450, %v6502
    %6504 = vdwg.mxu0
    %6505 = vmatprep.subr.bf16.mxu0 %v4608
    %6506 = vmatpush1.bf16.msra.mxu0 %v4607
    %6507 = vmatprep.subr.bf16.mxu0 %v4616
    %6508 = vmatpush1.bf16.msra.mxu0 %v4615
    %6509 = vmatprep.subr.bf16.mxu0 %v4624
    %6510 = vmatpush1.bf16.msra.mxu0 %v4623
    %6511 = vmatprep.subr.bf16.mxu0 %v4632
    %6512 = vmatpush1.bf16.msra.mxu0 %v4631
    %6513 = vmatprep.subr.bf16.mxu0 %v4640
    %6514 = vmatpush1.bf16.msra.mxu0 %v4639
    %6515 = vmatprep.subr.bf16.mxu0 %v4648
    %6516 = vmatpush1.bf16.msra.mxu0 %v4647
    %6517 = vmatprep.subr.bf16.mxu0 %v4656
    %6518 = vmatpush1.bf16.msra.mxu0 %v4655
    %6519 = vmatprep.subr.bf16.mxu0 %v4664
    %6520 = vmatpush1.bf16.msra.mxu0 %v4663
    %6521 = vmatprep.subr.bf16.mxu0 %v4672
    %6522 = vmatpush1.bf16.msra.mxu0 %v4671
    %6523 = vmatprep.subr.bf16.mxu0 %v4680
    %6524 = vmatpush1.bf16.msra.mxu0 %v4679
    %6525 = vmatprep.subr.bf16.mxu0 %v4688
    %6526 = vmatpush1.bf16.msra.mxu0 %v4687
    %6527 = vmatprep.subr.bf16.mxu0 %v4696
    %6528 = vmatpush1.bf16.msra.mxu0 %v4695
    %6529 = vmatprep.subr.bf16.mxu0 %v4704
    %6530 = vmatpush1.bf16.msra.mxu0 %v4703
    %6531 = vmatprep.subr.bf16.mxu0 %v4712
    %6532 = vmatpush1.bf16.msra.mxu0 %v4711
    %6533 = vmatprep.subr.bf16.mxu0 %v4720
    %6534 = vmatpush1.bf16.msra.mxu0 %v4719
    %6535 = vmatprep.subr.bf16.mxu0 %v4728
    %6536 = vmatpush1.bf16.msra.mxu0 %v4727
    %6537 = vmatprep.mubr.bf16.mxu0 %v186
    %6538 = vmatmul.mubr.bf16.gmra.mrb[0].mxu0 %v185
    %v6539 = vpop.f32.mrb[0].mxu0
    %v6540 = vadd.f32 %v6487, %v6539
    %v6541 = vpop.f32.mrb[0].mxu0
    %v6542 = vadd.f32 %v6489, %v6541
    %v6543 = vpop.f32.mrb[0].mxu0
    %v6544 = vadd.f32 %v6491, %v6543
    %v6545 = vpop.f32.mrb[0].mxu0
    %v6546 = vadd.f32 %v6493, %v6545
    %6547 = vmatprep.mubr.bf16.mxu0 %v202
    %6548 = vmatmul.mubr.bf16.gmra.mrb[0].mxu0 %v201
    %v6549 = vpop.f32.mrb[0].mxu0
    %v6550 = vadd.f32 %v6497, %v6549
    %v6551 = vpop.f32.mrb[0].mxu0
    %v6552 = vadd.f32 %v6499, %v6551
    %v6553 = vpop.f32.mrb[0].mxu0
    %v6554 = vadd.f32 %v6501, %v6553
    %v6555 = vpop.f32.mrb[0].mxu0
    %v6556 = vadd.f32 %v6503, %v6555
    %6557 = vdwg.mxu0
    %6558 = vmatprep.subr.bf16.mxu0 %v4736
    %6559 = vmatpush1.bf16.msra.mxu0 %v4735
    %6560 = vmatprep.subr.bf16.mxu0 %v4744
    %6561 = vmatpush1.bf16.msra.mxu0 %v4743
    %6562 = vmatprep.subr.bf16.mxu0 %v4752
    %6563 = vmatpush1.bf16.msra.mxu0 %v4751
    %6564 = vmatprep.subr.bf16.mxu0 %v4760
    %6565 = vmatpush1.bf16.msra.mxu0 %v4759
    %6566 = vmatprep.subr.bf16.mxu0 %v4768
    %6567 = vmatpush1.bf16.msra.mxu0 %v4767
    %6568 = vmatprep.subr.bf16.mxu0 %v4776
    %6569 = vmatpush1.bf16.msra.mxu0 %v4775
    %6570 = vmatprep.subr.bf16.mxu0 %v4784
    %6571 = vmatpush1.bf16.msra.mxu0 %v4783
    %6572 = vmatprep.subr.bf16.mxu0 %v4792
    %6573 = vmatpush1.bf16.msra.mxu0 %v4791
    %6574 = vmatprep.subr.bf16.mxu0 %v4800
    %6575 = vmatpush1.bf16.msra.mxu0 %v4799
    %6576 = vmatprep.subr.bf16.mxu0 %v4808
    %6577 = vmatpush1.bf16.msra.mxu0 %v4807
    %6578 = vmatprep.subr.bf16.mxu0 %v4816
    %6579 = vmatpush1.bf16.msra.mxu0 %v4815
    %6580 = vmatprep.subr.bf16.mxu0 %v4824
    %6581 = vmatpush1.bf16.msra.mxu0 %v4823
    %6582 = vmatprep.subr.bf16.mxu0 %v4832
    %6583 = vmatpush1.bf16.msra.mxu0 %v4831
    %6584 = vmatprep.subr.bf16.mxu0 %v4840
    %6585 = vmatpush1.bf16.msra.mxu0 %v4839
    %6586 = vmatprep.subr.bf16.mxu0 %v4848
    %6587 = vmatpush1.bf16.msra.mxu0 %v4847
    %6588 = vmatprep.subr.bf16.mxu0 %v4856
    %6589 = vmatpush1.bf16.msra.mxu0 %v4855
    %6590 = vmatprep.mubr.bf16.mxu0 %v188
    %6591 = vmatmul.mubr.bf16.gmra.mrb[0].mxu0 %v187
    %v6592 = vpop.f32.mrb[0].mxu0
    %v6593 = vadd.f32 %v6540, %v6592
    %v6594 = vpop.f32.mrb[0].mxu0
    %v6595 = vadd.f32 %v6542, %v6594
    %v6596 = vpop.f32.mrb[0].mxu0
    %v6597 = vadd.f32 %v6544, %v6596
    %v6598 = vpop.f32.mrb[0].mxu0
    %v6599 = vadd.f32 %v6546, %v6598
    %6600 = vmatprep.mubr.bf16.mxu0 %v204
    %6601 = vmatmul.mubr.bf16.gmra.mrb[0].mxu0 %v203
    %v6602 = vpop.f32.mrb[0].mxu0
    %v6603 = vadd.f32 %v6550, %v6602
    %v6604 = vpop.f32.mrb[0].mxu0
    %v6605 = vadd.f32 %v6552, %v6604
    %v6606 = vpop.f32.mrb[0].mxu0
    %v6607 = vadd.f32 %v6554, %v6606
    %v6608 = vpop.f32.mrb[0].mxu0
    %v6609 = vadd.f32 %v6556, %v6608
    %6610 = vdwg.mxu0
    %6611 = vmatprep.subr.bf16.mxu0 %v4864
    %6612 = vmatpush1.bf16.msra.mxu0 %v4863
    %6613 = vmatprep.subr.bf16.mxu0 %v4872
    %6614 = vmatpush1.bf16.msra.mxu0 %v4871
    %6615 = vmatprep.subr.bf16.mxu0 %v4880
    %6616 = vmatpush1.bf16.msra.mxu0 %v4879
    %6617 = vmatprep.subr.bf16.mxu0 %v4888
    %6618 = vmatpush1.bf16.msra.mxu0 %v4887
    %6619 = vmatprep.subr.bf16.mxu0 %v4896
    %6620 = vmatpush1.bf16.msra.mxu0 %v4895
    %6621 = vmatprep.subr.bf16.mxu0 %v4904
    %6622 = vmatpush1.bf16.msra.mxu0 %v4903
    %6623 = vmatprep.subr.bf16.mxu0 %v4912
    %6624 = vmatpush1.bf16.msra.mxu0 %v4911
    %6625 = vmatprep.subr.bf16.mxu0 %v4920
    %6626 = vmatpush1.bf16.msra.mxu0 %v4919
    %6627 = vmatprep.subr.bf16.mxu0 %v4928
    %6628 = vmatpush1.bf16.msra.mxu0 %v4927
    %6629 = vmatprep.subr.bf16.mxu0 %v4936
    %6630 = vmatpush1.bf16.msra.mxu0 %v4935
    %6631 = vmatprep.subr.bf16.mxu0 %v4944
    %6632 = vmatpush1.bf16.msra.mxu0 %v4943
    %6633 = vmatprep.subr.bf16.mxu0 %v4952
    %6634 = vmatpush1.bf16.msra.mxu0 %v4951
    %6635 = vmatprep.subr.bf16.mxu0 %v4960
    %6636 = vmatpush1.bf16.msra.mxu0 %v4959
    %6637 = vmatprep.subr.bf16.mxu0 %v4968
    %6638 = vmatpush1.bf16.msra.mxu0 %v4967
    %6639 = vmatprep.subr.bf16.mxu0 %v4976
    %6640 = vmatpush1.bf16.msra.mxu0 %v4975
    %6641 = vmatprep.subr.bf16.mxu0 %v4984
    %6642 = vmatpush1.bf16.msra.mxu0 %v4983
    %6643 = vmatprep.mubr.bf16.mxu0 %v190
    %6644 = vmatmul.mubr.bf16.gmra.mrb[0].mxu0 %v189
    %v6645 = vpop.f32.mrb[0].mxu0
    %v6646 = vadd.f32 %v6593, %v6645
    %v6647 = vpop.f32.mrb[0].mxu0
    %v6648 = vadd.f32 %v6595, %v6647
    %v6649 = vpop.f32.mrb[0].mxu0
    %v6650 = vadd.f32 %v6597, %v6649
    %v6651 = vpop.f32.mrb[0].mxu0
    %v6652 = vadd.f32 %v6599, %v6651
    %6653 = vmatprep.mubr.bf16.mxu0 %v206
    %6654 = vmatmul.mubr.bf16.gmra.mrb[0].mxu0 %v205
    %v6655 = vpop.f32.mrb[0].mxu0
    %v6656 = vadd.f32 %v6603, %v6655
    %v6657 = vpop.f32.mrb[0].mxu0
    %v6658 = vadd.f32 %v6605, %v6657
    %v6659 = vpop.f32.mrb[0].mxu0
    %v6660 = vadd.f32 %v6607, %v6659
    %v6661 = vpop.f32.mrb[0].mxu0
    %v6662 = vadd.f32 %v6609, %v6661
    %6663 = vdwg.mxu0
    %6664 = vmatprep.subr.bf16.mxu0 %v4992
    %6665 = vmatpush1.bf16.msra.mxu0 %v4991
    %6666 = vmatprep.subr.bf16.mxu0 %v5000
    %6667 = vmatpush1.bf16.msra.mxu0 %v4999
    %6668 = vmatprep.subr.bf16.mxu0 %v5008
    %6669 = vmatpush1.bf16.msra.mxu0 %v5007
    %6670 = vmatprep.subr.bf16.mxu0 %v5016
    %6671 = vmatpush1.bf16.msra.mxu0 %v5015
    %6672 = vmatprep.subr.bf16.mxu0 %v5024
    %6673 = vmatpush1.bf16.msra.mxu0 %v5023
    %6674 = vmatprep.subr.bf16.mxu0 %v5032
    %6675 = vmatpush1.bf16.msra.mxu0 %v5031
    %6676 = vmatprep.subr.bf16.mxu0 %v5040
    %6677 = vmatpush1.bf16.msra.mxu0 %v5039
    %6678 = vmatprep.subr.bf16.mxu0 %v5048
    %6679 = vmatpush1.bf16.msra.mxu0 %v5047
    %6680 = vmatprep.subr.bf16.mxu0 %v5056
    %6681 = vmatpush1.bf16.msra.mxu0 %v5055
    %6682 = vmatprep.subr.bf16.mxu0 %v5064
    %6683 = vmatpush1.bf16.msra.mxu0 %v5063
    %6684 = vmatprep.subr.bf16.mxu0 %v5072
    %6685 = vmatpush1.bf16.msra.mxu0 %v5071
    %6686 = vmatprep.subr.bf16.mxu0 %v5080
    %6687 = vmatpush1.bf16.msra.mxu0 %v5079
    %6688 = vmatprep.subr.bf16.mxu0 %v5088
    %6689 = vmatpush1.bf16.msra.mxu0 %v5087
    %6690 = vmatprep.subr.bf16.mxu0 %v5096
    %6691 = vmatpush1.bf16.msra.mxu0 %v5095
    %6692 = vmatprep.subr.bf16.mxu0 %v5104
    %6693 = vmatpush1.bf16.msra.mxu0 %v5103
    %6694 = vmatprep.subr.bf16.mxu0 %v5112
    %6695 = vmatpush1.bf16.msra.mxu0 %v5111
    %6696 = vmatprep.mubr.bf16.mxu0 %v192
    %6697 = vmatmul.mubr.bf16.gmra.mrb[0].mxu0 %v191
    %v6698 = vpop.f32.mrb[0].mxu0
    %v6699 = vadd.f32 %v6646, %v6698
    %v6700 = vpop.f32.mrb[0].mxu0
    %v6701 = vadd.f32 %v6648, %v6700
    %v6702 = vpop.f32.mrb[0].mxu0
    %v6703 = vadd.f32 %v6650, %v6702
    %v6704 = vpop.f32.mrb[0].mxu0
    %v6705 = vadd.f32 %v6652, %v6704
    %6706 = vmatprep.mubr.bf16.mxu0 %v208
    %6707 = vmatmul.mubr.bf16.gmra.mrb[0].mxu0 %v207
    %v6708 = vpop.f32.mrb[0].mxu0
    %v6709 = vadd.f32 %v6656, %v6708
    %v6710 = vpop.f32.mrb[0].mxu0
    %v6711 = vadd.f32 %v6658, %v6710
    %v6712 = vpop.f32.mrb[0].mxu0
    %v6713 = vadd.f32 %v6660, %v6712
    %v6714 = vpop.f32.mrb[0].mxu0
    %v6715 = vadd.f32 %v6662, %v6714
    %6716 = vdwg.mxu0
    %6717 = vmatprep.subr.bf16.mxu0 %v5120
    %6718 = vmatpush1.bf16.msra.mxu0 %v5119
    %6719 = vmatprep.subr.bf16.mxu0 %v5128
    %6720 = vmatpush1.bf16.msra.mxu0 %v5127
    %6721 = vmatprep.subr.bf16.mxu0 %v5136
    %6722 = vmatpush1.bf16.msra.mxu0 %v5135
    %6723 = vmatprep.subr.bf16.mxu0 %v5144
    %6724 = vmatpush1.bf16.msra.mxu0 %v5143
    %6725 = vmatprep.subr.bf16.mxu0 %v5152
    %6726 = vmatpush1.bf16.msra.mxu0 %v5151
    %6727 = vmatprep.subr.bf16.mxu0 %v5160
    %6728 = vmatpush1.bf16.msra.mxu0 %v5159
    %6729 = vmatprep.subr.bf16.mxu0 %v5168
    %6730 = vmatpush1.bf16.msra.mxu0 %v5167
    %6731 = vmatprep.subr.bf16.mxu0 %v5176
    %6732 = vmatpush1.bf16.msra.mxu0 %v5175
    %6733 = vmatprep.subr.bf16.mxu0 %v5184
    %6734 = vmatpush1.bf16.msra.mxu0 %v5183
    %6735 = vmatprep.subr.bf16.mxu0 %v5192
    %6736 = vmatpush1.bf16.msra.mxu0 %v5191
    %6737 = vmatprep.subr.bf16.mxu0 %v5200
    %6738 = vmatpush1.bf16.msra.mxu0 %v5199
    %6739 = vmatprep.subr.bf16.mxu0 %v5208
    %6740 = vmatpush1.bf16.msra.mxu0 %v5207
    %6741 = vmatprep.subr.bf16.mxu0 %v5216
    %6742 = vmatpush1.bf16.msra.mxu0 %v5215
    %6743 = vmatprep.subr.bf16.mxu0 %v5224
    %6744 = vmatpush1.bf16.msra.mxu0 %v5223
    %6745 = vmatprep.subr.bf16.mxu0 %v5232
    %6746 = vmatpush1.bf16.msra.mxu0 %v5231
    %6747 = vmatprep.subr.bf16.mxu0 %v5240
    %6748 = vmatpush1.bf16.msra.mxu0 %v5239
    %6749 = vmatprep.mubr.bf16.mxu0 %v194
    %6750 = vmatmul.mubr.bf16.gmra.mrb[0].mxu0 %v193
    %v6751 = vpop.f32.mrb[0].mxu0
    %v6752 = vadd.f32 %v6699, %v6751
    %v6753 = vpop.f32.mrb[0].mxu0
    %v6754 = vadd.f32 %v6701, %v6753
    %v6755 = vpop.f32.mrb[0].mxu0
    %v6756 = vadd.f32 %v6703, %v6755
    %v6757 = vpop.f32.mrb[0].mxu0
    %v6758 = vadd.f32 %v6705, %v6757
    %6759 = vmatprep.mubr.bf16.mxu0 %v210
    %6760 = vmatmul.mubr.bf16.gmra.mrb[0].mxu0 %v209
    %v6761 = vpop.f32.mrb[0].mxu0
    %v6762 = vadd.f32 %v6709, %v6761
    %v6763 = vpop.f32.mrb[0].mxu0
    %v6764 = vadd.f32 %v6711, %v6763
    %v6765 = vpop.f32.mrb[0].mxu0
    %v6766 = vadd.f32 %v6713, %v6765
    %v6767 = vpop.f32.mrb[0].mxu0
    %v6768 = vadd.f32 %v6715, %v6767
    %6769 = vdwg.mxu0
    %6770 = vmatprep.subr.bf16.mxu0 %v5248
    %6771 = vmatpush1.bf16.msra.mxu0 %v5247
    %6772 = vmatprep.subr.bf16.mxu0 %v5256
    %6773 = vmatpush1.bf16.msra.mxu0 %v5255
    %6774 = vmatprep.subr.bf16.mxu0 %v5264
    %6775 = vmatpush1.bf16.msra.mxu0 %v5263
    %6776 = vmatprep.subr.bf16.mxu0 %v5272
    %6777 = vmatpush1.bf16.msra.mxu0 %v5271
    %6778 = vmatprep.subr.bf16.mxu0 %v5280
    %6779 = vmatpush1.bf16.msra.mxu0 %v5279
    %6780 = vmatprep.subr.bf16.mxu0 %v5288
    %6781 = vmatpush1.bf16.msra.mxu0 %v5287
    %6782 = vmatprep.subr.bf16.mxu0 %v5296
    %6783 = vmatpush1.bf16.msra.mxu0 %v5295
    %6784 = vmatprep.subr.bf16.mxu0 %v5304
    %6785 = vmatpush1.bf16.msra.mxu0 %v5303
    %6786 = vmatprep.subr.bf16.mxu0 %v5312
    %6787 = vmatpush1.bf16.msra.mxu0 %v5311
    %6788 = vmatprep.subr.bf16.mxu0 %v5320
    %6789 = vmatpush1.bf16.msra.mxu0 %v5319
    %6790 = vmatprep.subr.bf16.mxu0 %v5328
    %6791 = vmatpush1.bf16.msra.mxu0 %v5327
    %6792 = vmatprep.subr.bf16.mxu0 %v5336
    %6793 = vmatpush1.bf16.msra.mxu0 %v5335
    %6794 = vmatprep.subr.bf16.mxu0 %v5344
    %6795 = vmatpush1.bf16.msra.mxu0 %v5343
    %6796 = vmatprep.subr.bf16.mxu0 %v5352
    %6797 = vmatpush1.bf16.msra.mxu0 %v5351
    %6798 = vmatprep.subr.bf16.mxu0 %v5360
    %6799 = vmatpush1.bf16.msra.mxu0 %v5359
    %6800 = vmatprep.subr.bf16.mxu0 %v5368
    %6801 = vmatpush1.bf16.msra.mxu0 %v5367
    %6802 = vmatprep.mubr.bf16.mxu0 %v196
    %6803 = vmatmul.mubr.bf16.gmra.mrb[0].mxu0 %v195
    %v6804 = vpop.f32.mrb[0].mxu0
    %v6805 = vadd.f32 %v6752, %v6804
    %v6806 = vpop.f32.mrb[0].mxu0
    %v6807 = vadd.f32 %v6754, %v6806
    %v6808 = vpop.f32.mrb[0].mxu0
    %v6809 = vadd.f32 %v6756, %v6808
    %v6810 = vpop.f32.mrb[0].mxu0
    %v6811 = vadd.f32 %v6758, %v6810
    %6812 = vmatprep.mubr.bf16.mxu0 %v212
    %6813 = vmatmul.mubr.bf16.gmra.mrb[0].mxu0 %v211
    %v6814 = vpop.f32.mrb[0].mxu0
    %v6815 = vadd.f32 %v6762, %v6814
    %v6816 = vpop.f32.mrb[0].mxu0
    %v6817 = vadd.f32 %v6764, %v6816
    %v6818 = vpop.f32.mrb[0].mxu0
    %v6819 = vadd.f32 %v6766, %v6818
    %v6820 = vpop.f32.mrb[0].mxu0
    %v6821 = vadd.f32 %v6768, %v6820
    %6822 = vdwg.mxu0
    %6823 = vmatprep.subr.bf16.mxu0 %v4354
    %6824 = vmatpush1.bf16.msra.mxu0 %v4353
    %6825 = vmatprep.subr.bf16.mxu0 %v4362
    %6826 = vmatpush1.bf16.msra.mxu0 %v4361
    %6827 = vmatprep.subr.bf16.mxu0 %v4370
    %6828 = vmatpush1.bf16.msra.mxu0 %v4369
    %6829 = vmatprep.subr.bf16.mxu0 %v4378
    %6830 = vmatpush1.bf16.msra.mxu0 %v4377
    %6831 = vmatprep.subr.bf16.mxu0 %v4386
    %6832 = vmatpush1.bf16.msra.mxu0 %v4385
    %6833 = vmatprep.subr.bf16.mxu0 %v4394
    %6834 = vmatpush1.bf16.msra.mxu0 %v4393
    %6835 = vmatprep.subr.bf16.mxu0 %v4402
    %6836 = vmatpush1.bf16.msra.mxu0 %v4401
    %6837 = vmatprep.subr.bf16.mxu0 %v4410
    %6838 = vmatpush1.bf16.msra.mxu0 %v4409
    %6839 = vmatprep.subr.bf16.mxu0 %v4418
    %6840 = vmatpush1.bf16.msra.mxu0 %v4417
    %6841 = vmatprep.subr.bf16.mxu0 %v4426
    %6842 = vmatpush1.bf16.msra.mxu0 %v4425
    %6843 = vmatprep.subr.bf16.mxu0 %v4434
    %6844 = vmatpush1.bf16.msra.mxu0 %v4433
    %6845 = vmatprep.subr.bf16.mxu0 %v4442
    %6846 = vmatpush1.bf16.msra.mxu0 %v4441
    %6847 = vmatprep.subr.bf16.mxu0 %v4450
    %6848 = vmatpush1.bf16.msra.mxu0 %v4449
    %6849 = vmatprep.subr.bf16.mxu0 %v4458
    %6850 = vmatpush1.bf16.msra.mxu0 %v4457
    %6851 = vmatprep.subr.bf16.mxu0 %v4466
    %6852 = vmatpush1.bf16.msra.mxu0 %v4465
    %6853 = vmatprep.subr.bf16.mxu0 %v4474
    %6854 = vmatpush1.bf16.msra.mxu0 %v4473
    %6855 = vmatprep.mubr.bf16.mxu0 %v182
    %6856 = vmatmul.mubr.bf16.gmra.mrb[0].mxu0 %v181
    %v6857 = vpop.f32.mrb[0].mxu0
    %v6858 = vadd.f32 %v1250, %v6857
    %v6859 = vpop.f32.mrb[0].mxu0
    %v6860 = vadd.f32 %v1254, %v6859
    %v6861 = vpop.f32.mrb[0].mxu0
    %v6862 = vadd.f32 %v1250, %v6861
    %v6863 = vpop.f32.mrb[0].mxu0
    %v6864 = vadd.f32 %v1254, %v6863
    %6865 = vmatprep.mubr.bf16.mxu0 %v198
    %6866 = vmatmul.mubr.bf16.gmra.mrb[0].mxu0 %v197
    %v6867 = vpop.f32.mrb[0].mxu0
    %v6868 = vadd.f32 %v1250, %v6867
    %v6869 = vpop.f32.mrb[0].mxu0
    %v6870 = vadd.f32 %v1254, %v6869
    %v6871 = vpop.f32.mrb[0].mxu0
    %v6872 = vadd.f32 %v1250, %v6871
    %v6873 = vpop.f32.mrb[0].mxu0
    %v6874 = vadd.f32 %v1254, %v6873
    %6875 = vdwg.mxu0
    %6876 = vmatprep.subr.bf16.mxu0 %v4482
    %6877 = vmatpush1.bf16.msra.mxu0 %v4481
    %6878 = vmatprep.subr.bf16.mxu0 %v4490
    %6879 = vmatpush1.bf16.msra.mxu0 %v4489
    %6880 = vmatprep.subr.bf16.mxu0 %v4498
    %6881 = vmatpush1.bf16.msra.mxu0 %v4497
    %6882 = vmatprep.subr.bf16.mxu0 %v4506
    %6883 = vmatpush1.bf16.msra.mxu0 %v4505
    %6884 = vmatprep.subr.bf16.mxu0 %v4514
    %6885 = vmatpush1.bf16.msra.mxu0 %v4513
    %6886 = vmatprep.subr.bf16.mxu0 %v4522
    %6887 = vmatpush1.bf16.msra.mxu0 %v4521
    %6888 = vmatprep.subr.bf16.mxu0 %v4530
    %6889 = vmatpush1.bf16.msra.mxu0 %v4529
    %6890 = vmatprep.subr.bf16.mxu0 %v4538
    %6891 = vmatpush1.bf16.msra.mxu0 %v4537
    %6892 = vmatprep.subr.bf16.mxu0 %v4546
    %6893 = vmatpush1.bf16.msra.mxu0 %v4545
    %6894 = vmatprep.subr.bf16.mxu0 %v4554
    %6895 = vmatpush1.bf16.msra.mxu0 %v4553
    %6896 = vmatprep.subr.bf16.mxu0 %v4562
    %6897 = vmatpush1.bf16.msra.mxu0 %v4561
    %6898 = vmatprep.subr.bf16.mxu0 %v4570
    %6899 = vmatpush1.bf16.msra.mxu0 %v4569
    %6900 = vmatprep.subr.bf16.mxu0 %v4578
    %6901 = vmatpush1.bf16.msra.mxu0 %v4577
    %6902 = vmatprep.subr.bf16.mxu0 %v4586
    %6903 = vmatpush1.bf16.msra.mxu0 %v4585
    %6904 = vmatprep.subr.bf16.mxu0 %v4594
    %6905 = vmatpush1.bf16.msra.mxu0 %v4593
    %6906 = vmatprep.subr.bf16.mxu0 %v4602
    %6907 = vmatpush1.bf16.msra.mxu0 %v4601
    %6908 = vmatprep.mubr.bf16.mxu0 %v184
    %6909 = vmatmul.mubr.bf16.gmra.mrb[0].mxu0 %v183
    %v6910 = vpop.f32.mrb[0].mxu0
    %v6911 = vadd.f32 %v6858, %v6910
    %v6912 = vpop.f32.mrb[0].mxu0
    %v6913 = vadd.f32 %v6860, %v6912
    %v6914 = vpop.f32.mrb[0].mxu0
    %v6915 = vadd.f32 %v6862, %v6914
    %v6916 = vpop.f32.mrb[0].mxu0
    %v6917 = vadd.f32 %v6864, %v6916
    %6918 = vmatprep.mubr.bf16.mxu0 %v200
    %6919 = vmatmul.mubr.bf16.gmra.mrb[0].mxu0 %v199
    %v6920 = vpop.f32.mrb[0].mxu0
    %v6921 = vadd.f32 %v6868, %v6920
    %v6922 = vpop.f32.mrb[0].mxu0
    %v6923 = vadd.f32 %v6870, %v6922
    %v6924 = vpop.f32.mrb[0].mxu0
    %v6925 = vadd.f32 %v6872, %v6924
    %v6926 = vpop.f32.mrb[0].mxu0
    %v6927 = vadd.f32 %v6874, %v6926
    %6928 = vdwg.mxu0
    %6929 = vmatprep.subr.bf16.mxu0 %v4610
    %6930 = vmatpush1.bf16.msra.mxu0 %v4609
    %6931 = vmatprep.subr.bf16.mxu0 %v4618
    %6932 = vmatpush1.bf16.msra.mxu0 %v4617
    %6933 = vmatprep.subr.bf16.mxu0 %v4626
    %6934 = vmatpush1.bf16.msra.mxu0 %v4625
    %6935 = vmatprep.subr.bf16.mxu0 %v4634
    %6936 = vmatpush1.bf16.msra.mxu0 %v4633
    %6937 = vmatprep.subr.bf16.mxu0 %v4642
    %6938 = vmatpush1.bf16.msra.mxu0 %v4641
    %6939 = vmatprep.subr.bf16.mxu0 %v4650
    %6940 = vmatpush1.bf16.msra.mxu0 %v4649
    %6941 = vmatprep.subr.bf16.mxu0 %v4658
    %6942 = vmatpush1.bf16.msra.mxu0 %v4657
    %6943 = vmatprep.subr.bf16.mxu0 %v4666
    %6944 = vmatpush1.bf16.msra.mxu0 %v4665
    %6945 = vmatprep.subr.bf16.mxu0 %v4674
    %6946 = vmatpush1.bf16.msra.mxu0 %v4673
    %6947 = vmatprep.subr.bf16.mxu0 %v4682
    %6948 = vmatpush1.bf16.msra.mxu0 %v4681
    %6949 = vmatprep.subr.bf16.mxu0 %v4690
    %6950 = vmatpush1.bf16.msra.mxu0 %v4689
    %6951 = vmatprep.subr.bf16.mxu0 %v4698
    %6952 = vmatpush1.bf16.msra.mxu0 %v4697
    %6953 = vmatprep.subr.bf16.mxu0 %v4706
    %6954 = vmatpush1.bf16.msra.mxu0 %v4705
    %6955 = vmatprep.subr.bf16.mxu0 %v4714
    %6956 = vmatpush1.bf16.msra.mxu0 %v4713
    %6957 = vmatprep.subr.bf16.mxu0 %v4722
    %6958 = vmatpush1.bf16.msra.mxu0 %v4721
    %6959 = vmatprep.subr.bf16.mxu0 %v4730
    %6960 = vmatpush1.bf16.msra.mxu0 %v4729
    %6961 = vmatprep.mubr.bf16.mxu0 %v186
    %6962 = vmatmul.mubr.bf16.gmra.mrb[0].mxu0 %v185
    %v6963 = vpop.f32.mrb[0].mxu0
    %v6964 = vadd.f32 %v6911, %v6963
    %v6965 = vpop.f32.mrb[0].mxu0
    %v6966 = vadd.f32 %v6913, %v6965
    %v6967 = vpop.f32.mrb[0].mxu0
    %v6968 = vadd.f32 %v6915, %v6967
    %v6969 = vpop.f32.mrb[0].mxu0
    %v6970 = vadd.f32 %v6917, %v6969
    %6971 = vmatprep.mubr.bf16.mxu0 %v202
    %6972 = vmatmul.mubr.bf16.gmra.mrb[0].mxu0 %v201
    %v6973 = vpop.f32.mrb[0].mxu0
    %v6974 = vadd.f32 %v6921, %v6973
    %v6975 = vpop.f32.mrb[0].mxu0
    %v6976 = vadd.f32 %v6923, %v6975
    %v6977 = vpop.f32.mrb[0].mxu0
    %v6978 = vadd.f32 %v6925, %v6977
    %v6979 = vpop.f32.mrb[0].mxu0
    %v6980 = vadd.f32 %v6927, %v6979
    %6981 = vdwg.mxu0
    %6982 = vmatprep.subr.bf16.mxu0 %v4738
    %6983 = vmatpush1.bf16.msra.mxu0 %v4737
    %6984 = vmatprep.subr.bf16.mxu0 %v4746
    %6985 = vmatpush1.bf16.msra.mxu0 %v4745
    %6986 = vmatprep.subr.bf16.mxu0 %v4754
    %6987 = vmatpush1.bf16.msra.mxu0 %v4753
    %6988 = vmatprep.subr.bf16.mxu0 %v4762
    %6989 = vmatpush1.bf16.msra.mxu0 %v4761
    %6990 = vmatprep.subr.bf16.mxu0 %v4770
    %6991 = vmatpush1.bf16.msra.mxu0 %v4769
    %6992 = vmatprep.subr.bf16.mxu0 %v4778
    %6993 = vmatpush1.bf16.msra.mxu0 %v4777
    %6994 = vmatprep.subr.bf16.mxu0 %v4786
    %6995 = vmatpush1.bf16.msra.mxu0 %v4785
    %6996 = vmatprep.subr.bf16.mxu0 %v4794
    %6997 = vmatpush1.bf16.msra.mxu0 %v4793
    %6998 = vmatprep.subr.bf16.mxu0 %v4802
    %6999 = vmatpush1.bf16.msra.mxu0 %v4801
    %7000 = vmatprep.subr.bf16.mxu0 %v4810
    %7001 = vmatpush1.bf16.msra.mxu0 %v4809
    %7002 = vmatprep.subr.bf16.mxu0 %v4818
    %7003 = vmatpush1.bf16.msra.mxu0 %v4817
    %7004 = vmatprep.subr.bf16.mxu0 %v4826
    %7005 = vmatpush1.bf16.msra.mxu0 %v4825
    %7006 = vmatprep.subr.bf16.mxu0 %v4834
    %7007 = vmatpush1.bf16.msra.mxu0 %v4833
    %7008 = vmatprep.subr.bf16.mxu0 %v4842
    %7009 = vmatpush1.bf16.msra.mxu0 %v4841
    %7010 = vmatprep.subr.bf16.mxu0 %v4850
    %7011 = vmatpush1.bf16.msra.mxu0 %v4849
    %7012 = vmatprep.subr.bf16.mxu0 %v4858
    %7013 = vmatpush1.bf16.msra.mxu0 %v4857
    %7014 = vmatprep.mubr.bf16.mxu0 %v188
    %7015 = vmatmul.mubr.bf16.gmra.mrb[0].mxu0 %v187
    %v7016 = vpop.f32.mrb[0].mxu0
    %v7017 = vadd.f32 %v6964, %v7016
    %v7018 = vpop.f32.mrb[0].mxu0
    %v7019 = vadd.f32 %v6966, %v7018
    %v7020 = vpop.f32.mrb[0].mxu0
    %v7021 = vadd.f32 %v6968, %v7020
    %v7022 = vpop.f32.mrb[0].mxu0
    %v7023 = vadd.f32 %v6970, %v7022
    %7024 = vmatprep.mubr.bf16.mxu0 %v204
    %7025 = vmatmul.mubr.bf16.gmra.mrb[0].mxu0 %v203
    %v7026 = vpop.f32.mrb[0].mxu0
    %v7027 = vadd.f32 %v6974, %v7026
    %v7028 = vpop.f32.mrb[0].mxu0
    %v7029 = vadd.f32 %v6976, %v7028
    %v7030 = vpop.f32.mrb[0].mxu0
    %v7031 = vadd.f32 %v6978, %v7030
    %v7032 = vpop.f32.mrb[0].mxu0
    %v7033 = vadd.f32 %v6980, %v7032
    %7034 = vdwg.mxu0
    %7035 = vmatprep.subr.bf16.mxu0 %v4866
    %7036 = vmatpush1.bf16.msra.mxu0 %v4865
    %7037 = vmatprep.subr.bf16.mxu0 %v4874
    %7038 = vmatpush1.bf16.msra.mxu0 %v4873
    %7039 = vmatprep.subr.bf16.mxu0 %v4882
    %7040 = vmatpush1.bf16.msra.mxu0 %v4881
    %7041 = vmatprep.subr.bf16.mxu0 %v4890
    %7042 = vmatpush1.bf16.msra.mxu0 %v4889
    %7043 = vmatprep.subr.bf16.mxu0 %v4898
    %7044 = vmatpush1.bf16.msra.mxu0 %v4897
    %7045 = vmatprep.subr.bf16.mxu0 %v4906
    %7046 = vmatpush1.bf16.msra.mxu0 %v4905
    %7047 = vmatprep.subr.bf16.mxu0 %v4914
    %7048 = vmatpush1.bf16.msra.mxu0 %v4913
    %7049 = vmatprep.subr.bf16.mxu0 %v4922
    %7050 = vmatpush1.bf16.msra.mxu0 %v4921
    %7051 = vmatprep.subr.bf16.mxu0 %v4930
    %7052 = vmatpush1.bf16.msra.mxu0 %v4929
    %7053 = vmatprep.subr.bf16.mxu0 %v4938
    %7054 = vmatpush1.bf16.msra.mxu0 %v4937
    %7055 = vmatprep.subr.bf16.mxu0 %v4946
    %7056 = vmatpush1.bf16.msra.mxu0 %v4945
    %7057 = vmatprep.subr.bf16.mxu0 %v4954
    %7058 = vmatpush1.bf16.msra.mxu0 %v4953
    %7059 = vmatprep.subr.bf16.mxu0 %v4962
    %7060 = vmatpush1.bf16.msra.mxu0 %v4961
    %7061 = vmatprep.subr.bf16.mxu0 %v4970
    %7062 = vmatpush1.bf16.msra.mxu0 %v4969
    %7063 = vmatprep.subr.bf16.mxu0 %v4978
    %7064 = vmatpush1.bf16.msra.mxu0 %v4977
    %7065 = vmatprep.subr.bf16.mxu0 %v4986
    %7066 = vmatpush1.bf16.msra.mxu0 %v4985
    %7067 = vmatprep.mubr.bf16.mxu0 %v190
    %7068 = vmatmul.mubr.bf16.gmra.mrb[0].mxu0 %v189
    %v7069 = vpop.f32.mrb[0].mxu0
    %v7070 = vadd.f32 %v7017, %v7069
    %v7071 = vpop.f32.mrb[0].mxu0
    %v7072 = vadd.f32 %v7019, %v7071
    %v7073 = vpop.f32.mrb[0].mxu0
    %v7074 = vadd.f32 %v7021, %v7073
    %v7075 = vpop.f32.mrb[0].mxu0
    %v7076 = vadd.f32 %v7023, %v7075
    %7077 = vmatprep.mubr.bf16.mxu0 %v206
    %7078 = vmatmul.mubr.bf16.gmra.mrb[0].mxu0 %v205
    %v7079 = vpop.f32.mrb[0].mxu0
    %v7080 = vadd.f32 %v7027, %v7079
    %v7081 = vpop.f32.mrb[0].mxu0
    %v7082 = vadd.f32 %v7029, %v7081
    %v7083 = vpop.f32.mrb[0].mxu0
    %v7084 = vadd.f32 %v7031, %v7083
    %v7085 = vpop.f32.mrb[0].mxu0
    %v7086 = vadd.f32 %v7033, %v7085
    %7087 = vdwg.mxu0
    %7088 = vmatprep.subr.bf16.mxu0 %v4994
    %7089 = vmatpush1.bf16.msra.mxu0 %v4993
    %7090 = vmatprep.subr.bf16.mxu0 %v5002
    %7091 = vmatpush1.bf16.msra.mxu0 %v5001
    %7092 = vmatprep.subr.bf16.mxu0 %v5010
    %7093 = vmatpush1.bf16.msra.mxu0 %v5009
    %7094 = vmatprep.subr.bf16.mxu0 %v5018
    %7095 = vmatpush1.bf16.msra.mxu0 %v5017
    %7096 = vmatprep.subr.bf16.mxu0 %v5026
    %7097 = vmatpush1.bf16.msra.mxu0 %v5025
    %7098 = vmatprep.subr.bf16.mxu0 %v5034
    %7099 = vmatpush1.bf16.msra.mxu0 %v5033
    %7100 = vmatprep.subr.bf16.mxu0 %v5042
    %7101 = vmatpush1.bf16.msra.mxu0 %v5041
    %7102 = vmatprep.subr.bf16.mxu0 %v5050
    %7103 = vmatpush1.bf16.msra.mxu0 %v5049
    %7104 = vmatprep.subr.bf16.mxu0 %v5058
    %7105 = vmatpush1.bf16.msra.mxu0 %v5057
    %7106 = vmatprep.subr.bf16.mxu0 %v5066
    %7107 = vmatpush1.bf16.msra.mxu0 %v5065
    %7108 = vmatprep.subr.bf16.mxu0 %v5074
    %7109 = vmatpush1.bf16.msra.mxu0 %v5073
    %7110 = vmatprep.subr.bf16.mxu0 %v5082
    %7111 = vmatpush1.bf16.msra.mxu0 %v5081
    %7112 = vmatprep.subr.bf16.mxu0 %v5090
    %7113 = vmatpush1.bf16.msra.mxu0 %v5089
    %7114 = vmatprep.subr.bf16.mxu0 %v5098
    %7115 = vmatpush1.bf16.msra.mxu0 %v5097
    %7116 = vmatprep.subr.bf16.mxu0 %v5106
    %7117 = vmatpush1.bf16.msra.mxu0 %v5105
    %7118 = vmatprep.subr.bf16.mxu0 %v5114
    %7119 = vmatpush1.bf16.msra.mxu0 %v5113
    %7120 = vmatprep.mubr.bf16.mxu0 %v192
    %7121 = vmatmul.mubr.bf16.gmra.mrb[0].mxu0 %v191
    %v7122 = vpop.f32.mrb[0].mxu0
    %v7123 = vadd.f32 %v7070, %v7122
    %v7124 = vpop.f32.mrb[0].mxu0
    %v7125 = vadd.f32 %v7072, %v7124
    %v7126 = vpop.f32.mrb[0].mxu0
    %v7127 = vadd.f32 %v7074, %v7126
    %v7128 = vpop.f32.mrb[0].mxu0
    %v7129 = vadd.f32 %v7076, %v7128
    %7130 = vmatprep.mubr.bf16.mxu0 %v208
    %7131 = vmatmul.mubr.bf16.gmra.mrb[0].mxu0 %v207
    %v7132 = vpop.f32.mrb[0].mxu0
    %v7133 = vadd.f32 %v7080, %v7132
    %v7134 = vpop.f32.mrb[0].mxu0
    %v7135 = vadd.f32 %v7082, %v7134
    %v7136 = vpop.f32.mrb[0].mxu0
    %v7137 = vadd.f32 %v7084, %v7136
    %v7138 = vpop.f32.mrb[0].mxu0
    %v7139 = vadd.f32 %v7086, %v7138
    %7140 = vdwg.mxu0
    %7141 = vmatprep.subr.bf16.mxu0 %v5122
    %7142 = vmatpush1.bf16.msra.mxu0 %v5121
    %7143 = vmatprep.subr.bf16.mxu0 %v5130
    %7144 = vmatpush1.bf16.msra.mxu0 %v5129
    %7145 = vmatprep.subr.bf16.mxu0 %v5138
    %7146 = vmatpush1.bf16.msra.mxu0 %v5137
    %7147 = vmatprep.subr.bf16.mxu0 %v5146
    %7148 = vmatpush1.bf16.msra.mxu0 %v5145
    %7149 = vmatprep.subr.bf16.mxu0 %v5154
    %7150 = vmatpush1.bf16.msra.mxu0 %v5153
    %7151 = vmatprep.subr.bf16.mxu0 %v5162
    %7152 = vmatpush1.bf16.msra.mxu0 %v5161
    %7153 = vmatprep.subr.bf16.mxu0 %v5170
    %7154 = vmatpush1.bf16.msra.mxu0 %v5169
    %7155 = vmatprep.subr.bf16.mxu0 %v5178
    %7156 = vmatpush1.bf16.msra.mxu0 %v5177
    %7157 = vmatprep.subr.bf16.mxu0 %v5186
    %7158 = vmatpush1.bf16.msra.mxu0 %v5185
    %7159 = vmatprep.subr.bf16.mxu0 %v5194
    %7160 = vmatpush1.bf16.msra.mxu0 %v5193
    %7161 = vmatprep.subr.bf16.mxu0 %v5202
    %7162 = vmatpush1.bf16.msra.mxu0 %v5201
    %7163 = vmatprep.subr.bf16.mxu0 %v5210
    %7164 = vmatpush1.bf16.msra.mxu0 %v5209
    %7165 = vmatprep.subr.bf16.mxu0 %v5218
    %7166 = vmatpush1.bf16.msra.mxu0 %v5217
    %7167 = vmatprep.subr.bf16.mxu0 %v5226
    %7168 = vmatpush1.bf16.msra.mxu0 %v5225
    %7169 = vmatprep.subr.bf16.mxu0 %v5234
    %7170 = vmatpush1.bf16.msra.mxu0 %v5233
    %7171 = vmatprep.subr.bf16.mxu0 %v5242
    %7172 = vmatpush1.bf16.msra.mxu0 %v5241
    %7173 = vmatprep.mubr.bf16.mxu0 %v194
    %7174 = vmatmul.mubr.bf16.gmra.mrb[0].mxu0 %v193
    %v7175 = vpop.f32.mrb[0].mxu0
    %v7176 = vadd.f32 %v7123, %v7175
    %v7177 = vpop.f32.mrb[0].mxu0
    %v7178 = vadd.f32 %v7125, %v7177
    %v7179 = vpop.f32.mrb[0].mxu0
    %v7180 = vadd.f32 %v7127, %v7179
    %v7181 = vpop.f32.mrb[0].mxu0
    %v7182 = vadd.f32 %v7129, %v7181
    %7183 = vmatprep.mubr.bf16.mxu0 %v210
    %7184 = vmatmul.mubr.bf16.gmra.mrb[0].mxu0 %v209
    %v7185 = vpop.f32.mrb[0].mxu0
    %v7186 = vadd.f32 %v7133, %v7185
    %v7187 = vpop.f32.mrb[0].mxu0
    %v7188 = vadd.f32 %v7135, %v7187
    %v7189 = vpop.f32.mrb[0].mxu0
    %v7190 = vadd.f32 %v7137, %v7189
    %v7191 = vpop.f32.mrb[0].mxu0
    %v7192 = vadd.f32 %v7139, %v7191
    %7193 = vdwg.mxu0
    %7194 = vmatprep.subr.bf16.mxu0 %v5250
    %7195 = vmatpush1.bf16.msra.mxu0 %v5249
    %7196 = vmatprep.subr.bf16.mxu0 %v5258
    %7197 = vmatpush1.bf16.msra.mxu0 %v5257
    %7198 = vmatprep.subr.bf16.mxu0 %v5266
    %7199 = vmatpush1.bf16.msra.mxu0 %v5265
    %7200 = vmatprep.subr.bf16.mxu0 %v5274
    %7201 = vmatpush1.bf16.msra.mxu0 %v5273
    %7202 = vmatprep.subr.bf16.mxu0 %v5282
    %7203 = vmatpush1.bf16.msra.mxu0 %v5281
    %7204 = vmatprep.subr.bf16.mxu0 %v5290
    %7205 = vmatpush1.bf16.msra.mxu0 %v5289
    %7206 = vmatprep.subr.bf16.mxu0 %v5298
    %7207 = vmatpush1.bf16.msra.mxu0 %v5297
    %7208 = vmatprep.subr.bf16.mxu0 %v5306
    %7209 = vmatpush1.bf16.msra.mxu0 %v5305
    %7210 = vmatprep.subr.bf16.mxu0 %v5314
    %7211 = vmatpush1.bf16.msra.mxu0 %v5313
    %7212 = vmatprep.subr.bf16.mxu0 %v5322
    %7213 = vmatpush1.bf16.msra.mxu0 %v5321
    %7214 = vmatprep.subr.bf16.mxu0 %v5330
    %7215 = vmatpush1.bf16.msra.mxu0 %v5329
    %7216 = vmatprep.subr.bf16.mxu0 %v5338
    %7217 = vmatpush1.bf16.msra.mxu0 %v5337
    %7218 = vmatprep.subr.bf16.mxu0 %v5346
    %7219 = vmatpush1.bf16.msra.mxu0 %v5345
    %7220 = vmatprep.subr.bf16.mxu0 %v5354
    %7221 = vmatpush1.bf16.msra.mxu0 %v5353
    %7222 = vmatprep.subr.bf16.mxu0 %v5362
    %7223 = vmatpush1.bf16.msra.mxu0 %v5361
    %7224 = vmatprep.subr.bf16.mxu0 %v5370
    %7225 = vmatpush1.bf16.msra.mxu0 %v5369
    %7226 = vmatprep.mubr.bf16.mxu0 %v196
    %7227 = vmatmul.mubr.bf16.gmra.mrb[0].mxu0 %v195
    %v7228 = vpop.f32.mrb[0].mxu0
    %v7229 = vadd.f32 %v7176, %v7228
    %v7230 = vpop.f32.mrb[0].mxu0
    %v7231 = vadd.f32 %v7178, %v7230
    %v7232 = vpop.f32.mrb[0].mxu0
    %v7233 = vadd.f32 %v7180, %v7232
    %v7234 = vpop.f32.mrb[0].mxu0
    %v7235 = vadd.f32 %v7182, %v7234
    %7236 = vmatprep.mubr.bf16.mxu0 %v212
    %7237 = vmatmul.mubr.bf16.gmra.mrb[0].mxu0 %v211
    %v7238 = vpop.f32.mrb[0].mxu0
    %v7239 = vadd.f32 %v7186, %v7238
    %v7240 = vpop.f32.mrb[0].mxu0
    %v7241 = vadd.f32 %v7188, %v7240
    %v7242 = vpop.f32.mrb[0].mxu0
    %v7243 = vadd.f32 %v7190, %v7242
    %v7244 = vpop.f32.mrb[0].mxu0
    %v7245 = vadd.f32 %v7192, %v7244
    %7246 = vdwg.mxu0
    %7247 = vmatprep.subr.bf16.mxu0 %v4356
    %7248 = vmatpush1.bf16.msra.mxu0 %v4355
    %7249 = vmatprep.subr.bf16.mxu0 %v4364
    %7250 = vmatpush1.bf16.msra.mxu0 %v4363
    %7251 = vmatprep.subr.bf16.mxu0 %v4372
    %7252 = vmatpush1.bf16.msra.mxu0 %v4371
    %7253 = vmatprep.subr.bf16.mxu0 %v4380
    %7254 = vmatpush1.bf16.msra.mxu0 %v4379
    %7255 = vmatprep.subr.bf16.mxu0 %v4388
    %7256 = vmatpush1.bf16.msra.mxu0 %v4387
    %7257 = vmatprep.subr.bf16.mxu0 %v4396
    %7258 = vmatpush1.bf16.msra.mxu0 %v4395
    %7259 = vmatprep.subr.bf16.mxu0 %v4404
    %7260 = vmatpush1.bf16.msra.mxu0 %v4403
    %7261 = vmatprep.subr.bf16.mxu0 %v4412
    %7262 = vmatpush1.bf16.msra.mxu0 %v4411
    %7263 = vmatprep.subr.bf16.mxu0 %v4420
    %7264 = vmatpush1.bf16.msra.mxu0 %v4419
    %7265 = vmatprep.subr.bf16.mxu0 %v4428
    %7266 = vmatpush1.bf16.msra.mxu0 %v4427
    %7267 = vmatprep.subr.bf16.mxu0 %v4436
    %7268 = vmatpush1.bf16.msra.mxu0 %v4435
    %7269 = vmatprep.subr.bf16.mxu0 %v4444
    %7270 = vmatpush1.bf16.msra.mxu0 %v4443
    %7271 = vmatprep.subr.bf16.mxu0 %v4452
    %7272 = vmatpush1.bf16.msra.mxu0 %v4451
    %7273 = vmatprep.subr.bf16.mxu0 %v4460
    %7274 = vmatpush1.bf16.msra.mxu0 %v4459
    %7275 = vmatprep.subr.bf16.mxu0 %v4468
    %7276 = vmatpush1.bf16.msra.mxu0 %v4467
    %7277 = vmatprep.subr.bf16.mxu0 %v4476
    %7278 = vmatpush1.bf16.msra.mxu0 %v4475
    %7279 = vmatprep.mubr.bf16.mxu0 %v182
    %7280 = vmatmul.mubr.bf16.gmra.mrb[0].mxu0 %v181
    %v7281 = vpop.f32.mrb[0].mxu0
    %v7282 = vadd.f32 %v1258, %v7281
    %v7283 = vpop.f32.mrb[0].mxu0
    %v7284 = vadd.f32 %v1262, %v7283
    %v7285 = vpop.f32.mrb[0].mxu0
    %v7286 = vadd.f32 %v1258, %v7285
    %v7287 = vpop.f32.mrb[0].mxu0
    %v7288 = vadd.f32 %v1262, %v7287
    %7289 = vmatprep.mubr.bf16.mxu0 %v198
    %7290 = vmatmul.mubr.bf16.gmra.mrb[0].mxu0 %v197
    %v7291 = vpop.f32.mrb[0].mxu0
    %v7292 = vadd.f32 %v1258, %v7291
    %v7293 = vpop.f32.mrb[0].mxu0
    %v7294 = vadd.f32 %v1262, %v7293
    %v7295 = vpop.f32.mrb[0].mxu0
    %v7296 = vadd.f32 %v1258, %v7295
    %v7297 = vpop.f32.mrb[0].mxu0
    %v7298 = vadd.f32 %v1262, %v7297
    %7299 = vdwg.mxu0
    %7300 = vmatprep.subr.bf16.mxu0 %v4484
    %7301 = vmatpush1.bf16.msra.mxu0 %v4483
    %7302 = vmatprep.subr.bf16.mxu0 %v4492
    %7303 = vmatpush1.bf16.msra.mxu0 %v4491
    %7304 = vmatprep.subr.bf16.mxu0 %v4500
    %7305 = vmatpush1.bf16.msra.mxu0 %v4499
    %7306 = vmatprep.subr.bf16.mxu0 %v4508
    %7307 = vmatpush1.bf16.msra.mxu0 %v4507
    %7308 = vmatprep.subr.bf16.mxu0 %v4516
    %7309 = vmatpush1.bf16.msra.mxu0 %v4515
    %7310 = vmatprep.subr.bf16.mxu0 %v4524
    %7311 = vmatpush1.bf16.msra.mxu0 %v4523
    %7312 = vmatprep.subr.bf16.mxu0 %v4532
    %7313 = vmatpush1.bf16.msra.mxu0 %v4531
    %7314 = vmatprep.subr.bf16.mxu0 %v4540
    %7315 = vmatpush1.bf16.msra.mxu0 %v4539
    %7316 = vmatprep.subr.bf16.mxu0 %v4548
    %7317 = vmatpush1.bf16.msra.mxu0 %v4547
    %7318 = vmatprep.subr.bf16.mxu0 %v4556
    %7319 = vmatpush1.bf16.msra.mxu0 %v4555
    %7320 = vmatprep.subr.bf16.mxu0 %v4564
    %7321 = vmatpush1.bf16.msra.mxu0 %v4563
    %7322 = vmatprep.subr.bf16.mxu0 %v4572
    %7323 = vmatpush1.bf16.msra.mxu0 %v4571
    %7324 = vmatprep.subr.bf16.mxu0 %v4580
    %7325 = vmatpush1.bf16.msra.mxu0 %v4579
    %7326 = vmatprep.subr.bf16.mxu0 %v4588
    %7327 = vmatpush1.bf16.msra.mxu0 %v4587
    %7328 = vmatprep.subr.bf16.mxu0 %v4596
    %7329 = vmatpush1.bf16.msra.mxu0 %v4595
    %7330 = vmatprep.subr.bf16.mxu0 %v4604
    %7331 = vmatpush1.bf16.msra.mxu0 %v4603
    %7332 = vmatprep.mubr.bf16.mxu0 %v184
    %7333 = vmatmul.mubr.bf16.gmra.mrb[0].mxu0 %v183
    %v7334 = vpop.f32.mrb[0].mxu0
    %v7335 = vadd.f32 %v7282, %v7334
    %v7336 = vpop.f32.mrb[0].mxu0
    %v7337 = vadd.f32 %v7284, %v7336
    %v7338 = vpop.f32.mrb[0].mxu0
    %v7339 = vadd.f32 %v7286, %v7338
    %v7340 = vpop.f32.mrb[0].mxu0
    %v7341 = vadd.f32 %v7288, %v7340
    %7342 = vmatprep.mubr.bf16.mxu0 %v200
    %7343 = vmatmul.mubr.bf16.gmra.mrb[0].mxu0 %v199
    %v7344 = vpop.f32.mrb[0].mxu0
    %v7345 = vadd.f32 %v7292, %v7344
    %v7346 = vpop.f32.mrb[0].mxu0
    %v7347 = vadd.f32 %v7294, %v7346
    %v7348 = vpop.f32.mrb[0].mxu0
    %v7349 = vadd.f32 %v7296, %v7348
    %v7350 = vpop.f32.mrb[0].mxu0
    %v7351 = vadd.f32 %v7298, %v7350
    %7352 = vdwg.mxu0
    %7353 = vmatprep.subr.bf16.mxu0 %v4612
    %7354 = vmatpush1.bf16.msra.mxu0 %v4611
    %7355 = vmatprep.subr.bf16.mxu0 %v4620
    %7356 = vmatpush1.bf16.msra.mxu0 %v4619
    %7357 = vmatprep.subr.bf16.mxu0 %v4628
    %7358 = vmatpush1.bf16.msra.mxu0 %v4627
    %7359 = vmatprep.subr.bf16.mxu0 %v4636
    %7360 = vmatpush1.bf16.msra.mxu0 %v4635
    %7361 = vmatprep.subr.bf16.mxu0 %v4644
    %7362 = vmatpush1.bf16.msra.mxu0 %v4643
    %7363 = vmatprep.subr.bf16.mxu0 %v4652
    %7364 = vmatpush1.bf16.msra.mxu0 %v4651
    %7365 = vmatprep.subr.bf16.mxu0 %v4660
    %7366 = vmatpush1.bf16.msra.mxu0 %v4659
    %7367 = vmatprep.subr.bf16.mxu0 %v4668
    %7368 = vmatpush1.bf16.msra.mxu0 %v4667
    %7369 = vmatprep.subr.bf16.mxu0 %v4676
    %7370 = vmatpush1.bf16.msra.mxu0 %v4675
    %7371 = vmatprep.subr.bf16.mxu0 %v4684
    %7372 = vmatpush1.bf16.msra.mxu0 %v4683
    %7373 = vmatprep.subr.bf16.mxu0 %v4692
    %7374 = vmatpush1.bf16.msra.mxu0 %v4691
    %7375 = vmatprep.subr.bf16.mxu0 %v4700
    %7376 = vmatpush1.bf16.msra.mxu0 %v4699
    %7377 = vmatprep.subr.bf16.mxu0 %v4708
    %7378 = vmatpush1.bf16.msra.mxu0 %v4707
    %7379 = vmatprep.subr.bf16.mxu0 %v4716
    %7380 = vmatpush1.bf16.msra.mxu0 %v4715
    %7381 = vmatprep.subr.bf16.mxu0 %v4724
    %7382 = vmatpush1.bf16.msra.mxu0 %v4723
    %7383 = vmatprep.subr.bf16.mxu0 %v4732
    %7384 = vmatpush1.bf16.msra.mxu0 %v4731
    %7385 = vmatprep.mubr.bf16.mxu0 %v186
    %7386 = vmatmul.mubr.bf16.gmra.mrb[0].mxu0 %v185
    %v7387 = vpop.f32.mrb[0].mxu0
    %v7388 = vadd.f32 %v7335, %v7387
    %v7389 = vpop.f32.mrb[0].mxu0
    %v7390 = vadd.f32 %v7337, %v7389
    %v7391 = vpop.f32.mrb[0].mxu0
    %v7392 = vadd.f32 %v7339, %v7391
    %v7393 = vpop.f32.mrb[0].mxu0
    %v7394 = vadd.f32 %v7341, %v7393
    %7395 = vmatprep.mubr.bf16.mxu0 %v202
    %7396 = vmatmul.mubr.bf16.gmra.mrb[0].mxu0 %v201
    %v7397 = vpop.f32.mrb[0].mxu0
    %v7398 = vadd.f32 %v7345, %v7397
    %v7399 = vpop.f32.mrb[0].mxu0
    %v7400 = vadd.f32 %v7347, %v7399
    %v7401 = vpop.f32.mrb[0].mxu0
    %v7402 = vadd.f32 %v7349, %v7401
    %v7403 = vpop.f32.mrb[0].mxu0
    %v7404 = vadd.f32 %v7351, %v7403
    %7405 = vdwg.mxu0
    %7406 = vmatprep.subr.bf16.mxu0 %v4740
    %7407 = vmatpush1.bf16.msra.mxu0 %v4739
    %7408 = vmatprep.subr.bf16.mxu0 %v4748
    %7409 = vmatpush1.bf16.msra.mxu0 %v4747
    %7410 = vmatprep.subr.bf16.mxu0 %v4756
    %7411 = vmatpush1.bf16.msra.mxu0 %v4755
    %7412 = vmatprep.subr.bf16.mxu0 %v4764
    %7413 = vmatpush1.bf16.msra.mxu0 %v4763
    %7414 = vmatprep.subr.bf16.mxu0 %v4772
    %7415 = vmatpush1.bf16.msra.mxu0 %v4771
    %7416 = vmatprep.subr.bf16.mxu0 %v4780
    %7417 = vmatpush1.bf16.msra.mxu0 %v4779
    %7418 = vmatprep.subr.bf16.mxu0 %v4788
    %7419 = vmatpush1.bf16.msra.mxu0 %v4787
    %7420 = vmatprep.subr.bf16.mxu0 %v4796
    %7421 = vmatpush1.bf16.msra.mxu0 %v4795
    %7422 = vmatprep.subr.bf16.mxu0 %v4804
    %7423 = vmatpush1.bf16.msra.mxu0 %v4803
    %7424 = vmatprep.subr.bf16.mxu0 %v4812
    %7425 = vmatpush1.bf16.msra.mxu0 %v4811
    %7426 = vmatprep.subr.bf16.mxu0 %v4820
    %7427 = vmatpush1.bf16.msra.mxu0 %v4819
    %7428 = vmatprep.subr.bf16.mxu0 %v4828
    %7429 = vmatpush1.bf16.msra.mxu0 %v4827
    %7430 = vmatprep.subr.bf16.mxu0 %v4836
    %7431 = vmatpush1.bf16.msra.mxu0 %v4835
    %7432 = vmatprep.subr.bf16.mxu0 %v4844
    %7433 = vmatpush1.bf16.msra.mxu0 %v4843
    %7434 = vmatprep.subr.bf16.mxu0 %v4852
    %7435 = vmatpush1.bf16.msra.mxu0 %v4851
    %7436 = vmatprep.subr.bf16.mxu0 %v4860
    %7437 = vmatpush1.bf16.msra.mxu0 %v4859
    %7438 = vmatprep.mubr.bf16.mxu0 %v188
    %7439 = vmatmul.mubr.bf16.gmra.mrb[0].mxu0 %v187
    %v7440 = vpop.f32.mrb[0].mxu0
    %v7441 = vadd.f32 %v7388, %v7440
    %v7442 = vpop.f32.mrb[0].mxu0
    %v7443 = vadd.f32 %v7390, %v7442
    %v7444 = vpop.f32.mrb[0].mxu0
    %v7445 = vadd.f32 %v7392, %v7444
    %v7446 = vpop.f32.mrb[0].mxu0
    %v7447 = vadd.f32 %v7394, %v7446
    %7448 = vmatprep.mubr.bf16.mxu0 %v204
    %7449 = vmatmul.mubr.bf16.gmra.mrb[0].mxu0 %v203
    %v7450 = vpop.f32.mrb[0].mxu0
    %v7451 = vadd.f32 %v7398, %v7450
    %v7452 = vpop.f32.mrb[0].mxu0
    %v7453 = vadd.f32 %v7400, %v7452
    %v7454 = vpop.f32.mrb[0].mxu0
    %v7455 = vadd.f32 %v7402, %v7454
    %v7456 = vpop.f32.mrb[0].mxu0
    %v7457 = vadd.f32 %v7404, %v7456
    %7458 = vdwg.mxu0
    %7459 = vmatprep.subr.bf16.mxu0 %v4868
    %7460 = vmatpush1.bf16.msra.mxu0 %v4867
    %7461 = vmatprep.subr.bf16.mxu0 %v4876
    %7462 = vmatpush1.bf16.msra.mxu0 %v4875
    %7463 = vmatprep.subr.bf16.mxu0 %v4884
    %7464 = vmatpush1.bf16.msra.mxu0 %v4883
    %7465 = vmatprep.subr.bf16.mxu0 %v4892
    %7466 = vmatpush1.bf16.msra.mxu0 %v4891
    %7467 = vmatprep.subr.bf16.mxu0 %v4900
    %7468 = vmatpush1.bf16.msra.mxu0 %v4899
    %7469 = vmatprep.subr.bf16.mxu0 %v4908
    %7470 = vmatpush1.bf16.msra.mxu0 %v4907
    %7471 = vmatprep.subr.bf16.mxu0 %v4916
    %7472 = vmatpush1.bf16.msra.mxu0 %v4915
    %7473 = vmatprep.subr.bf16.mxu0 %v4924
    %7474 = vmatpush1.bf16.msra.mxu0 %v4923
    %7475 = vmatprep.subr.bf16.mxu0 %v4932
    %7476 = vmatpush1.bf16.msra.mxu0 %v4931
    %7477 = vmatprep.subr.bf16.mxu0 %v4940
    %7478 = vmatpush1.bf16.msra.mxu0 %v4939
    %7479 = vmatprep.subr.bf16.mxu0 %v4948
    %7480 = vmatpush1.bf16.msra.mxu0 %v4947
    %7481 = vmatprep.subr.bf16.mxu0 %v4956
    %7482 = vmatpush1.bf16.msra.mxu0 %v4955
    %7483 = vmatprep.subr.bf16.mxu0 %v4964
    %7484 = vmatpush1.bf16.msra.mxu0 %v4963
    %7485 = vmatprep.subr.bf16.mxu0 %v4972
    %7486 = vmatpush1.bf16.msra.mxu0 %v4971
    %7487 = vmatprep.subr.bf16.mxu0 %v4980
    %7488 = vmatpush1.bf16.msra.mxu0 %v4979
    %7489 = vmatprep.subr.bf16.mxu0 %v4988
    %7490 = vmatpush1.bf16.msra.mxu0 %v4987
    %7491 = vmatprep.mubr.bf16.mxu0 %v190
    %7492 = vmatmul.mubr.bf16.gmra.mrb[0].mxu0 %v189
    %v7493 = vpop.f32.mrb[0].mxu0
    %v7494 = vadd.f32 %v7441, %v7493
    %v7495 = vpop.f32.mrb[0].mxu0
    %v7496 = vadd.f32 %v7443, %v7495
    %v7497 = vpop.f32.mrb[0].mxu0
    %v7498 = vadd.f32 %v7445, %v7497
    %v7499 = vpop.f32.mrb[0].mxu0
    %v7500 = vadd.f32 %v7447, %v7499
    %7501 = vmatprep.mubr.bf16.mxu0 %v206
    %7502 = vmatmul.mubr.bf16.gmra.mrb[0].mxu0 %v205
    %v7503 = vpop.f32.mrb[0].mxu0
    %v7504 = vadd.f32 %v7451, %v7503
    %v7505 = vpop.f32.mrb[0].mxu0
    %v7506 = vadd.f32 %v7453, %v7505
    %v7507 = vpop.f32.mrb[0].mxu0
    %v7508 = vadd.f32 %v7455, %v7507
    %v7509 = vpop.f32.mrb[0].mxu0
    %v7510 = vadd.f32 %v7457, %v7509
    %7511 = vdwg.mxu0
    %7512 = vmatprep.subr.bf16.mxu0 %v4996
    %7513 = vmatpush1.bf16.msra.mxu0 %v4995
    %7514 = vmatprep.subr.bf16.mxu0 %v5004
    %7515 = vmatpush1.bf16.msra.mxu0 %v5003
    %7516 = vmatprep.subr.bf16.mxu0 %v5012
    %7517 = vmatpush1.bf16.msra.mxu0 %v5011
    %7518 = vmatprep.subr.bf16.mxu0 %v5020
    %7519 = vmatpush1.bf16.msra.mxu0 %v5019
    %7520 = vmatprep.subr.bf16.mxu0 %v5028
    %7521 = vmatpush1.bf16.msra.mxu0 %v5027
    %7522 = vmatprep.subr.bf16.mxu0 %v5036
    %7523 = vmatpush1.bf16.msra.mxu0 %v5035
    %7524 = vmatprep.subr.bf16.mxu0 %v5044
    %7525 = vmatpush1.bf16.msra.mxu0 %v5043
    %7526 = vmatprep.subr.bf16.mxu0 %v5052
    %7527 = vmatpush1.bf16.msra.mxu0 %v5051
    %7528 = vmatprep.subr.bf16.mxu0 %v5060
    %7529 = vmatpush1.bf16.msra.mxu0 %v5059
    %7530 = vmatprep.subr.bf16.mxu0 %v5068
    %7531 = vmatpush1.bf16.msra.mxu0 %v5067
    %7532 = vmatprep.subr.bf16.mxu0 %v5076
    %7533 = vmatpush1.bf16.msra.mxu0 %v5075
    %7534 = vmatprep.subr.bf16.mxu0 %v5084
    %7535 = vmatpush1.bf16.msra.mxu0 %v5083
    %7536 = vmatprep.subr.bf16.mxu0 %v5092
    %7537 = vmatpush1.bf16.msra.mxu0 %v5091
    %7538 = vmatprep.subr.bf16.mxu0 %v5100
    %7539 = vmatpush1.bf16.msra.mxu0 %v5099
    %7540 = vmatprep.subr.bf16.mxu0 %v5108
    %7541 = vmatpush1.bf16.msra.mxu0 %v5107
    %7542 = vmatprep.subr.bf16.mxu0 %v5116
    %7543 = vmatpush1.bf16.msra.mxu0 %v5115
    %7544 = vmatprep.mubr.bf16.mxu0 %v192
    %7545 = vmatmul.mubr.bf16.gmra.mrb[0].mxu0 %v191
    %v7546 = vpop.f32.mrb[0].mxu0
    %v7547 = vadd.f32 %v7494, %v7546
    %v7548 = vpop.f32.mrb[0].mxu0
    %v7549 = vadd.f32 %v7496, %v7548
    %v7550 = vpop.f32.mrb[0].mxu0
    %v7551 = vadd.f32 %v7498, %v7550
    %v7552 = vpop.f32.mrb[0].mxu0
    %v7553 = vadd.f32 %v7500, %v7552
    %7554 = vmatprep.mubr.bf16.mxu0 %v208
    %7555 = vmatmul.mubr.bf16.gmra.mrb[0].mxu0 %v207
    %v7556 = vpop.f32.mrb[0].mxu0
    %v7557 = vadd.f32 %v7504, %v7556
    %v7558 = vpop.f32.mrb[0].mxu0
    %v7559 = vadd.f32 %v7506, %v7558
    %v7560 = vpop.f32.mrb[0].mxu0
    %v7561 = vadd.f32 %v7508, %v7560
    %v7562 = vpop.f32.mrb[0].mxu0
    %v7563 = vadd.f32 %v7510, %v7562
    %7564 = vdwg.mxu0
    %7565 = vmatprep.subr.bf16.mxu0 %v5124
    %7566 = vmatpush1.bf16.msra.mxu0 %v5123
    %7567 = vmatprep.subr.bf16.mxu0 %v5132
    %7568 = vmatpush1.bf16.msra.mxu0 %v5131
    %7569 = vmatprep.subr.bf16.mxu0 %v5140
    %7570 = vmatpush1.bf16.msra.mxu0 %v5139
    %7571 = vmatprep.subr.bf16.mxu0 %v5148
    %7572 = vmatpush1.bf16.msra.mxu0 %v5147
    %7573 = vmatprep.subr.bf16.mxu0 %v5156
    %7574 = vmatpush1.bf16.msra.mxu0 %v5155
    %7575 = vmatprep.subr.bf16.mxu0 %v5164
    %7576 = vmatpush1.bf16.msra.mxu0 %v5163
    %7577 = vmatprep.subr.bf16.mxu0 %v5172
    %7578 = vmatpush1.bf16.msra.mxu0 %v5171
    %7579 = vmatprep.subr.bf16.mxu0 %v5180
    %7580 = vmatpush1.bf16.msra.mxu0 %v5179
    %7581 = vmatprep.subr.bf16.mxu0 %v5188
    %7582 = vmatpush1.bf16.msra.mxu0 %v5187
    %7583 = vmatprep.subr.bf16.mxu0 %v5196
    %7584 = vmatpush1.bf16.msra.mxu0 %v5195
    %7585 = vmatprep.subr.bf16.mxu0 %v5204
    %7586 = vmatpush1.bf16.msra.mxu0 %v5203
    %7587 = vmatprep.subr.bf16.mxu0 %v5212
    %7588 = vmatpush1.bf16.msra.mxu0 %v5211
    %7589 = vmatprep.subr.bf16.mxu0 %v5220
    %7590 = vmatpush1.bf16.msra.mxu0 %v5219
    %7591 = vmatprep.subr.bf16.mxu0 %v5228
    %7592 = vmatpush1.bf16.msra.mxu0 %v5227
    %7593 = vmatprep.subr.bf16.mxu0 %v5236
    %7594 = vmatpush1.bf16.msra.mxu0 %v5235
    %7595 = vmatprep.subr.bf16.mxu0 %v5244
    %7596 = vmatpush1.bf16.msra.mxu0 %v5243
    %7597 = vmatprep.mubr.bf16.mxu0 %v194
    %7598 = vmatmul.mubr.bf16.gmra.mrb[0].mxu0 %v193
    %v7599 = vpop.f32.mrb[0].mxu0
    %v7600 = vadd.f32 %v7547, %v7599
    %v7601 = vpop.f32.mrb[0].mxu0
    %v7602 = vadd.f32 %v7549, %v7601
    %v7603 = vpop.f32.mrb[0].mxu0
    %v7604 = vadd.f32 %v7551, %v7603
    %v7605 = vpop.f32.mrb[0].mxu0
    %v7606 = vadd.f32 %v7553, %v7605
    %7607 = vmatprep.mubr.bf16.mxu0 %v210
    %7608 = vmatmul.mubr.bf16.gmra.mrb[0].mxu0 %v209
    %v7609 = vpop.f32.mrb[0].mxu0
    %v7610 = vadd.f32 %v7557, %v7609
    %v7611 = vpop.f32.mrb[0].mxu0
    %v7612 = vadd.f32 %v7559, %v7611
    %v7613 = vpop.f32.mrb[0].mxu0
    %v7614 = vadd.f32 %v7561, %v7613
    %v7615 = vpop.f32.mrb[0].mxu0
    %v7616 = vadd.f32 %v7563, %v7615
    %7617 = vdwg.mxu0
    %7618 = vmatprep.subr.bf16.mxu0 %v5252
    %7619 = vmatpush1.bf16.msra.mxu0 %v5251
    %7620 = vmatprep.subr.bf16.mxu0 %v5260
    %7621 = vmatpush1.bf16.msra.mxu0 %v5259
    %7622 = vmatprep.subr.bf16.mxu0 %v5268
    %7623 = vmatpush1.bf16.msra.mxu0 %v5267
    %7624 = vmatprep.subr.bf16.mxu0 %v5276
    %7625 = vmatpush1.bf16.msra.mxu0 %v5275
    %7626 = vmatprep.subr.bf16.mxu0 %v5284
    %7627 = vmatpush1.bf16.msra.mxu0 %v5283
    %7628 = vmatprep.subr.bf16.mxu0 %v5292
    %7629 = vmatpush1.bf16.msra.mxu0 %v5291
    %7630 = vmatprep.subr.bf16.mxu0 %v5300
    %7631 = vmatpush1.bf16.msra.mxu0 %v5299
    %7632 = vmatprep.subr.bf16.mxu0 %v5308
    %7633 = vmatpush1.bf16.msra.mxu0 %v5307
    %7634 = vmatprep.subr.bf16.mxu0 %v5316
    %7635 = vmatpush1.bf16.msra.mxu0 %v5315
    %7636 = vmatprep.subr.bf16.mxu0 %v5324
    %7637 = vmatpush1.bf16.msra.mxu0 %v5323
    %7638 = vmatprep.subr.bf16.mxu0 %v5332
    %7639 = vmatpush1.bf16.msra.mxu0 %v5331
    %7640 = vmatprep.subr.bf16.mxu0 %v5340
    %7641 = vmatpush1.bf16.msra.mxu0 %v5339
    %7642 = vmatprep.subr.bf16.mxu0 %v5348
    %7643 = vmatpush1.bf16.msra.mxu0 %v5347
    %7644 = vmatprep.subr.bf16.mxu0 %v5356
    %7645 = vmatpush1.bf16.msra.mxu0 %v5355
    %7646 = vmatprep.subr.bf16.mxu0 %v5364
    %7647 = vmatpush1.bf16.msra.mxu0 %v5363
    %7648 = vmatprep.subr.bf16.mxu0 %v5372
    %7649 = vmatpush1.bf16.msra.mxu0 %v5371
    %7650 = vmatprep.mubr.bf16.mxu0 %v196
    %7651 = vmatmul.mubr.bf16.gmra.mrb[0].mxu0 %v195
    %v7652 = vpop.f32.mrb[0].mxu0
    %v7653 = vadd.f32 %v7600, %v7652
    %v7654 = vpop.f32.mrb[0].mxu0
    %v7655 = vadd.f32 %v7602, %v7654
    %v7656 = vpop.f32.mrb[0].mxu0
    %v7657 = vadd.f32 %v7604, %v7656
    %v7658 = vpop.f32.mrb[0].mxu0
    %v7659 = vadd.f32 %v7606, %v7658
    %7660 = vmatprep.mubr.bf16.mxu0 %v212
    %7661 = vmatmul.mubr.bf16.gmra.mrb[0].mxu0 %v211
    %v7662 = vpop.f32.mrb[0].mxu0
    %v7663 = vadd.f32 %v7610, %v7662
    %v7664 = vpop.f32.mrb[0].mxu0
    %v7665 = vadd.f32 %v7612, %v7664
    %v7666 = vpop.f32.mrb[0].mxu0
    %v7667 = vadd.f32 %v7614, %v7666
    %v7668 = vpop.f32.mrb[0].mxu0
    %v7669 = vadd.f32 %v7616, %v7668
    %7670 = vdwg.mxu0
    %7671 = vmatprep.subr.bf16.mxu0 %v4358
    %7672 = vmatpush1.bf16.msra.mxu0 %v4357
    %7673 = vmatprep.subr.bf16.mxu0 %v4366
    %7674 = vmatpush1.bf16.msra.mxu0 %v4365
    %7675 = vmatprep.subr.bf16.mxu0 %v4374
    %7676 = vmatpush1.bf16.msra.mxu0 %v4373
    %7677 = vmatprep.subr.bf16.mxu0 %v4382
    %7678 = vmatpush1.bf16.msra.mxu0 %v4381
    %7679 = vmatprep.subr.bf16.mxu0 %v4390
    %7680 = vmatpush1.bf16.msra.mxu0 %v4389
    %7681 = vmatprep.subr.bf16.mxu0 %v4398
    %7682 = vmatpush1.bf16.msra.mxu0 %v4397
    %7683 = vmatprep.subr.bf16.mxu0 %v4406
    %7684 = vmatpush1.bf16.msra.mxu0 %v4405
    %7685 = vmatprep.subr.bf16.mxu0 %v4414
    %7686 = vmatpush1.bf16.msra.mxu0 %v4413
    %7687 = vmatprep.subr.bf16.mxu0 %v4422
    %7688 = vmatpush1.bf16.msra.mxu0 %v4421
    %7689 = vmatprep.subr.bf16.mxu0 %v4430
    %7690 = vmatpush1.bf16.msra.mxu0 %v4429
    %7691 = vmatprep.subr.bf16.mxu0 %v4438
    %7692 = vmatpush1.bf16.msra.mxu0 %v4437
    %7693 = vmatprep.subr.bf16.mxu0 %v4446
    %7694 = vmatpush1.bf16.msra.mxu0 %v4445
    %7695 = vmatprep.subr.bf16.mxu0 %v4454
    %7696 = vmatpush1.bf16.msra.mxu0 %v4453
    %7697 = vmatprep.subr.bf16.mxu0 %v4462
    %7698 = vmatpush1.bf16.msra.mxu0 %v4461
    %7699 = vmatprep.subr.bf16.mxu0 %v4470
    %7700 = vmatpush1.bf16.msra.mxu0 %v4469
    %7701 = vmatprep.subr.bf16.mxu0 %v4478
    %7702 = vmatpush1.bf16.msra.mxu0 %v4477
    %7703 = vmatprep.mubr.bf16.mxu0 %v182
    %7704 = vmatmul.mubr.bf16.gmra.mrb[0].mxu0 %v181
    %v7705 = vpop.f32.mrb[0].mxu0
    %v7706 = vadd.f32 %v1266, %v7705
    %v7707 = vpop.f32.mrb[0].mxu0
    %v7708 = vadd.f32 %v1270, %v7707
    %v7709 = vpop.f32.mrb[0].mxu0
    %v7710 = vadd.f32 %v1266, %v7709
    %v7711 = vpop.f32.mrb[0].mxu0
    %v7712 = vadd.f32 %v1270, %v7711
    %7713 = vmatprep.mubr.bf16.mxu0 %v198
    %7714 = vmatmul.mubr.bf16.gmra.mrb[0].mxu0 %v197
    %v7715 = vpop.f32.mrb[0].mxu0
    %v7716 = vadd.f32 %v1266, %v7715
    %v7717 = vpop.f32.mrb[0].mxu0
    %v7718 = vadd.f32 %v1270, %v7717
    %v7719 = vpop.f32.mrb[0].mxu0
    %v7720 = vadd.f32 %v1266, %v7719
    %v7721 = vpop.f32.mrb[0].mxu0
    %v7722 = vadd.f32 %v1270, %v7721
    %7723 = vdwg.mxu0
    %7724 = vmatprep.subr.bf16.mxu0 %v4486
    %7725 = vmatpush1.bf16.msra.mxu0 %v4485
    %7726 = vmatprep.subr.bf16.mxu0 %v4494
    %7727 = vmatpush1.bf16.msra.mxu0 %v4493
    %7728 = vmatprep.subr.bf16.mxu0 %v4502
    %7729 = vmatpush1.bf16.msra.mxu0 %v4501
    %7730 = vmatprep.subr.bf16.mxu0 %v4510
    %7731 = vmatpush1.bf16.msra.mxu0 %v4509
    %7732 = vmatprep.subr.bf16.mxu0 %v4518
    %7733 = vmatpush1.bf16.msra.mxu0 %v4517
    %7734 = vmatprep.subr.bf16.mxu0 %v4526
    %7735 = vmatpush1.bf16.msra.mxu0 %v4525
    %7736 = vmatprep.subr.bf16.mxu0 %v4534
    %7737 = vmatpush1.bf16.msra.mxu0 %v4533
    %7738 = vmatprep.subr.bf16.mxu0 %v4542
    %7739 = vmatpush1.bf16.msra.mxu0 %v4541
    %7740 = vmatprep.subr.bf16.mxu0 %v4550
    %7741 = vmatpush1.bf16.msra.mxu0 %v4549
    %7742 = vmatprep.subr.bf16.mxu0 %v4558
    %7743 = vmatpush1.bf16.msra.mxu0 %v4557
    %7744 = vmatprep.subr.bf16.mxu0 %v4566
    %7745 = vmatpush1.bf16.msra.mxu0 %v4565
    %7746 = vmatprep.subr.bf16.mxu0 %v4574
    %7747 = vmatpush1.bf16.msra.mxu0 %v4573
    %7748 = vmatprep.subr.bf16.mxu0 %v4582
    %7749 = vmatpush1.bf16.msra.mxu0 %v4581
    %7750 = vmatprep.subr.bf16.mxu0 %v4590
    %7751 = vmatpush1.bf16.msra.mxu0 %v4589
    %7752 = vmatprep.subr.bf16.mxu0 %v4598
    %7753 = vmatpush1.bf16.msra.mxu0 %v4597
    %7754 = vmatprep.subr.bf16.mxu0 %v4606
    %7755 = vmatpush1.bf16.msra.mxu0 %v4605
    %7756 = vmatprep.mubr.bf16.mxu0 %v184
    %7757 = vmatmul.mubr.bf16.gmra.mrb[0].mxu0 %v183
    %v7758 = vpop.f32.mrb[0].mxu0
    %v7759 = vadd.f32 %v7706, %v7758
    %v7760 = vpop.f32.mrb[0].mxu0
    %v7761 = vadd.f32 %v7708, %v7760
    %v7762 = vpop.f32.mrb[0].mxu0
    %v7763 = vadd.f32 %v7710, %v7762
    %v7764 = vpop.f32.mrb[0].mxu0
    %v7765 = vadd.f32 %v7712, %v7764
    %7766 = vmatprep.mubr.bf16.mxu0 %v200
    %7767 = vmatmul.mubr.bf16.gmra.mrb[0].mxu0 %v199
    %v7768 = vpop.f32.mrb[0].mxu0
    %v7769 = vadd.f32 %v7716, %v7768
    %v7770 = vpop.f32.mrb[0].mxu0
    %v7771 = vadd.f32 %v7718, %v7770
    %v7772 = vpop.f32.mrb[0].mxu0
    %v7773 = vadd.f32 %v7720, %v7772
    %v7774 = vpop.f32.mrb[0].mxu0
    %v7775 = vadd.f32 %v7722, %v7774
    %7776 = vdwg.mxu0
    %7777 = vmatprep.subr.bf16.mxu0 %v4614
    %7778 = vmatpush1.bf16.msra.mxu0 %v4613
    %7779 = vmatprep.subr.bf16.mxu0 %v4622
    %7780 = vmatpush1.bf16.msra.mxu0 %v4621
    %7781 = vmatprep.subr.bf16.mxu0 %v4630
    %7782 = vmatpush1.bf16.msra.mxu0 %v4629
    %7783 = vmatprep.subr.bf16.mxu0 %v4638
    %7784 = vmatpush1.bf16.msra.mxu0 %v4637
    %7785 = vmatprep.subr.bf16.mxu0 %v4646
    %7786 = vmatpush1.bf16.msra.mxu0 %v4645
    %7787 = vmatprep.subr.bf16.mxu0 %v4654
    %7788 = vmatpush1.bf16.msra.mxu0 %v4653
    %7789 = vmatprep.subr.bf16.mxu0 %v4662
    %7790 = vmatpush1.bf16.msra.mxu0 %v4661
    %7791 = vmatprep.subr.bf16.mxu0 %v4670
    %7792 = vmatpush1.bf16.msra.mxu0 %v4669
    %7793 = vmatprep.subr.bf16.mxu0 %v4678
    %7794 = vmatpush1.bf16.msra.mxu0 %v4677
    %7795 = vmatprep.subr.bf16.mxu0 %v4686
    %7796 = vmatpush1.bf16.msra.mxu0 %v4685
    %7797 = vmatprep.subr.bf16.mxu0 %v4694
    %7798 = vmatpush1.bf16.msra.mxu0 %v4693
    %7799 = vmatprep.subr.bf16.mxu0 %v4702
    %7800 = vmatpush1.bf16.msra.mxu0 %v4701
    %7801 = vmatprep.subr.bf16.mxu0 %v4710
    %7802 = vmatpush1.bf16.msra.mxu0 %v4709
    %7803 = vmatprep.subr.bf16.mxu0 %v4718
    %7804 = vmatpush1.bf16.msra.mxu0 %v4717
    %7805 = vmatprep.subr.bf16.mxu0 %v4726
    %7806 = vmatpush1.bf16.msra.mxu0 %v4725
    %7807 = vmatprep.subr.bf16.mxu0 %v4734
    %7808 = vmatpush1.bf16.msra.mxu0 %v4733
    %7809 = vmatprep.mubr.bf16.mxu0 %v186
    %7810 = vmatmul.mubr.bf16.gmra.mrb[0].mxu0 %v185
    %v7811 = vpop.f32.mrb[0].mxu0
    %v7812 = vadd.f32 %v7759, %v7811
    %v7813 = vpop.f32.mrb[0].mxu0
    %v7814 = vadd.f32 %v7761, %v7813
    %v7815 = vpop.f32.mrb[0].mxu0
    %v7816 = vadd.f32 %v7763, %v7815
    %v7817 = vpop.f32.mrb[0].mxu0
    %v7818 = vadd.f32 %v7765, %v7817
    %7819 = vmatprep.mubr.bf16.mxu0 %v202
    %7820 = vmatmul.mubr.bf16.gmra.mrb[0].mxu0 %v201
    %v7821 = vpop.f32.mrb[0].mxu0
    %v7822 = vadd.f32 %v7769, %v7821
    %v7823 = vpop.f32.mrb[0].mxu0
    %v7824 = vadd.f32 %v7771, %v7823
    %v7825 = vpop.f32.mrb[0].mxu0
    %v7826 = vadd.f32 %v7773, %v7825
    %v7827 = vpop.f32.mrb[0].mxu0
    %v7828 = vadd.f32 %v7775, %v7827
    %7829 = vdwg.mxu0
    %7830 = vmatprep.subr.bf16.mxu0 %v4742
    %7831 = vmatpush1.bf16.msra.mxu0 %v4741
    %7832 = vmatprep.subr.bf16.mxu0 %v4750
    %7833 = vmatpush1.bf16.msra.mxu0 %v4749
    %7834 = vmatprep.subr.bf16.mxu0 %v4758
    %7835 = vmatpush1.bf16.msra.mxu0 %v4757
    %7836 = vmatprep.subr.bf16.mxu0 %v4766
    %7837 = vmatpush1.bf16.msra.mxu0 %v4765
    %7838 = vmatprep.subr.bf16.mxu0 %v4774
    %7839 = vmatpush1.bf16.msra.mxu0 %v4773
    %7840 = vmatprep.subr.bf16.mxu0 %v4782
    %7841 = vmatpush1.bf16.msra.mxu0 %v4781
    %7842 = vmatprep.subr.bf16.mxu0 %v4790
    %7843 = vmatpush1.bf16.msra.mxu0 %v4789
    %7844 = vmatprep.subr.bf16.mxu0 %v4798
    %7845 = vmatpush1.bf16.msra.mxu0 %v4797
    %7846 = vmatprep.subr.bf16.mxu0 %v4806
    %7847 = vmatpush1.bf16.msra.mxu0 %v4805
    %7848 = vmatprep.subr.bf16.mxu0 %v4814
    %7849 = vmatpush1.bf16.msra.mxu0 %v4813
    %7850 = vmatprep.subr.bf16.mxu0 %v4822
    %7851 = vmatpush1.bf16.msra.mxu0 %v4821
    %7852 = vmatprep.subr.bf16.mxu0 %v4830
    %7853 = vmatpush1.bf16.msra.mxu0 %v4829
    %7854 = vmatprep.subr.bf16.mxu0 %v4838
    %7855 = vmatpush1.bf16.msra.mxu0 %v4837
    %7856 = vmatprep.subr.bf16.mxu0 %v4846
    %7857 = vmatpush1.bf16.msra.mxu0 %v4845
    %7858 = vmatprep.subr.bf16.mxu0 %v4854
    %7859 = vmatpush1.bf16.msra.mxu0 %v4853
    %7860 = vmatprep.subr.bf16.mxu0 %v4862
    %7861 = vmatpush1.bf16.msra.mxu0 %v4861
    %7862 = vmatprep.mubr.bf16.mxu0 %v188
    %7863 = vmatmul.mubr.bf16.gmra.mrb[0].mxu0 %v187
    %v7864 = vpop.f32.mrb[0].mxu0
    %v7865 = vadd.f32 %v7812, %v7864
    %v7866 = vpop.f32.mrb[0].mxu0
    %v7867 = vadd.f32 %v7814, %v7866
    %v7868 = vpop.f32.mrb[0].mxu0
    %v7869 = vadd.f32 %v7816, %v7868
    %v7870 = vpop.f32.mrb[0].mxu0
    %v7871 = vadd.f32 %v7818, %v7870
    %7872 = vmatprep.mubr.bf16.mxu0 %v204
    %7873 = vmatmul.mubr.bf16.gmra.mrb[0].mxu0 %v203
    %v7874 = vpop.f32.mrb[0].mxu0
    %v7875 = vadd.f32 %v7822, %v7874
    %v7876 = vpop.f32.mrb[0].mxu0
    %v7877 = vadd.f32 %v7824, %v7876
    %v7878 = vpop.f32.mrb[0].mxu0
    %v7879 = vadd.f32 %v7826, %v7878
    %v7880 = vpop.f32.mrb[0].mxu0
    %v7881 = vadd.f32 %v7828, %v7880
    %7882 = vdwg.mxu0
    %7883 = vmatprep.subr.bf16.mxu0 %v4870
    %7884 = vmatpush1.bf16.msra.mxu0 %v4869
    %7885 = vmatprep.subr.bf16.mxu0 %v4878
    %7886 = vmatpush1.bf16.msra.mxu0 %v4877
    %7887 = vmatprep.subr.bf16.mxu0 %v4886
    %7888 = vmatpush1.bf16.msra.mxu0 %v4885
    %7889 = vmatprep.subr.bf16.mxu0 %v4894
    %7890 = vmatpush1.bf16.msra.mxu0 %v4893
    %7891 = vmatprep.subr.bf16.mxu0 %v4902
    %7892 = vmatpush1.bf16.msra.mxu0 %v4901
    %7893 = vmatprep.subr.bf16.mxu0 %v4910
    %7894 = vmatpush1.bf16.msra.mxu0 %v4909
    %7895 = vmatprep.subr.bf16.mxu0 %v4918
    %7896 = vmatpush1.bf16.msra.mxu0 %v4917
    %7897 = vmatprep.subr.bf16.mxu0 %v4926
    %7898 = vmatpush1.bf16.msra.mxu0 %v4925
    %7899 = vmatprep.subr.bf16.mxu0 %v4934
    %7900 = vmatpush1.bf16.msra.mxu0 %v4933
    %7901 = vmatprep.subr.bf16.mxu0 %v4942
    %7902 = vmatpush1.bf16.msra.mxu0 %v4941
    %7903 = vmatprep.subr.bf16.mxu0 %v4950
    %7904 = vmatpush1.bf16.msra.mxu0 %v4949
    %7905 = vmatprep.subr.bf16.mxu0 %v4958
    %7906 = vmatpush1.bf16.msra.mxu0 %v4957
    %7907 = vmatprep.subr.bf16.mxu0 %v4966
    %7908 = vmatpush1.bf16.msra.mxu0 %v4965
    %7909 = vmatprep.subr.bf16.mxu0 %v4974
    %7910 = vmatpush1.bf16.msra.mxu0 %v4973
    %7911 = vmatprep.subr.bf16.mxu0 %v4982
    %7912 = vmatpush1.bf16.msra.mxu0 %v4981
    %7913 = vmatprep.subr.bf16.mxu0 %v4990
    %7914 = vmatpush1.bf16.msra.mxu0 %v4989
    %7915 = vmatprep.mubr.bf16.mxu0 %v190
    %7916 = vmatmul.mubr.bf16.gmra.mrb[0].mxu0 %v189
    %v7917 = vpop.f32.mrb[0].mxu0
    %v7918 = vadd.f32 %v7865, %v7917
    %v7919 = vpop.f32.mrb[0].mxu0
    %v7920 = vadd.f32 %v7867, %v7919
    %v7921 = vpop.f32.mrb[0].mxu0
    %v7922 = vadd.f32 %v7869, %v7921
    %v7923 = vpop.f32.mrb[0].mxu0
    %v7924 = vadd.f32 %v7871, %v7923
    %7925 = vmatprep.mubr.bf16.mxu0 %v206
    %7926 = vmatmul.mubr.bf16.gmra.mrb[0].mxu0 %v205
    %v7927 = vpop.f32.mrb[0].mxu0
    %v7928 = vadd.f32 %v7875, %v7927
    %v7929 = vpop.f32.mrb[0].mxu0
    %v7930 = vadd.f32 %v7877, %v7929
    %v7931 = vpop.f32.mrb[0].mxu0
    %v7932 = vadd.f32 %v7879, %v7931
    %v7933 = vpop.f32.mrb[0].mxu0
    %v7934 = vadd.f32 %v7881, %v7933
    %7935 = vdwg.mxu0
    %7936 = vmatprep.subr.bf16.mxu0 %v4998
    %7937 = vmatpush1.bf16.msra.mxu0 %v4997
    %7938 = vmatprep.subr.bf16.mxu0 %v5006
    %7939 = vmatpush1.bf16.msra.mxu0 %v5005
    %7940 = vmatprep.subr.bf16.mxu0 %v5014
    %7941 = vmatpush1.bf16.msra.mxu0 %v5013
    %7942 = vmatprep.subr.bf16.mxu0 %v5022
    %7943 = vmatpush1.bf16.msra.mxu0 %v5021
    %7944 = vmatprep.subr.bf16.mxu0 %v5030
    %7945 = vmatpush1.bf16.msra.mxu0 %v5029
    %7946 = vmatprep.subr.bf16.mxu0 %v5038
    %7947 = vmatpush1.bf16.msra.mxu0 %v5037
    %7948 = vmatprep.subr.bf16.mxu0 %v5046
    %7949 = vmatpush1.bf16.msra.mxu0 %v5045
    %7950 = vmatprep.subr.bf16.mxu0 %v5054
    %7951 = vmatpush1.bf16.msra.mxu0 %v5053
    %7952 = vmatprep.subr.bf16.mxu0 %v5062
    %7953 = vmatpush1.bf16.msra.mxu0 %v5061
    %7954 = vmatprep.subr.bf16.mxu0 %v5070
    %7955 = vmatpush1.bf16.msra.mxu0 %v5069
    %7956 = vmatprep.subr.bf16.mxu0 %v5078
    %7957 = vmatpush1.bf16.msra.mxu0 %v5077
    %7958 = vmatprep.subr.bf16.mxu0 %v5086
    %7959 = vmatpush1.bf16.msra.mxu0 %v5085
    %7960 = vmatprep.subr.bf16.mxu0 %v5094
    %7961 = vmatpush1.bf16.msra.mxu0 %v5093
    %7962 = vmatprep.subr.bf16.mxu0 %v5102
    %7963 = vmatpush1.bf16.msra.mxu0 %v5101
    %7964 = vmatprep.subr.bf16.mxu0 %v5110
    %7965 = vmatpush1.bf16.msra.mxu0 %v5109
    %7966 = vmatprep.subr.bf16.mxu0 %v5118
    %7967 = vmatpush1.bf16.msra.mxu0 %v5117
    %7968 = vmatprep.mubr.bf16.mxu0 %v192
    %7969 = vmatmul.mubr.bf16.gmra.mrb[0].mxu0 %v191
    %v7970 = vpop.f32.mrb[0].mxu0
    %v7971 = vadd.f32 %v7918, %v7970
    %v7972 = vpop.f32.mrb[0].mxu0
    %v7973 = vadd.f32 %v7920, %v7972
    %v7974 = vpop.f32.mrb[0].mxu0
    %v7975 = vadd.f32 %v7922, %v7974
    %v7976 = vpop.f32.mrb[0].mxu0
    %v7977 = vadd.f32 %v7924, %v7976
    %7978 = vmatprep.mubr.bf16.mxu0 %v208
    %7979 = vmatmul.mubr.bf16.gmra.mrb[0].mxu0 %v207
    %v7980 = vpop.f32.mrb[0].mxu0
    %v7981 = vadd.f32 %v7928, %v7980
    %v7982 = vpop.f32.mrb[0].mxu0
    %v7983 = vadd.f32 %v7930, %v7982
    %v7984 = vpop.f32.mrb[0].mxu0
    %v7985 = vadd.f32 %v7932, %v7984
    %v7986 = vpop.f32.mrb[0].mxu0
    %v7987 = vadd.f32 %v7934, %v7986
    %7988 = vdwg.mxu0
    %7989 = vmatprep.subr.bf16.mxu0 %v5126
    %7990 = vmatpush1.bf16.msra.mxu0 %v5125
    %7991 = vmatprep.subr.bf16.mxu0 %v5134
    %7992 = vmatpush1.bf16.msra.mxu0 %v5133
    %7993 = vmatprep.subr.bf16.mxu0 %v5142
    %7994 = vmatpush1.bf16.msra.mxu0 %v5141
    %7995 = vmatprep.subr.bf16.mxu0 %v5150
    %7996 = vmatpush1.bf16.msra.mxu0 %v5149
    %7997 = vmatprep.subr.bf16.mxu0 %v5158
    %7998 = vmatpush1.bf16.msra.mxu0 %v5157
    %7999 = vmatprep.subr.bf16.mxu0 %v5166
    %8000 = vmatpush1.bf16.msra.mxu0 %v5165
    %8001 = vmatprep.subr.bf16.mxu0 %v5174
    %8002 = vmatpush1.bf16.msra.mxu0 %v5173
    %8003 = vmatprep.subr.bf16.mxu0 %v5182
    %8004 = vmatpush1.bf16.msra.mxu0 %v5181
    %8005 = vmatprep.subr.bf16.mxu0 %v5190
    %8006 = vmatpush1.bf16.msra.mxu0 %v5189
    %8007 = vmatprep.subr.bf16.mxu0 %v5198
    %8008 = vmatpush1.bf16.msra.mxu0 %v5197
    %8009 = vmatprep.subr.bf16.mxu0 %v5206
    %8010 = vmatpush1.bf16.msra.mxu0 %v5205
    %8011 = vmatprep.subr.bf16.mxu0 %v5214
    %8012 = vmatpush1.bf16.msra.mxu0 %v5213
    %8013 = vmatprep.subr.bf16.mxu0 %v5222
    %8014 = vmatpush1.bf16.msra.mxu0 %v5221
    %8015 = vmatprep.subr.bf16.mxu0 %v5230
    %8016 = vmatpush1.bf16.msra.mxu0 %v5229
    %8017 = vmatprep.subr.bf16.mxu0 %v5238
    %8018 = vmatpush1.bf16.msra.mxu0 %v5237
    %8019 = vmatprep.subr.bf16.mxu0 %v5246
    %8020 = vmatpush1.bf16.msra.mxu0 %v5245
    %8021 = vmatprep.mubr.bf16.mxu0 %v194
    %8022 = vmatmul.mubr.bf16.gmra.mrb[0].mxu0 %v193
    %v8023 = vpop.f32.mrb[0].mxu0
    %v8024 = vadd.f32 %v7971, %v8023
    %v8025 = vpop.f32.mrb[0].mxu0
    %v8026 = vadd.f32 %v7973, %v8025
    %v8027 = vpop.f32.mrb[0].mxu0
    %v8028 = vadd.f32 %v7975, %v8027
    %v8029 = vpop.f32.mrb[0].mxu0
    %v8030 = vadd.f32 %v7977, %v8029
    %8031 = vmatprep.mubr.bf16.mxu0 %v210
    %8032 = vmatmul.mubr.bf16.gmra.mrb[0].mxu0 %v209
    %v8033 = vpop.f32.mrb[0].mxu0
    %v8034 = vadd.f32 %v7981, %v8033
    %v8035 = vpop.f32.mrb[0].mxu0
    %v8036 = vadd.f32 %v7983, %v8035
    %v8037 = vpop.f32.mrb[0].mxu0
    %v8038 = vadd.f32 %v7985, %v8037
    %v8039 = vpop.f32.mrb[0].mxu0
    %v8040 = vadd.f32 %v7987, %v8039
    %8041 = vdwg.mxu0
    %8042 = vmatprep.subr.bf16.mxu0 %v5254
    %8043 = vmatpush1.bf16.msra.mxu0 %v5253
    %8044 = vmatprep.subr.bf16.mxu0 %v5262
    %8045 = vmatpush1.bf16.msra.mxu0 %v5261
    %8046 = vmatprep.subr.bf16.mxu0 %v5270
    %8047 = vmatpush1.bf16.msra.mxu0 %v5269
    %8048 = vmatprep.subr.bf16.mxu0 %v5278
    %8049 = vmatpush1.bf16.msra.mxu0 %v5277
    %8050 = vmatprep.subr.bf16.mxu0 %v5286
    %8051 = vmatpush1.bf16.msra.mxu0 %v5285
    %8052 = vmatprep.subr.bf16.mxu0 %v5294
    %8053 = vmatpush1.bf16.msra.mxu0 %v5293
    %8054 = vmatprep.subr.bf16.mxu0 %v5302
    %8055 = vmatpush1.bf16.msra.mxu0 %v5301
    %8056 = vmatprep.subr.bf16.mxu0 %v5310
    %8057 = vmatpush1.bf16.msra.mxu0 %v5309
    %8058 = vmatprep.subr.bf16.mxu0 %v5318
    %8059 = vmatpush1.bf16.msra.mxu0 %v5317
    %8060 = vmatprep.subr.bf16.mxu0 %v5326
    %8061 = vmatpush1.bf16.msra.mxu0 %v5325
    %8062 = vmatprep.subr.bf16.mxu0 %v5334
    %8063 = vmatpush1.bf16.msra.mxu0 %v5333
    %8064 = vmatprep.subr.bf16.mxu0 %v5342
    %8065 = vmatpush1.bf16.msra.mxu0 %v5341
    %8066 = vmatprep.subr.bf16.mxu0 %v5350
    %8067 = vmatpush1.bf16.msra.mxu0 %v5349
    %8068 = vmatprep.subr.bf16.mxu0 %v5358
    %8069 = vmatpush1.bf16.msra.mxu0 %v5357
    %8070 = vmatprep.subr.bf16.mxu0 %v5366
    %8071 = vmatpush1.bf16.msra.mxu0 %v5365
    %8072 = vmatprep.subr.bf16.mxu0 %v5374
    %8073 = vmatpush1.bf16.msra.mxu0 %v5373
    %8074 = vmatprep.mubr.bf16.mxu0 %v196
    %8075 = vmatmul.mubr.bf16.gmra.mrb[0].mxu0 %v195
    %v8076 = vpop.f32.mrb[0].mxu0
    %v8077 = vadd.f32 %v8024, %v8076
    %v8078 = vpop.f32.mrb[0].mxu0
    %v8079 = vadd.f32 %v8026, %v8078
    %v8080 = vpop.f32.mrb[0].mxu0
    %v8081 = vadd.f32 %v8028, %v8080
    %v8082 = vpop.f32.mrb[0].mxu0
    %v8083 = vadd.f32 %v8030, %v8082
    %8084 = vmatprep.mubr.bf16.mxu0 %v212
    %8085 = vmatmul.mubr.bf16.gmra.mrb[0].mxu0 %v211
    %v8086 = vpop.f32.mrb[0].mxu0
    %v8087 = vadd.f32 %v8034, %v8086
    %v8088 = vpop.f32.mrb[0].mxu0
    %v8089 = vadd.f32 %v8036, %v8088
    %v8090 = vpop.f32.mrb[0].mxu0
    %v8091 = vadd.f32 %v8038, %v8090
    %v8092 = vpop.f32.mrb[0].mxu0
    %v8093 = vadd.f32 %v8040, %v8092
    %8094 = vdwg.mxu0
    %v8095 = vmax.f32 %v6805, 0.0
    %v8096 = vmax.f32 %v6807, 0.0
    %v8097 = vmax.f32 %v7229, 0.0
    %v8098 = vmax.f32 %v7231, 0.0
    %v8099 = vmax.f32 %v7653, 0.0
    %v8100 = vmax.f32 %v7655, 0.0
    %v8101 = vmax.f32 %v8077, 0.0
    %v8102 = vmax.f32 %v8079, 0.0
    %v8103 = vmax.f32 %v6809, 0.0
    %v8104 = vmax.f32 %v6811, 0.0
    %v8105 = vmax.f32 %v7233, 0.0
    %v8106 = vmax.f32 %v7235, 0.0
    %v8107 = vmax.f32 %v7657, 0.0
    %v8108 = vmax.f32 %v7659, 0.0
    %v8109 = vmax.f32 %v8081, 0.0
    %v8110 = vmax.f32 %v8083, 0.0
    %v8111 = vmax.f32 %v6815, 0.0
    %v8112 = vmax.f32 %v6817, 0.0
    %v8113 = vmax.f32 %v7239, 0.0
    %v8114 = vmax.f32 %v7241, 0.0
    %v8115 = vmax.f32 %v7663, 0.0
    %v8116 = vmax.f32 %v7665, 0.0
    %v8117 = vmax.f32 %v8087, 0.0
    %v8118 = vmax.f32 %v8089, 0.0
    %v8119 = vmax.f32 %v6819, 0.0
    %v8120 = vmax.f32 %v6821, 0.0
    %v8121 = vmax.f32 %v7243, 0.0
    %v8122 = vmax.f32 %v7245, 0.0
    %v8123 = vmax.f32 %v7667, 0.0
    %v8124 = vmax.f32 %v7669, 0.0
    %v8125 = vmax.f32 %v8091, 0.0
    %v8126 = vmax.f32 %v8093, 0.0
    %v8127 = vpack.c.bf16 %v8103, %v8095
    %v8128 = vpack.c.bf16 %v8104, %v8096
    %v8129 = vpack.c.bf16 %v8105, %v8097
    %v8130 = vpack.c.bf16 %v8106, %v8098
    %v8131 = vpack.c.bf16 %v8107, %v8099
    %v8132 = vpack.c.bf16 %v8108, %v8100
    %v8133 = vpack.c.bf16 %v8109, %v8101
    %v8134 = vpack.c.bf16 %v8110, %v8102
    %v8135 = vpack.c.bf16 %v8119, %v8111
    %v8136 = vpack.c.bf16 %v8120, %v8112
    %v8137 = vpack.c.bf16 %v8121, %v8113
    %v8138 = vpack.c.bf16 %v8122, %v8114
    %v8139 = vpack.c.bf16 %v8123, %v8115
    %v8140 = vpack.c.bf16 %v8124, %v8116
    %v8141 = vpack.c.bf16 %v8125, %v8117
    %v8142 = vpack.c.bf16 %v8126, %v8118
    %v8143 = vld [vmem:[#allocation8] sm:$0xff]
    %v8144 = vld [vmem:[#allocation8 + $0x8] sm:$0xff]
    %v8145 = vld [vmem:[#allocation8 + $0x10] sm:$0xff]
    %v8146 = vld [vmem:[#allocation8 + $0x18] sm:$0xff]
    %v8147 = vld [vmem:[#allocation8 + $0x20] sm:$0xff]
    %v8148 = vld [vmem:[#allocation8 + $0x28] sm:$0xff]
    %v8149 = vld [vmem:[#allocation8 + $0x30] sm:$0xff]
    %v8150 = vld [vmem:[#allocation8 + $0x38] sm:$0xff]
    %v8151 = vld [vmem:[#allocation8 + $0x40] sm:$0xff]
    %v8152 = vld [vmem:[#allocation8 + $0x48] sm:$0xff]
    %v8153 = vld [vmem:[#allocation8 + $0x50] sm:$0xff]
    %v8154 = vld [vmem:[#allocation8 + $0x58] sm:$0xff]
    %v8155 = vld [vmem:[#allocation8 + $0x60] sm:$0xff]
    %v8156 = vld [vmem:[#allocation8 + $0x68] sm:$0xff]
    %v8157 = vld [vmem:[#allocation8 + $0x70] sm:$0xff]
    %v8158 = vld [vmem:[#allocation8 + $0x78] sm:$0xff]
    %v8159 = vld [vmem:[#allocation8 + $0x80] sm:$0xff]
    %v8160 = vld [vmem:[#allocation8 + $0x88] sm:$0xff]
    %v8161 = vld [vmem:[#allocation8 + $0x90] sm:$0xff]
    %v8162 = vld [vmem:[#allocation8 + $0x98] sm:$0xff]
    %v8163 = vld [vmem:[#allocation8 + $0xa0] sm:$0xff]
    %v8164 = vld [vmem:[#allocation8 + $0xa8] sm:$0xff]
    %v8165 = vld [vmem:[#allocation8 + $0xb0] sm:$0xff]
    %v8166 = vld [vmem:[#allocation8 + $0xb8] sm:$0xff]
    %v8167 = vld [vmem:[#allocation8 + $0xc0] sm:$0xff]
    %v8168 = vld [vmem:[#allocation8 + $0xc8] sm:$0xff]
    %v8169 = vld [vmem:[#allocation8 + $0xd0] sm:$0xff]
    %v8170 = vld [vmem:[#allocation8 + $0xd8] sm:$0xff]
    %v8171 = vld [vmem:[#allocation8 + $0xe0] sm:$0xff]
    %v8172 = vld [vmem:[#allocation8 + $0xe8] sm:$0xff]
    %v8173 = vld [vmem:[#allocation8 + $0xf0] sm:$0xff]
    %v8174 = vld [vmem:[#allocation8 + $0xf8] sm:$0xff]
    %v8175 = vld [vmem:[#allocation8 + $0x100] sm:$0xff]
    %v8176 = vld [vmem:[#allocation8 + $0x108] sm:$0xff]
    %v8177 = vld [vmem:[#allocation8 + $0x110] sm:$0xff]
    %v8178 = vld [vmem:[#allocation8 + $0x118] sm:$0xff]
    %v8179 = vld [vmem:[#allocation8 + $0x120] sm:$0xff]
    %v8180 = vld [vmem:[#allocation8 + $0x128] sm:$0xff]
    %v8181 = vld [vmem:[#allocation8 + $0x130] sm:$0xff]
    %v8182 = vld [vmem:[#allocation8 + $0x138] sm:$0xff]
    %v8183 = vld [vmem:[#allocation8 + $0x140] sm:$0xff]
    %v8184 = vld [vmem:[#allocation8 + $0x148] sm:$0xff]
    %v8185 = vld [vmem:[#allocation8 + $0x150] sm:$0xff]
    %v8186 = vld [vmem:[#allocation8 + $0x158] sm:$0xff]
    %v8187 = vld [vmem:[#allocation8 + $0x160] sm:$0xff]
    %v8188 = vld [vmem:[#allocation8 + $0x168] sm:$0xff]
    %v8189 = vld [vmem:[#allocation8 + $0x170] sm:$0xff]
    %v8190 = vld [vmem:[#allocation8 + $0x178] sm:$0xff]
    %v8191 = vld [vmem:[#allocation8 + $0x180] sm:$0xff]
    %v8192 = vld [vmem:[#allocation8 + $0x188] sm:$0xff]
    %v8193 = vld [vmem:[#allocation8 + $0x190] sm:$0xff]
    %v8194 = vld [vmem:[#allocation8 + $0x198] sm:$0xff]
    %v8195 = vld [vmem:[#allocation8 + $0x1a0] sm:$0xff]
    %v8196 = vld [vmem:[#allocation8 + $0x1a8] sm:$0xff]
    %v8197 = vld [vmem:[#allocation8 + $0x1b0] sm:$0xff]
    %v8198 = vld [vmem:[#allocation8 + $0x1b8] sm:$0xff]
    %v8199 = vld [vmem:[#allocation8 + $0x1c0] sm:$0xff]
    %v8200 = vld [vmem:[#allocation8 + $0x1c8] sm:$0xff]
    %v8201 = vld [vmem:[#allocation8 + $0x1d0] sm:$0xff]
    %v8202 = vld [vmem:[#allocation8 + $0x1d8] sm:$0xff]
    %v8203 = vld [vmem:[#allocation8 + $0x1e0] sm:$0xff]
    %v8204 = vld [vmem:[#allocation8 + $0x1e8] sm:$0xff]
    %v8205 = vld [vmem:[#allocation8 + $0x1f0] sm:$0xff]
    %v8206 = vld [vmem:[#allocation8 + $0x1f8] sm:$0xff]
    %v8207 = vld [vmem:[#allocation8 + $0x200] sm:$0xff]
    %v8208 = vld [vmem:[#allocation8 + $0x208] sm:$0xff]
    %v8209 = vld [vmem:[#allocation8 + $0x210] sm:$0xff]
    %v8210 = vld [vmem:[#allocation8 + $0x218] sm:$0xff]
    %v8211 = vld [vmem:[#allocation8 + $0x220] sm:$0xff]
    %v8212 = vld [vmem:[#allocation8 + $0x228] sm:$0xff]
    %v8213 = vld [vmem:[#allocation8 + $0x230] sm:$0xff]
    %v8214 = vld [vmem:[#allocation8 + $0x238] sm:$0xff]
    %v8215 = vld [vmem:[#allocation8 + $0x240] sm:$0xff]
    %v8216 = vld [vmem:[#allocation8 + $0x248] sm:$0xff]
    %v8217 = vld [vmem:[#allocation8 + $0x250] sm:$0xff]
    %v8218 = vld [vmem:[#allocation8 + $0x258] sm:$0xff]
    %v8219 = vld [vmem:[#allocation8 + $0x260] sm:$0xff]
    %v8220 = vld [vmem:[#allocation8 + $0x268] sm:$0xff]
    %v8221 = vld [vmem:[#allocation8 + $0x270] sm:$0xff]
    %v8222 = vld [vmem:[#allocation8 + $0x278] sm:$0xff]
    %v8223 = vld [vmem:[#allocation8 + $0x280] sm:$0xff]
    %v8224 = vld [vmem:[#allocation8 + $0x288] sm:$0xff]
    %v8225 = vld [vmem:[#allocation8 + $0x290] sm:$0xff]
    %v8226 = vld [vmem:[#allocation8 + $0x298] sm:$0xff]
    %v8227 = vld [vmem:[#allocation8 + $0x2a0] sm:$0xff]
    %v8228 = vld [vmem:[#allocation8 + $0x2a8] sm:$0xff]
    %v8229 = vld [vmem:[#allocation8 + $0x2b0] sm:$0xff]
    %v8230 = vld [vmem:[#allocation8 + $0x2b8] sm:$0xff]
    %v8231 = vld [vmem:[#allocation8 + $0x2c0] sm:$0xff]
    %v8232 = vld [vmem:[#allocation8 + $0x2c8] sm:$0xff]
    %v8233 = vld [vmem:[#allocation8 + $0x2d0] sm:$0xff]
    %v8234 = vld [vmem:[#allocation8 + $0x2d8] sm:$0xff]
    %v8235 = vld [vmem:[#allocation8 + $0x2e0] sm:$0xff]
    %v8236 = vld [vmem:[#allocation8 + $0x2e8] sm:$0xff]
    %v8237 = vld [vmem:[#allocation8 + $0x2f0] sm:$0xff]
    %v8238 = vld [vmem:[#allocation8 + $0x2f8] sm:$0xff]
    %v8239 = vld [vmem:[#allocation8 + $0x300] sm:$0xff]
    %v8240 = vld [vmem:[#allocation8 + $0x308] sm:$0xff]
    %v8241 = vld [vmem:[#allocation8 + $0x310] sm:$0xff]
    %v8242 = vld [vmem:[#allocation8 + $0x318] sm:$0xff]
    %v8243 = vld [vmem:[#allocation8 + $0x320] sm:$0xff]
    %v8244 = vld [vmem:[#allocation8 + $0x328] sm:$0xff]
    %v8245 = vld [vmem:[#allocation8 + $0x330] sm:$0xff]
    %v8246 = vld [vmem:[#allocation8 + $0x338] sm:$0xff]
    %v8247 = vld [vmem:[#allocation8 + $0x340] sm:$0xff]
    %v8248 = vld [vmem:[#allocation8 + $0x348] sm:$0xff]
    %v8249 = vld [vmem:[#allocation8 + $0x350] sm:$0xff]
    %v8250 = vld [vmem:[#allocation8 + $0x358] sm:$0xff]
    %v8251 = vld [vmem:[#allocation8 + $0x360] sm:$0xff]
    %v8252 = vld [vmem:[#allocation8 + $0x368] sm:$0xff]
    %v8253 = vld [vmem:[#allocation8 + $0x370] sm:$0xff]
    %v8254 = vld [vmem:[#allocation8 + $0x378] sm:$0xff]
    %v8255 = vld [vmem:[#allocation8 + $0x380] sm:$0xff]
    %v8256 = vld [vmem:[#allocation8 + $0x388] sm:$0xff]
    %v8257 = vld [vmem:[#allocation8 + $0x390] sm:$0xff]
    %v8258 = vld [vmem:[#allocation8 + $0x398] sm:$0xff]
    %v8259 = vld [vmem:[#allocation8 + $0x3a0] sm:$0xff]
    %v8260 = vld [vmem:[#allocation8 + $0x3a8] sm:$0xff]
    %v8261 = vld [vmem:[#allocation8 + $0x3b0] sm:$0xff]
    %v8262 = vld [vmem:[#allocation8 + $0x3b8] sm:$0xff]
    %v8263 = vld [vmem:[#allocation8 + $0x3c0] sm:$0xff]
    %v8264 = vld [vmem:[#allocation8 + $0x3c8] sm:$0xff]
    %v8265 = vld [vmem:[#allocation8 + $0x3d0] sm:$0xff]
    %v8266 = vld [vmem:[#allocation8 + $0x3d8] sm:$0xff]
    %v8267 = vld [vmem:[#allocation8 + $0x3e0] sm:$0xff]
    %v8268 = vld [vmem:[#allocation8 + $0x3e8] sm:$0xff]
    %v8269 = vld [vmem:[#allocation8 + $0x3f0] sm:$0xff]
    %v8270 = vld [vmem:[#allocation8 + $0x3f8] sm:$0xff]
    %v8271 = vld [vmem:[#allocation8 + $0x400] sm:$0xff]
    %v8272 = vld [vmem:[#allocation8 + $0x408] sm:$0xff]
    %v8273 = vld [vmem:[#allocation8 + $0x410] sm:$0xff]
    %v8274 = vld [vmem:[#allocation8 + $0x418] sm:$0xff]
    %v8275 = vld [vmem:[#allocation8 + $0x420] sm:$0xff]
    %v8276 = vld [vmem:[#allocation8 + $0x428] sm:$0xff]
    %v8277 = vld [vmem:[#allocation8 + $0x430] sm:$0xff]
    %v8278 = vld [vmem:[#allocation8 + $0x438] sm:$0xff]
    %v8279 = vld [vmem:[#allocation8 + $0x440] sm:$0xff]
    %v8280 = vld [vmem:[#allocation8 + $0x448] sm:$0xff]
    %v8281 = vld [vmem:[#allocation8 + $0x450] sm:$0xff]
    %v8282 = vld [vmem:[#allocation8 + $0x458] sm:$0xff]
    %v8283 = vld [vmem:[#allocation8 + $0x460] sm:$0xff]
    %v8284 = vld [vmem:[#allocation8 + $0x468] sm:$0xff]
    %v8285 = vld [vmem:[#allocation8 + $0x470] sm:$0xff]
    %v8286 = vld [vmem:[#allocation8 + $0x478] sm:$0xff]
    %v8287 = vld [vmem:[#allocation8 + $0x480] sm:$0xff]
    %v8288 = vld [vmem:[#allocation8 + $0x488] sm:$0xff]
    %v8289 = vld [vmem:[#allocation8 + $0x490] sm:$0xff]
    %v8290 = vld [vmem:[#allocation8 + $0x498] sm:$0xff]
    %v8291 = vld [vmem:[#allocation8 + $0x4a0] sm:$0xff]
    %v8292 = vld [vmem:[#allocation8 + $0x4a8] sm:$0xff]
    %v8293 = vld [vmem:[#allocation8 + $0x4b0] sm:$0xff]
    %v8294 = vld [vmem:[#allocation8 + $0x4b8] sm:$0xff]
    %v8295 = vld [vmem:[#allocation8 + $0x4c0] sm:$0xff]
    %v8296 = vld [vmem:[#allocation8 + $0x4c8] sm:$0xff]
    %v8297 = vld [vmem:[#allocation8 + $0x4d0] sm:$0xff]
    %v8298 = vld [vmem:[#allocation8 + $0x4d8] sm:$0xff]
    %v8299 = vld [vmem:[#allocation8 + $0x4e0] sm:$0xff]
    %v8300 = vld [vmem:[#allocation8 + $0x4e8] sm:$0xff]
    %v8301 = vld [vmem:[#allocation8 + $0x4f0] sm:$0xff]
    %v8302 = vld [vmem:[#allocation8 + $0x4f8] sm:$0xff]
    %v8303 = vld [vmem:[#allocation8 + $0x500] sm:$0xff]
    %v8304 = vld [vmem:[#allocation8 + $0x508] sm:$0xff]
    %v8305 = vld [vmem:[#allocation8 + $0x510] sm:$0xff]
    %v8306 = vld [vmem:[#allocation8 + $0x518] sm:$0xff]
    %v8307 = vld [vmem:[#allocation8 + $0x520] sm:$0xff]
    %v8308 = vld [vmem:[#allocation8 + $0x528] sm:$0xff]
    %v8309 = vld [vmem:[#allocation8 + $0x530] sm:$0xff]
    %v8310 = vld [vmem:[#allocation8 + $0x538] sm:$0xff]
    %v8311 = vld [vmem:[#allocation8 + $0x540] sm:$0xff]
    %v8312 = vld [vmem:[#allocation8 + $0x548] sm:$0xff]
    %v8313 = vld [vmem:[#allocation8 + $0x550] sm:$0xff]
    %v8314 = vld [vmem:[#allocation8 + $0x558] sm:$0xff]
    %v8315 = vld [vmem:[#allocation8 + $0x560] sm:$0xff]
    %v8316 = vld [vmem:[#allocation8 + $0x568] sm:$0xff]
    %v8317 = vld [vmem:[#allocation8 + $0x570] sm:$0xff]
    %v8318 = vld [vmem:[#allocation8 + $0x578] sm:$0xff]
    %v8319 = vld [vmem:[#allocation8 + $0x580] sm:$0xff]
    %v8320 = vld [vmem:[#allocation8 + $0x588] sm:$0xff]
    %v8321 = vld [vmem:[#allocation8 + $0x590] sm:$0xff]
    %v8322 = vld [vmem:[#allocation8 + $0x598] sm:$0xff]
    %v8323 = vld [vmem:[#allocation8 + $0x5a0] sm:$0xff]
    %v8324 = vld [vmem:[#allocation8 + $0x5a8] sm:$0xff]
    %v8325 = vld [vmem:[#allocation8 + $0x5b0] sm:$0xff]
    %v8326 = vld [vmem:[#allocation8 + $0x5b8] sm:$0xff]
    %v8327 = vld [vmem:[#allocation8 + $0x5c0] sm:$0xff]
    %v8328 = vld [vmem:[#allocation8 + $0x5c8] sm:$0xff]
    %v8329 = vld [vmem:[#allocation8 + $0x5d0] sm:$0xff]
    %v8330 = vld [vmem:[#allocation8 + $0x5d8] sm:$0xff]
    %v8331 = vld [vmem:[#allocation8 + $0x5e0] sm:$0xff]
    %v8332 = vld [vmem:[#allocation8 + $0x5e8] sm:$0xff]
    %v8333 = vld [vmem:[#allocation8 + $0x5f0] sm:$0xff]
    %v8334 = vld [vmem:[#allocation8 + $0x5f8] sm:$0xff]
    %v8335 = vld [vmem:[#allocation8 + $0x600] sm:$0xff]
    %v8336 = vld [vmem:[#allocation8 + $0x608] sm:$0xff]
    %v8337 = vld [vmem:[#allocation8 + $0x610] sm:$0xff]
    %v8338 = vld [vmem:[#allocation8 + $0x618] sm:$0xff]
    %v8339 = vld [vmem:[#allocation8 + $0x620] sm:$0xff]
    %v8340 = vld [vmem:[#allocation8 + $0x628] sm:$0xff]
    %v8341 = vld [vmem:[#allocation8 + $0x630] sm:$0xff]
    %v8342 = vld [vmem:[#allocation8 + $0x638] sm:$0xff]
    %v8343 = vld [vmem:[#allocation8 + $0x640] sm:$0xff]
    %v8344 = vld [vmem:[#allocation8 + $0x648] sm:$0xff]
    %v8345 = vld [vmem:[#allocation8 + $0x650] sm:$0xff]
    %v8346 = vld [vmem:[#allocation8 + $0x658] sm:$0xff]
    %v8347 = vld [vmem:[#allocation8 + $0x660] sm:$0xff]
    %v8348 = vld [vmem:[#allocation8 + $0x668] sm:$0xff]
    %v8349 = vld [vmem:[#allocation8 + $0x670] sm:$0xff]
    %v8350 = vld [vmem:[#allocation8 + $0x678] sm:$0xff]
    %v8351 = vld [vmem:[#allocation8 + $0x680] sm:$0xff]
    %v8352 = vld [vmem:[#allocation8 + $0x688] sm:$0xff]
    %v8353 = vld [vmem:[#allocation8 + $0x690] sm:$0xff]
    %v8354 = vld [vmem:[#allocation8 + $0x698] sm:$0xff]
    %v8355 = vld [vmem:[#allocation8 + $0x6a0] sm:$0xff]
    %v8356 = vld [vmem:[#allocation8 + $0x6a8] sm:$0xff]
    %v8357 = vld [vmem:[#allocation8 + $0x6b0] sm:$0xff]
    %v8358 = vld [vmem:[#allocation8 + $0x6b8] sm:$0xff]
    %v8359 = vld [vmem:[#allocation8 + $0x6c0] sm:$0xff]
    %v8360 = vld [vmem:[#allocation8 + $0x6c8] sm:$0xff]
    %v8361 = vld [vmem:[#allocation8 + $0x6d0] sm:$0xff]
    %v8362 = vld [vmem:[#allocation8 + $0x6d8] sm:$0xff]
    %v8363 = vld [vmem:[#allocation8 + $0x6e0] sm:$0xff]
    %v8364 = vld [vmem:[#allocation8 + $0x6e8] sm:$0xff]
    %v8365 = vld [vmem:[#allocation8 + $0x6f0] sm:$0xff]
    %v8366 = vld [vmem:[#allocation8 + $0x6f8] sm:$0xff]
    %v8367 = vld [vmem:[#allocation8 + $0x700] sm:$0xff]
    %v8368 = vld [vmem:[#allocation8 + $0x708] sm:$0xff]
    %v8369 = vld [vmem:[#allocation8 + $0x710] sm:$0xff]
    %v8370 = vld [vmem:[#allocation8 + $0x718] sm:$0xff]
    %v8371 = vld [vmem:[#allocation8 + $0x720] sm:$0xff]
    %v8372 = vld [vmem:[#allocation8 + $0x728] sm:$0xff]
    %v8373 = vld [vmem:[#allocation8 + $0x730] sm:$0xff]
    %v8374 = vld [vmem:[#allocation8 + $0x738] sm:$0xff]
    %v8375 = vld [vmem:[#allocation8 + $0x740] sm:$0xff]
    %v8376 = vld [vmem:[#allocation8 + $0x748] sm:$0xff]
    %v8377 = vld [vmem:[#allocation8 + $0x750] sm:$0xff]
    %v8378 = vld [vmem:[#allocation8 + $0x758] sm:$0xff]
    %v8379 = vld [vmem:[#allocation8 + $0x760] sm:$0xff]
    %v8380 = vld [vmem:[#allocation8 + $0x768] sm:$0xff]
    %v8381 = vld [vmem:[#allocation8 + $0x770] sm:$0xff]
    %v8382 = vld [vmem:[#allocation8 + $0x778] sm:$0xff]
    %v8383 = vld [vmem:[#allocation8 + $0x780] sm:$0xff]
    %v8384 = vld [vmem:[#allocation8 + $0x788] sm:$0xff]
    %v8385 = vld [vmem:[#allocation8 + $0x790] sm:$0xff]
    %v8386 = vld [vmem:[#allocation8 + $0x798] sm:$0xff]
    %v8387 = vld [vmem:[#allocation8 + $0x7a0] sm:$0xff]
    %v8388 = vld [vmem:[#allocation8 + $0x7a8] sm:$0xff]
    %v8389 = vld [vmem:[#allocation8 + $0x7b0] sm:$0xff]
    %v8390 = vld [vmem:[#allocation8 + $0x7b8] sm:$0xff]
    %v8391 = vld [vmem:[#allocation8 + $0x7c0] sm:$0xff]
    %v8392 = vld [vmem:[#allocation8 + $0x7c8] sm:$0xff]
    %v8393 = vld [vmem:[#allocation8 + $0x7d0] sm:$0xff]
    %v8394 = vld [vmem:[#allocation8 + $0x7d8] sm:$0xff]
    %v8395 = vld [vmem:[#allocation8 + $0x7e0] sm:$0xff]
    %v8396 = vld [vmem:[#allocation8 + $0x7e8] sm:$0xff]
    %v8397 = vld [vmem:[#allocation8 + $0x7f0] sm:$0xff]
    %v8398 = vld [vmem:[#allocation8 + $0x7f8] sm:$0xff]
    %v8399 = vld [vmem:[#allocation10] sm:$0xf]
    %v8401 = vlaneseq
    %v8402 = vshrl.u32 %v8401, 7
    %v8403 = vsub.s32 0, %v8402
    %v8404 = vrot.slane %v8399, %v8403
    %v8405 = vlaneseq
    %v8406 = vshrl.u32 %v8405, 7
    %v8407 = vsub.s32 1, %v8406
    %v8408 = vrot.slane %v8399, %v8407
    %v8409 = vlaneseq
    %v8410 = vshrl.u32 %v8409, 7
    %v8411 = vsub.s32 2, %v8410
    %v8412 = vrot.slane %v8399, %v8411
    %v8413 = vlaneseq
    %v8414 = vshrl.u32 %v8413, 7
    %v8415 = vsub.s32 3, %v8414
    %v8416 = vrot.slane %v8399, %v8415
    %v8677 = vunpack.c.l.b16 %v8143
    %v8678 = vunpack.c.h.b16 %v8143
    %v8679 = vunpack.c.l.b16 %v8144
    %v8680 = vunpack.c.h.b16 %v8144
    %v8681 = vunpack.c.l.b16 %v8145
    %v8682 = vunpack.c.h.b16 %v8145
    %v8683 = vunpack.c.l.b16 %v8146
    %v8684 = vunpack.c.h.b16 %v8146
    %v8685 = vunpack.c.l.b16 %v8147
    %v8686 = vunpack.c.h.b16 %v8147
    %v8687 = vunpack.c.l.b16 %v8148
    %v8688 = vunpack.c.h.b16 %v8148
    %v8689 = vunpack.c.l.b16 %v8149
    %v8690 = vunpack.c.h.b16 %v8149
    %v8691 = vunpack.c.l.b16 %v8150
    %v8692 = vunpack.c.h.b16 %v8150
    %v8693 = vunpack.c.l.b16 %v8151
    %v8694 = vunpack.c.h.b16 %v8151
    %v8695 = vunpack.c.l.b16 %v8152
    %v8696 = vunpack.c.h.b16 %v8152
    %v8697 = vunpack.c.l.b16 %v8153
    %v8698 = vunpack.c.h.b16 %v8153
    %v8699 = vunpack.c.l.b16 %v8154
    %v8700 = vunpack.c.h.b16 %v8154
    %v8701 = vunpack.c.l.b16 %v8155
    %v8702 = vunpack.c.h.b16 %v8155
    %v8703 = vunpack.c.l.b16 %v8156
    %v8704 = vunpack.c.h.b16 %v8156
    %v8705 = vunpack.c.l.b16 %v8157
    %v8706 = vunpack.c.h.b16 %v8157
    %v8707 = vunpack.c.l.b16 %v8158
    %v8708 = vunpack.c.h.b16 %v8158
    %v8709 = vunpack.c.l.b16 %v8159
    %v8710 = vunpack.c.h.b16 %v8159
    %v8711 = vunpack.c.l.b16 %v8160
    %v8712 = vunpack.c.h.b16 %v8160
    %v8713 = vunpack.c.l.b16 %v8161
    %v8714 = vunpack.c.h.b16 %v8161
    %v8715 = vunpack.c.l.b16 %v8162
    %v8716 = vunpack.c.h.b16 %v8162
    %v8717 = vunpack.c.l.b16 %v8163
    %v8718 = vunpack.c.h.b16 %v8163
    %v8719 = vunpack.c.l.b16 %v8164
    %v8720 = vunpack.c.h.b16 %v8164
    %v8721 = vunpack.c.l.b16 %v8165
    %v8722 = vunpack.c.h.b16 %v8165
    %v8723 = vunpack.c.l.b16 %v8166
    %v8724 = vunpack.c.h.b16 %v8166
    %v8725 = vunpack.c.l.b16 %v8167
    %v8726 = vunpack.c.h.b16 %v8167
    %v8727 = vunpack.c.l.b16 %v8168
    %v8728 = vunpack.c.h.b16 %v8168
    %v8729 = vunpack.c.l.b16 %v8169
    %v8730 = vunpack.c.h.b16 %v8169
    %v8731 = vunpack.c.l.b16 %v8170
    %v8732 = vunpack.c.h.b16 %v8170
    %v8733 = vunpack.c.l.b16 %v8171
    %v8734 = vunpack.c.h.b16 %v8171
    %v8735 = vunpack.c.l.b16 %v8172
    %v8736 = vunpack.c.h.b16 %v8172
    %v8737 = vunpack.c.l.b16 %v8173
    %v8738 = vunpack.c.h.b16 %v8173
    %v8739 = vunpack.c.l.b16 %v8174
    %v8740 = vunpack.c.h.b16 %v8174
    %v8741 = vunpack.c.l.b16 %v8175
    %v8742 = vunpack.c.h.b16 %v8175
    %v8743 = vunpack.c.l.b16 %v8176
    %v8744 = vunpack.c.h.b16 %v8176
    %v8745 = vunpack.c.l.b16 %v8177
    %v8746 = vunpack.c.h.b16 %v8177
    %v8747 = vunpack.c.l.b16 %v8178
    %v8748 = vunpack.c.h.b16 %v8178
    %v8749 = vunpack.c.l.b16 %v8179
    %v8750 = vunpack.c.h.b16 %v8179
    %v8751 = vunpack.c.l.b16 %v8180
    %v8752 = vunpack.c.h.b16 %v8180
    %v8753 = vunpack.c.l.b16 %v8181
    %v8754 = vunpack.c.h.b16 %v8181
    %v8755 = vunpack.c.l.b16 %v8182
    %v8756 = vunpack.c.h.b16 %v8182
    %v8757 = vunpack.c.l.b16 %v8183
    %v8758 = vunpack.c.h.b16 %v8183
    %v8759 = vunpack.c.l.b16 %v8184
    %v8760 = vunpack.c.h.b16 %v8184
    %v8761 = vunpack.c.l.b16 %v8185
    %v8762 = vunpack.c.h.b16 %v8185
    %v8763 = vunpack.c.l.b16 %v8186
    %v8764 = vunpack.c.h.b16 %v8186
    %v8765 = vunpack.c.l.b16 %v8187
    %v8766 = vunpack.c.h.b16 %v8187
    %v8767 = vunpack.c.l.b16 %v8188
    %v8768 = vunpack.c.h.b16 %v8188
    %v8769 = vunpack.c.l.b16 %v8189
    %v8770 = vunpack.c.h.b16 %v8189
    %v8771 = vunpack.c.l.b16 %v8190
    %v8772 = vunpack.c.h.b16 %v8190
    %v8773 = vunpack.c.l.b16 %v8191
    %v8774 = vunpack.c.h.b16 %v8191
    %v8775 = vunpack.c.l.b16 %v8192
    %v8776 = vunpack.c.h.b16 %v8192
    %v8777 = vunpack.c.l.b16 %v8193
    %v8778 = vunpack.c.h.b16 %v8193
    %v8779 = vunpack.c.l.b16 %v8194
    %v8780 = vunpack.c.h.b16 %v8194
    %v8781 = vunpack.c.l.b16 %v8195
    %v8782 = vunpack.c.h.b16 %v8195
    %v8783 = vunpack.c.l.b16 %v8196
    %v8784 = vunpack.c.h.b16 %v8196
    %v8785 = vunpack.c.l.b16 %v8197
    %v8786 = vunpack.c.h.b16 %v8197
    %v8787 = vunpack.c.l.b16 %v8198
    %v8788 = vunpack.c.h.b16 %v8198
    %v8789 = vunpack.c.l.b16 %v8199
    %v8790 = vunpack.c.h.b16 %v8199
    %v8791 = vunpack.c.l.b16 %v8200
    %v8792 = vunpack.c.h.b16 %v8200
    %v8793 = vunpack.c.l.b16 %v8201
    %v8794 = vunpack.c.h.b16 %v8201
    %v8795 = vunpack.c.l.b16 %v8202
    %v8796 = vunpack.c.h.b16 %v8202
    %v8797 = vunpack.c.l.b16 %v8203
    %v8798 = vunpack.c.h.b16 %v8203
    %v8799 = vunpack.c.l.b16 %v8204
    %v8800 = vunpack.c.h.b16 %v8204
    %v8801 = vunpack.c.l.b16 %v8205
    %v8802 = vunpack.c.h.b16 %v8205
    %v8803 = vunpack.c.l.b16 %v8206
    %v8804 = vunpack.c.h.b16 %v8206
    %v8805 = vunpack.c.l.b16 %v8207
    %v8806 = vunpack.c.h.b16 %v8207
    %v8807 = vunpack.c.l.b16 %v8208
    %v8808 = vunpack.c.h.b16 %v8208
    %v8809 = vunpack.c.l.b16 %v8209
    %v8810 = vunpack.c.h.b16 %v8209
    %v8811 = vunpack.c.l.b16 %v8210
    %v8812 = vunpack.c.h.b16 %v8210
    %v8813 = vunpack.c.l.b16 %v8211
    %v8814 = vunpack.c.h.b16 %v8211
    %v8815 = vunpack.c.l.b16 %v8212
    %v8816 = vunpack.c.h.b16 %v8212
    %v8817 = vunpack.c.l.b16 %v8213
    %v8818 = vunpack.c.h.b16 %v8213
    %v8819 = vunpack.c.l.b16 %v8214
    %v8820 = vunpack.c.h.b16 %v8214
    %v8821 = vunpack.c.l.b16 %v8215
    %v8822 = vunpack.c.h.b16 %v8215
    %v8823 = vunpack.c.l.b16 %v8216
    %v8824 = vunpack.c.h.b16 %v8216
    %v8825 = vunpack.c.l.b16 %v8217
    %v8826 = vunpack.c.h.b16 %v8217
    %v8827 = vunpack.c.l.b16 %v8218
    %v8828 = vunpack.c.h.b16 %v8218
    %v8829 = vunpack.c.l.b16 %v8219
    %v8830 = vunpack.c.h.b16 %v8219
    %v8831 = vunpack.c.l.b16 %v8220
    %v8832 = vunpack.c.h.b16 %v8220
    %v8833 = vunpack.c.l.b16 %v8221
    %v8834 = vunpack.c.h.b16 %v8221
    %v8835 = vunpack.c.l.b16 %v8222
    %v8836 = vunpack.c.h.b16 %v8222
    %v8837 = vunpack.c.l.b16 %v8223
    %v8838 = vunpack.c.h.b16 %v8223
    %v8839 = vunpack.c.l.b16 %v8224
    %v8840 = vunpack.c.h.b16 %v8224
    %v8841 = vunpack.c.l.b16 %v8225
    %v8842 = vunpack.c.h.b16 %v8225
    %v8843 = vunpack.c.l.b16 %v8226
    %v8844 = vunpack.c.h.b16 %v8226
    %v8845 = vunpack.c.l.b16 %v8227
    %v8846 = vunpack.c.h.b16 %v8227
    %v8847 = vunpack.c.l.b16 %v8228
    %v8848 = vunpack.c.h.b16 %v8228
    %v8849 = vunpack.c.l.b16 %v8229
    %v8850 = vunpack.c.h.b16 %v8229
    %v8851 = vunpack.c.l.b16 %v8230
    %v8852 = vunpack.c.h.b16 %v8230
    %v8853 = vunpack.c.l.b16 %v8231
    %v8854 = vunpack.c.h.b16 %v8231
    %v8855 = vunpack.c.l.b16 %v8232
    %v8856 = vunpack.c.h.b16 %v8232
    %v8857 = vunpack.c.l.b16 %v8233
    %v8858 = vunpack.c.h.b16 %v8233
    %v8859 = vunpack.c.l.b16 %v8234
    %v8860 = vunpack.c.h.b16 %v8234
    %v8861 = vunpack.c.l.b16 %v8235
    %v8862 = vunpack.c.h.b16 %v8235
    %v8863 = vunpack.c.l.b16 %v8236
    %v8864 = vunpack.c.h.b16 %v8236
    %v8865 = vunpack.c.l.b16 %v8237
    %v8866 = vunpack.c.h.b16 %v8237
    %v8867 = vunpack.c.l.b16 %v8238
    %v8868 = vunpack.c.h.b16 %v8238
    %v8869 = vunpack.c.l.b16 %v8239
    %v8870 = vunpack.c.h.b16 %v8239
    %v8871 = vunpack.c.l.b16 %v8240
    %v8872 = vunpack.c.h.b16 %v8240
    %v8873 = vunpack.c.l.b16 %v8241
    %v8874 = vunpack.c.h.b16 %v8241
    %v8875 = vunpack.c.l.b16 %v8242
    %v8876 = vunpack.c.h.b16 %v8242
    %v8877 = vunpack.c.l.b16 %v8243
    %v8878 = vunpack.c.h.b16 %v8243
    %v8879 = vunpack.c.l.b16 %v8244
    %v8880 = vunpack.c.h.b16 %v8244
    %v8881 = vunpack.c.l.b16 %v8245
    %v8882 = vunpack.c.h.b16 %v8245
    %v8883 = vunpack.c.l.b16 %v8246
    %v8884 = vunpack.c.h.b16 %v8246
    %v8885 = vunpack.c.l.b16 %v8247
    %v8886 = vunpack.c.h.b16 %v8247
    %v8887 = vunpack.c.l.b16 %v8248
    %v8888 = vunpack.c.h.b16 %v8248
    %v8889 = vunpack.c.l.b16 %v8249
    %v8890 = vunpack.c.h.b16 %v8249
    %v8891 = vunpack.c.l.b16 %v8250
    %v8892 = vunpack.c.h.b16 %v8250
    %v8893 = vunpack.c.l.b16 %v8251
    %v8894 = vunpack.c.h.b16 %v8251
    %v8895 = vunpack.c.l.b16 %v8252
    %v8896 = vunpack.c.h.b16 %v8252
    %v8897 = vunpack.c.l.b16 %v8253
    %v8898 = vunpack.c.h.b16 %v8253
    %v8899 = vunpack.c.l.b16 %v8254
    %v8900 = vunpack.c.h.b16 %v8254
    %v8901 = vunpack.c.l.b16 %v8255
    %v8902 = vunpack.c.h.b16 %v8255
    %v8903 = vunpack.c.l.b16 %v8256
    %v8904 = vunpack.c.h.b16 %v8256
    %v8905 = vunpack.c.l.b16 %v8257
    %v8906 = vunpack.c.h.b16 %v8257
    %v8907 = vunpack.c.l.b16 %v8258
    %v8908 = vunpack.c.h.b16 %v8258
    %v8909 = vunpack.c.l.b16 %v8259
    %v8910 = vunpack.c.h.b16 %v8259
    %v8911 = vunpack.c.l.b16 %v8260
    %v8912 = vunpack.c.h.b16 %v8260
    %v8913 = vunpack.c.l.b16 %v8261
    %v8914 = vunpack.c.h.b16 %v8261
    %v8915 = vunpack.c.l.b16 %v8262
    %v8916 = vunpack.c.h.b16 %v8262
    %v8917 = vunpack.c.l.b16 %v8263
    %v8918 = vunpack.c.h.b16 %v8263
    %v8919 = vunpack.c.l.b16 %v8264
    %v8920 = vunpack.c.h.b16 %v8264
    %v8921 = vunpack.c.l.b16 %v8265
    %v8922 = vunpack.c.h.b16 %v8265
    %v8923 = vunpack.c.l.b16 %v8266
    %v8924 = vunpack.c.h.b16 %v8266
    %v8925 = vunpack.c.l.b16 %v8267
    %v8926 = vunpack.c.h.b16 %v8267
    %v8927 = vunpack.c.l.b16 %v8268
    %v8928 = vunpack.c.h.b16 %v8268
    %v8929 = vunpack.c.l.b16 %v8269
    %v8930 = vunpack.c.h.b16 %v8269
    %v8931 = vunpack.c.l.b16 %v8270
    %v8932 = vunpack.c.h.b16 %v8270
    %v8933 = vunpack.c.l.b16 %v8271
    %v8934 = vunpack.c.h.b16 %v8271
    %v8935 = vunpack.c.l.b16 %v8272
    %v8936 = vunpack.c.h.b16 %v8272
    %v8937 = vunpack.c.l.b16 %v8273
    %v8938 = vunpack.c.h.b16 %v8273
    %v8939 = vunpack.c.l.b16 %v8274
    %v8940 = vunpack.c.h.b16 %v8274
    %v8941 = vunpack.c.l.b16 %v8275
    %v8942 = vunpack.c.h.b16 %v8275
    %v8943 = vunpack.c.l.b16 %v8276
    %v8944 = vunpack.c.h.b16 %v8276
    %v8945 = vunpack.c.l.b16 %v8277
    %v8946 = vunpack.c.h.b16 %v8277
    %v8947 = vunpack.c.l.b16 %v8278
    %v8948 = vunpack.c.h.b16 %v8278
    %v8949 = vunpack.c.l.b16 %v8279
    %v8950 = vunpack.c.h.b16 %v8279
    %v8951 = vunpack.c.l.b16 %v8280
    %v8952 = vunpack.c.h.b16 %v8280
    %v8953 = vunpack.c.l.b16 %v8281
    %v8954 = vunpack.c.h.b16 %v8281
    %v8955 = vunpack.c.l.b16 %v8282
    %v8956 = vunpack.c.h.b16 %v8282
    %v8957 = vunpack.c.l.b16 %v8283
    %v8958 = vunpack.c.h.b16 %v8283
    %v8959 = vunpack.c.l.b16 %v8284
    %v8960 = vunpack.c.h.b16 %v8284
    %v8961 = vunpack.c.l.b16 %v8285
    %v8962 = vunpack.c.h.b16 %v8285
    %v8963 = vunpack.c.l.b16 %v8286
    %v8964 = vunpack.c.h.b16 %v8286
    %v8965 = vunpack.c.l.b16 %v8287
    %v8966 = vunpack.c.h.b16 %v8287
    %v8967 = vunpack.c.l.b16 %v8288
    %v8968 = vunpack.c.h.b16 %v8288
    %v8969 = vunpack.c.l.b16 %v8289
    %v8970 = vunpack.c.h.b16 %v8289
    %v8971 = vunpack.c.l.b16 %v8290
    %v8972 = vunpack.c.h.b16 %v8290
    %v8973 = vunpack.c.l.b16 %v8291
    %v8974 = vunpack.c.h.b16 %v8291
    %v8975 = vunpack.c.l.b16 %v8292
    %v8976 = vunpack.c.h.b16 %v8292
    %v8977 = vunpack.c.l.b16 %v8293
    %v8978 = vunpack.c.h.b16 %v8293
    %v8979 = vunpack.c.l.b16 %v8294
    %v8980 = vunpack.c.h.b16 %v8294
    %v8981 = vunpack.c.l.b16 %v8295
    %v8982 = vunpack.c.h.b16 %v8295
    %v8983 = vunpack.c.l.b16 %v8296
    %v8984 = vunpack.c.h.b16 %v8296
    %v8985 = vunpack.c.l.b16 %v8297
    %v8986 = vunpack.c.h.b16 %v8297
    %v8987 = vunpack.c.l.b16 %v8298
    %v8988 = vunpack.c.h.b16 %v8298
    %v8989 = vunpack.c.l.b16 %v8299
    %v8990 = vunpack.c.h.b16 %v8299
    %v8991 = vunpack.c.l.b16 %v8300
    %v8992 = vunpack.c.h.b16 %v8300
    %v8993 = vunpack.c.l.b16 %v8301
    %v8994 = vunpack.c.h.b16 %v8301
    %v8995 = vunpack.c.l.b16 %v8302
    %v8996 = vunpack.c.h.b16 %v8302
    %v8997 = vunpack.c.l.b16 %v8303
    %v8998 = vunpack.c.h.b16 %v8303
    %v8999 = vunpack.c.l.b16 %v8304
    %v9000 = vunpack.c.h.b16 %v8304
    %v9001 = vunpack.c.l.b16 %v8305
    %v9002 = vunpack.c.h.b16 %v8305
    %v9003 = vunpack.c.l.b16 %v8306
    %v9004 = vunpack.c.h.b16 %v8306
    %v9005 = vunpack.c.l.b16 %v8307
    %v9006 = vunpack.c.h.b16 %v8307
    %v9007 = vunpack.c.l.b16 %v8308
    %v9008 = vunpack.c.h.b16 %v8308
    %v9009 = vunpack.c.l.b16 %v8309
    %v9010 = vunpack.c.h.b16 %v8309
    %v9011 = vunpack.c.l.b16 %v8310
    %v9012 = vunpack.c.h.b16 %v8310
    %v9013 = vunpack.c.l.b16 %v8311
    %v9014 = vunpack.c.h.b16 %v8311
    %v9015 = vunpack.c.l.b16 %v8312
    %v9016 = vunpack.c.h.b16 %v8312
    %v9017 = vunpack.c.l.b16 %v8313
    %v9018 = vunpack.c.h.b16 %v8313
    %v9019 = vunpack.c.l.b16 %v8314
    %v9020 = vunpack.c.h.b16 %v8314
    %v9021 = vunpack.c.l.b16 %v8315
    %v9022 = vunpack.c.h.b16 %v8315
    %v9023 = vunpack.c.l.b16 %v8316
    %v9024 = vunpack.c.h.b16 %v8316
    %v9025 = vunpack.c.l.b16 %v8317
    %v9026 = vunpack.c.h.b16 %v8317
    %v9027 = vunpack.c.l.b16 %v8318
    %v9028 = vunpack.c.h.b16 %v8318
    %v9029 = vunpack.c.l.b16 %v8319
    %v9030 = vunpack.c.h.b16 %v8319
    %v9031 = vunpack.c.l.b16 %v8320
    %v9032 = vunpack.c.h.b16 %v8320
    %v9033 = vunpack.c.l.b16 %v8321
    %v9034 = vunpack.c.h.b16 %v8321
    %v9035 = vunpack.c.l.b16 %v8322
    %v9036 = vunpack.c.h.b16 %v8322
    %v9037 = vunpack.c.l.b16 %v8323
    %v9038 = vunpack.c.h.b16 %v8323
    %v9039 = vunpack.c.l.b16 %v8324
    %v9040 = vunpack.c.h.b16 %v8324
    %v9041 = vunpack.c.l.b16 %v8325
    %v9042 = vunpack.c.h.b16 %v8325
    %v9043 = vunpack.c.l.b16 %v8326
    %v9044 = vunpack.c.h.b16 %v8326
    %v9045 = vunpack.c.l.b16 %v8327
    %v9046 = vunpack.c.h.b16 %v8327
    %v9047 = vunpack.c.l.b16 %v8328
    %v9048 = vunpack.c.h.b16 %v8328
    %v9049 = vunpack.c.l.b16 %v8329
    %v9050 = vunpack.c.h.b16 %v8329
    %v9051 = vunpack.c.l.b16 %v8330
    %v9052 = vunpack.c.h.b16 %v8330
    %v9053 = vunpack.c.l.b16 %v8331
    %v9054 = vunpack.c.h.b16 %v8331
    %v9055 = vunpack.c.l.b16 %v8332
    %v9056 = vunpack.c.h.b16 %v8332
    %v9057 = vunpack.c.l.b16 %v8333
    %v9058 = vunpack.c.h.b16 %v8333
    %v9059 = vunpack.c.l.b16 %v8334
    %v9060 = vunpack.c.h.b16 %v8334
    %v9061 = vunpack.c.l.b16 %v8335
    %v9062 = vunpack.c.h.b16 %v8335
    %v9063 = vunpack.c.l.b16 %v8336
    %v9064 = vunpack.c.h.b16 %v8336
    %v9065 = vunpack.c.l.b16 %v8337
    %v9066 = vunpack.c.h.b16 %v8337
    %v9067 = vunpack.c.l.b16 %v8338
    %v9068 = vunpack.c.h.b16 %v8338
    %v9069 = vunpack.c.l.b16 %v8339
    %v9070 = vunpack.c.h.b16 %v8339
    %v9071 = vunpack.c.l.b16 %v8340
    %v9072 = vunpack.c.h.b16 %v8340
    %v9073 = vunpack.c.l.b16 %v8341
    %v9074 = vunpack.c.h.b16 %v8341
    %v9075 = vunpack.c.l.b16 %v8342
    %v9076 = vunpack.c.h.b16 %v8342
    %v9077 = vunpack.c.l.b16 %v8343
    %v9078 = vunpack.c.h.b16 %v8343
    %v9079 = vunpack.c.l.b16 %v8344
    %v9080 = vunpack.c.h.b16 %v8344
    %v9081 = vunpack.c.l.b16 %v8345
    %v9082 = vunpack.c.h.b16 %v8345
    %v9083 = vunpack.c.l.b16 %v8346
    %v9084 = vunpack.c.h.b16 %v8346
    %v9085 = vunpack.c.l.b16 %v8347
    %v9086 = vunpack.c.h.b16 %v8347
    %v9087 = vunpack.c.l.b16 %v8348
    %v9088 = vunpack.c.h.b16 %v8348
    %v9089 = vunpack.c.l.b16 %v8349
    %v9090 = vunpack.c.h.b16 %v8349
    %v9091 = vunpack.c.l.b16 %v8350
    %v9092 = vunpack.c.h.b16 %v8350
    %v9093 = vunpack.c.l.b16 %v8351
    %v9094 = vunpack.c.h.b16 %v8351
    %v9095 = vunpack.c.l.b16 %v8352
    %v9096 = vunpack.c.h.b16 %v8352
    %v9097 = vunpack.c.l.b16 %v8353
    %v9098 = vunpack.c.h.b16 %v8353
    %v9099 = vunpack.c.l.b16 %v8354
    %v9100 = vunpack.c.h.b16 %v8354
    %v9101 = vunpack.c.l.b16 %v8355
    %v9102 = vunpack.c.h.b16 %v8355
    %v9103 = vunpack.c.l.b16 %v8356
    %v9104 = vunpack.c.h.b16 %v8356
    %v9105 = vunpack.c.l.b16 %v8357
    %v9106 = vunpack.c.h.b16 %v8357
    %v9107 = vunpack.c.l.b16 %v8358
    %v9108 = vunpack.c.h.b16 %v8358
    %v9109 = vunpack.c.l.b16 %v8359
    %v9110 = vunpack.c.h.b16 %v8359
    %v9111 = vunpack.c.l.b16 %v8360
    %v9112 = vunpack.c.h.b16 %v8360
    %v9113 = vunpack.c.l.b16 %v8361
    %v9114 = vunpack.c.h.b16 %v8361
    %v9115 = vunpack.c.l.b16 %v8362
    %v9116 = vunpack.c.h.b16 %v8362
    %v9117 = vunpack.c.l.b16 %v8363
    %v9118 = vunpack.c.h.b16 %v8363
    %v9119 = vunpack.c.l.b16 %v8364
    %v9120 = vunpack.c.h.b16 %v8364
    %v9121 = vunpack.c.l.b16 %v8365
    %v9122 = vunpack.c.h.b16 %v8365
    %v9123 = vunpack.c.l.b16 %v8366
    %v9124 = vunpack.c.h.b16 %v8366
    %v9125 = vunpack.c.l.b16 %v8367
    %v9126 = vunpack.c.h.b16 %v8367
    %v9127 = vunpack.c.l.b16 %v8368
    %v9128 = vunpack.c.h.b16 %v8368
    %v9129 = vunpack.c.l.b16 %v8369
    %v9130 = vunpack.c.h.b16 %v8369
    %v9131 = vunpack.c.l.b16 %v8370
    %v9132 = vunpack.c.h.b16 %v8370
    %v9133 = vunpack.c.l.b16 %v8371
    %v9134 = vunpack.c.h.b16 %v8371
    %v9135 = vunpack.c.l.b16 %v8372
    %v9136 = vunpack.c.h.b16 %v8372
    %v9137 = vunpack.c.l.b16 %v8373
    %v9138 = vunpack.c.h.b16 %v8373
    %v9139 = vunpack.c.l.b16 %v8374
    %v9140 = vunpack.c.h.b16 %v8374
    %v9141 = vunpack.c.l.b16 %v8375
    %v9142 = vunpack.c.h.b16 %v8375
    %v9143 = vunpack.c.l.b16 %v8376
    %v9144 = vunpack.c.h.b16 %v8376
    %v9145 = vunpack.c.l.b16 %v8377
    %v9146 = vunpack.c.h.b16 %v8377
    %v9147 = vunpack.c.l.b16 %v8378
    %v9148 = vunpack.c.h.b16 %v8378
    %v9149 = vunpack.c.l.b16 %v8379
    %v9150 = vunpack.c.h.b16 %v8379
    %v9151 = vunpack.c.l.b16 %v8380
    %v9152 = vunpack.c.h.b16 %v8380
    %v9153 = vunpack.c.l.b16 %v8381
    %v9154 = vunpack.c.h.b16 %v8381
    %v9155 = vunpack.c.l.b16 %v8382
    %v9156 = vunpack.c.h.b16 %v8382
    %v9157 = vunpack.c.l.b16 %v8383
    %v9158 = vunpack.c.h.b16 %v8383
    %v9159 = vunpack.c.l.b16 %v8384
    %v9160 = vunpack.c.h.b16 %v8384
    %v9161 = vunpack.c.l.b16 %v8385
    %v9162 = vunpack.c.h.b16 %v8385
    %v9163 = vunpack.c.l.b16 %v8386
    %v9164 = vunpack.c.h.b16 %v8386
    %v9165 = vunpack.c.l.b16 %v8387
    %v9166 = vunpack.c.h.b16 %v8387
    %v9167 = vunpack.c.l.b16 %v8388
    %v9168 = vunpack.c.h.b16 %v8388
    %v9169 = vunpack.c.l.b16 %v8389
    %v9170 = vunpack.c.h.b16 %v8389
    %v9171 = vunpack.c.l.b16 %v8390
    %v9172 = vunpack.c.h.b16 %v8390
    %v9173 = vunpack.c.l.b16 %v8391
    %v9174 = vunpack.c.h.b16 %v8391
    %v9175 = vunpack.c.l.b16 %v8392
    %v9176 = vunpack.c.h.b16 %v8392
    %v9177 = vunpack.c.l.b16 %v8393
    %v9178 = vunpack.c.h.b16 %v8393
    %v9179 = vunpack.c.l.b16 %v8394
    %v9180 = vunpack.c.h.b16 %v8394
    %v9181 = vunpack.c.l.b16 %v8395
    %v9182 = vunpack.c.h.b16 %v8395
    %v9183 = vunpack.c.l.b16 %v8396
    %v9184 = vunpack.c.h.b16 %v8396
    %v9185 = vunpack.c.l.b16 %v8397
    %v9186 = vunpack.c.h.b16 %v8397
    %v9187 = vunpack.c.l.b16 %v8398
    %v9188 = vunpack.c.h.b16 %v8398
    %v9189 = vpack.c.b16 %v8681, %v8677
    %v9190 = vpack.c.b16 %v8682, %v8678
    %v9191 = vpack.c.b16 %v8683, %v8679
    %v9192 = vpack.c.b16 %v8684, %v8680
    %v9193 = vpack.c.b16 %v8689, %v8685
    %v9194 = vpack.c.b16 %v8690, %v8686
    %v9195 = vpack.c.b16 %v8691, %v8687
    %v9196 = vpack.c.b16 %v8692, %v8688
    %v9197 = vpack.c.b16 %v8697, %v8693
    %v9198 = vpack.c.b16 %v8698, %v8694
    %v9199 = vpack.c.b16 %v8699, %v8695
    %v9200 = vpack.c.b16 %v8700, %v8696
    %v9201 = vpack.c.b16 %v8705, %v8701
    %v9202 = vpack.c.b16 %v8706, %v8702
    %v9203 = vpack.c.b16 %v8707, %v8703
    %v9204 = vpack.c.b16 %v8708, %v8704
    %v9205 = vpack.c.b16 %v8713, %v8709
    %v9206 = vpack.c.b16 %v8714, %v8710
    %v9207 = vpack.c.b16 %v8715, %v8711
    %v9208 = vpack.c.b16 %v8716, %v8712
    %v9209 = vpack.c.b16 %v8721, %v8717
    %v9210 = vpack.c.b16 %v8722, %v8718
    %v9211 = vpack.c.b16 %v8723, %v8719
    %v9212 = vpack.c.b16 %v8724, %v8720
    %v9213 = vpack.c.b16 %v8729, %v8725
    %v9214 = vpack.c.b16 %v8730, %v8726
    %v9215 = vpack.c.b16 %v8731, %v8727
    %v9216 = vpack.c.b16 %v8732, %v8728
    %v9217 = vpack.c.b16 %v8737, %v8733
    %v9218 = vpack.c.b16 %v8738, %v8734
    %v9219 = vpack.c.b16 %v8739, %v8735
    %v9220 = vpack.c.b16 %v8740, %v8736
    %v9221 = vpack.c.b16 %v8745, %v8741
    %v9222 = vpack.c.b16 %v8746, %v8742
    %v9223 = vpack.c.b16 %v8747, %v8743
    %v9224 = vpack.c.b16 %v8748, %v8744
    %v9225 = vpack.c.b16 %v8753, %v8749
    %v9226 = vpack.c.b16 %v8754, %v8750
    %v9227 = vpack.c.b16 %v8755, %v8751
    %v9228 = vpack.c.b16 %v8756, %v8752
    %v9229 = vpack.c.b16 %v8761, %v8757
    %v9230 = vpack.c.b16 %v8762, %v8758
    %v9231 = vpack.c.b16 %v8763, %v8759
    %v9232 = vpack.c.b16 %v8764, %v8760
    %v9233 = vpack.c.b16 %v8769, %v8765
    %v9234 = vpack.c.b16 %v8770, %v8766
    %v9235 = vpack.c.b16 %v8771, %v8767
    %v9236 = vpack.c.b16 %v8772, %v8768
    %v9237 = vpack.c.b16 %v8777, %v8773
    %v9238 = vpack.c.b16 %v8778, %v8774
    %v9239 = vpack.c.b16 %v8779, %v8775
    %v9240 = vpack.c.b16 %v8780, %v8776
    %v9241 = vpack.c.b16 %v8785, %v8781
    %v9242 = vpack.c.b16 %v8786, %v8782
    %v9243 = vpack.c.b16 %v8787, %v8783
    %v9244 = vpack.c.b16 %v8788, %v8784
    %v9245 = vpack.c.b16 %v8793, %v8789
    %v9246 = vpack.c.b16 %v8794, %v8790
    %v9247 = vpack.c.b16 %v8795, %v8791
    %v9248 = vpack.c.b16 %v8796, %v8792
    %v9249 = vpack.c.b16 %v8801, %v8797
    %v9250 = vpack.c.b16 %v8802, %v8798
    %v9251 = vpack.c.b16 %v8803, %v8799
    %v9252 = vpack.c.b16 %v8804, %v8800
    %v9253 = vpack.c.b16 %v8809, %v8805
    %v9254 = vpack.c.b16 %v8810, %v8806
    %v9255 = vpack.c.b16 %v8811, %v8807
    %v9256 = vpack.c.b16 %v8812, %v8808
    %v9257 = vpack.c.b16 %v8817, %v8813
    %v9258 = vpack.c.b16 %v8818, %v8814
    %v9259 = vpack.c.b16 %v8819, %v8815
    %v9260 = vpack.c.b16 %v8820, %v8816
    %v9261 = vpack.c.b16 %v8825, %v8821
    %v9262 = vpack.c.b16 %v8826, %v8822
    %v9263 = vpack.c.b16 %v8827, %v8823
    %v9264 = vpack.c.b16 %v8828, %v8824
    %v9265 = vpack.c.b16 %v8833, %v8829
    %v9266 = vpack.c.b16 %v8834, %v8830
    %v9267 = vpack.c.b16 %v8835, %v8831
    %v9268 = vpack.c.b16 %v8836, %v8832
    %v9269 = vpack.c.b16 %v8841, %v8837
    %v9270 = vpack.c.b16 %v8842, %v8838
    %v9271 = vpack.c.b16 %v8843, %v8839
    %v9272 = vpack.c.b16 %v8844, %v8840
    %v9273 = vpack.c.b16 %v8849, %v8845
    %v9274 = vpack.c.b16 %v8850, %v8846
    %v9275 = vpack.c.b16 %v8851, %v8847
    %v9276 = vpack.c.b16 %v8852, %v8848
    %v9277 = vpack.c.b16 %v8857, %v8853
    %v9278 = vpack.c.b16 %v8858, %v8854
    %v9279 = vpack.c.b16 %v8859, %v8855
    %v9280 = vpack.c.b16 %v8860, %v8856
    %v9281 = vpack.c.b16 %v8865, %v8861
    %v9282 = vpack.c.b16 %v8866, %v8862
    %v9283 = vpack.c.b16 %v8867, %v8863
    %v9284 = vpack.c.b16 %v8868, %v8864
    %v9285 = vpack.c.b16 %v8873, %v8869
    %v9286 = vpack.c.b16 %v8874, %v8870
    %v9287 = vpack.c.b16 %v8875, %v8871
    %v9288 = vpack.c.b16 %v8876, %v8872
    %v9289 = vpack.c.b16 %v8881, %v8877
    %v9290 = vpack.c.b16 %v8882, %v8878
    %v9291 = vpack.c.b16 %v8883, %v8879
    %v9292 = vpack.c.b16 %v8884, %v8880
    %v9293 = vpack.c.b16 %v8889, %v8885
    %v9294 = vpack.c.b16 %v8890, %v8886
    %v9295 = vpack.c.b16 %v8891, %v8887
    %v9296 = vpack.c.b16 %v8892, %v8888
    %v9297 = vpack.c.b16 %v8897, %v8893
    %v9298 = vpack.c.b16 %v8898, %v8894
    %v9299 = vpack.c.b16 %v8899, %v8895
    %v9300 = vpack.c.b16 %v8900, %v8896
    %v9301 = vpack.c.b16 %v8905, %v8901
    %v9302 = vpack.c.b16 %v8906, %v8902
    %v9303 = vpack.c.b16 %v8907, %v8903
    %v9304 = vpack.c.b16 %v8908, %v8904
    %v9305 = vpack.c.b16 %v8913, %v8909
    %v9306 = vpack.c.b16 %v8914, %v8910
    %v9307 = vpack.c.b16 %v8915, %v8911
    %v9308 = vpack.c.b16 %v8916, %v8912
    %v9309 = vpack.c.b16 %v8921, %v8917
    %v9310 = vpack.c.b16 %v8922, %v8918
    %v9311 = vpack.c.b16 %v8923, %v8919
    %v9312 = vpack.c.b16 %v8924, %v8920
    %v9313 = vpack.c.b16 %v8929, %v8925
    %v9314 = vpack.c.b16 %v8930, %v8926
    %v9315 = vpack.c.b16 %v8931, %v8927
    %v9316 = vpack.c.b16 %v8932, %v8928
    %v9317 = vpack.c.b16 %v8937, %v8933
    %v9318 = vpack.c.b16 %v8938, %v8934
    %v9319 = vpack.c.b16 %v8939, %v8935
    %v9320 = vpack.c.b16 %v8940, %v8936
    %v9321 = vpack.c.b16 %v8945, %v8941
    %v9322 = vpack.c.b16 %v8946, %v8942
    %v9323 = vpack.c.b16 %v8947, %v8943
    %v9324 = vpack.c.b16 %v8948, %v8944
    %v9325 = vpack.c.b16 %v8953, %v8949
    %v9326 = vpack.c.b16 %v8954, %v8950
    %v9327 = vpack.c.b16 %v8955, %v8951
    %v9328 = vpack.c.b16 %v8956, %v8952
    %v9329 = vpack.c.b16 %v8961, %v8957
    %v9330 = vpack.c.b16 %v8962, %v8958
    %v9331 = vpack.c.b16 %v8963, %v8959
    %v9332 = vpack.c.b16 %v8964, %v8960
    %v9333 = vpack.c.b16 %v8969, %v8965
    %v9334 = vpack.c.b16 %v8970, %v8966
    %v9335 = vpack.c.b16 %v8971, %v8967
    %v9336 = vpack.c.b16 %v8972, %v8968
    %v9337 = vpack.c.b16 %v8977, %v8973
    %v9338 = vpack.c.b16 %v8978, %v8974
    %v9339 = vpack.c.b16 %v8979, %v8975
    %v9340 = vpack.c.b16 %v8980, %v8976
    %v9341 = vpack.c.b16 %v8985, %v8981
    %v9342 = vpack.c.b16 %v8986, %v8982
    %v9343 = vpack.c.b16 %v8987, %v8983
    %v9344 = vpack.c.b16 %v8988, %v8984
    %v9345 = vpack.c.b16 %v8993, %v8989
    %v9346 = vpack.c.b16 %v8994, %v8990
    %v9347 = vpack.c.b16 %v8995, %v8991
    %v9348 = vpack.c.b16 %v8996, %v8992
    %v9349 = vpack.c.b16 %v9001, %v8997
    %v9350 = vpack.c.b16 %v9002, %v8998
    %v9351 = vpack.c.b16 %v9003, %v8999
    %v9352 = vpack.c.b16 %v9004, %v9000
    %v9353 = vpack.c.b16 %v9009, %v9005
    %v9354 = vpack.c.b16 %v9010, %v9006
    %v9355 = vpack.c.b16 %v9011, %v9007
    %v9356 = vpack.c.b16 %v9012, %v9008
    %v9357 = vpack.c.b16 %v9017, %v9013
    %v9358 = vpack.c.b16 %v9018, %v9014
    %v9359 = vpack.c.b16 %v9019, %v9015
    %v9360 = vpack.c.b16 %v9020, %v9016
    %v9361 = vpack.c.b16 %v9025, %v9021
    %v9362 = vpack.c.b16 %v9026, %v9022
    %v9363 = vpack.c.b16 %v9027, %v9023
    %v9364 = vpack.c.b16 %v9028, %v9024
    %v9365 = vpack.c.b16 %v9033, %v9029
    %v9366 = vpack.c.b16 %v9034, %v9030
    %v9367 = vpack.c.b16 %v9035, %v9031
    %v9368 = vpack.c.b16 %v9036, %v9032
    %v9369 = vpack.c.b16 %v9041, %v9037
    %v9370 = vpack.c.b16 %v9042, %v9038
    %v9371 = vpack.c.b16 %v9043, %v9039
    %v9372 = vpack.c.b16 %v9044, %v9040
    %v9373 = vpack.c.b16 %v9049, %v9045
    %v9374 = vpack.c.b16 %v9050, %v9046
    %v9375 = vpack.c.b16 %v9051, %v9047
    %v9376 = vpack.c.b16 %v9052, %v9048
    %v9377 = vpack.c.b16 %v9057, %v9053
    %v9378 = vpack.c.b16 %v9058, %v9054
    %v9379 = vpack.c.b16 %v9059, %v9055
    %v9380 = vpack.c.b16 %v9060, %v9056
    %v9381 = vpack.c.b16 %v9065, %v9061
    %v9382 = vpack.c.b16 %v9066, %v9062
    %v9383 = vpack.c.b16 %v9067, %v9063
    %v9384 = vpack.c.b16 %v9068, %v9064
    %v9385 = vpack.c.b16 %v9073, %v9069
    %v9386 = vpack.c.b16 %v9074, %v9070
    %v9387 = vpack.c.b16 %v9075, %v9071
    %v9388 = vpack.c.b16 %v9076, %v9072
    %v9389 = vpack.c.b16 %v9081, %v9077
    %v9390 = vpack.c.b16 %v9082, %v9078
    %v9391 = vpack.c.b16 %v9083, %v9079
    %v9392 = vpack.c.b16 %v9084, %v9080
    %v9393 = vpack.c.b16 %v9089, %v9085
    %v9394 = vpack.c.b16 %v9090, %v9086
    %v9395 = vpack.c.b16 %v9091, %v9087
    %v9396 = vpack.c.b16 %v9092, %v9088
    %v9397 = vpack.c.b16 %v9097, %v9093
    %v9398 = vpack.c.b16 %v9098, %v9094
    %v9399 = vpack.c.b16 %v9099, %v9095
    %v9400 = vpack.c.b16 %v9100, %v9096
    %v9401 = vpack.c.b16 %v9105, %v9101
    %v9402 = vpack.c.b16 %v9106, %v9102
    %v9403 = vpack.c.b16 %v9107, %v9103
    %v9404 = vpack.c.b16 %v9108, %v9104
    %v9405 = vpack.c.b16 %v9113, %v9109
    %v9406 = vpack.c.b16 %v9114, %v9110
    %v9407 = vpack.c.b16 %v9115, %v9111
    %v9408 = vpack.c.b16 %v9116, %v9112
    %v9409 = vpack.c.b16 %v9121, %v9117
    %v9410 = vpack.c.b16 %v9122, %v9118
    %v9411 = vpack.c.b16 %v9123, %v9119
    %v9412 = vpack.c.b16 %v9124, %v9120
    %v9413 = vpack.c.b16 %v9129, %v9125
    %v9414 = vpack.c.b16 %v9130, %v9126
    %v9415 = vpack.c.b16 %v9131, %v9127
    %v9416 = vpack.c.b16 %v9132, %v9128
    %v9417 = vpack.c.b16 %v9137, %v9133
    %v9418 = vpack.c.b16 %v9138, %v9134
    %v9419 = vpack.c.b16 %v9139, %v9135
    %v9420 = vpack.c.b16 %v9140, %v9136
    %v9421 = vpack.c.b16 %v9145, %v9141
    %v9422 = vpack.c.b16 %v9146, %v9142
    %v9423 = vpack.c.b16 %v9147, %v9143
    %v9424 = vpack.c.b16 %v9148, %v9144
    %v9425 = vpack.c.b16 %v9153, %v9149
    %v9426 = vpack.c.b16 %v9154, %v9150
    %v9427 = vpack.c.b16 %v9155, %v9151
    %v9428 = vpack.c.b16 %v9156, %v9152
    %v9429 = vpack.c.b16 %v9161, %v9157
    %v9430 = vpack.c.b16 %v9162, %v9158
    %v9431 = vpack.c.b16 %v9163, %v9159
    %v9432 = vpack.c.b16 %v9164, %v9160
    %v9433 = vpack.c.b16 %v9169, %v9165
    %v9434 = vpack.c.b16 %v9170, %v9166
    %v9435 = vpack.c.b16 %v9171, %v9167
    %v9436 = vpack.c.b16 %v9172, %v9168
    %v9437 = vpack.c.b16 %v9177, %v9173
    %v9438 = vpack.c.b16 %v9178, %v9174
    %v9439 = vpack.c.b16 %v9179, %v9175
    %v9440 = vpack.c.b16 %v9180, %v9176
    %v9441 = vpack.c.b16 %v9185, %v9181
    %v9442 = vpack.c.b16 %v9186, %v9182
    %v9443 = vpack.c.b16 %v9187, %v9183
    %v9444 = vpack.c.b16 %v9188, %v9184
    %9701 = vmatprep.subr.bf16.mxu0 %v9190
    %9702 = vmatpush1.bf16.msra.mxu0 %v9189
    %9703 = vmatprep.subr.bf16.mxu0 %v9194
    %9704 = vmatpush1.bf16.msra.mxu0 %v9193
    %9705 = vmatprep.subr.bf16.mxu0 %v9198
    %9706 = vmatpush1.bf16.msra.mxu0 %v9197
    %9707 = vmatprep.subr.bf16.mxu0 %v9202
    %9708 = vmatpush1.bf16.msra.mxu0 %v9201
    %9709 = vmatprep.subr.bf16.mxu0 %v9206
    %9710 = vmatpush1.bf16.msra.mxu0 %v9205
    %9711 = vmatprep.subr.bf16.mxu0 %v9210
    %9712 = vmatpush1.bf16.msra.mxu0 %v9209
    %9713 = vmatprep.subr.bf16.mxu0 %v9214
    %9714 = vmatpush1.bf16.msra.mxu0 %v9213
    %9715 = vmatprep.subr.bf16.mxu0 %v9218
    %9716 = vmatpush1.bf16.msra.mxu0 %v9217
    %9717 = vmatprep.subr.bf16.mxu0 %v9222
    %9718 = vmatpush1.bf16.msra.mxu0 %v9221
    %9719 = vmatprep.subr.bf16.mxu0 %v9226
    %9720 = vmatpush1.bf16.msra.mxu0 %v9225
    %9721 = vmatprep.subr.bf16.mxu0 %v9230
    %9722 = vmatpush1.bf16.msra.mxu0 %v9229
    %9723 = vmatprep.subr.bf16.mxu0 %v9234
    %9724 = vmatpush1.bf16.msra.mxu0 %v9233
    %9725 = vmatprep.subr.bf16.mxu0 %v9238
    %9726 = vmatpush1.bf16.msra.mxu0 %v9237
    %9727 = vmatprep.subr.bf16.mxu0 %v9242
    %9728 = vmatpush1.bf16.msra.mxu0 %v9241
    %9729 = vmatprep.subr.bf16.mxu0 %v9246
    %9730 = vmatpush1.bf16.msra.mxu0 %v9245
    %9731 = vmatprep.subr.bf16.mxu0 %v9250
    %9732 = vmatpush1.bf16.msra.mxu0 %v9249
    %9733 = vmatprep.mubr.bf16.mxu0 %v8128
    %9734 = vmatmul.mubr.bf16.gmra.mrb[0].mxu0 %v8127
    %v9735 = vpop.f32.mrb[0].mxu0
    %v9736 = vadd.f32 %v8404, %v9735
    %v9737 = vpop.f32.mrb[0].mxu0
    %v9738 = vadd.f32 %v8408, %v9737
    %v9739 = vpop.f32.mrb[0].mxu0
    %v9740 = vadd.f32 %v8404, %v9739
    %v9741 = vpop.f32.mrb[0].mxu0
    %v9742 = vadd.f32 %v8408, %v9741
    %9743 = vmatprep.mubr.bf16.mxu0 %v8136
    %9744 = vmatmul.mubr.bf16.gmra.mrb[0].mxu0 %v8135
    %v9745 = vpop.f32.mrb[0].mxu0
    %v9746 = vadd.f32 %v8404, %v9745
    %v9747 = vpop.f32.mrb[0].mxu0
    %v9748 = vadd.f32 %v8408, %v9747
    %v9749 = vpop.f32.mrb[0].mxu0
    %v9750 = vadd.f32 %v8404, %v9749
    %v9751 = vpop.f32.mrb[0].mxu0
    %v9752 = vadd.f32 %v8408, %v9751
    %9753 = vdwg.mxu0
    %9754 = vmatprep.subr.bf16.mxu0 %v9254
    %9755 = vmatpush1.bf16.msra.mxu0 %v9253
    %9756 = vmatprep.subr.bf16.mxu0 %v9258
    %9757 = vmatpush1.bf16.msra.mxu0 %v9257
    %9758 = vmatprep.subr.bf16.mxu0 %v9262
    %9759 = vmatpush1.bf16.msra.mxu0 %v9261
    %9760 = vmatprep.subr.bf16.mxu0 %v9266
    %9761 = vmatpush1.bf16.msra.mxu0 %v9265
    %9762 = vmatprep.subr.bf16.mxu0 %v9270
    %9763 = vmatpush1.bf16.msra.mxu0 %v9269
    %9764 = vmatprep.subr.bf16.mxu0 %v9274
    %9765 = vmatpush1.bf16.msra.mxu0 %v9273
    %9766 = vmatprep.subr.bf16.mxu0 %v9278
    %9767 = vmatpush1.bf16.msra.mxu0 %v9277
    %9768 = vmatprep.subr.bf16.mxu0 %v9282
    %9769 = vmatpush1.bf16.msra.mxu0 %v9281
    %9770 = vmatprep.subr.bf16.mxu0 %v9286
    %9771 = vmatpush1.bf16.msra.mxu0 %v9285
    %9772 = vmatprep.subr.bf16.mxu0 %v9290
    %9773 = vmatpush1.bf16.msra.mxu0 %v9289
    %9774 = vmatprep.subr.bf16.mxu0 %v9294
    %9775 = vmatpush1.bf16.msra.mxu0 %v9293
    %9776 = vmatprep.subr.bf16.mxu0 %v9298
    %9777 = vmatpush1.bf16.msra.mxu0 %v9297
    %9778 = vmatprep.subr.bf16.mxu0 %v9302
    %9779 = vmatpush1.bf16.msra.mxu0 %v9301
    %9780 = vmatprep.subr.bf16.mxu0 %v9306
    %9781 = vmatpush1.bf16.msra.mxu0 %v9305
    %9782 = vmatprep.subr.bf16.mxu0 %v9310
    %9783 = vmatpush1.bf16.msra.mxu0 %v9309
    %9784 = vmatprep.subr.bf16.mxu0 %v9314
    %9785 = vmatpush1.bf16.msra.mxu0 %v9313
    %9786 = vmatprep.mubr.bf16.mxu0 %v8130
    %9787 = vmatmul.mubr.bf16.gmra.mrb[0].mxu0 %v8129
    %v9788 = vpop.f32.mrb[0].mxu0
    %v9789 = vadd.f32 %v9736, %v9788
    %v9790 = vpop.f32.mrb[0].mxu0
    %v9791 = vadd.f32 %v9738, %v9790
    %v9792 = vpop.f32.mrb[0].mxu0
    %v9793 = vadd.f32 %v9740, %v9792
    %v9794 = vpop.f32.mrb[0].mxu0
    %v9795 = vadd.f32 %v9742, %v9794
    %9796 = vmatprep.mubr.bf16.mxu0 %v8138
    %9797 = vmatmul.mubr.bf16.gmra.mrb[0].mxu0 %v8137
    %v9798 = vpop.f32.mrb[0].mxu0
    %v9799 = vadd.f32 %v9746, %v9798
    %v9800 = vpop.f32.mrb[0].mxu0
    %v9801 = vadd.f32 %v9748, %v9800
    %v9802 = vpop.f32.mrb[0].mxu0
    %v9803 = vadd.f32 %v9750, %v9802
    %v9804 = vpop.f32.mrb[0].mxu0
    %v9805 = vadd.f32 %v9752, %v9804
    %9806 = vdwg.mxu0
    %9807 = vmatprep.subr.bf16.mxu0 %v9318
    %9808 = vmatpush1.bf16.msra.mxu0 %v9317
    %9809 = vmatprep.subr.bf16.mxu0 %v9322
    %9810 = vmatpush1.bf16.msra.mxu0 %v9321
    %9811 = vmatprep.subr.bf16.mxu0 %v9326
    %9812 = vmatpush1.bf16.msra.mxu0 %v9325
    %9813 = vmatprep.subr.bf16.mxu0 %v9330
    %9814 = vmatpush1.bf16.msra.mxu0 %v9329
    %9815 = vmatprep.subr.bf16.mxu0 %v9334
    %9816 = vmatpush1.bf16.msra.mxu0 %v9333
    %9817 = vmatprep.subr.bf16.mxu0 %v9338
    %9818 = vmatpush1.bf16.msra.mxu0 %v9337
    %9819 = vmatprep.subr.bf16.mxu0 %v9342
    %9820 = vmatpush1.bf16.msra.mxu0 %v9341
    %9821 = vmatprep.subr.bf16.mxu0 %v9346
    %9822 = vmatpush1.bf16.msra.mxu0 %v9345
    %9823 = vmatprep.subr.bf16.mxu0 %v9350
    %9824 = vmatpush1.bf16.msra.mxu0 %v9349
    %9825 = vmatprep.subr.bf16.mxu0 %v9354
    %9826 = vmatpush1.bf16.msra.mxu0 %v9353
    %9827 = vmatprep.subr.bf16.mxu0 %v9358
    %9828 = vmatpush1.bf16.msra.mxu0 %v9357
    %9829 = vmatprep.subr.bf16.mxu0 %v9362
    %9830 = vmatpush1.bf16.msra.mxu0 %v9361
    %9831 = vmatprep.subr.bf16.mxu0 %v9366
    %9832 = vmatpush1.bf16.msra.mxu0 %v9365
    %9833 = vmatprep.subr.bf16.mxu0 %v9370
    %9834 = vmatpush1.bf16.msra.mxu0 %v9369
    %9835 = vmatprep.subr.bf16.mxu0 %v9374
    %9836 = vmatpush1.bf16.msra.mxu0 %v9373
    %9837 = vmatprep.subr.bf16.mxu0 %v9378
    %9838 = vmatpush1.bf16.msra.mxu0 %v9377
    %9839 = vmatprep.mubr.bf16.mxu0 %v8132
    %9840 = vmatmul.mubr.bf16.gmra.mrb[0].mxu0 %v8131
    %v9841 = vpop.f32.mrb[0].mxu0
    %v9842 = vadd.f32 %v9789, %v9841
    %v9843 = vpop.f32.mrb[0].mxu0
    %v9844 = vadd.f32 %v9791, %v9843
    %v9845 = vpop.f32.mrb[0].mxu0
    %v9846 = vadd.f32 %v9793, %v9845
    %v9847 = vpop.f32.mrb[0].mxu0
    %v9848 = vadd.f32 %v9795, %v9847
    %9849 = vmatprep.mubr.bf16.mxu0 %v8140
    %9850 = vmatmul.mubr.bf16.gmra.mrb[0].mxu0 %v8139
    %v9851 = vpop.f32.mrb[0].mxu0
    %v9852 = vadd.f32 %v9799, %v9851
    %v9853 = vpop.f32.mrb[0].mxu0
    %v9854 = vadd.f32 %v9801, %v9853
    %v9855 = vpop.f32.mrb[0].mxu0
    %v9856 = vadd.f32 %v9803, %v9855
    %v9857 = vpop.f32.mrb[0].mxu0
    %v9858 = vadd.f32 %v9805, %v9857
    %9859 = vdwg.mxu0
    %9860 = vmatprep.subr.bf16.mxu0 %v9382
    %9861 = vmatpush1.bf16.msra.mxu0 %v9381
    %9862 = vmatprep.subr.bf16.mxu0 %v9386
    %9863 = vmatpush1.bf16.msra.mxu0 %v9385
    %9864 = vmatprep.subr.bf16.mxu0 %v9390
    %9865 = vmatpush1.bf16.msra.mxu0 %v9389
    %9866 = vmatprep.subr.bf16.mxu0 %v9394
    %9867 = vmatpush1.bf16.msra.mxu0 %v9393
    %9868 = vmatprep.subr.bf16.mxu0 %v9398
    %9869 = vmatpush1.bf16.msra.mxu0 %v9397
    %9870 = vmatprep.subr.bf16.mxu0 %v9402
    %9871 = vmatpush1.bf16.msra.mxu0 %v9401
    %9872 = vmatprep.subr.bf16.mxu0 %v9406
    %9873 = vmatpush1.bf16.msra.mxu0 %v9405
    %9874 = vmatprep.subr.bf16.mxu0 %v9410
    %9875 = vmatpush1.bf16.msra.mxu0 %v9409
    %9876 = vmatprep.subr.bf16.mxu0 %v9414
    %9877 = vmatpush1.bf16.msra.mxu0 %v9413
    %9878 = vmatprep.subr.bf16.mxu0 %v9418
    %9879 = vmatpush1.bf16.msra.mxu0 %v9417
    %9880 = vmatprep.subr.bf16.mxu0 %v9422
    %9881 = vmatpush1.bf16.msra.mxu0 %v9421
    %9882 = vmatprep.subr.bf16.mxu0 %v9426
    %9883 = vmatpush1.bf16.msra.mxu0 %v9425
    %9884 = vmatprep.subr.bf16.mxu0 %v9430
    %9885 = vmatpush1.bf16.msra.mxu0 %v9429
    %9886 = vmatprep.subr.bf16.mxu0 %v9434
    %9887 = vmatpush1.bf16.msra.mxu0 %v9433
    %9888 = vmatprep.subr.bf16.mxu0 %v9438
    %9889 = vmatpush1.bf16.msra.mxu0 %v9437
    %9890 = vmatprep.subr.bf16.mxu0 %v9442
    %9891 = vmatpush1.bf16.msra.mxu0 %v9441
    %9892 = vmatprep.mubr.bf16.mxu0 %v8134
    %9893 = vmatmul.mubr.bf16.gmra.mrb[0].mxu0 %v8133
    %v9894 = vpop.f32.mrb[0].mxu0
    %v9895 = vadd.f32 %v9842, %v9894
    %v9896 = vpop.f32.mrb[0].mxu0
    %v9897 = vadd.f32 %v9844, %v9896
    %v9898 = vpop.f32.mrb[0].mxu0
    %v9899 = vadd.f32 %v9846, %v9898
    %v9900 = vpop.f32.mrb[0].mxu0
    %v9901 = vadd.f32 %v9848, %v9900
    %9902 = vmatprep.mubr.bf16.mxu0 %v8142
    %9903 = vmatmul.mubr.bf16.gmra.mrb[0].mxu0 %v8141
    %v9904 = vpop.f32.mrb[0].mxu0
    %v9905 = vadd.f32 %v9852, %v9904
    %v9906 = vpop.f32.mrb[0].mxu0
    %v9907 = vadd.f32 %v9854, %v9906
    %v9908 = vpop.f32.mrb[0].mxu0
    %v9909 = vadd.f32 %v9856, %v9908
    %v9910 = vpop.f32.mrb[0].mxu0
    %v9911 = vadd.f32 %v9858, %v9910
    %9912 = vdwg.mxu0
    %9913 = vmatprep.subr.bf16.mxu0 %v9192
    %9914 = vmatpush1.bf16.msra.mxu0 %v9191
    %9915 = vmatprep.subr.bf16.mxu0 %v9196
    %9916 = vmatpush1.bf16.msra.mxu0 %v9195
    %9917 = vmatprep.subr.bf16.mxu0 %v9200
    %9918 = vmatpush1.bf16.msra.mxu0 %v9199
    %9919 = vmatprep.subr.bf16.mxu0 %v9204
    %9920 = vmatpush1.bf16.msra.mxu0 %v9203
    %9921 = vmatprep.subr.bf16.mxu0 %v9208
    %9922 = vmatpush1.bf16.msra.mxu0 %v9207
    %9923 = vmatprep.subr.bf16.mxu0 %v9212
    %9924 = vmatpush1.bf16.msra.mxu0 %v9211
    %9925 = vmatprep.subr.bf16.mxu0 %v9216
    %9926 = vmatpush1.bf16.msra.mxu0 %v9215
    %9927 = vmatprep.subr.bf16.mxu0 %v9220
    %9928 = vmatpush1.bf16.msra.mxu0 %v9219
    %9929 = vmatprep.subr.bf16.mxu0 %v9224
    %9930 = vmatpush1.bf16.msra.mxu0 %v9223
    %9931 = vmatprep.subr.bf16.mxu0 %v9228
    %9932 = vmatpush1.bf16.msra.mxu0 %v9227
    %9933 = vmatprep.subr.bf16.mxu0 %v9232
    %9934 = vmatpush1.bf16.msra.mxu0 %v9231
    %9935 = vmatprep.subr.bf16.mxu0 %v9236
    %9936 = vmatpush1.bf16.msra.mxu0 %v9235
    %9937 = vmatprep.subr.bf16.mxu0 %v9240
    %9938 = vmatpush1.bf16.msra.mxu0 %v9239
    %9939 = vmatprep.subr.bf16.mxu0 %v9244
    %9940 = vmatpush1.bf16.msra.mxu0 %v9243
    %9941 = vmatprep.subr.bf16.mxu0 %v9248
    %9942 = vmatpush1.bf16.msra.mxu0 %v9247
    %9943 = vmatprep.subr.bf16.mxu0 %v9252
    %9944 = vmatpush1.bf16.msra.mxu0 %v9251
    %9945 = vmatprep.mubr.bf16.mxu0 %v8128
    %9946 = vmatmul.mubr.bf16.gmra.mrb[0].mxu0 %v8127
    %v9947 = vpop.f32.mrb[0].mxu0
    %v9948 = vadd.f32 %v8412, %v9947
    %v9949 = vpop.f32.mrb[0].mxu0
    %v9950 = vadd.f32 %v8416, %v9949
    %v9951 = vpop.f32.mrb[0].mxu0
    %v9952 = vadd.f32 %v8412, %v9951
    %v9953 = vpop.f32.mrb[0].mxu0
    %v9954 = vadd.f32 %v8416, %v9953
    %9955 = vmatprep.mubr.bf16.mxu0 %v8136
    %9956 = vmatmul.mubr.bf16.gmra.mrb[0].mxu0 %v8135
    %v9957 = vpop.f32.mrb[0].mxu0
    %v9958 = vadd.f32 %v8412, %v9957
    %v9959 = vpop.f32.mrb[0].mxu0
    %v9960 = vadd.f32 %v8416, %v9959
    %v9961 = vpop.f32.mrb[0].mxu0
    %v9962 = vadd.f32 %v8412, %v9961
    %v9963 = vpop.f32.mrb[0].mxu0
    %v9964 = vadd.f32 %v8416, %v9963
    %9965 = vdwg.mxu0
    %9966 = vmatprep.subr.bf16.mxu0 %v9256
    %9967 = vmatpush1.bf16.msra.mxu0 %v9255
    %9968 = vmatprep.subr.bf16.mxu0 %v9260
    %9969 = vmatpush1.bf16.msra.mxu0 %v9259
    %9970 = vmatprep.subr.bf16.mxu0 %v9264
    %9971 = vmatpush1.bf16.msra.mxu0 %v9263
    %9972 = vmatprep.subr.bf16.mxu0 %v9268
    %9973 = vmatpush1.bf16.msra.mxu0 %v9267
    %9974 = vmatprep.subr.bf16.mxu0 %v9272
    %9975 = vmatpush1.bf16.msra.mxu0 %v9271
    %9976 = vmatprep.subr.bf16.mxu0 %v9276
    %9977 = vmatpush1.bf16.msra.mxu0 %v9275
    %9978 = vmatprep.subr.bf16.mxu0 %v9280
    %9979 = vmatpush1.bf16.msra.mxu0 %v9279
    %9980 = vmatprep.subr.bf16.mxu0 %v9284
    %9981 = vmatpush1.bf16.msra.mxu0 %v9283
    %9982 = vmatprep.subr.bf16.mxu0 %v9288
    %9983 = vmatpush1.bf16.msra.mxu0 %v9287
    %9984 = vmatprep.subr.bf16.mxu0 %v9292
    %9985 = vmatpush1.bf16.msra.mxu0 %v9291
    %9986 = vmatprep.subr.bf16.mxu0 %v9296
    %9987 = vmatpush1.bf16.msra.mxu0 %v9295
    %9988 = vmatprep.subr.bf16.mxu0 %v9300
    %9989 = vmatpush1.bf16.msra.mxu0 %v9299
    %9990 = vmatprep.subr.bf16.mxu0 %v9304
    %9991 = vmatpush1.bf16.msra.mxu0 %v9303
    %9992 = vmatprep.subr.bf16.mxu0 %v9308
    %9993 = vmatpush1.bf16.msra.mxu0 %v9307
    %9994 = vmatprep.subr.bf16.mxu0 %v9312
    %9995 = vmatpush1.bf16.msra.mxu0 %v9311
    %9996 = vmatprep.subr.bf16.mxu0 %v9316
    %9997 = vmatpush1.bf16.msra.mxu0 %v9315
    %9998 = vmatprep.mubr.bf16.mxu0 %v8130
    %9999 = vmatmul.mubr.bf16.gmra.mrb[0].mxu0 %v8129
    %v10000 = vpop.f32.mrb[0].mxu0
    %v10001 = vadd.f32 %v9948, %v10000
    %v10002 = vpop.f32.mrb[0].mxu0
    %v10003 = vadd.f32 %v9950, %v10002
    %v10004 = vpop.f32.mrb[0].mxu0
    %v10005 = vadd.f32 %v9952, %v10004
    %v10006 = vpop.f32.mrb[0].mxu0
    %v10007 = vadd.f32 %v9954, %v10006
    %10008 = vmatprep.mubr.bf16.mxu0 %v8138
    %10009 = vmatmul.mubr.bf16.gmra.mrb[0].mxu0 %v8137
    %v10010 = vpop.f32.mrb[0].mxu0
    %v10011 = vadd.f32 %v9958, %v10010
    %v10012 = vpop.f32.mrb[0].mxu0
    %v10013 = vadd.f32 %v9960, %v10012
    %v10014 = vpop.f32.mrb[0].mxu0
    %v10015 = vadd.f32 %v9962, %v10014
    %v10016 = vpop.f32.mrb[0].mxu0
    %v10017 = vadd.f32 %v9964, %v10016
    %10018 = vdwg.mxu0
    %10019 = vmatprep.subr.bf16.mxu0 %v9320
    %10020 = vmatpush1.bf16.msra.mxu0 %v9319
    %10021 = vmatprep.subr.bf16.mxu0 %v9324
    %10022 = vmatpush1.bf16.msra.mxu0 %v9323
    %10023 = vmatprep.subr.bf16.mxu0 %v9328
    %10024 = vmatpush1.bf16.msra.mxu0 %v9327
    %10025 = vmatprep.subr.bf16.mxu0 %v9332
    %10026 = vmatpush1.bf16.msra.mxu0 %v9331
    %10027 = vmatprep.subr.bf16.mxu0 %v9336
    %10028 = vmatpush1.bf16.msra.mxu0 %v9335
    %10029 = vmatprep.subr.bf16.mxu0 %v9340
    %10030 = vmatpush1.bf16.msra.mxu0 %v9339
    %10031 = vmatprep.subr.bf16.mxu0 %v9344
    %10032 = vmatpush1.bf16.msra.mxu0 %v9343
    %10033 = vmatprep.subr.bf16.mxu0 %v9348
    %10034 = vmatpush1.bf16.msra.mxu0 %v9347
    %10035 = vmatprep.subr.bf16.mxu0 %v9352
    %10036 = vmatpush1.bf16.msra.mxu0 %v9351
    %10037 = vmatprep.subr.bf16.mxu0 %v9356
    %10038 = vmatpush1.bf16.msra.mxu0 %v9355
    %10039 = vmatprep.subr.bf16.mxu0 %v9360
    %10040 = vmatpush1.bf16.msra.mxu0 %v9359
    %10041 = vmatprep.subr.bf16.mxu0 %v9364
    %10042 = vmatpush1.bf16.msra.mxu0 %v9363
    %10043 = vmatprep.subr.bf16.mxu0 %v9368
    %10044 = vmatpush1.bf16.msra.mxu0 %v9367
    %10045 = vmatprep.subr.bf16.mxu0 %v9372
    %10046 = vmatpush1.bf16.msra.mxu0 %v9371
    %10047 = vmatprep.subr.bf16.mxu0 %v9376
    %10048 = vmatpush1.bf16.msra.mxu0 %v9375
    %10049 = vmatprep.subr.bf16.mxu0 %v9380
    %10050 = vmatpush1.bf16.msra.mxu0 %v9379
    %10051 = vmatprep.mubr.bf16.mxu0 %v8132
    %10052 = vmatmul.mubr.bf16.gmra.mrb[0].mxu0 %v8131
    %v10053 = vpop.f32.mrb[0].mxu0
    %v10054 = vadd.f32 %v10001, %v10053
    %v10055 = vpop.f32.mrb[0].mxu0
    %v10056 = vadd.f32 %v10003, %v10055
    %v10057 = vpop.f32.mrb[0].mxu0
    %v10058 = vadd.f32 %v10005, %v10057
    %v10059 = vpop.f32.mrb[0].mxu0
    %v10060 = vadd.f32 %v10007, %v10059
    %10061 = vmatprep.mubr.bf16.mxu0 %v8140
    %10062 = vmatmul.mubr.bf16.gmra.mrb[0].mxu0 %v8139
    %v10063 = vpop.f32.mrb[0].mxu0
    %v10064 = vadd.f32 %v10011, %v10063
    %v10065 = vpop.f32.mrb[0].mxu0
    %v10066 = vadd.f32 %v10013, %v10065
    %v10067 = vpop.f32.mrb[0].mxu0
    %v10068 = vadd.f32 %v10015, %v10067
    %v10069 = vpop.f32.mrb[0].mxu0
    %v10070 = vadd.f32 %v10017, %v10069
    %10071 = vdwg.mxu0
    %10072 = vmatprep.subr.bf16.mxu0 %v9384
    %10073 = vmatpush1.bf16.msra.mxu0 %v9383
    %10074 = vmatprep.subr.bf16.mxu0 %v9388
    %10075 = vmatpush1.bf16.msra.mxu0 %v9387
    %10076 = vmatprep.subr.bf16.mxu0 %v9392
    %10077 = vmatpush1.bf16.msra.mxu0 %v9391
    %10078 = vmatprep.subr.bf16.mxu0 %v9396
    %10079 = vmatpush1.bf16.msra.mxu0 %v9395
    %10080 = vmatprep.subr.bf16.mxu0 %v9400
    %10081 = vmatpush1.bf16.msra.mxu0 %v9399
    %10082 = vmatprep.subr.bf16.mxu0 %v9404
    %10083 = vmatpush1.bf16.msra.mxu0 %v9403
    %10084 = vmatprep.subr.bf16.mxu0 %v9408
    %10085 = vmatpush1.bf16.msra.mxu0 %v9407
    %10086 = vmatprep.subr.bf16.mxu0 %v9412
    %10087 = vmatpush1.bf16.msra.mxu0 %v9411
    %10088 = vmatprep.subr.bf16.mxu0 %v9416
    %10089 = vmatpush1.bf16.msra.mxu0 %v9415
    %10090 = vmatprep.subr.bf16.mxu0 %v9420
    %10091 = vmatpush1.bf16.msra.mxu0 %v9419
    %10092 = vmatprep.subr.bf16.mxu0 %v9424
    %10093 = vmatpush1.bf16.msra.mxu0 %v9423
    %10094 = vmatprep.subr.bf16.mxu0 %v9428
    %10095 = vmatpush1.bf16.msra.mxu0 %v9427
    %10096 = vmatprep.subr.bf16.mxu0 %v9432
    %10097 = vmatpush1.bf16.msra.mxu0 %v9431
    %10098 = vmatprep.subr.bf16.mxu0 %v9436
    %10099 = vmatpush1.bf16.msra.mxu0 %v9435
    %10100 = vmatprep.subr.bf16.mxu0 %v9440
    %10101 = vmatpush1.bf16.msra.mxu0 %v9439
    %10102 = vmatprep.subr.bf16.mxu0 %v9444
    %10103 = vmatpush1.bf16.msra.mxu0 %v9443
    %10104 = vmatprep.mubr.bf16.mxu0 %v8134
    %10105 = vmatmul.mubr.bf16.gmra.mrb[0].mxu0 %v8133
    %v10106 = vpop.f32.mrb[0].mxu0
    %v10107 = vadd.f32 %v10054, %v10106
    %v10108 = vpop.f32.mrb[0].mxu0
    %v10109 = vadd.f32 %v10056, %v10108
    %v10110 = vpop.f32.mrb[0].mxu0
    %v10111 = vadd.f32 %v10058, %v10110
    %v10112 = vpop.f32.mrb[0].mxu0
    %v10113 = vadd.f32 %v10060, %v10112
    %10114 = vmatprep.mubr.bf16.mxu0 %v8142
    %10115 = vmatmul.mubr.bf16.gmra.mrb[0].mxu0 %v8141
    %v10116 = vpop.f32.mrb[0].mxu0
    %v10117 = vadd.f32 %v10064, %v10116
    %v10118 = vpop.f32.mrb[0].mxu0
    %v10119 = vadd.f32 %v10066, %v10118
    %v10120 = vpop.f32.mrb[0].mxu0
    %v10121 = vadd.f32 %v10068, %v10120
    %v10122 = vpop.f32.mrb[0].mxu0
    %v10123 = vadd.f32 %v10070, %v10122
    %10124 = vdwg.mxu0
    %v10125 = vmax.f32 %v9895, 0.0
    %v10126 = vmax.f32 %v9897, 0.0
    %v10127 = vmax.f32 %v10107, 0.0
    %v10128 = vmax.f32 %v10109, 0.0
    %v10129 = vmax.f32 %v9899, 0.0
    %v10130 = vmax.f32 %v9901, 0.0
    %v10131 = vmax.f32 %v10111, 0.0
    %v10132 = vmax.f32 %v10113, 0.0
    %v10133 = vmax.f32 %v9905, 0.0
    %v10134 = vmax.f32 %v9907, 0.0
    %v10135 = vmax.f32 %v10117, 0.0
    %v10136 = vmax.f32 %v10119, 0.0
    %v10137 = vmax.f32 %v9909, 0.0
    %v10138 = vmax.f32 %v9911, 0.0
    %v10139 = vmax.f32 %v10121, 0.0
    %v10140 = vmax.f32 %v10123, 0.0
    %v10141 = vpack.c.bf16 %v10129, %v10125
    %v10142 = vpack.c.bf16 %v10130, %v10126
    %v10143 = vpack.c.bf16 %v10131, %v10127
    %v10144 = vpack.c.bf16 %v10132, %v10128
    %v10145 = vpack.c.bf16 %v10137, %v10133
    %v10146 = vpack.c.bf16 %v10138, %v10134
    %v10147 = vpack.c.bf16 %v10139, %v10135
    %v10148 = vpack.c.bf16 %v10140, %v10136
    %v10149 = vld [vmem:[#allocation11] sm:$0xf]
    %v10150 = vld [vmem:[#allocation11 + $0x4] sm:$0xf]
    %v10151 = vld [vmem:[#allocation11 + $0x8] sm:$0xf]
    %v10152 = vld [vmem:[#allocation11 + $0xc] sm:$0xf]
    %v10153 = vld [vmem:[#allocation11 + $0x10] sm:$0xf]
    %v10154 = vld [vmem:[#allocation11 + $0x14] sm:$0xf]
    %v10155 = vld [vmem:[#allocation11 + $0x18] sm:$0xf]
    %v10156 = vld [vmem:[#allocation11 + $0x1c] sm:$0xf]
    %v10157 = vld [vmem:[#allocation11 + $0x20] sm:$0xf]
    %v10158 = vld [vmem:[#allocation11 + $0x24] sm:$0xf]
    %v10159 = vld [vmem:[#allocation11 + $0x28] sm:$0xf]
    %v10160 = vld [vmem:[#allocation11 + $0x2c] sm:$0xf]
    %v10161 = vld [vmem:[#allocation11 + $0x30] sm:$0xf]
    %v10162 = vld [vmem:[#allocation11 + $0x34] sm:$0xf]
    %v10163 = vld [vmem:[#allocation11 + $0x38] sm:$0xf]
    %v10164 = vld [vmem:[#allocation11 + $0x3c] sm:$0xf]
    %v10165 = vld [vmem:[#allocation11 + $0x40] sm:$0xf]
    %v10166 = vld [vmem:[#allocation11 + $0x44] sm:$0xf]
    %v10167 = vld [vmem:[#allocation11 + $0x48] sm:$0xf]
    %v10168 = vld [vmem:[#allocation11 + $0x4c] sm:$0xf]
    %v10169 = vld [vmem:[#allocation11 + $0x50] sm:$0xf]
    %v10170 = vld [vmem:[#allocation11 + $0x54] sm:$0xf]
    %v10171 = vld [vmem:[#allocation11 + $0x58] sm:$0xf]
    %v10172 = vld [vmem:[#allocation11 + $0x5c] sm:$0xf]
    %v10173 = vld [vmem:[#allocation11 + $0x60] sm:$0xf]
    %v10174 = vld [vmem:[#allocation11 + $0x64] sm:$0xf]
    %v10175 = vld [vmem:[#allocation11 + $0x68] sm:$0xf]
    %v10176 = vld [vmem:[#allocation11 + $0x6c] sm:$0xf]
    %v10177 = vld [vmem:[#allocation11 + $0x70] sm:$0xf]
    %v10178 = vld [vmem:[#allocation11 + $0x74] sm:$0xf]
    %v10179 = vld [vmem:[#allocation11 + $0x78] sm:$0xf]
    %v10180 = vld [vmem:[#allocation11 + $0x7c] sm:$0xf]
    %v10181 = vld [vmem:[#allocation11 + $0x80] sm:$0xf]
    %v10182 = vld [vmem:[#allocation11 + $0x84] sm:$0xf]
    %v10183 = vld [vmem:[#allocation11 + $0x88] sm:$0xf]
    %v10184 = vld [vmem:[#allocation11 + $0x8c] sm:$0xf]
    %v10185 = vld [vmem:[#allocation11 + $0x90] sm:$0xf]
    %v10186 = vld [vmem:[#allocation11 + $0x94] sm:$0xf]
    %v10187 = vld [vmem:[#allocation11 + $0x98] sm:$0xf]
    %v10188 = vld [vmem:[#allocation11 + $0x9c] sm:$0xf]
    %v10189 = vld [vmem:[#allocation11 + $0xa0] sm:$0xf]
    %v10190 = vld [vmem:[#allocation11 + $0xa4] sm:$0xf]
    %v10191 = vld [vmem:[#allocation11 + $0xa8] sm:$0xf]
    %v10192 = vld [vmem:[#allocation11 + $0xac] sm:$0xf]
    %v10193 = vld [vmem:[#allocation11 + $0xb0] sm:$0xf]
    %v10194 = vld [vmem:[#allocation11 + $0xb4] sm:$0xf]
    %v10195 = vld [vmem:[#allocation11 + $0xb8] sm:$0xf]
    %v10196 = vld [vmem:[#allocation11 + $0xbc] sm:$0xf]
    %v10197 = vld [vmem:[#allocation11 + $0xc0] sm:$0xf]
    %v10198 = vld [vmem:[#allocation11 + $0xc4] sm:$0xf]
    %v10199 = vld [vmem:[#allocation11 + $0xc8] sm:$0xf]
    %v10200 = vld [vmem:[#allocation11 + $0xcc] sm:$0xf]
    %v10201 = vld [vmem:[#allocation11 + $0xd0] sm:$0xf]
    %v10202 = vld [vmem:[#allocation11 + $0xd4] sm:$0xf]
    %v10203 = vld [vmem:[#allocation11 + $0xd8] sm:$0xf]
    %v10204 = vld [vmem:[#allocation11 + $0xdc] sm:$0xf]
    %v10205 = vld [vmem:[#allocation11 + $0xe0] sm:$0xf]
    %v10206 = vld [vmem:[#allocation11 + $0xe4] sm:$0xf]
    %v10207 = vld [vmem:[#allocation11 + $0xe8] sm:$0xf]
    %v10208 = vld [vmem:[#allocation11 + $0xec] sm:$0xf]
    %v10209 = vld [vmem:[#allocation11 + $0xf0] sm:$0xf]
    %v10210 = vld [vmem:[#allocation11 + $0xf4] sm:$0xf]
    %v10211 = vld [vmem:[#allocation11 + $0xf8] sm:$0xf]
    %v10212 = vld [vmem:[#allocation11 + $0xfc] sm:$0xf]
    %v10213 = vld [vmem:[#allocation13] sm:$0x1]
    %v10215 = vlaneseq
    %v10216 = vshrl.u32 %v10215, 7
    %v10217 = vsub.s32 0, %v10216
    %v10218 = vrot.slane %v10213, %v10217
    %v10284 = vunpack.c.l.b16 %v10149
    %v10285 = vunpack.c.l.b16 %v10150
    %v10286 = vunpack.c.l.b16 %v10151
    %v10287 = vunpack.c.l.b16 %v10152
    %v10288 = vunpack.c.l.b16 %v10153
    %v10289 = vunpack.c.l.b16 %v10154
    %v10290 = vunpack.c.l.b16 %v10155
    %v10291 = vunpack.c.l.b16 %v10156
    %v10292 = vunpack.c.l.b16 %v10157
    %v10293 = vunpack.c.l.b16 %v10158
    %v10294 = vunpack.c.l.b16 %v10159
    %v10295 = vunpack.c.l.b16 %v10160
    %v10296 = vunpack.c.l.b16 %v10161
    %v10297 = vunpack.c.l.b16 %v10162
    %v10298 = vunpack.c.l.b16 %v10163
    %v10299 = vunpack.c.l.b16 %v10164
    %v10300 = vunpack.c.l.b16 %v10165
    %v10301 = vunpack.c.l.b16 %v10166
    %v10302 = vunpack.c.l.b16 %v10167
    %v10303 = vunpack.c.l.b16 %v10168
    %v10304 = vunpack.c.l.b16 %v10169
    %v10305 = vunpack.c.l.b16 %v10170
    %v10306 = vunpack.c.l.b16 %v10171
    %v10307 = vunpack.c.l.b16 %v10172
    %v10308 = vunpack.c.l.b16 %v10173
    %v10309 = vunpack.c.l.b16 %v10174
    %v10310 = vunpack.c.l.b16 %v10175
    %v10311 = vunpack.c.l.b16 %v10176
    %v10312 = vunpack.c.l.b16 %v10177
    %v10313 = vunpack.c.l.b16 %v10178
    %v10314 = vunpack.c.l.b16 %v10179
    %v10315 = vunpack.c.l.b16 %v10180
    %v10316 = vunpack.c.l.b16 %v10181
    %v10317 = vunpack.c.l.b16 %v10182
    %v10318 = vunpack.c.l.b16 %v10183
    %v10319 = vunpack.c.l.b16 %v10184
    %v10320 = vunpack.c.l.b16 %v10185
    %v10321 = vunpack.c.l.b16 %v10186
    %v10322 = vunpack.c.l.b16 %v10187
    %v10323 = vunpack.c.l.b16 %v10188
    %v10324 = vunpack.c.l.b16 %v10189
    %v10325 = vunpack.c.l.b16 %v10190
    %v10326 = vunpack.c.l.b16 %v10191
    %v10327 = vunpack.c.l.b16 %v10192
    %v10328 = vunpack.c.l.b16 %v10193
    %v10329 = vunpack.c.l.b16 %v10194
    %v10330 = vunpack.c.l.b16 %v10195
    %v10331 = vunpack.c.l.b16 %v10196
    %v10332 = vunpack.c.l.b16 %v10197
    %v10333 = vunpack.c.l.b16 %v10198
    %v10334 = vunpack.c.l.b16 %v10199
    %v10335 = vunpack.c.l.b16 %v10200
    %v10336 = vunpack.c.l.b16 %v10201
    %v10337 = vunpack.c.l.b16 %v10202
    %v10338 = vunpack.c.l.b16 %v10203
    %v10339 = vunpack.c.l.b16 %v10204
    %v10340 = vunpack.c.l.b16 %v10205
    %v10341 = vunpack.c.l.b16 %v10206
    %v10342 = vunpack.c.l.b16 %v10207
    %v10343 = vunpack.c.l.b16 %v10208
    %v10344 = vunpack.c.l.b16 %v10209
    %v10345 = vunpack.c.l.b16 %v10210
    %v10346 = vunpack.c.l.b16 %v10211
    %v10347 = vunpack.c.l.b16 %v10212
    %v10348 = vpack.c.b16 %v10285, %v10284
    %v10349 = vpack.c.b16 %v10287, %v10286
    %v10350 = vpack.c.b16 %v10289, %v10288
    %v10351 = vpack.c.b16 %v10291, %v10290
    %v10352 = vpack.c.b16 %v10293, %v10292
    %v10353 = vpack.c.b16 %v10295, %v10294
    %v10354 = vpack.c.b16 %v10297, %v10296
    %v10355 = vpack.c.b16 %v10299, %v10298
    %v10356 = vpack.c.b16 %v10301, %v10300
    %v10357 = vpack.c.b16 %v10303, %v10302
    %v10358 = vpack.c.b16 %v10305, %v10304
    %v10359 = vpack.c.b16 %v10307, %v10306
    %v10360 = vpack.c.b16 %v10309, %v10308
    %v10361 = vpack.c.b16 %v10311, %v10310
    %v10362 = vpack.c.b16 %v10313, %v10312
    %v10363 = vpack.c.b16 %v10315, %v10314
    %v10364 = vpack.c.b16 %v10317, %v10316
    %v10365 = vpack.c.b16 %v10319, %v10318
    %v10366 = vpack.c.b16 %v10321, %v10320
    %v10367 = vpack.c.b16 %v10323, %v10322
    %v10368 = vpack.c.b16 %v10325, %v10324
    %v10369 = vpack.c.b16 %v10327, %v10326
    %v10370 = vpack.c.b16 %v10329, %v10328
    %v10371 = vpack.c.b16 %v10331, %v10330
    %v10372 = vpack.c.b16 %v10333, %v10332
    %v10373 = vpack.c.b16 %v10335, %v10334
    %v10374 = vpack.c.b16 %v10337, %v10336
    %v10375 = vpack.c.b16 %v10339, %v10338
    %v10376 = vpack.c.b16 %v10341, %v10340
    %v10377 = vpack.c.b16 %v10343, %v10342
    %v10378 = vpack.c.b16 %v10345, %v10344
    %v10379 = vpack.c.b16 %v10347, %v10346
    %10412 = vmatprep.subr.bf16.mxu0 0
    %10413 = vmatpush1.bf16.msra.mxu0 %v10348
    %10414 = vmatprep.subr.bf16.mxu0 0
    %10415 = vmatpush1.bf16.msra.mxu0 %v10349
    %10416 = vmatprep.subr.bf16.mxu0 0
    %10417 = vmatpush1.bf16.msra.mxu0 %v10350
    %10418 = vmatprep.subr.bf16.mxu0 0
    %10419 = vmatpush1.bf16.msra.mxu0 %v10351
    %10420 = vmatprep.subr.bf16.mxu0 0
    %10421 = vmatpush1.bf16.msra.mxu0 %v10352
    %10422 = vmatprep.subr.bf16.mxu0 0
    %10423 = vmatpush1.bf16.msra.mxu0 %v10353
    %10424 = vmatprep.subr.bf16.mxu0 0
    %10425 = vmatpush1.bf16.msra.mxu0 %v10354
    %10426 = vmatprep.subr.bf16.mxu0 0
    %10427 = vmatpush1.bf16.msra.mxu0 %v10355
    %10428 = vmatprep.subr.bf16.mxu0 0
    %10429 = vmatpush1.bf16.msra.mxu0 %v10356
    %10430 = vmatprep.subr.bf16.mxu0 0
    %10431 = vmatpush1.bf16.msra.mxu0 %v10357
    %10432 = vmatprep.subr.bf16.mxu0 0
    %10433 = vmatpush1.bf16.msra.mxu0 %v10358
    %10434 = vmatprep.subr.bf16.mxu0 0
    %10435 = vmatpush1.bf16.msra.mxu0 %v10359
    %10436 = vmatprep.subr.bf16.mxu0 0
    %10437 = vmatpush1.bf16.msra.mxu0 %v10360
    %10438 = vmatprep.subr.bf16.mxu0 0
    %10439 = vmatpush1.bf16.msra.mxu0 %v10361
    %10440 = vmatprep.subr.bf16.mxu0 0
    %10441 = vmatpush1.bf16.msra.mxu0 %v10362
    %10442 = vmatprep.subr.bf16.mxu0 0
    %10443 = vmatpush1.bf16.msra.mxu0 %v10363
    %10444 = vmatprep.mubr.bf16.mxu0 %v10142
    %10445 = vmatmul.mubr.bf16.gmra.mrb[0].mxu0 %v10141
    %v10446 = vpop.f32.mrb[0].mxu0
    %v10447 = vadd.f32 %v10218, %v10446
    %v10448 = vpop.f32.mrb[0].mxu0
    %v10449 = vpop.f32.mrb[0].mxu0
    %v10450 = vadd.f32 %v10218, %v10449
    %v10451 = vpop.f32.mrb[0].mxu0
    %10452 = vmatprep.mubr.bf16.mxu0 %v10146
    %10453 = vmatmul.mubr.bf16.gmra.mrb[0].mxu0 %v10145
    %v10454 = vpop.f32.mrb[0].mxu0
    %v10455 = vadd.f32 %v10218, %v10454
    %v10456 = vpop.f32.mrb[0].mxu0
    %v10457 = vpop.f32.mrb[0].mxu0
    %v10458 = vadd.f32 %v10218, %v10457
    %v10459 = vpop.f32.mrb[0].mxu0
    %10460 = vdwg.mxu0
    %10461 = vmatprep.subr.bf16.mxu0 0
    %10462 = vmatpush1.bf16.msra.mxu0 %v10364
    %10463 = vmatprep.subr.bf16.mxu0 0
    %10464 = vmatpush1.bf16.msra.mxu0 %v10365
    %10465 = vmatprep.subr.bf16.mxu0 0
    %10466 = vmatpush1.bf16.msra.mxu0 %v10366
    %10467 = vmatprep.subr.bf16.mxu0 0
    %10468 = vmatpush1.bf16.msra.mxu0 %v10367
    %10469 = vmatprep.subr.bf16.mxu0 0
    %10470 = vmatpush1.bf16.msra.mxu0 %v10368
    %10471 = vmatprep.subr.bf16.mxu0 0
    %10472 = vmatpush1.bf16.msra.mxu0 %v10369
    %10473 = vmatprep.subr.bf16.mxu0 0
    %10474 = vmatpush1.bf16.msra.mxu0 %v10370
    %10475 = vmatprep.subr.bf16.mxu0 0
    %10476 = vmatpush1.bf16.msra.mxu0 %v10371
    %10477 = vmatprep.subr.bf16.mxu0 0
    %10478 = vmatpush1.bf16.msra.mxu0 %v10372
    %10479 = vmatprep.subr.bf16.mxu0 0
    %10480 = vmatpush1.bf16.msra.mxu0 %v10373
    %10481 = vmatprep.subr.bf16.mxu0 0
    %10482 = vmatpush1.bf16.msra.mxu0 %v10374
    %10483 = vmatprep.subr.bf16.mxu0 0
    %10484 = vmatpush1.bf16.msra.mxu0 %v10375
    %10485 = vmatprep.subr.bf16.mxu0 0
    %10486 = vmatpush1.bf16.msra.mxu0 %v10376
    %10487 = vmatprep.subr.bf16.mxu0 0
    %10488 = vmatpush1.bf16.msra.mxu0 %v10377
    %10489 = vmatprep.subr.bf16.mxu0 0
    %10490 = vmatpush1.bf16.msra.mxu0 %v10378
    %10491 = vmatprep.subr.bf16.mxu0 0
    %10492 = vmatpush1.bf16.msra.mxu0 %v10379
    %10493 = vmatprep.mubr.bf16.mxu0 %v10144
    %10494 = vmatmul.mubr.bf16.gmra.mrb[0].mxu0 %v10143
    %v10495 = vpop.f32.mrb[0].mxu0
    %v10496 = vadd.f32 %v10447, %v10495
    %v10497 = vpop.f32.mrb[0].mxu0
    %v10498 = vpop.f32.mrb[0].mxu0
    %v10499 = vadd.f32 %v10450, %v10498
    %v10500 = vpop.f32.mrb[0].mxu0
    %10501 = vmatprep.mubr.bf16.mxu0 %v10148
    %10502 = vmatmul.mubr.bf16.gmra.mrb[0].mxu0 %v10147
    %v10503 = vpop.f32.mrb[0].mxu0
    %v10504 = vadd.f32 %v10455, %v10503
    %v10505 = vpop.f32.mrb[0].mxu0
    %v10506 = vpop.f32.mrb[0].mxu0
    %v10507 = vadd.f32 %v10458, %v10506
    %v10508 = vpop.f32.mrb[0].mxu0
    %10509 = vdwg.mxu0
    %10510 = vst [vmem:[#allocation14] sm:$0xff] %v10496
    %10511 = vst [vmem:[#allocation14 + $0x8] sm:$0xff] %v10499
    %10512 = vst [vmem:[#allocation14 + $0x10] sm:$0xff] %v10504
    %10513 = vst [vmem:[#allocation14 + $0x18] sm:$0xff] %v10507
    // Predicated region
    $region58: #{tpu_custom_call.1} parent=1 // pred_check
      _
    $region59: #{tpu_custom_call.1} parent=1 // pred_check_branch
      %10515 = sbr.rel (0) target = $region61
    $region60: #{tpu_custom_call.1} parent=1 // pred_region
      %s10517 = ssub.s32 512, 512
      %10518 = vsyncadd [#allocation4], %s10517
      %s10519 = sshll.u32 [#allocation14], 4
      %s10520 = int_to_ptr.vmem [resolvable:$true] %s10519
      %10525 = dma.vmem_to_hbm [thread:$0]  %s10520, 512, %s7, [#allocation4], 128, 128, 8
    $region61: #{tpu_custom_call.1} parent=1 // pred_fallthru
      _
    // Predicated region
    $region62: #{tpu_custom_call.1} parent=1 // pred_check
      _
    $region63: #{tpu_custom_call.1} parent=1 // pred_check_branch
      %10527 = sbr.rel (0) target = $region65
    $region64: #{tpu_custom_call.1} parent=1 // pred_region
      %10528 = dma.done [#allocation4], 512
    $region65: #{tpu_custom_call.1} parent=1 // pred_fallthru
      _
    %10529 = vsyncpa [#allocation3], 1
    %10530 = vsyncpa [#allocation6], 1
    %10531 = vsyncpa [#allocation9], 1
    %10532 = vsyncpa [#allocation12], 1
    %10533 = vsyncpa [#allocation4], 1

</llo_original>
